<compile_context>
chip_gen: v5e
topology: v5e:2x2
jax: 0.10.0
libtpu: 0.0.40
codegen_flags: <defaults>
</compile_context>

<pallas_src>
import functools
import math

import jax
import jax.numpy as jnp
from jax import lax
from jax.experimental import pallas as pl
from jax.experimental.pallas import tpu as pltpu

LANE = 128                       # channel padding target (lane width)
ACT_DTYPE = jnp.bfloat16         # activation / weight storage dtype
F32 = jnp.float32


def _cround(c):
    return ((c + LANE - 1) // LANE) * LANE


# ----------------------------------------------------------------------------
# In-kernel helpers (operate on plain values; only dots / iota / elementwise)
# ----------------------------------------------------------------------------
def _shift_rows(x, delta):
    """out[i] = x[i + delta]; out-of-range rows are zero.

    Implemented as a 0/1 row-shift matmul so zero-padding for the conv
    boundaries comes for free and the MXU LHS stays contiguous/aligned.
    """
    l = x.shape[0]
    r = lax.broadcasted_iota(jnp.int32, (l, l), 0)
    c = lax.broadcasted_iota(jnp.int32, (l, l), 1)
    s = (c == r + delta).astype(x.dtype)
    return jnp.dot(s, x, preferred_element_type=F32).astype(x.dtype)


def _even_rows(x):
    """out[m] = x[2m] (stride-2 subsample along rows) via a 0/1 selection dot."""
    l = x.shape[0]
    r = lax.broadcasted_iota(jnp.int32, (l // 2, l), 0)
    c = lax.broadcasted_iota(jnp.int32, (l // 2, l), 1)
    s = (c == 2 * r).astype(x.dtype)
    return jnp.dot(s, x, preferred_element_type=F32).astype(x.dtype)


def _conv3(x, w_ref, c_in):
    """k=3, stride=1, pad=1 conv: out[l] = x[l-1]@W0 + x[l]@W1 + x[l+1]@W2.

    x is bf16 (L, c_in); w_ref is the tap-major (3*c_in, c_out) weight ref
    (aligned 128-multiple row slices).  Returns f32 (L, c_out).
    """
    xm = _shift_rows(x, -1)                                   # x[l-1], row 0 -> 0
    xp = _shift_rows(x, +1)                                   # x[l+1], last row -> 0
    acc = jnp.dot(xm, w_ref[0:c_in, :], preferred_element_type=F32)
    acc += jnp.dot(x, w_ref[c_in:2 * c_in, :], preferred_element_type=F32)
    acc += jnp.dot(xp, w_ref[2 * c_in:3 * c_in, :], preferred_element_type=F32)
    return acc


def _basic_block(h, ops, stride, c_in, c_mid, has_down):
    """BasicBlock: conv1+BN+ReLU -> conv2+BN -> (+ downsample(x) | x) -> ReLU."""
    if has_down:
        w1, s1, b1, w2, s2, b2, wd, sd, bd = ops
    else:
        w1, s1, b1, w2, s2, b2 = ops

    # conv1 + BN + ReLU.  For stride 2 the conv is evaluated at all positions
    # (cheap at these sizes) and then even rows are selected; selection of the
    # post-ReLU bf16 activation is exact and commutes with the elementwise ops.
    z1 = _conv3(h, w1, c_in)
    a1 = jnp.maximum(z1 * s1[...] + b1[...], 0.0).astype(ACT_DTYPE)
    if stride == 2:
        y1 = _even_rows(a1)
        x_res = _even_rows(h)
    else:
        y1 = a1
        x_res = h

    # conv2 + BN
    z2 = _conv3(y1, w2, c_mid)
    z2 = z2 * s2[...] + b2[...]

    # residual path
    if has_down:
        iden = jnp.dot(x_res, wd[...], preferred_element_type=F32)
        iden = iden * sd[...] + bd[...]
    else:
        iden = x_res.astype(F32)

    return jnp.maximum(z2 + iden, 0.0).astype(ACT_DTYPE)


def _fused_resnet_kernel(*refs, l_pool, block_meta):
    """Whole forward pass for one sample (grid iterates / parallelizes batch)."""
    it = iter(refs)
    pepo_ref = next(it)                                  # (2*l_pool, 8) patches
    w_s, s_s, b_s = next(it), next(it), next(it)         # stem weights

    # ---- stem: conv1(k7,s2,p3) + BN + ReLU + maxpool(k3,s2,p1) ----
    y = jnp.dot(pepo_ref[...], w_s[...], preferred_element_type=F32)
    y = jnp.maximum(y * s_s[...] + b_s[...], 0.0).astype(ACT_DTYPE)
    ye = y[0:l_pool, :]                                  # conv out, even positions
    yo = y[l_pool:2 * l_pool, :]                         # conv out, odd positions
    # pool[j] = max(y[2j-1], y[2j], y[2j+1]) = max(yo[j-1], ye[j], yo[j]);
    # the missing y[-1] maps to 0, valid because the conv output is post-ReLU.
    yo_prev = _shift_rows(yo, -1)
    h = jnp.maximum(jnp.maximum(ye, yo), yo_prev)        # (l_pool, 128) bf16

    # ---- layer1..layer4 BasicBlocks, fully on-chip ----
    for (stride_b, c_in, c_mid, has_down, n_ops) in block_meta:
        ops = [next(it) for _ in range(n_ops)]
        h = _basic_block(h, ops, stride_b, c_in, c_mid, has_down)

    o_ref = next(it)
    o_ref[...] = h


# ----------------------------------------------------------------------------
# Wrapper: builds stem patches, flattens params, one pallas_call for the net.
# ----------------------------------------------------------------------------
def resnet_forward(x, params):
    n, _c_in, length = x.shape
    sp = params["stem"]
    kpad = sp["w"].shape[0]                 # padded stem contraction (8)
    c1 = sp["w"].shape[1]                   # padded stem channels (128)

    k, st, pd = 7, 2, 3
    l_conv = (length + 2 * pd - k) // st + 1
    l_pool = (l_conv + 2 - 3) // 2 + 1
    assert l_conv == 2 * l_pool, "stem fusion assumes an even conv length"

    # TODO(synk): stem patch builder assumes in_channel == 1 (module default).
    xpad = jnp.pad(x[:, 0, :], ((0, 0), (pd, pd)))       # (N, L + 6)

    def taps(offset):
        # conv position l covers padded index 2l + t; even l=2m -> 4m+t, odd -> 4m+2+t
        cols = [xpad[:, offset + t: offset + t + 4 * (l_pool - 1) + 1: 4]
                for t in range(k)]
        p = jnp.stack(cols, axis=-1)                     # (N, l_pool, 7)
        return jnp.pad(p, ((0, 0), (0, 0), (0, kpad - k))).astype(ACT_DTYPE)

    pepo = jnp.concatenate([taps(0), taps(2)], axis=1)   # (N, 2*l_pool, kpad)

    # ---- flatten block params; static metadata (stride iff downsample) ----
    blocks = [bp for layer in params["layers"] for bp in layer]
    block_meta, block_ops = [], []
    for bp in blocks:
        has_down = "wd" in bp                # in this family: downsample <=> stride 2
        c_in = bp["w1"].shape[0] // 3
        c_mid = bp["s1"].shape[1]
        ops = [bp["w1"], bp["s1"], bp["b1"], bp["w2"], bp["s2"], bp["b2"]]
        if has_down:
            ops += [bp["wd"], bp["sd"], bp["bd"]]
        block_meta.append((2 if has_down else 1, c_in, c_mid, has_down, len(ops)))
        block_ops.append(ops)

    # final (static) activation shape
    l_out, c_out = l_pool, c1
    for (s_b, _ci, c_mid, _hd, _no) in block_meta:
        l_out //= s_b
        c_out = c_mid

    operands = [pepo, sp["w"], sp["s"], sp["b"]]
    operands += [op for ops in block_ops for op in ops]

    in_specs = [pl.BlockSpec((None, 2 * l_pool, kpad), lambda b: (b, 0, 0))]
    for op in operands[1:]:
        # weights / BN params: full-array blocks, constant index -> resident.
        in_specs.append(pl.BlockSpec(op.shape, lambda b: (0, 0)))
    out_specs = pl.BlockSpec((None, l_out, c_out), lambda b: (b, 0, 0))
    out_shape = jax.ShapeDtypeStruct((n, l_out, c_out), ACT_DTYPE)

    # ---- advisory cost estimate (true contraction sizes, weights counted once)
    flops = 2 * (2 * l_pool) * kpad * c1
    l_cur = l_pool
    for (s_b, c_in, c_mid, hd, _no) in block_meta:
        l_nxt = l_cur // s_b
        flops += 2 * l_cur * (3 * c_in) * c_mid          # conv1 (full length)
        flops += 2 * l_nxt * (3 * c_mid) * c_mid         # conv2
        if hd:
            flops += 2 * l_nxt * c_in * c_mid            # 1x1 downsample
        l_cur = l_nxt
    flops *= n
    bytes_accessed = int(pepo.size) * pepo.dtype.itemsize
    bytes_accessed += sum(int(math.prod(op.shape)) * op.dtype.itemsize
                          for op in operands[1:])
    bytes_accessed += n * l_out * c_out * jnp.dtype(ACT_DTYPE).itemsize

    kernel = functools.partial(_fused_resnet_kernel,
                               l_pool=l_pool, block_meta=tuple(block_meta))

    out = pl.pallas_call(
        kernel,
        out_shape=out_shape,
        grid=(n,),
        in_specs=in_specs,
        out_specs=out_specs,
        compiler_params=pltpu.CompilerParams(
            dimension_semantics=("parallel",),          # batch -> megacore on v7x
            vmem_limit_bytes=32 * 1024 * 1024,
        ),
        cost_estimate=pl.CostEstimate(flops=int(flops), transcendentals=0,
                                      bytes_accessed=int(bytes_accessed)),
    )(*operands)

    # back to PyTorch NCL layout; last stage (512 ch) needs no un-padding.
    return jnp.transpose(out, (0, 2, 1)).astype(jnp.float32)


# ----------------------------------------------------------------------------
# Parameter init (deterministic, synthetic -- mirrors the module's __init__),
# prepared directly into kernel layout (tap-major 2D weights, padded channels).
# ----------------------------------------------------------------------------
def _conv_w(key, c_in, c_out, k):
    fan_out = c_out * k  # kaiming_normal_, mode='fan_out', nonlinearity='relu'
    std = (2.0 / fan_out) ** 0.5
    return jax.random.normal(key, (c_out, c_in, k), jnp.float32) * std


def _bn_fold(key, c, eps=1e-5):
    gamma = jnp.ones((c,), jnp.float32)    # nn.init.constant_(weight, 1)
    beta = jnp.zeros((c,), jnp.float32)    # nn.init.constant_(bias, 0)
    k1, k2 = jax.random.split(key)
    running_mean = 0.1 * jax.random.normal(k1, (c,), jnp.float32)
    running_var = 0.9 + 0.1 * jnp.abs(jax.random.normal(k2, (c,), jnp.float32))
    scale = gamma / jnp.sqrt(running_var + eps)
    bias = beta - running_mean * scale
    return scale, bias


def _prep_conv(w, c_in_pad, c_out_pad):
    """(C_out, C_in, K) torch layout -> (K * c_in_pad, c_out_pad), tap-major, bf16."""
    c_out, c_in, k = w.shape
    w = jnp.transpose(w, (2, 1, 0))                        # (K, C_in, C_out)
    w = jnp.pad(w, ((0, 0), (0, c_in_pad - c_in), (0, c_out_pad - c_out)))
    return w.reshape(k * c_in_pad, c_out_pad).astype(ACT_DTYPE)


def _prep_bn(scale, bias, c_pad):
    c = scale.shape[0]
    s = jnp.pad(scale, (0, c_pad - c)).reshape(1, c_pad).astype(jnp.float32)
    b = jnp.pad(bias, (0, c_pad - c)).reshape(1, c_pad).astype(jnp.float32)
    return s, b


def init_resnet(key, in_channel=1, layers=(1, 1, 1, 1)):
    keys = iter(jax.random.split(key, 256))

    # Stem: conv1 (k=7,s=2,p=3, no bias) + bn1; contraction K*Cin padded to 8.
    w1 = _conv_w(next(keys), in_channel, 64, 7)
    c1_pad = _cround(64)
    w1_2d = _prep_conv(w1, in_channel, c1_pad)             # (7*in_channel, 128)
    kc = 7 * in_channel
    kc_pad = ((kc + 7) // 8) * 8                           # one sublane group
    w1_2d = jnp.pad(w1_2d, ((0, kc_pad - kc), (0, 0)))
    s1, b1 = _prep_bn(*_bn_fold(next(keys), 64), c1_pad)
    params = {"stem": {"w": w1_2d, "s": s1, "b": b1}, "layers": []}

    inplanes = 64
    for planes, n_blocks, stride in zip((64, 128, 256, 512), layers, (1, 2, 2, 2)):
        block_list = []
        for bi in range(n_blocks):
            s = stride if bi == 0 else 1
            ci_pad, co_pad = _cround(inplanes), _cround(planes)
            bp = {
                "w1": _prep_conv(_conv_w(next(keys), inplanes, planes, 3), ci_pad, co_pad),
                "w2": _prep_conv(_conv_w(next(keys), planes, planes, 3), co_pad, co_pad),
            }
            bp["s1"], bp["b1"] = _prep_bn(*_bn_fold(next(keys), planes), co_pad)
            bp["s2"], bp["b2"] = _prep_bn(*_bn_fold(next(keys), planes), co_pad)
            if s != 1 or inplanes != planes:               # BasicBlock.expansion == 1
                bp["wd"] = _prep_conv(_conv_w(next(keys), inplanes, planes, 1),
                                      ci_pad, co_pad)
                bp["sd"], bp["bd"] = _prep_bn(*_bn_fold(next(keys), planes), co_pad)
            block_list.append(bp)
            inplanes = planes
        params["layers"].append(block_list)
    return params


# ----------------------------------------------------------------------------
if __name__ == "__main__":
    key = jax.random.PRNGKey(0)
    k_params, k_input = jax.random.split(key)

    params = init_resnet(k_params, in_channel=1, layers=(1, 1, 1, 1))
    # input: (batch=2, in_channel=1, length=128)  -> output (2, 512, 4)
    x = jax.random.normal(k_input, (2, 1, 128), jnp.float32)

    fwd = jax.jit(resnet_forward)
    out = jax.block_until_ready(fwd(x, params))

    assert out.shape == (2, 512, 4), out.shape
    assert out.dtype == jnp.float32
    assert bool(jnp.all(jnp.isfinite(out)))
    print("KERNEL_OK")
</pallas_src>

<mosaic_0001>
module attributes {stable_mosaic.version = 11 : i64} {
  func.func @_fused_resnet_kernel(%arg0: i32, %arg1: memref<1x64x8xbf16, #tpu.memory_space<vmem>>, %arg2: memref<8x128xbf16, #tpu.memory_space<vmem>>, %arg3: memref<1x128xf32, #tpu.memory_space<vmem>>, %arg4: memref<1x128xf32, #tpu.memory_space<vmem>>, %arg5: memref<384x128xbf16, #tpu.memory_space<vmem>>, %arg6: memref<1x128xf32, #tpu.memory_space<vmem>>, %arg7: memref<1x128xf32, #tpu.memory_space<vmem>>, %arg8: memref<384x128xbf16, #tpu.memory_space<vmem>>, %arg9: memref<1x128xf32, #tpu.memory_space<vmem>>, %arg10: memref<1x128xf32, #tpu.memory_space<vmem>>, %arg11: memref<384x128xbf16, #tpu.memory_space<vmem>>, %arg12: memref<1x128xf32, #tpu.memory_space<vmem>>, %arg13: memref<1x128xf32, #tpu.memory_space<vmem>>, %arg14: memref<384x128xbf16, #tpu.memory_space<vmem>>, %arg15: memref<1x128xf32, #tpu.memory_space<vmem>>, %arg16: memref<1x128xf32, #tpu.memory_space<vmem>>, %arg17: memref<128x128xbf16, #tpu.memory_space<vmem>>, %arg18: memref<1x128xf32, #tpu.memory_space<vmem>>, %arg19: memref<1x128xf32, #tpu.memory_space<vmem>>, %arg20: memref<384x256xbf16, #tpu.memory_space<vmem>>, %arg21: memref<1x256xf32, #tpu.memory_space<vmem>>, %arg22: memref<1x256xf32, #tpu.memory_space<vmem>>, %arg23: memref<768x256xbf16, #tpu.memory_space<vmem>>, %arg24: memref<1x256xf32, #tpu.memory_space<vmem>>, %arg25: memref<1x256xf32, #tpu.memory_space<vmem>>, %arg26: memref<128x256xbf16, #tpu.memory_space<vmem>>, %arg27: memref<1x256xf32, #tpu.memory_space<vmem>>, %arg28: memref<1x256xf32, #tpu.memory_space<vmem>>, %arg29: memref<768x512xbf16, #tpu.memory_space<vmem>>, %arg30: memref<1x512xf32, #tpu.memory_space<vmem>>, %arg31: memref<1x512xf32, #tpu.memory_space<vmem>>, %arg32: memref<1536x512xbf16, #tpu.memory_space<vmem>>, %arg33: memref<1x512xf32, #tpu.memory_space<vmem>>, %arg34: memref<1x512xf32, #tpu.memory_space<vmem>>, %arg35: memref<256x512xbf16, #tpu.memory_space<vmem>>, %arg36: memref<1x512xf32, #tpu.memory_space<vmem>>, %arg37: memref<1x512xf32, #tpu.memory_space<vmem>>, %arg38: memref<1x4x512xbf16, #tpu.memory_space<vmem>>) attributes {dimension_semantics = [#tpu.dimension_semantics<parallel>], iteration_bounds = array<i64: 2>, scalar_prefetch = 0 : i64, scratch_operands = 0 : i64, tpu.core_type = #tpu.core_type<tc>, window_params = [{transform_indices = @transform_0, window_bounds = array<i64: 1, 64, 8>}, {pipeline_mode = #tpu.pipeline_mode<synchronous>, transform_indices = @transform_1, window_bounds = array<i64: 8, 128>}, {pipeline_mode = #tpu.pipeline_mode<synchronous>, transform_indices = @transform_2, window_bounds = array<i64: 1, 128>}, {pipeline_mode = #tpu.pipeline_mode<synchronous>, transform_indices = @transform_3, window_bounds = array<i64: 1, 128>}, {pipeline_mode = #tpu.pipeline_mode<synchronous>, transform_indices = @transform_4, window_bounds = array<i64: 384, 128>}, {pipeline_mode = #tpu.pipeline_mode<synchronous>, transform_indices = @transform_5, window_bounds = array<i64: 1, 128>}, {pipeline_mode = #tpu.pipeline_mode<synchronous>, transform_indices = @transform_6, window_bounds = array<i64: 1, 128>}, {pipeline_mode = #tpu.pipeline_mode<synchronous>, transform_indices = @transform_7, window_bounds = array<i64: 384, 128>}, {pipeline_mode = #tpu.pipeline_mode<synchronous>, transform_indices = @transform_8, window_bounds = array<i64: 1, 128>}, {pipeline_mode = #tpu.pipeline_mode<synchronous>, transform_indices = @transform_9, window_bounds = array<i64: 1, 128>}, {pipeline_mode = #tpu.pipeline_mode<synchronous>, transform_indices = @transform_10, window_bounds = array<i64: 384, 128>}, {pipeline_mode = #tpu.pipeline_mode<synchronous>, transform_indices = @transform_11, window_bounds = array<i64: 1, 128>}, {pipeline_mode = #tpu.pipeline_mode<synchronous>, transform_indices = @transform_12, window_bounds = array<i64: 1, 128>}, {pipeline_mode = #tpu.pipeline_mode<synchronous>, transform_indices = @transform_13, window_bounds = array<i64: 384, 128>}, {pipeline_mode = #tpu.pipeline_mode<synchronous>, transform_indices = @transform_14, window_bounds = array<i64: 1, 128>}, {pipeline_mode = #tpu.pipeline_mode<synchronous>, transform_indices = @transform_15, window_bounds = array<i64: 1, 128>}, {pipeline_mode = #tpu.pipeline_mode<synchronous>, transform_indices = @transform_16, window_bounds = array<i64: 128, 128>}, {pipeline_mode = #tpu.pipeline_mode<synchronous>, transform_indices = @transform_17, window_bounds = array<i64: 1, 128>}, {pipeline_mode = #tpu.pipeline_mode<synchronous>, transform_indices = @transform_18, window_bounds = array<i64: 1, 128>}, {pipeline_mode = #tpu.pipeline_mode<synchronous>, transform_indices = @transform_19, window_bounds = array<i64: 384, 256>}, {pipeline_mode = #tpu.pipeline_mode<synchronous>, transform_indices = @transform_20, window_bounds = array<i64: 1, 256>}, {pipeline_mode = #tpu.pipeline_mode<synchronous>, transform_indices = @transform_21, window_bounds = array<i64: 1, 256>}, {pipeline_mode = #tpu.pipeline_mode<synchronous>, transform_indices = @transform_22, window_bounds = array<i64: 768, 256>}, {pipeline_mode = #tpu.pipeline_mode<synchronous>, transform_indices = @transform_23, window_bounds = array<i64: 1, 256>}, {pipeline_mode = #tpu.pipeline_mode<synchronous>, transform_indices = @transform_24, window_bounds = array<i64: 1, 256>}, {pipeline_mode = #tpu.pipeline_mode<synchronous>, transform_indices = @transform_25, window_bounds = array<i64: 128, 256>}, {pipeline_mode = #tpu.pipeline_mode<synchronous>, transform_indices = @transform_26, window_bounds = array<i64: 1, 256>}, {pipeline_mode = #tpu.pipeline_mode<synchronous>, transform_indices = @transform_27, window_bounds = array<i64: 1, 256>}, {pipeline_mode = #tpu.pipeline_mode<synchronous>, transform_indices = @transform_28, window_bounds = array<i64: 768, 512>}, {pipeline_mode = #tpu.pipeline_mode<synchronous>, transform_indices = @transform_29, window_bounds = array<i64: 1, 512>}, {pipeline_mode = #tpu.pipeline_mode<synchronous>, transform_indices = @transform_30, window_bounds = array<i64: 1, 512>}, {pipeline_mode = #tpu.pipeline_mode<synchronous>, transform_indices = @transform_31, window_bounds = array<i64: 1536, 512>}, {pipeline_mode = #tpu.pipeline_mode<synchronous>, transform_indices = @transform_32, window_bounds = array<i64: 1, 512>}, {pipeline_mode = #tpu.pipeline_mode<synchronous>, transform_indices = @transform_33, window_bounds = array<i64: 1, 512>}, {pipeline_mode = #tpu.pipeline_mode<synchronous>, transform_indices = @transform_34, window_bounds = array<i64: 256, 512>}, {pipeline_mode = #tpu.pipeline_mode<synchronous>, transform_indices = @transform_35, window_bounds = array<i64: 1, 512>}, {pipeline_mode = #tpu.pipeline_mode<synchronous>, transform_indices = @transform_36, window_bounds = array<i64: 1, 512>}, {transform_indices = @transform_37, window_bounds = array<i64: 1, 4, 512>}]} {
    %c0 = arith.constant 0 : index
    %c0_0 = arith.constant 0 : index
    %c0_1 = arith.constant 0 : index
    %0 = vector.load %arg1[%c0, %c0_0, %c0_1] : memref<1x64x8xbf16, #tpu.memory_space<vmem>>, vector<1x64x8xbf16>
    %1 = vector.shape_cast %0 : vector<1x64x8xbf16> to vector<64x8xbf16>
    %c0_2 = arith.constant 0 : index
    %c0_3 = arith.constant 0 : index
    %2 = vector.load %arg2[%c0_2, %c0_3] : memref<8x128xbf16, #tpu.memory_space<vmem>>, vector<8x128xbf16>
    %cst = arith.constant dense<0.000000e+00> : vector<64x128xf32>
    %3 = tpu.matmul %1, %2, %cst {dimension_numbers = #tpu.dot_dimension_numbers<[1], [0], [0], [1], [0, 0, 1, 1], [], []>} : vector<64x8xbf16>, vector<8x128xbf16>, vector<64x128xf32> -> vector<64x128xf32>
    %c0_4 = arith.constant 0 : index
    %c0_5 = arith.constant 0 : index
    %4 = vector.load %arg3[%c0_4, %c0_5] : memref<1x128xf32, #tpu.memory_space<vmem>>, vector<1x128xf32>
    %5 = vector.broadcast %4 : vector<1x128xf32> to vector<64x128xf32>
    %6 = arith.mulf %3, %5 : vector<64x128xf32>
    %c0_6 = arith.constant 0 : index
    %c0_7 = arith.constant 0 : index
    %7 = vector.load %arg4[%c0_6, %c0_7] : memref<1x128xf32, #tpu.memory_space<vmem>>, vector<1x128xf32>
    %8 = vector.broadcast %7 : vector<1x128xf32> to vector<64x128xf32>
    %9 = arith.addf %6, %8 : vector<64x128xf32>
    %cst_8 = arith.constant 0.000000e+00 : f32
    %10 = vector.broadcast %cst_8 : f32 to vector<64x128xf32>
    %11 = arith.maximumf %9, %10 : vector<64x128xf32>
    %12 = arith.truncf %11 : vector<64x128xf32> to vector<64x128xbf16>
    %13 = vector.extract_strided_slice %12 {offsets = [0, 0], sizes = [32, 128], strides = [1, 1]} : vector<64x128xbf16> to vector<32x128xbf16>
    %14 = vector.extract_strided_slice %12 {offsets = [32, 0], sizes = [32, 128], strides = [1, 1]} : vector<64x128xbf16> to vector<32x128xbf16>
    %15 = tpu.iota {dimensions = array<i32: 0>} : vector<32x32xi32>
    %16 = tpu.iota {dimensions = array<i32: 1>} : vector<32x32xi32>
    %c-1_i32 = arith.constant -1 : i32
    %17 = vector.broadcast %c-1_i32 : i32 to vector<32x32xi32>
    %18 = arith.addi %15, %17 : vector<32x32xi32>
    %19 = arith.cmpi eq, %16, %18 : vector<32x32xi32>
    %20 = arith.extui %19 : vector<32x32xi1> to vector<32x32xi32>
    %21 = arith.sitofp %20 : vector<32x32xi32> to vector<32x32xf32>
    %22 = arith.truncf %21 : vector<32x32xf32> to vector<32x32xbf16>
    %cst_9 = arith.constant dense<0.000000e+00> : vector<32x128xf32>
    %23 = tpu.matmul %22, %14, %cst_9 {dimension_numbers = #tpu.dot_dimension_numbers<[1], [0], [0], [1], [0, 0, 1, 1], [], []>} : vector<32x32xbf16>, vector<32x128xbf16>, vector<32x128xf32> -> vector<32x128xf32>
    %24 = arith.truncf %23 : vector<32x128xf32> to vector<32x128xbf16>
    %25 = arith.maximumf %13, %14 : vector<32x128xbf16>
    %26 = arith.maximumf %25, %24 : vector<32x128xbf16>
    %27 = tpu.iota {dimensions = array<i32: 0>} : vector<32x32xi32>
    %28 = tpu.iota {dimensions = array<i32: 1>} : vector<32x32xi32>
    %c-1_i32_10 = arith.constant -1 : i32
    %29 = vector.broadcast %c-1_i32_10 : i32 to vector<32x32xi32>
    %30 = arith.addi %27, %29 : vector<32x32xi32>
    %31 = arith.cmpi eq, %28, %30 : vector<32x32xi32>
    %32 = arith.extui %31 : vector<32x32xi1> to vector<32x32xi32>
    %33 = arith.sitofp %32 : vector<32x32xi32> to vector<32x32xf32>
    %34 = arith.truncf %33 : vector<32x32xf32> to vector<32x32xbf16>
    %cst_11 = arith.constant dense<0.000000e+00> : vector<32x128xf32>
    %35 = tpu.matmul %34, %26, %cst_11 {dimension_numbers = #tpu.dot_dimension_numbers<[1], [0], [0], [1], [0, 0, 1, 1], [], []>} : vector<32x32xbf16>, vector<32x128xbf16>, vector<32x128xf32> -> vector<32x128xf32>
    %36 = arith.truncf %35 : vector<32x128xf32> to vector<32x128xbf16>
    %37 = tpu.iota {dimensions = array<i32: 0>} : vector<32x32xi32>
    %38 = tpu.iota {dimensions = array<i32: 1>} : vector<32x32xi32>
    %c1_i32 = arith.constant 1 : i32
    %39 = vector.broadcast %c1_i32 : i32 to vector<32x32xi32>
    %40 = arith.addi %37, %39 : vector<32x32xi32>
    %41 = arith.cmpi eq, %38, %40 : vector<32x32xi32>
    %42 = arith.extui %41 : vector<32x32xi1> to vector<32x32xi32>
    %43 = arith.sitofp %42 : vector<32x32xi32> to vector<32x32xf32>
    %44 = arith.truncf %43 : vector<32x32xf32> to vector<32x32xbf16>
    %cst_12 = arith.constant dense<0.000000e+00> : vector<32x128xf32>
    %45 = tpu.matmul %44, %26, %cst_12 {dimension_numbers = #tpu.dot_dimension_numbers<[1], [0], [0], [1], [0, 0, 1, 1], [], []>} : vector<32x32xbf16>, vector<32x128xbf16>, vector<32x128xf32> -> vector<32x128xf32>
    %46 = arith.truncf %45 : vector<32x128xf32> to vector<32x128xbf16>
    %c0_13 = arith.constant 0 : index
    %c0_14 = arith.constant 0 : index
    %47 = vector.load %arg5[%c0_13, %c0_14] : memref<384x128xbf16, #tpu.memory_space<vmem>>, vector<128x128xbf16>
    %cst_15 = arith.constant dense<0.000000e+00> : vector<32x128xf32>
    %48 = tpu.matmul %36, %47, %cst_15 {dimension_numbers = #tpu.dot_dimension_numbers<[1], [0], [0], [1], [0, 0, 1, 1], [], []>} : vector<32x128xbf16>, vector<128x128xbf16>, vector<32x128xf32> -> vector<32x128xf32>
    %c128 = arith.constant 128 : index
    %c0_16 = arith.constant 0 : index
    %49 = vector.load %arg5[%c128, %c0_16] : memref<384x128xbf16, #tpu.memory_space<vmem>>, vector<128x128xbf16>
    %cst_17 = arith.constant dense<0.000000e+00> : vector<32x128xf32>
    %50 = tpu.matmul %26, %49, %cst_17 {dimension_numbers = #tpu.dot_dimension_numbers<[1], [0], [0], [1], [0, 0, 1, 1], [], []>} : vector<32x128xbf16>, vector<128x128xbf16>, vector<32x128xf32> -> vector<32x128xf32>
    %51 = arith.addf %48, %50 : vector<32x128xf32>
    %c256 = arith.constant 256 : index
    %c0_18 = arith.constant 0 : index
    %52 = vector.load %arg5[%c256, %c0_18] : memref<384x128xbf16, #tpu.memory_space<vmem>>, vector<128x128xbf16>
    %cst_19 = arith.constant dense<0.000000e+00> : vector<32x128xf32>
    %53 = tpu.matmul %46, %52, %cst_19 {dimension_numbers = #tpu.dot_dimension_numbers<[1], [0], [0], [1], [0, 0, 1, 1], [], []>} : vector<32x128xbf16>, vector<128x128xbf16>, vector<32x128xf32> -> vector<32x128xf32>
    %54 = arith.addf %51, %53 : vector<32x128xf32>
    %c0_20 = arith.constant 0 : index
    %c0_21 = arith.constant 0 : index
    %55 = vector.load %arg6[%c0_20, %c0_21] : memref<1x128xf32, #tpu.memory_space<vmem>>, vector<1x128xf32>
    %56 = vector.broadcast %55 : vector<1x128xf32> to vector<32x128xf32>
    %57 = arith.mulf %54, %56 : vector<32x128xf32>
    %c0_22 = arith.constant 0 : index
    %c0_23 = arith.constant 0 : index
    %58 = vector.load %arg7[%c0_22, %c0_23] : memref<1x128xf32, #tpu.memory_space<vmem>>, vector<1x128xf32>
    %59 = vector.broadcast %58 : vector<1x128xf32> to vector<32x128xf32>
    %60 = arith.addf %57, %59 : vector<32x128xf32>
    %cst_24 = arith.constant 0.000000e+00 : f32
    %61 = vector.broadcast %cst_24 : f32 to vector<32x128xf32>
    %62 = arith.maximumf %60, %61 : vector<32x128xf32>
    %63 = arith.truncf %62 : vector<32x128xf32> to vector<32x128xbf16>
    %64 = tpu.iota {dimensions = array<i32: 0>} : vector<32x32xi32>
    %65 = tpu.iota {dimensions = array<i32: 1>} : vector<32x32xi32>
    %c-1_i32_25 = arith.constant -1 : i32
    %66 = vector.broadcast %c-1_i32_25 : i32 to vector<32x32xi32>
    %67 = arith.addi %64, %66 : vector<32x32xi32>
    %68 = arith.cmpi eq, %65, %67 : vector<32x32xi32>
    %69 = arith.extui %68 : vector<32x32xi1> to vector<32x32xi32>
    %70 = arith.sitofp %69 : vector<32x32xi32> to vector<32x32xf32>
    %71 = arith.truncf %70 : vector<32x32xf32> to vector<32x32xbf16>
    %cst_26 = arith.constant dense<0.000000e+00> : vector<32x128xf32>
    %72 = tpu.matmul %71, %63, %cst_26 {dimension_numbers = #tpu.dot_dimension_numbers<[1], [0], [0], [1], [0, 0, 1, 1], [], []>} : vector<32x32xbf16>, vector<32x128xbf16>, vector<32x128xf32> -> vector<32x128xf32>
    %73 = arith.truncf %72 : vector<32x128xf32> to vector<32x128xbf16>
    %74 = tpu.iota {dimensions = array<i32: 0>} : vector<32x32xi32>
    %75 = tpu.iota {dimensions = array<i32: 1>} : vector<32x32xi32>
    %c1_i32_27 = arith.constant 1 : i32
    %76 = vector.broadcast %c1_i32_27 : i32 to vector<32x32xi32>
    %77 = arith.addi %74, %76 : vector<32x32xi32>
    %78 = arith.cmpi eq, %75, %77 : vector<32x32xi32>
    %79 = arith.extui %78 : vector<32x32xi1> to vector<32x32xi32>
    %80 = arith.sitofp %79 : vector<32x32xi32> to vector<32x32xf32>
    %81 = arith.truncf %80 : vector<32x32xf32> to vector<32x32xbf16>
    %cst_28 = arith.constant dense<0.000000e+00> : vector<32x128xf32>
    %82 = tpu.matmul %81, %63, %cst_28 {dimension_numbers = #tpu.dot_dimension_numbers<[1], [0], [0], [1], [0, 0, 1, 1], [], []>} : vector<32x32xbf16>, vector<32x128xbf16>, vector<32x128xf32> -> vector<32x128xf32>
    %83 = arith.truncf %82 : vector<32x128xf32> to vector<32x128xbf16>
    %c0_29 = arith.constant 0 : index
    %c0_30 = arith.constant 0 : index
    %84 = vector.load %arg8[%c0_29, %c0_30] : memref<384x128xbf16, #tpu.memory_space<vmem>>, vector<128x128xbf16>
    %cst_31 = arith.constant dense<0.000000e+00> : vector<32x128xf32>
    %85 = tpu.matmul %73, %84, %cst_31 {dimension_numbers = #tpu.dot_dimension_numbers<[1], [0], [0], [1], [0, 0, 1, 1], [], []>} : vector<32x128xbf16>, vector<128x128xbf16>, vector<32x128xf32> -> vector<32x128xf32>
    %c128_32 = arith.constant 128 : index
    %c0_33 = arith.constant 0 : index
    %86 = vector.load %arg8[%c128_32, %c0_33] : memref<384x128xbf16, #tpu.memory_space<vmem>>, vector<128x128xbf16>
    %cst_34 = arith.constant dense<0.000000e+00> : vector<32x128xf32>
    %87 = tpu.matmul %63, %86, %cst_34 {dimension_numbers = #tpu.dot_dimension_numbers<[1], [0], [0], [1], [0, 0, 1, 1], [], []>} : vector<32x128xbf16>, vector<128x128xbf16>, vector<32x128xf32> -> vector<32x128xf32>
    %88 = arith.addf %85, %87 : vector<32x128xf32>
    %c256_35 = arith.constant 256 : index
    %c0_36 = arith.constant 0 : index
    %89 = vector.load %arg8[%c256_35, %c0_36] : memref<384x128xbf16, #tpu.memory_space<vmem>>, vector<128x128xbf16>
    %cst_37 = arith.constant dense<0.000000e+00> : vector<32x128xf32>
    %90 = tpu.matmul %83, %89, %cst_37 {dimension_numbers = #tpu.dot_dimension_numbers<[1], [0], [0], [1], [0, 0, 1, 1], [], []>} : vector<32x128xbf16>, vector<128x128xbf16>, vector<32x128xf32> -> vector<32x128xf32>
    %91 = arith.addf %88, %90 : vector<32x128xf32>
    %c0_38 = arith.constant 0 : index
    %c0_39 = arith.constant 0 : index
    %92 = vector.load %arg9[%c0_38, %c0_39] : memref<1x128xf32, #tpu.memory_space<vmem>>, vector<1x128xf32>
    %93 = vector.broadcast %92 : vector<1x128xf32> to vector<32x128xf32>
    %94 = arith.mulf %91, %93 : vector<32x128xf32>
    %c0_40 = arith.constant 0 : index
    %c0_41 = arith.constant 0 : index
    %95 = vector.load %arg10[%c0_40, %c0_41] : memref<1x128xf32, #tpu.memory_space<vmem>>, vector<1x128xf32>
    %96 = vector.broadcast %95 : vector<1x128xf32> to vector<32x128xf32>
    %97 = arith.addf %94, %96 : vector<32x128xf32>
    %98 = arith.extf %26 : vector<32x128xbf16> to vector<32x128xf32>
    %99 = arith.addf %97, %98 : vector<32x128xf32>
    %cst_42 = arith.constant 0.000000e+00 : f32
    %100 = vector.broadcast %cst_42 : f32 to vector<32x128xf32>
    %101 = arith.maximumf %99, %100 : vector<32x128xf32>
    %102 = arith.truncf %101 : vector<32x128xf32> to vector<32x128xbf16>
    %103 = tpu.iota {dimensions = array<i32: 0>} : vector<32x32xi32>
    %104 = tpu.iota {dimensions = array<i32: 1>} : vector<32x32xi32>
    %c-1_i32_43 = arith.constant -1 : i32
    %105 = vector.broadcast %c-1_i32_43 : i32 to vector<32x32xi32>
    %106 = arith.addi %103, %105 : vector<32x32xi32>
    %107 = arith.cmpi eq, %104, %106 : vector<32x32xi32>
    %108 = arith.extui %107 : vector<32x32xi1> to vector<32x32xi32>
    %109 = arith.sitofp %108 : vector<32x32xi32> to vector<32x32xf32>
    %110 = arith.truncf %109 : vector<32x32xf32> to vector<32x32xbf16>
    %cst_44 = arith.constant dense<0.000000e+00> : vector<32x128xf32>
    %111 = tpu.matmul %110, %102, %cst_44 {dimension_numbers = #tpu.dot_dimension_numbers<[1], [0], [0], [1], [0, 0, 1, 1], [], []>} : vector<32x32xbf16>, vector<32x128xbf16>, vector<32x128xf32> -> vector<32x128xf32>
    %112 = arith.truncf %111 : vector<32x128xf32> to vector<32x128xbf16>
    %113 = tpu.iota {dimensions = array<i32: 0>} : vector<32x32xi32>
    %114 = tpu.iota {dimensions = array<i32: 1>} : vector<32x32xi32>
    %c1_i32_45 = arith.constant 1 : i32
    %115 = vector.broadcast %c1_i32_45 : i32 to vector<32x32xi32>
    %116 = arith.addi %113, %115 : vector<32x32xi32>
    %117 = arith.cmpi eq, %114, %116 : vector<32x32xi32>
    %118 = arith.extui %117 : vector<32x32xi1> to vector<32x32xi32>
    %119 = arith.sitofp %118 : vector<32x32xi32> to vector<32x32xf32>
    %120 = arith.truncf %119 : vector<32x32xf32> to vector<32x32xbf16>
    %cst_46 = arith.constant dense<0.000000e+00> : vector<32x128xf32>
    %121 = tpu.matmul %120, %102, %cst_46 {dimension_numbers = #tpu.dot_dimension_numbers<[1], [0], [0], [1], [0, 0, 1, 1], [], []>} : vector<32x32xbf16>, vector<32x128xbf16>, vector<32x128xf32> -> vector<32x128xf32>
    %122 = arith.truncf %121 : vector<32x128xf32> to vector<32x128xbf16>
    %c0_47 = arith.constant 0 : index
    %c0_48 = arith.constant 0 : index
    %123 = vector.load %arg11[%c0_47, %c0_48] : memref<384x128xbf16, #tpu.memory_space<vmem>>, vector<128x128xbf16>
    %cst_49 = arith.constant dense<0.000000e+00> : vector<32x128xf32>
    %124 = tpu.matmul %112, %123, %cst_49 {dimension_numbers = #tpu.dot_dimension_numbers<[1], [0], [0], [1], [0, 0, 1, 1], [], []>} : vector<32x128xbf16>, vector<128x128xbf16>, vector<32x128xf32> -> vector<32x128xf32>
    %c128_50 = arith.constant 128 : index
    %c0_51 = arith.constant 0 : index
    %125 = vector.load %arg11[%c128_50, %c0_51] : memref<384x128xbf16, #tpu.memory_space<vmem>>, vector<128x128xbf16>
    %cst_52 = arith.constant dense<0.000000e+00> : vector<32x128xf32>
    %126 = tpu.matmul %102, %125, %cst_52 {dimension_numbers = #tpu.dot_dimension_numbers<[1], [0], [0], [1], [0, 0, 1, 1], [], []>} : vector<32x128xbf16>, vector<128x128xbf16>, vector<32x128xf32> -> vector<32x128xf32>
    %127 = arith.addf %124, %126 : vector<32x128xf32>
    %c256_53 = arith.constant 256 : index
    %c0_54 = arith.constant 0 : index
    %128 = vector.load %arg11[%c256_53, %c0_54] : memref<384x128xbf16, #tpu.memory_space<vmem>>, vector<128x128xbf16>
    %cst_55 = arith.constant dense<0.000000e+00> : vector<32x128xf32>
    %129 = tpu.matmul %122, %128, %cst_55 {dimension_numbers = #tpu.dot_dimension_numbers<[1], [0], [0], [1], [0, 0, 1, 1], [], []>} : vector<32x128xbf16>, vector<128x128xbf16>, vector<32x128xf32> -> vector<32x128xf32>
    %130 = arith.addf %127, %129 : vector<32x128xf32>
    %c0_56 = arith.constant 0 : index
    %c0_57 = arith.constant 0 : index
    %131 = vector.load %arg12[%c0_56, %c0_57] : memref<1x128xf32, #tpu.memory_space<vmem>>, vector<1x128xf32>
    %132 = vector.broadcast %131 : vector<1x128xf32> to vector<32x128xf32>
    %133 = arith.mulf %130, %132 : vector<32x128xf32>
    %c0_58 = arith.constant 0 : index
    %c0_59 = arith.constant 0 : index
    %134 = vector.load %arg13[%c0_58, %c0_59] : memref<1x128xf32, #tpu.memory_space<vmem>>, vector<1x128xf32>
    %135 = vector.broadcast %134 : vector<1x128xf32> to vector<32x128xf32>
    %136 = arith.addf %133, %135 : vector<32x128xf32>
    %cst_60 = arith.constant 0.000000e+00 : f32
    %137 = vector.broadcast %cst_60 : f32 to vector<32x128xf32>
    %138 = arith.maximumf %136, %137 : vector<32x128xf32>
    %139 = arith.truncf %138 : vector<32x128xf32> to vector<32x128xbf16>
    %140 = tpu.iota {dimensions = array<i32: 0>} : vector<16x32xi32>
    %141 = tpu.iota {dimensions = array<i32: 1>} : vector<16x32xi32>
    %c2_i32 = arith.constant 2 : i32
    %142 = vector.broadcast %c2_i32 : i32 to vector<16x32xi32>
    %143 = arith.muli %142, %140 : vector<16x32xi32>
    %144 = arith.cmpi eq, %141, %143 : vector<16x32xi32>
    %145 = arith.extui %144 : vector<16x32xi1> to vector<16x32xi32>
    %146 = arith.sitofp %145 : vector<16x32xi32> to vector<16x32xf32>
    %147 = arith.truncf %146 : vector<16x32xf32> to vector<16x32xbf16>
    %cst_61 = arith.constant dense<0.000000e+00> : vector<16x128xf32>
    %148 = tpu.matmul %147, %139, %cst_61 {dimension_numbers = #tpu.dot_dimension_numbers<[1], [0], [0], [1], [0, 0, 1, 1], [], []>} : vector<16x32xbf16>, vector<32x128xbf16>, vector<16x128xf32> -> vector<16x128xf32>
    %149 = arith.truncf %148 : vector<16x128xf32> to vector<16x128xbf16>
    %150 = tpu.iota {dimensions = array<i32: 0>} : vector<16x32xi32>
    %151 = tpu.iota {dimensions = array<i32: 1>} : vector<16x32xi32>
    %c2_i32_62 = arith.constant 2 : i32
    %152 = vector.broadcast %c2_i32_62 : i32 to vector<16x32xi32>
    %153 = arith.muli %152, %150 : vector<16x32xi32>
    %154 = arith.cmpi eq, %151, %153 : vector<16x32xi32>
    %155 = arith.extui %154 : vector<16x32xi1> to vector<16x32xi32>
    %156 = arith.sitofp %155 : vector<16x32xi32> to vector<16x32xf32>
    %157 = arith.truncf %156 : vector<16x32xf32> to vector<16x32xbf16>
    %cst_63 = arith.constant dense<0.000000e+00> : vector<16x128xf32>
    %158 = tpu.matmul %157, %102, %cst_63 {dimension_numbers = #tpu.dot_dimension_numbers<[1], [0], [0], [1], [0, 0, 1, 1], [], []>} : vector<16x32xbf16>, vector<32x128xbf16>, vector<16x128xf32> -> vector<16x128xf32>
    %159 = arith.truncf %158 : vector<16x128xf32> to vector<16x128xbf16>
    %160 = tpu.iota {dimensions = array<i32: 0>} : vector<16x16xi32>
    %161 = tpu.iota {dimensions = array<i32: 1>} : vector<16x16xi32>
    %c-1_i32_64 = arith.constant -1 : i32
    %162 = vector.broadcast %c-1_i32_64 : i32 to vector<16x16xi32>
    %163 = arith.addi %160, %162 : vector<16x16xi32>
    %164 = arith.cmpi eq, %161, %163 : vector<16x16xi32>
    %165 = arith.extui %164 : vector<16x16xi1> to vector<16x16xi32>
    %166 = arith.sitofp %165 : vector<16x16xi32> to vector<16x16xf32>
    %167 = arith.truncf %166 : vector<16x16xf32> to vector<16x16xbf16>
    %cst_65 = arith.constant dense<0.000000e+00> : vector<16x128xf32>
    %168 = tpu.matmul %167, %149, %cst_65 {dimension_numbers = #tpu.dot_dimension_numbers<[1], [0], [0], [1], [0, 0, 1, 1], [], []>} : vector<16x16xbf16>, vector<16x128xbf16>, vector<16x128xf32> -> vector<16x128xf32>
    %169 = arith.truncf %168 : vector<16x128xf32> to vector<16x128xbf16>
    %170 = tpu.iota {dimensions = array<i32: 0>} : vector<16x16xi32>
    %171 = tpu.iota {dimensions = array<i32: 1>} : vector<16x16xi32>
    %c1_i32_66 = arith.constant 1 : i32
    %172 = vector.broadcast %c1_i32_66 : i32 to vector<16x16xi32>
    %173 = arith.addi %170, %172 : vector<16x16xi32>
    %174 = arith.cmpi eq, %171, %173 : vector<16x16xi32>
    %175 = arith.extui %174 : vector<16x16xi1> to vector<16x16xi32>
    %176 = arith.sitofp %175 : vector<16x16xi32> to vector<16x16xf32>
    %177 = arith.truncf %176 : vector<16x16xf32> to vector<16x16xbf16>
    %cst_67 = arith.constant dense<0.000000e+00> : vector<16x128xf32>
    %178 = tpu.matmul %177, %149, %cst_67 {dimension_numbers = #tpu.dot_dimension_numbers<[1], [0], [0], [1], [0, 0, 1, 1], [], []>} : vector<16x16xbf16>, vector<16x128xbf16>, vector<16x128xf32> -> vector<16x128xf32>
    %179 = arith.truncf %178 : vector<16x128xf32> to vector<16x128xbf16>
    %c0_68 = arith.constant 0 : index
    %c0_69 = arith.constant 0 : index
    %180 = vector.load %arg14[%c0_68, %c0_69] : memref<384x128xbf16, #tpu.memory_space<vmem>>, vector<128x128xbf16>
    %cst_70 = arith.constant dense<0.000000e+00> : vector<16x128xf32>
    %181 = tpu.matmul %169, %180, %cst_70 {dimension_numbers = #tpu.dot_dimension_numbers<[1], [0], [0], [1], [0, 0, 1, 1], [], []>} : vector<16x128xbf16>, vector<128x128xbf16>, vector<16x128xf32> -> vector<16x128xf32>
    %c128_71 = arith.constant 128 : index
    %c0_72 = arith.constant 0 : index
    %182 = vector.load %arg14[%c128_71, %c0_72] : memref<384x128xbf16, #tpu.memory_space<vmem>>, vector<128x128xbf16>
    %cst_73 = arith.constant dense<0.000000e+00> : vector<16x128xf32>
    %183 = tpu.matmul %149, %182, %cst_73 {dimension_numbers = #tpu.dot_dimension_numbers<[1], [0], [0], [1], [0, 0, 1, 1], [], []>} : vector<16x128xbf16>, vector<128x128xbf16>, vector<16x128xf32> -> vector<16x128xf32>
    %184 = arith.addf %181, %183 : vector<16x128xf32>
    %c256_74 = arith.constant 256 : index
    %c0_75 = arith.constant 0 : index
    %185 = vector.load %arg14[%c256_74, %c0_75] : memref<384x128xbf16, #tpu.memory_space<vmem>>, vector<128x128xbf16>
    %cst_76 = arith.constant dense<0.000000e+00> : vector<16x128xf32>
    %186 = tpu.matmul %179, %185, %cst_76 {dimension_numbers = #tpu.dot_dimension_numbers<[1], [0], [0], [1], [0, 0, 1, 1], [], []>} : vector<16x128xbf16>, vector<128x128xbf16>, vector<16x128xf32> -> vector<16x128xf32>
    %187 = arith.addf %184, %186 : vector<16x128xf32>
    %c0_77 = arith.constant 0 : index
    %c0_78 = arith.constant 0 : index
    %188 = vector.load %arg15[%c0_77, %c0_78] : memref<1x128xf32, #tpu.memory_space<vmem>>, vector<1x128xf32>
    %189 = vector.broadcast %188 : vector<1x128xf32> to vector<16x128xf32>
    %190 = arith.mulf %187, %189 : vector<16x128xf32>
    %c0_79 = arith.constant 0 : index
    %c0_80 = arith.constant 0 : index
    %191 = vector.load %arg16[%c0_79, %c0_80] : memref<1x128xf32, #tpu.memory_space<vmem>>, vector<1x128xf32>
    %192 = vector.broadcast %191 : vector<1x128xf32> to vector<16x128xf32>
    %193 = arith.addf %190, %192 : vector<16x128xf32>
    %c0_81 = arith.constant 0 : index
    %c0_82 = arith.constant 0 : index
    %194 = vector.load %arg17[%c0_81, %c0_82] : memref<128x128xbf16, #tpu.memory_space<vmem>>, vector<128x128xbf16>
    %cst_83 = arith.constant dense<0.000000e+00> : vector<16x128xf32>
    %195 = tpu.matmul %159, %194, %cst_83 {dimension_numbers = #tpu.dot_dimension_numbers<[1], [0], [0], [1], [0, 0, 1, 1], [], []>} : vector<16x128xbf16>, vector<128x128xbf16>, vector<16x128xf32> -> vector<16x128xf32>
    %c0_84 = arith.constant 0 : index
    %c0_85 = arith.constant 0 : index
    %196 = vector.load %arg18[%c0_84, %c0_85] : memref<1x128xf32, #tpu.memory_space<vmem>>, vector<1x128xf32>
    %197 = vector.broadcast %196 : vector<1x128xf32> to vector<16x128xf32>
    %198 = arith.mulf %195, %197 : vector<16x128xf32>
    %c0_86 = arith.constant 0 : index
    %c0_87 = arith.constant 0 : index
    %199 = vector.load %arg19[%c0_86, %c0_87] : memref<1x128xf32, #tpu.memory_space<vmem>>, vector<1x128xf32>
    %200 = vector.broadcast %199 : vector<1x128xf32> to vector<16x128xf32>
    %201 = arith.addf %198, %200 : vector<16x128xf32>
    %202 = arith.addf %193, %201 : vector<16x128xf32>
    %cst_88 = arith.constant 0.000000e+00 : f32
    %203 = vector.broadcast %cst_88 : f32 to vector<16x128xf32>
    %204 = arith.maximumf %202, %203 : vector<16x128xf32>
    %205 = arith.truncf %204 : vector<16x128xf32> to vector<16x128xbf16>
    %206 = tpu.iota {dimensions = array<i32: 0>} : vector<16x16xi32>
    %207 = tpu.iota {dimensions = array<i32: 1>} : vector<16x16xi32>
    %c-1_i32_89 = arith.constant -1 : i32
    %208 = vector.broadcast %c-1_i32_89 : i32 to vector<16x16xi32>
    %209 = arith.addi %206, %208 : vector<16x16xi32>
    %210 = arith.cmpi eq, %207, %209 : vector<16x16xi32>
    %211 = arith.extui %210 : vector<16x16xi1> to vector<16x16xi32>
    %212 = arith.sitofp %211 : vector<16x16xi32> to vector<16x16xf32>
    %213 = arith.truncf %212 : vector<16x16xf32> to vector<16x16xbf16>
    %cst_90 = arith.constant dense<0.000000e+00> : vector<16x128xf32>
    %214 = tpu.matmul %213, %205, %cst_90 {dimension_numbers = #tpu.dot_dimension_numbers<[1], [0], [0], [1], [0, 0, 1, 1], [], []>} : vector<16x16xbf16>, vector<16x128xbf16>, vector<16x128xf32> -> vector<16x128xf32>
    %215 = arith.truncf %214 : vector<16x128xf32> to vector<16x128xbf16>
    %216 = tpu.iota {dimensions = array<i32: 0>} : vector<16x16xi32>
    %217 = tpu.iota {dimensions = array<i32: 1>} : vector<16x16xi32>
    %c1_i32_91 = arith.constant 1 : i32
    %218 = vector.broadcast %c1_i32_91 : i32 to vector<16x16xi32>
    %219 = arith.addi %216, %218 : vector<16x16xi32>
    %220 = arith.cmpi eq, %217, %219 : vector<16x16xi32>
    %221 = arith.extui %220 : vector<16x16xi1> to vector<16x16xi32>
    %222 = arith.sitofp %221 : vector<16x16xi32> to vector<16x16xf32>
    %223 = arith.truncf %222 : vector<16x16xf32> to vector<16x16xbf16>
    %cst_92 = arith.constant dense<0.000000e+00> : vector<16x128xf32>
    %224 = tpu.matmul %223, %205, %cst_92 {dimension_numbers = #tpu.dot_dimension_numbers<[1], [0], [0], [1], [0, 0, 1, 1], [], []>} : vector<16x16xbf16>, vector<16x128xbf16>, vector<16x128xf32> -> vector<16x128xf32>
    %225 = arith.truncf %224 : vector<16x128xf32> to vector<16x128xbf16>
    %c0_93 = arith.constant 0 : index
    %c0_94 = arith.constant 0 : index
    %226 = vector.load %arg20[%c0_93, %c0_94] : memref<384x256xbf16, #tpu.memory_space<vmem>>, vector<128x256xbf16>
    %cst_95 = arith.constant dense<0.000000e+00> : vector<16x256xf32>
    %227 = tpu.matmul %215, %226, %cst_95 {dimension_numbers = #tpu.dot_dimension_numbers<[1], [0], [0], [1], [0, 0, 1, 1], [], []>} : vector<16x128xbf16>, vector<128x256xbf16>, vector<16x256xf32> -> vector<16x256xf32>
    %c128_96 = arith.constant 128 : index
    %c0_97 = arith.constant 0 : index
    %228 = vector.load %arg20[%c128_96, %c0_97] : memref<384x256xbf16, #tpu.memory_space<vmem>>, vector<128x256xbf16>
    %cst_98 = arith.constant dense<0.000000e+00> : vector<16x256xf32>
    %229 = tpu.matmul %205, %228, %cst_98 {dimension_numbers = #tpu.dot_dimension_numbers<[1], [0], [0], [1], [0, 0, 1, 1], [], []>} : vector<16x128xbf16>, vector<128x256xbf16>, vector<16x256xf32> -> vector<16x256xf32>
    %230 = arith.addf %227, %229 : vector<16x256xf32>
    %c256_99 = arith.constant 256 : index
    %c0_100 = arith.constant 0 : index
    %231 = vector.load %arg20[%c256_99, %c0_100] : memref<384x256xbf16, #tpu.memory_space<vmem>>, vector<128x256xbf16>
    %cst_101 = arith.constant dense<0.000000e+00> : vector<16x256xf32>
    %232 = tpu.matmul %225, %231, %cst_101 {dimension_numbers = #tpu.dot_dimension_numbers<[1], [0], [0], [1], [0, 0, 1, 1], [], []>} : vector<16x128xbf16>, vector<128x256xbf16>, vector<16x256xf32> -> vector<16x256xf32>
    %233 = arith.addf %230, %232 : vector<16x256xf32>
    %c0_102 = arith.constant 0 : index
    %c0_103 = arith.constant 0 : index
    %234 = vector.load %arg21[%c0_102, %c0_103] : memref<1x256xf32, #tpu.memory_space<vmem>>, vector<1x256xf32>
    %235 = vector.broadcast %234 : vector<1x256xf32> to vector<16x256xf32>
    %236 = arith.mulf %233, %235 : vector<16x256xf32>
    %c0_104 = arith.constant 0 : index
    %c0_105 = arith.constant 0 : index
    %237 = vector.load %arg22[%c0_104, %c0_105] : memref<1x256xf32, #tpu.memory_space<vmem>>, vector<1x256xf32>
    %238 = vector.broadcast %237 : vector<1x256xf32> to vector<16x256xf32>
    %239 = arith.addf %236, %238 : vector<16x256xf32>
    %cst_106 = arith.constant 0.000000e+00 : f32
    %240 = vector.broadcast %cst_106 : f32 to vector<16x256xf32>
    %241 = arith.maximumf %239, %240 : vector<16x256xf32>
    %242 = arith.truncf %241 : vector<16x256xf32> to vector<16x256xbf16>
    %243 = tpu.iota {dimensions = array<i32: 0>} : vector<8x16xi32>
    %244 = tpu.iota {dimensions = array<i32: 1>} : vector<8x16xi32>
    %c2_i32_107 = arith.constant 2 : i32
    %245 = vector.broadcast %c2_i32_107 : i32 to vector<8x16xi32>
    %246 = arith.muli %245, %243 : vector<8x16xi32>
    %247 = arith.cmpi eq, %244, %246 : vector<8x16xi32>
    %248 = arith.extui %247 : vector<8x16xi1> to vector<8x16xi32>
    %249 = arith.sitofp %248 : vector<8x16xi32> to vector<8x16xf32>
    %250 = arith.truncf %249 : vector<8x16xf32> to vector<8x16xbf16>
    %cst_108 = arith.constant dense<0.000000e+00> : vector<8x256xf32>
    %251 = tpu.matmul %250, %242, %cst_108 {dimension_numbers = #tpu.dot_dimension_numbers<[1], [0], [0], [1], [0, 0, 1, 1], [], []>} : vector<8x16xbf16>, vector<16x256xbf16>, vector<8x256xf32> -> vector<8x256xf32>
    %252 = arith.truncf %251 : vector<8x256xf32> to vector<8x256xbf16>
    %253 = tpu.iota {dimensions = array<i32: 0>} : vector<8x16xi32>
    %254 = tpu.iota {dimensions = array<i32: 1>} : vector<8x16xi32>
    %c2_i32_109 = arith.constant 2 : i32
    %255 = vector.broadcast %c2_i32_109 : i32 to vector<8x16xi32>
    %256 = arith.muli %255, %253 : vector<8x16xi32>
    %257 = arith.cmpi eq, %254, %256 : vector<8x16xi32>
    %258 = arith.extui %257 : vector<8x16xi1> to vector<8x16xi32>
    %259 = arith.sitofp %258 : vector<8x16xi32> to vector<8x16xf32>
    %260 = arith.truncf %259 : vector<8x16xf32> to vector<8x16xbf16>
    %cst_110 = arith.constant dense<0.000000e+00> : vector<8x128xf32>
    %261 = tpu.matmul %260, %205, %cst_110 {dimension_numbers = #tpu.dot_dimension_numbers<[1], [0], [0], [1], [0, 0, 1, 1], [], []>} : vector<8x16xbf16>, vector<16x128xbf16>, vector<8x128xf32> -> vector<8x128xf32>
    %262 = arith.truncf %261 : vector<8x128xf32> to vector<8x128xbf16>
    %263 = tpu.iota {dimensions = array<i32: 0>} : vector<8x8xi32>
    %264 = tpu.iota {dimensions = array<i32: 1>} : vector<8x8xi32>
    %c-1_i32_111 = arith.constant -1 : i32
    %265 = vector.broadcast %c-1_i32_111 : i32 to vector<8x8xi32>
    %266 = arith.addi %263, %265 : vector<8x8xi32>
    %267 = arith.cmpi eq, %264, %266 : vector<8x8xi32>
    %268 = arith.extui %267 : vector<8x8xi1> to vector<8x8xi32>
    %269 = arith.sitofp %268 : vector<8x8xi32> to vector<8x8xf32>
    %270 = arith.truncf %269 : vector<8x8xf32> to vector<8x8xbf16>
    %cst_112 = arith.constant dense<0.000000e+00> : vector<8x256xf32>
    %271 = tpu.matmul %270, %252, %cst_112 {dimension_numbers = #tpu.dot_dimension_numbers<[1], [0], [0], [1], [0, 0, 1, 1], [], []>} : vector<8x8xbf16>, vector<8x256xbf16>, vector<8x256xf32> -> vector<8x256xf32>
    %272 = arith.truncf %271 : vector<8x256xf32> to vector<8x256xbf16>
    %273 = tpu.iota {dimensions = array<i32: 0>} : vector<8x8xi32>
    %274 = tpu.iota {dimensions = array<i32: 1>} : vector<8x8xi32>
    %c1_i32_113 = arith.constant 1 : i32
    %275 = vector.broadcast %c1_i32_113 : i32 to vector<8x8xi32>
    %276 = arith.addi %273, %275 : vector<8x8xi32>
    %277 = arith.cmpi eq, %274, %276 : vector<8x8xi32>
    %278 = arith.extui %277 : vector<8x8xi1> to vector<8x8xi32>
    %279 = arith.sitofp %278 : vector<8x8xi32> to vector<8x8xf32>
    %280 = arith.truncf %279 : vector<8x8xf32> to vector<8x8xbf16>
    %cst_114 = arith.constant dense<0.000000e+00> : vector<8x256xf32>
    %281 = tpu.matmul %280, %252, %cst_114 {dimension_numbers = #tpu.dot_dimension_numbers<[1], [0], [0], [1], [0, 0, 1, 1], [], []>} : vector<8x8xbf16>, vector<8x256xbf16>, vector<8x256xf32> -> vector<8x256xf32>
    %282 = arith.truncf %281 : vector<8x256xf32> to vector<8x256xbf16>
    %c0_115 = arith.constant 0 : index
    %c0_116 = arith.constant 0 : index
    %283 = vector.load %arg23[%c0_115, %c0_116] : memref<768x256xbf16, #tpu.memory_space<vmem>>, vector<256x256xbf16>
    %cst_117 = arith.constant dense<0.000000e+00> : vector<8x256xf32>
    %284 = tpu.matmul %272, %283, %cst_117 {dimension_numbers = #tpu.dot_dimension_numbers<[1], [0], [0], [1], [0, 0, 1, 1], [], []>} : vector<8x256xbf16>, vector<256x256xbf16>, vector<8x256xf32> -> vector<8x256xf32>
    %c256_118 = arith.constant 256 : index
    %c0_119 = arith.constant 0 : index
    %285 = vector.load %arg23[%c256_118, %c0_119] : memref<768x256xbf16, #tpu.memory_space<vmem>>, vector<256x256xbf16>
    %cst_120 = arith.constant dense<0.000000e+00> : vector<8x256xf32>
    %286 = tpu.matmul %252, %285, %cst_120 {dimension_numbers = #tpu.dot_dimension_numbers<[1], [0], [0], [1], [0, 0, 1, 1], [], []>} : vector<8x256xbf16>, vector<256x256xbf16>, vector<8x256xf32> -> vector<8x256xf32>
    %287 = arith.addf %284, %286 : vector<8x256xf32>
    %c512 = arith.constant 512 : index
    %c0_121 = arith.constant 0 : index
    %288 = vector.load %arg23[%c512, %c0_121] : memref<768x256xbf16, #tpu.memory_space<vmem>>, vector<256x256xbf16>
    %cst_122 = arith.constant dense<0.000000e+00> : vector<8x256xf32>
    %289 = tpu.matmul %282, %288, %cst_122 {dimension_numbers = #tpu.dot_dimension_numbers<[1], [0], [0], [1], [0, 0, 1, 1], [], []>} : vector<8x256xbf16>, vector<256x256xbf16>, vector<8x256xf32> -> vector<8x256xf32>
    %290 = arith.addf %287, %289 : vector<8x256xf32>
    %c0_123 = arith.constant 0 : index
    %c0_124 = arith.constant 0 : index
    %291 = vector.load %arg24[%c0_123, %c0_124] : memref<1x256xf32, #tpu.memory_space<vmem>>, vector<1x256xf32>
    %292 = vector.broadcast %291 : vector<1x256xf32> to vector<8x256xf32>
    %293 = arith.mulf %290, %292 : vector<8x256xf32>
    %c0_125 = arith.constant 0 : index
    %c0_126 = arith.constant 0 : index
    %294 = vector.load %arg25[%c0_125, %c0_126] : memref<1x256xf32, #tpu.memory_space<vmem>>, vector<1x256xf32>
    %295 = vector.broadcast %294 : vector<1x256xf32> to vector<8x256xf32>
    %296 = arith.addf %293, %295 : vector<8x256xf32>
    %c0_127 = arith.constant 0 : index
    %c0_128 = arith.constant 0 : index
    %297 = vector.load %arg26[%c0_127, %c0_128] : memref<128x256xbf16, #tpu.memory_space<vmem>>, vector<128x256xbf16>
    %cst_129 = arith.constant dense<0.000000e+00> : vector<8x256xf32>
    %298 = tpu.matmul %262, %297, %cst_129 {dimension_numbers = #tpu.dot_dimension_numbers<[1], [0], [0], [1], [0, 0, 1, 1], [], []>} : vector<8x128xbf16>, vector<128x256xbf16>, vector<8x256xf32> -> vector<8x256xf32>
    %c0_130 = arith.constant 0 : index
    %c0_131 = arith.constant 0 : index
    %299 = vector.load %arg27[%c0_130, %c0_131] : memref<1x256xf32, #tpu.memory_space<vmem>>, vector<1x256xf32>
    %300 = vector.broadcast %299 : vector<1x256xf32> to vector<8x256xf32>
    %301 = arith.mulf %298, %300 : vector<8x256xf32>
    %c0_132 = arith.constant 0 : index
    %c0_133 = arith.constant 0 : index
    %302 = vector.load %arg28[%c0_132, %c0_133] : memref<1x256xf32, #tpu.memory_space<vmem>>, vector<1x256xf32>
    %303 = vector.broadcast %302 : vector<1x256xf32> to vector<8x256xf32>
    %304 = arith.addf %301, %303 : vector<8x256xf32>
    %305 = arith.addf %296, %304 : vector<8x256xf32>
    %cst_134 = arith.constant 0.000000e+00 : f32
    %306 = vector.broadcast %cst_134 : f32 to vector<8x256xf32>
    %307 = arith.maximumf %305, %306 : vector<8x256xf32>
    %308 = arith.truncf %307 : vector<8x256xf32> to vector<8x256xbf16>
    %309 = tpu.iota {dimensions = array<i32: 0>} : vector<8x8xi32>
    %310 = tpu.iota {dimensions = array<i32: 1>} : vector<8x8xi32>
    %c-1_i32_135 = arith.constant -1 : i32
    %311 = vector.broadcast %c-1_i32_135 : i32 to vector<8x8xi32>
    %312 = arith.addi %309, %311 : vector<8x8xi32>
    %313 = arith.cmpi eq, %310, %312 : vector<8x8xi32>
    %314 = arith.extui %313 : vector<8x8xi1> to vector<8x8xi32>
    %315 = arith.sitofp %314 : vector<8x8xi32> to vector<8x8xf32>
    %316 = arith.truncf %315 : vector<8x8xf32> to vector<8x8xbf16>
    %cst_136 = arith.constant dense<0.000000e+00> : vector<8x256xf32>
    %317 = tpu.matmul %316, %308, %cst_136 {dimension_numbers = #tpu.dot_dimension_numbers<[1], [0], [0], [1], [0, 0, 1, 1], [], []>} : vector<8x8xbf16>, vector<8x256xbf16>, vector<8x256xf32> -> vector<8x256xf32>
    %318 = arith.truncf %317 : vector<8x256xf32> to vector<8x256xbf16>
    %319 = tpu.iota {dimensions = array<i32: 0>} : vector<8x8xi32>
    %320 = tpu.iota {dimensions = array<i32: 1>} : vector<8x8xi32>
    %c1_i32_137 = arith.constant 1 : i32
    %321 = vector.broadcast %c1_i32_137 : i32 to vector<8x8xi32>
    %322 = arith.addi %319, %321 : vector<8x8xi32>
    %323 = arith.cmpi eq, %320, %322 : vector<8x8xi32>
    %324 = arith.extui %323 : vector<8x8xi1> to vector<8x8xi32>
    %325 = arith.sitofp %324 : vector<8x8xi32> to vector<8x8xf32>
    %326 = arith.truncf %325 : vector<8x8xf32> to vector<8x8xbf16>
    %cst_138 = arith.constant dense<0.000000e+00> : vector<8x256xf32>
    %327 = tpu.matmul %326, %308, %cst_138 {dimension_numbers = #tpu.dot_dimension_numbers<[1], [0], [0], [1], [0, 0, 1, 1], [], []>} : vector<8x8xbf16>, vector<8x256xbf16>, vector<8x256xf32> -> vector<8x256xf32>
    %328 = arith.truncf %327 : vector<8x256xf32> to vector<8x256xbf16>
    %c0_139 = arith.constant 0 : index
    %c0_140 = arith.constant 0 : index
    %329 = vector.load %arg29[%c0_139, %c0_140] : memref<768x512xbf16, #tpu.memory_space<vmem>>, vector<256x512xbf16>
    %cst_141 = arith.constant dense<0.000000e+00> : vector<8x512xf32>
    %330 = tpu.matmul %318, %329, %cst_141 {dimension_numbers = #tpu.dot_dimension_numbers<[1], [0], [0], [1], [0, 0, 1, 1], [], []>} : vector<8x256xbf16>, vector<256x512xbf16>, vector<8x512xf32> -> vector<8x512xf32>
    %c256_142 = arith.constant 256 : index
    %c0_143 = arith.constant 0 : index
    %331 = vector.load %arg29[%c256_142, %c0_143] : memref<768x512xbf16, #tpu.memory_space<vmem>>, vector<256x512xbf16>
    %cst_144 = arith.constant dense<0.000000e+00> : vector<8x512xf32>
    %332 = tpu.matmul %308, %331, %cst_144 {dimension_numbers = #tpu.dot_dimension_numbers<[1], [0], [0], [1], [0, 0, 1, 1], [], []>} : vector<8x256xbf16>, vector<256x512xbf16>, vector<8x512xf32> -> vector<8x512xf32>
    %333 = arith.addf %330, %332 : vector<8x512xf32>
    %c512_145 = arith.constant 512 : index
    %c0_146 = arith.constant 0 : index
    %334 = vector.load %arg29[%c512_145, %c0_146] : memref<768x512xbf16, #tpu.memory_space<vmem>>, vector<256x512xbf16>
    %cst_147 = arith.constant dense<0.000000e+00> : vector<8x512xf32>
    %335 = tpu.matmul %328, %334, %cst_147 {dimension_numbers = #tpu.dot_dimension_numbers<[1], [0], [0], [1], [0, 0, 1, 1], [], []>} : vector<8x256xbf16>, vector<256x512xbf16>, vector<8x512xf32> -> vector<8x512xf32>
    %336 = arith.addf %333, %335 : vector<8x512xf32>
    %c0_148 = arith.constant 0 : index
    %c0_149 = arith.constant 0 : index
    %337 = vector.load %arg30[%c0_148, %c0_149] : memref<1x512xf32, #tpu.memory_space<vmem>>, vector<1x512xf32>
    %338 = vector.broadcast %337 : vector<1x512xf32> to vector<8x512xf32>
    %339 = arith.mulf %336, %338 : vector<8x512xf32>
    %c0_150 = arith.constant 0 : index
    %c0_151 = arith.constant 0 : index
    %340 = vector.load %arg31[%c0_150, %c0_151] : memref<1x512xf32, #tpu.memory_space<vmem>>, vector<1x512xf32>
    %341 = vector.broadcast %340 : vector<1x512xf32> to vector<8x512xf32>
    %342 = arith.addf %339, %341 : vector<8x512xf32>
    %cst_152 = arith.constant 0.000000e+00 : f32
    %343 = vector.broadcast %cst_152 : f32 to vector<8x512xf32>
    %344 = arith.maximumf %342, %343 : vector<8x512xf32>
    %345 = arith.truncf %344 : vector<8x512xf32> to vector<8x512xbf16>
    %346 = tpu.iota {dimensions = array<i32: 0>} : vector<4x8xi32>
    %347 = tpu.iota {dimensions = array<i32: 1>} : vector<4x8xi32>
    %c2_i32_153 = arith.constant 2 : i32
    %348 = vector.broadcast %c2_i32_153 : i32 to vector<4x8xi32>
    %349 = arith.muli %348, %346 : vector<4x8xi32>
    %350 = arith.cmpi eq, %347, %349 : vector<4x8xi32>
    %351 = arith.extui %350 : vector<4x8xi1> to vector<4x8xi32>
    %352 = arith.sitofp %351 : vector<4x8xi32> to vector<4x8xf32>
    %353 = arith.truncf %352 : vector<4x8xf32> to vector<4x8xbf16>
    %cst_154 = arith.constant dense<0.000000e+00> : vector<4x512xf32>
    %354 = tpu.matmul %353, %345, %cst_154 {dimension_numbers = #tpu.dot_dimension_numbers<[1], [0], [0], [1], [0, 0, 1, 1], [], []>} : vector<4x8xbf16>, vector<8x512xbf16>, vector<4x512xf32> -> vector<4x512xf32>
    %355 = arith.truncf %354 : vector<4x512xf32> to vector<4x512xbf16>
    %356 = tpu.iota {dimensions = array<i32: 0>} : vector<4x8xi32>
    %357 = tpu.iota {dimensions = array<i32: 1>} : vector<4x8xi32>
    %c2_i32_155 = arith.constant 2 : i32
    %358 = vector.broadcast %c2_i32_155 : i32 to vector<4x8xi32>
    %359 = arith.muli %358, %356 : vector<4x8xi32>
    %360 = arith.cmpi eq, %357, %359 : vector<4x8xi32>
    %361 = arith.extui %360 : vector<4x8xi1> to vector<4x8xi32>
    %362 = arith.sitofp %361 : vector<4x8xi32> to vector<4x8xf32>
    %363 = arith.truncf %362 : vector<4x8xf32> to vector<4x8xbf16>
    %cst_156 = arith.constant dense<0.000000e+00> : vector<4x256xf32>
    %364 = tpu.matmul %363, %308, %cst_156 {dimension_numbers = #tpu.dot_dimension_numbers<[1], [0], [0], [1], [0, 0, 1, 1], [], []>} : vector<4x8xbf16>, vector<8x256xbf16>, vector<4x256xf32> -> vector<4x256xf32>
    %365 = arith.truncf %364 : vector<4x256xf32> to vector<4x256xbf16>
    %366 = tpu.iota {dimensions = array<i32: 0>} : vector<4x4xi32>
    %367 = tpu.iota {dimensions = array<i32: 1>} : vector<4x4xi32>
    %c-1_i32_157 = arith.constant -1 : i32
    %368 = vector.broadcast %c-1_i32_157 : i32 to vector<4x4xi32>
    %369 = arith.addi %366, %368 : vector<4x4xi32>
    %370 = arith.cmpi eq, %367, %369 : vector<4x4xi32>
    %371 = arith.extui %370 : vector<4x4xi1> to vector<4x4xi32>
    %372 = arith.sitofp %371 : vector<4x4xi32> to vector<4x4xf32>
    %373 = arith.truncf %372 : vector<4x4xf32> to vector<4x4xbf16>
    %cst_158 = arith.constant dense<0.000000e+00> : vector<4x512xf32>
    %374 = tpu.matmul %373, %355, %cst_158 {dimension_numbers = #tpu.dot_dimension_numbers<[1], [0], [0], [1], [0, 0, 1, 1], [], []>} : vector<4x4xbf16>, vector<4x512xbf16>, vector<4x512xf32> -> vector<4x512xf32>
    %375 = arith.truncf %374 : vector<4x512xf32> to vector<4x512xbf16>
    %376 = tpu.iota {dimensions = array<i32: 0>} : vector<4x4xi32>
    %377 = tpu.iota {dimensions = array<i32: 1>} : vector<4x4xi32>
    %c1_i32_159 = arith.constant 1 : i32
    %378 = vector.broadcast %c1_i32_159 : i32 to vector<4x4xi32>
    %379 = arith.addi %376, %378 : vector<4x4xi32>
    %380 = arith.cmpi eq, %377, %379 : vector<4x4xi32>
    %381 = arith.extui %380 : vector<4x4xi1> to vector<4x4xi32>
    %382 = arith.sitofp %381 : vector<4x4xi32> to vector<4x4xf32>
    %383 = arith.truncf %382 : vector<4x4xf32> to vector<4x4xbf16>
    %cst_160 = arith.constant dense<0.000000e+00> : vector<4x512xf32>
    %384 = tpu.matmul %383, %355, %cst_160 {dimension_numbers = #tpu.dot_dimension_numbers<[1], [0], [0], [1], [0, 0, 1, 1], [], []>} : vector<4x4xbf16>, vector<4x512xbf16>, vector<4x512xf32> -> vector<4x512xf32>
    %385 = arith.truncf %384 : vector<4x512xf32> to vector<4x512xbf16>
    %c0_161 = arith.constant 0 : index
    %c0_162 = arith.constant 0 : index
    %386 = vector.load %arg32[%c0_161, %c0_162] : memref<1536x512xbf16, #tpu.memory_space<vmem>>, vector<512x512xbf16>
    %cst_163 = arith.constant dense<0.000000e+00> : vector<4x512xf32>
    %387 = tpu.matmul %375, %386, %cst_163 {dimension_numbers = #tpu.dot_dimension_numbers<[1], [0], [0], [1], [0, 0, 1, 1], [], []>} : vector<4x512xbf16>, vector<512x512xbf16>, vector<4x512xf32> -> vector<4x512xf32>
    %c512_164 = arith.constant 512 : index
    %c0_165 = arith.constant 0 : index
    %388 = vector.load %arg32[%c512_164, %c0_165] : memref<1536x512xbf16, #tpu.memory_space<vmem>>, vector<512x512xbf16>
    %cst_166 = arith.constant dense<0.000000e+00> : vector<4x512xf32>
    %389 = tpu.matmul %355, %388, %cst_166 {dimension_numbers = #tpu.dot_dimension_numbers<[1], [0], [0], [1], [0, 0, 1, 1], [], []>} : vector<4x512xbf16>, vector<512x512xbf16>, vector<4x512xf32> -> vector<4x512xf32>
    %390 = arith.addf %387, %389 : vector<4x512xf32>
    %c1024 = arith.constant 1024 : index
    %c0_167 = arith.constant 0 : index
    %391 = vector.load %arg32[%c1024, %c0_167] : memref<1536x512xbf16, #tpu.memory_space<vmem>>, vector<512x512xbf16>
    %cst_168 = arith.constant dense<0.000000e+00> : vector<4x512xf32>
    %392 = tpu.matmul %385, %391, %cst_168 {dimension_numbers = #tpu.dot_dimension_numbers<[1], [0], [0], [1], [0, 0, 1, 1], [], []>} : vector<4x512xbf16>, vector<512x512xbf16>, vector<4x512xf32> -> vector<4x512xf32>
    %393 = arith.addf %390, %392 : vector<4x512xf32>
    %c0_169 = arith.constant 0 : index
    %c0_170 = arith.constant 0 : index
    %394 = vector.load %arg33[%c0_169, %c0_170] : memref<1x512xf32, #tpu.memory_space<vmem>>, vector<1x512xf32>
    %395 = vector.broadcast %394 : vector<1x512xf32> to vector<4x512xf32>
    %396 = arith.mulf %393, %395 : vector<4x512xf32>
    %c0_171 = arith.constant 0 : index
    %c0_172 = arith.constant 0 : index
    %397 = vector.load %arg34[%c0_171, %c0_172] : memref<1x512xf32, #tpu.memory_space<vmem>>, vector<1x512xf32>
    %398 = vector.broadcast %397 : vector<1x512xf32> to vector<4x512xf32>
    %399 = arith.addf %396, %398 : vector<4x512xf32>
    %c0_173 = arith.constant 0 : index
    %c0_174 = arith.constant 0 : index
    %400 = vector.load %arg35[%c0_173, %c0_174] : memref<256x512xbf16, #tpu.memory_space<vmem>>, vector<256x512xbf16>
    %cst_175 = arith.constant dense<0.000000e+00> : vector<4x512xf32>
    %401 = tpu.matmul %365, %400, %cst_175 {dimension_numbers = #tpu.dot_dimension_numbers<[1], [0], [0], [1], [0, 0, 1, 1], [], []>} : vector<4x256xbf16>, vector<256x512xbf16>, vector<4x512xf32> -> vector<4x512xf32>
    %c0_176 = arith.constant 0 : index
    %c0_177 = arith.constant 0 : index
    %402 = vector.load %arg36[%c0_176, %c0_177] : memref<1x512xf32, #tpu.memory_space<vmem>>, vector<1x512xf32>
    %403 = vector.broadcast %402 : vector<1x512xf32> to vector<4x512xf32>
    %404 = arith.mulf %401, %403 : vector<4x512xf32>
    %c0_178 = arith.constant 0 : index
    %c0_179 = arith.constant 0 : index
    %405 = vector.load %arg37[%c0_178, %c0_179] : memref<1x512xf32, #tpu.memory_space<vmem>>, vector<1x512xf32>
    %406 = vector.broadcast %405 : vector<1x512xf32> to vector<4x512xf32>
    %407 = arith.addf %404, %406 : vector<4x512xf32>
    %408 = arith.addf %399, %407 : vector<4x512xf32>
    %cst_180 = arith.constant 0.000000e+00 : f32
    %409 = vector.broadcast %cst_180 : f32 to vector<4x512xf32>
    %410 = arith.maximumf %408, %409 : vector<4x512xf32>
    %411 = arith.truncf %410 : vector<4x512xf32> to vector<4x512xbf16>
    %c0_181 = arith.constant 0 : index
    %c0_182 = arith.constant 0 : index
    %c0_183 = arith.constant 0 : index
    %412 = vector.load %arg38[%c0_181, %c0_182, %c0_183] : memref<1x4x512xbf16, #tpu.memory_space<vmem>>, vector<1x4x512xbf16>
    %413 = vector.shape_cast %412 : vector<1x4x512xbf16> to vector<4x512xbf16>
    %414 = vector.shape_cast %411 : vector<4x512xbf16> to vector<1x4x512xbf16>
    tpu.vector_store %arg38[%c0_181, %c0_182, %c0_183], %414 {strides = array<i32>} : memref<1x4x512xbf16, #tpu.memory_space<vmem>>, vector<1x4x512xbf16>,
    return
  }
  func.func @transform_0(%arg0: i32) -> (i32, i32, i32) {
    %c0_i32 = arith.constant 0 : i32
    %c0_i32_0 = arith.constant 0 : i32
    %c0_i32_1 = arith.constant 0 : i32
    return %arg0, %c0_i32, %c0_i32_0 : i32, i32, i32
  }
  func.func @transform_1(%arg0: i32) -> (i32, i32) {
    %c0_i32 = arith.constant 0 : i32
    %c0_i32_0 = arith.constant 0 : i32
    %c0_i32_1 = arith.constant 0 : i32
    return %c0_i32, %c0_i32_0 : i32, i32
  }
  func.func @transform_2(%arg0: i32) -> (i32, i32) {
    %c0_i32 = arith.constant 0 : i32
    %c0_i32_0 = arith.constant 0 : i32
    %c0_i32_1 = arith.constant 0 : i32
    return %c0_i32, %c0_i32_0 : i32, i32
  }
  func.func @transform_3(%arg0: i32) -> (i32, i32) {
    %c0_i32 = arith.constant 0 : i32
    %c0_i32_0 = arith.constant 0 : i32
    %c0_i32_1 = arith.constant 0 : i32
    return %c0_i32, %c0_i32_0 : i32, i32
  }
  func.func @transform_4(%arg0: i32) -> (i32, i32) {
    %c0_i32 = arith.constant 0 : i32
    %c0_i32_0 = arith.constant 0 : i32
    %c0_i32_1 = arith.constant 0 : i32
    return %c0_i32, %c0_i32_0 : i32, i32
  }
  func.func @transform_5(%arg0: i32) -> (i32, i32) {
    %c0_i32 = arith.constant 0 : i32
    %c0_i32_0 = arith.constant 0 : i32
    %c0_i32_1 = arith.constant 0 : i32
    return %c0_i32, %c0_i32_0 : i32, i32
  }
  func.func @transform_6(%arg0: i32) -> (i32, i32) {
    %c0_i32 = arith.constant 0 : i32
    %c0_i32_0 = arith.constant 0 : i32
    %c0_i32_1 = arith.constant 0 : i32
    return %c0_i32, %c0_i32_0 : i32, i32
  }
  func.func @transform_7(%arg0: i32) -> (i32, i32) {
    %c0_i32 = arith.constant 0 : i32
    %c0_i32_0 = arith.constant 0 : i32
    %c0_i32_1 = arith.constant 0 : i32
    return %c0_i32, %c0_i32_0 : i32, i32
  }
  func.func @transform_8(%arg0: i32) -> (i32, i32) {
    %c0_i32 = arith.constant 0 : i32
    %c0_i32_0 = arith.constant 0 : i32
    %c0_i32_1 = arith.constant 0 : i32
    return %c0_i32, %c0_i32_0 : i32, i32
  }
  func.func @transform_9(%arg0: i32) -> (i32, i32) {
    %c0_i32 = arith.constant 0 : i32
    %c0_i32_0 = arith.constant 0 : i32
    %c0_i32_1 = arith.constant 0 : i32
    return %c0_i32, %c0_i32_0 : i32, i32
  }
  func.func @transform_10(%arg0: i32) -> (i32, i32) {
    %c0_i32 = arith.constant 0 : i32
    %c0_i32_0 = arith.constant 0 : i32
    %c0_i32_1 = arith.constant 0 : i32
    return %c0_i32, %c0_i32_0 : i32, i32
  }
  func.func @transform_11(%arg0: i32) -> (i32, i32) {
    %c0_i32 = arith.constant 0 : i32
    %c0_i32_0 = arith.constant 0 : i32
    %c0_i32_1 = arith.constant 0 : i32
    return %c0_i32, %c0_i32_0 : i32, i32
  }
  func.func @transform_12(%arg0: i32) -> (i32, i32) {
    %c0_i32 = arith.constant 0 : i32
    %c0_i32_0 = arith.constant 0 : i32
    %c0_i32_1 = arith.constant 0 : i32
    return %c0_i32, %c0_i32_0 : i32, i32
  }
  func.func @transform_13(%arg0: i32) -> (i32, i32) {
    %c0_i32 = arith.constant 0 : i32
    %c0_i32_0 = arith.constant 0 : i32
    %c0_i32_1 = arith.constant 0 : i32
    return %c0_i32, %c0_i32_0 : i32, i32
  }
  func.func @transform_14(%arg0: i32) -> (i32, i32) {
    %c0_i32 = arith.constant 0 : i32
    %c0_i32_0 = arith.constant 0 : i32
    %c0_i32_1 = arith.constant 0 : i32
    return %c0_i32, %c0_i32_0 : i32, i32
  }
  func.func @transform_15(%arg0: i32) -> (i32, i32) {
    %c0_i32 = arith.constant 0 : i32
    %c0_i32_0 = arith.constant 0 : i32
    %c0_i32_1 = arith.constant 0 : i32
    return %c0_i32, %c0_i32_0 : i32, i32
  }
  func.func @transform_16(%arg0: i32) -> (i32, i32) {
    %c0_i32 = arith.constant 0 : i32
    %c0_i32_0 = arith.constant 0 : i32
    %c0_i32_1 = arith.constant 0 : i32
    return %c0_i32, %c0_i32_0 : i32, i32
  }
  func.func @transform_17(%arg0: i32) -> (i32, i32) {
    %c0_i32 = arith.constant 0 : i32
    %c0_i32_0 = arith.constant 0 : i32
    %c0_i32_1 = arith.constant 0 : i32
    return %c0_i32, %c0_i32_0 : i32, i32
  }
  func.func @transform_18(%arg0: i32) -> (i32, i32) {
    %c0_i32 = arith.constant 0 : i32
    %c0_i32_0 = arith.constant 0 : i32
    %c0_i32_1 = arith.constant 0 : i32
    return %c0_i32, %c0_i32_0 : i32, i32
  }
  func.func @transform_19(%arg0: i32) -> (i32, i32) {
    %c0_i32 = arith.constant 0 : i32
    %c0_i32_0 = arith.constant 0 : i32
    %c0_i32_1 = arith.constant 0 : i32
    return %c0_i32, %c0_i32_0 : i32, i32
  }
  func.func @transform_20(%arg0: i32) -> (i32, i32) {
    %c0_i32 = arith.constant 0 : i32
    %c0_i32_0 = arith.constant 0 : i32
    %c0_i32_1 = arith.constant 0 : i32
    return %c0_i32, %c0_i32_0 : i32, i32
  }
  func.func @transform_21(%arg0: i32) -> (i32, i32) {
    %c0_i32 = arith.constant 0 : i32
    %c0_i32_0 = arith.constant 0 : i32
    %c0_i32_1 = arith.constant 0 : i32
    return %c0_i32, %c0_i32_0 : i32, i32
  }
  func.func @transform_22(%arg0: i32) -> (i32, i32) {
    %c0_i32 = arith.constant 0 : i32
    %c0_i32_0 = arith.constant 0 : i32
    %c0_i32_1 = arith.constant 0 : i32
    return %c0_i32, %c0_i32_0 : i32, i32
  }
  func.func @transform_23(%arg0: i32) -> (i32, i32) {
    %c0_i32 = arith.constant 0 : i32
    %c0_i32_0 = arith.constant 0 : i32
    %c0_i32_1 = arith.constant 0 : i32
    return %c0_i32, %c0_i32_0 : i32, i32
  }
  func.func @transform_24(%arg0: i32) -> (i32, i32) {
    %c0_i32 = arith.constant 0 : i32
    %c0_i32_0 = arith.constant 0 : i32
    %c0_i32_1 = arith.constant 0 : i32
    return %c0_i32, %c0_i32_0 : i32, i32
  }
  func.func @transform_25(%arg0: i32) -> (i32, i32) {
    %c0_i32 = arith.constant 0 : i32
    %c0_i32_0 = arith.constant 0 : i32
    %c0_i32_1 = arith.constant 0 : i32
    return %c0_i32, %c0_i32_0 : i32, i32
  }
  func.func @transform_26(%arg0: i32) -> (i32, i32) {
    %c0_i32 = arith.constant 0 : i32
    %c0_i32_0 = arith.constant 0 : i32
    %c0_i32_1 = arith.constant 0 : i32
    return %c0_i32, %c0_i32_0 : i32, i32
  }
  func.func @transform_27(%arg0: i32) -> (i32, i32) {
    %c0_i32 = arith.constant 0 : i32
    %c0_i32_0 = arith.constant 0 : i32
    %c0_i32_1 = arith.constant 0 : i32
    return %c0_i32, %c0_i32_0 : i32, i32
  }
  func.func @transform_28(%arg0: i32) -> (i32, i32) {
    %c0_i32 = arith.constant 0 : i32
    %c0_i32_0 = arith.constant 0 : i32
    %c0_i32_1 = arith.constant 0 : i32
    return %c0_i32, %c0_i32_0 : i32, i32
  }
  func.func @transform_29(%arg0: i32) -> (i32, i32) {
    %c0_i32 = arith.constant 0 : i32
    %c0_i32_0 = arith.constant 0 : i32
    %c0_i32_1 = arith.constant 0 : i32
    return %c0_i32, %c0_i32_0 : i32, i32
  }
  func.func @transform_30(%arg0: i32) -> (i32, i32) {
    %c0_i32 = arith.constant 0 : i32
    %c0_i32_0 = arith.constant 0 : i32
    %c0_i32_1 = arith.constant 0 : i32
    return %c0_i32, %c0_i32_0 : i32, i32
  }
  func.func @transform_31(%arg0: i32) -> (i32, i32) {
    %c0_i32 = arith.constant 0 : i32
    %c0_i32_0 = arith.constant 0 : i32
    %c0_i32_1 = arith.constant 0 : i32
    return %c0_i32, %c0_i32_0 : i32, i32
  }
  func.func @transform_32(%arg0: i32) -> (i32, i32) {
    %c0_i32 = arith.constant 0 : i32
    %c0_i32_0 = arith.constant 0 : i32
    %c0_i32_1 = arith.constant 0 : i32
    return %c0_i32, %c0_i32_0 : i32, i32
  }
  func.func @transform_33(%arg0: i32) -> (i32, i32) {
    %c0_i32 = arith.constant 0 : i32
    %c0_i32_0 = arith.constant 0 : i32
    %c0_i32_1 = arith.constant 0 : i32
    return %c0_i32, %c0_i32_0 : i32, i32
  }
  func.func @transform_34(%arg0: i32) -> (i32, i32) {
    %c0_i32 = arith.constant 0 : i32
    %c0_i32_0 = arith.constant 0 : i32
    %c0_i32_1 = arith.constant 0 : i32
    return %c0_i32, %c0_i32_0 : i32, i32
  }
  func.func @transform_35(%arg0: i32) -> (i32, i32) {
    %c0_i32 = arith.constant 0 : i32
    %c0_i32_0 = arith.constant 0 : i32
    %c0_i32_1 = arith.constant 0 : i32
    return %c0_i32, %c0_i32_0 : i32, i32
  }
  func.func @transform_36(%arg0: i32) -> (i32, i32) {
    %c0_i32 = arith.constant 0 : i32
    %c0_i32_0 = arith.constant 0 : i32
    %c0_i32_1 = arith.constant 0 : i32
    return %c0_i32, %c0_i32_0 : i32, i32
  }
  func.func @transform_37(%arg0: i32) -> (i32, i32, i32) {
    %c0_i32 = arith.constant 0 : i32
    %c0_i32_0 = arith.constant 0 : i32
    %c0_i32_1 = arith.constant 0 : i32
    return %arg0, %c0_i32, %c0_i32_0 : i32, i32, i32
  }
}

</mosaic_0001>

<llo_original>
// kernel: resnet_forward.1
$region0: #{resnet_forward.1}
  #allocation0 [shape = 'u32[]', space=smem, size = 0x4, offset = 0x4, fixed_abs, tag = 'smem constant byte address 0x4 - core index']
  #allocation1 [shape = 'u32[72,128]{1,0:T(1,128)}', space=vmem, size = 0x9000, scoped, tag = 'internal scratch']
  %s0 = inlined_call_operand.smem [shape: u32[38], index: -1, kind: input, shape index: {}]
  %s1 = sld [smem:[%s0]]
  %s2 = scalar_lea.smem %s0, 1
  %s3 = sld [smem:[%s2]]
  %s4 = scalar_lea.smem %s0, 2
  %s5 = sld [smem:[%s4]]
  %s6 = scalar_lea.smem %s0, 3
  %s7 = sld [smem:[%s6]]
  %s8 = scalar_lea.smem %s0, 4
  %s9 = sld [smem:[%s8]]
  %s10 = scalar_lea.smem %s0, 5
  %s11 = sld [smem:[%s10]]
  %s12 = scalar_lea.smem %s0, 6
  %s13 = sld [smem:[%s12]]
  %s14 = scalar_lea.smem %s0, 7
  %s15 = sld [smem:[%s14]]
  %s16 = scalar_lea.smem %s0, 8
  %s17 = sld [smem:[%s16]]
  %s18 = scalar_lea.smem %s0, 9
  %s19 = sld [smem:[%s18]]
  %s20 = scalar_lea.smem %s0, 10
  %s21 = sld [smem:[%s20]]
  %s22 = scalar_lea.smem %s0, 11
  %s23 = sld [smem:[%s22]]
  %s24 = scalar_lea.smem %s0, 12
  %s25 = sld [smem:[%s24]]
  %s26 = scalar_lea.smem %s0, 13
  %s27 = sld [smem:[%s26]]
  %s28 = scalar_lea.smem %s0, 14
  %s29 = sld [smem:[%s28]]
  %s30 = scalar_lea.smem %s0, 15
  %s31 = sld [smem:[%s30]]
  %s32 = scalar_lea.smem %s0, 16
  %s33 = sld [smem:[%s32]]
  %s34 = scalar_lea.smem %s0, 17
  %s35 = sld [smem:[%s34]]
  %s36 = scalar_lea.smem %s0, 18
  %s37 = sld [smem:[%s36]]
  %s38 = scalar_lea.smem %s0, 19
  %s39 = sld [smem:[%s38]]
  %s40 = scalar_lea.smem %s0, 20
  %s41 = sld [smem:[%s40]]
  %s42 = scalar_lea.smem %s0, 21
  %s43 = sld [smem:[%s42]]
  %s44 = scalar_lea.smem %s0, 22
  %s45 = sld [smem:[%s44]]
  %s46 = scalar_lea.smem %s0, 23
  %s47 = sld [smem:[%s46]]
  %s48 = scalar_lea.smem %s0, 24
  %s49 = sld [smem:[%s48]]
  %s50 = scalar_lea.smem %s0, 25
  %s51 = sld [smem:[%s50]]
  %s52 = scalar_lea.smem %s0, 26
  %s53 = sld [smem:[%s52]]
  %s54 = scalar_lea.smem %s0, 27
  %s55 = sld [smem:[%s54]]
  %s56 = scalar_lea.smem %s0, 28
  %s57 = sld [smem:[%s56]]
  %s58 = scalar_lea.smem %s0, 29
  %s59 = sld [smem:[%s58]]
  %s60 = scalar_lea.smem %s0, 30
  %s61 = sld [smem:[%s60]]
  %s62 = scalar_lea.smem %s0, 31
  %s63 = sld [smem:[%s62]]
  %s64 = scalar_lea.smem %s0, 32
  %s65 = sld [smem:[%s64]]
  %s66 = scalar_lea.smem %s0, 33
  %s67 = sld [smem:[%s66]]
  %s68 = scalar_lea.smem %s0, 34
  %s69 = sld [smem:[%s68]]
  %s70 = scalar_lea.smem %s0, 35
  %s71 = sld [smem:[%s70]]
  %s72 = scalar_lea.smem %s0, 36
  %s73 = sld [smem:[%s72]]
  %s74 = scalar_lea.smem %s0, 37
  %s75 = sld [smem:[%s74]]
  %s76 = sld [smem:[#allocation0]]
  $region325: #{resnet_forward.1} parent=0
    _
  %s78 = ssub.s32 1, %s76
  %s79 = scalar_select 0, %s78, %s76
  $region1: #{resnet_forward.1} parent=0
    #allocation2 [shape = 'u8[2048]{0}', space=vmem, size = 0x800, scoped, tag = 'input window, operand 1, single buffered']
    #allocation3 [shape = 's32[2]{0}', space=sflag, size = 0x8, scoped, tag = 'scoped memory for resnet_forward.1']
    #allocation4 [shape = 'u8[512]{0}', space=vmem, size = 0x400, scoped, tag = 'input window, operand 2, single buffered']
    #allocation5 [shape = 's32[1]{0}', space=sflag, size = 0x4, scoped, tag = 'scoped memory for resnet_forward.1']
    #allocation6 [shape = 'u8[512]{0}', space=vmem, size = 0x400, scoped, tag = 'input window, operand 3, single buffered']
    #allocation7 [shape = 'u8[98304]{0}', space=vmem, size = 0x18000, scoped, tag = 'input window, operand 4, single buffered']
    #allocation8 [shape = 's32[1]{0}', space=sflag, size = 0x4, scoped, tag = 'scoped memory for resnet_forward.1']
    #allocation9 [shape = 'u8[512]{0}', space=vmem, size = 0x400, scoped, tag = 'input window, operand 5, single buffered']
    #allocation10 [shape = 'u8[512]{0}', space=vmem, size = 0x400, scoped, tag = 'input window, operand 6, single buffered']
    #allocation11 [shape = 's32[1]{0}', space=sflag, size = 0x4, scoped, tag = 'scoped memory for resnet_forward.1']
    #allocation12 [shape = 'u8[98304]{0}', space=vmem, size = 0x18000, scoped, tag = 'input window, operand 7, single buffered']
    #allocation13 [shape = 'u8[512]{0}', space=vmem, size = 0x400, scoped, tag = 'input window, operand 8, single buffered']
    #allocation14 [shape = 's32[1]{0}', space=sflag, size = 0x4, scoped, tag = 'scoped memory for resnet_forward.1']
    #allocation15 [shape = 'u8[512]{0}', space=vmem, size = 0x400, scoped, tag = 'input window, operand 9, single buffered']
    #allocation16 [shape = 'u8[98304]{0}', space=vmem, size = 0x18000, scoped, tag = 'input window, operand 10, single buffered']
    #allocation17 [shape = 's32[1]{0}', space=sflag, size = 0x4, scoped, tag = 'scoped memory for resnet_forward.1']
    #allocation18 [shape = 'u8[512]{0}', space=vmem, size = 0x400, scoped, tag = 'input window, operand 11, single buffered']
    #allocation19 [shape = 'u8[512]{0}', space=vmem, size = 0x400, scoped, tag = 'input window, operand 12, single buffered']
    #allocation20 [shape = 's32[1]{0}', space=sflag, size = 0x4, scoped, tag = 'scoped memory for resnet_forward.1']
    #allocation21 [shape = 'u8[98304]{0}', space=vmem, size = 0x18000, scoped, tag = 'input window, operand 13, single buffered']
    #allocation22 [shape = 'u8[512]{0}', space=vmem, size = 0x400, scoped, tag = 'input window, operand 14, single buffered']
    #allocation23 [shape = 's32[1]{0}', space=sflag, size = 0x4, scoped, tag = 'scoped memory for resnet_forward.1']
    #allocation24 [shape = 'u8[512]{0}', space=vmem, size = 0x400, scoped, tag = 'input window, operand 15, single buffered']
    #allocation25 [shape = 'u8[32768]{0}', space=vmem, size = 0x8000, scoped, tag = 'input window, operand 16, single buffered']
    #allocation26 [shape = 's32[1]{0}', space=sflag, size = 0x4, scoped, tag = 'scoped memory for resnet_forward.1']
    #allocation27 [shape = 'u8[512]{0}', space=vmem, size = 0x400, scoped, tag = 'input window, operand 17, single buffered']
    #allocation28 [shape = 'u8[512]{0}', space=vmem, size = 0x400, scoped, tag = 'input window, operand 18, single buffered']
    #allocation29 [shape = 's32[1]{0}', space=sflag, size = 0x4, scoped, tag = 'scoped memory for resnet_forward.1']
    #allocation30 [shape = 'u8[196608]{0}', space=vmem, size = 0x30000, scoped, tag = 'input window, operand 19, single buffered']
    #allocation31 [shape = 'u8[1024]{0}', space=vmem, size = 0x400, scoped, tag = 'input window, operand 20, single buffered']
    #allocation32 [shape = 's32[1]{0}', space=sflag, size = 0x4, scoped, tag = 'scoped memory for resnet_forward.1']
    #allocation33 [shape = 'u8[1024]{0}', space=vmem, size = 0x400, scoped, tag = 'input window, operand 21, single buffered']
    #allocation34 [shape = 'u8[393216]{0}', space=vmem, size = 0x60000, scoped, tag = 'input window, operand 22, single buffered']
    #allocation35 [shape = 's32[1]{0}', space=sflag, size = 0x4, scoped, tag = 'scoped memory for resnet_forward.1']
    #allocation36 [shape = 'u8[1024]{0}', space=vmem, size = 0x400, scoped, tag = 'input window, operand 23, single buffered']
    #allocation37 [shape = 'u8[1024]{0}', space=vmem, size = 0x400, scoped, tag = 'input window, operand 24, single buffered']
    #allocation38 [shape = 's32[1]{0}', space=sflag, size = 0x4, scoped, tag = 'scoped memory for resnet_forward.1']
    #allocation39 [shape = 'u8[65536]{0}', space=vmem, size = 0x10000, scoped, tag = 'input window, operand 25, single buffered']
    #allocation40 [shape = 'u8[1024]{0}', space=vmem, size = 0x400, scoped, tag = 'input window, operand 26, single buffered']
    #allocation41 [shape = 's32[1]{0}', space=sflag, size = 0x4, scoped, tag = 'scoped memory for resnet_forward.1']
    #allocation42 [shape = 'u8[1024]{0}', space=vmem, size = 0x400, scoped, tag = 'input window, operand 27, single buffered']
    #allocation43 [shape = 'u8[786432]{0}', space=vmem, size = 0xc0000, scoped, tag = 'input window, operand 28, single buffered']
    #allocation44 [shape = 's32[1]{0}', space=sflag, size = 0x4, scoped, tag = 'scoped memory for resnet_forward.1']
    #allocation45 [shape = 'u8[2048]{0}', space=vmem, size = 0x800, scoped, tag = 'input window, operand 29, single buffered']
    #allocation46 [shape = 'u8[2048]{0}', space=vmem, size = 0x800, scoped, tag = 'input window, operand 30, single buffered']
    #allocation47 [shape = 's32[1]{0}', space=sflag, size = 0x4, scoped, tag = 'scoped memory for resnet_forward.1']
    #allocation48 [shape = 'u8[1572864]{0}', space=vmem, size = 0x180000, scoped, tag = 'input window, operand 31, single buffered']
    #allocation49 [shape = 'u8[2048]{0}', space=vmem, size = 0x800, scoped, tag = 'input window, operand 32, single buffered']
    #allocation50 [shape = 's32[1]{0}', space=sflag, size = 0x4, scoped, tag = 'scoped memory for resnet_forward.1']
    #allocation51 [shape = 'u8[2048]{0}', space=vmem, size = 0x800, scoped, tag = 'input window, operand 33, single buffered']
    #allocation52 [shape = 'u8[262144]{0}', space=vmem, size = 0x40000, scoped, tag = 'input window, operand 34, single buffered']
    #allocation53 [shape = 's32[1]{0}', space=sflag, size = 0x4, scoped, tag = 'scoped memory for resnet_forward.1']
    #allocation54 [shape = 'u8[2048]{0}', space=vmem, size = 0x800, scoped, tag = 'input window, operand 35, single buffered']
    #allocation55 [shape = 'u8[2048]{0}', space=vmem, size = 0x800, scoped, tag = 'input window, operand 36, single buffered']
    #allocation56 [shape = 's32[1]{0}', space=sflag, size = 0x4, scoped, tag = 'scoped memory for resnet_forward.1']
    %80 = vsyncpa [#allocation3], 0
    %81 = vsyncpa [#allocation5], 0
    %82 = vsyncpa [#allocation8], 0
    %83 = vsyncpa [#allocation11], 0
    %84 = vsyncpa [#allocation14], 0
    %85 = vsyncpa [#allocation17], 0
    %86 = vsyncpa [#allocation20], 0
    %87 = vsyncpa [#allocation23], 0
    %88 = vsyncpa [#allocation26], 0
    %89 = vsyncpa [#allocation29], 0
    %90 = vsyncpa [#allocation32], 0
    %91 = vsyncpa [#allocation35], 0
    %92 = vsyncpa [#allocation38], 0
    %93 = vsyncpa [#allocation41], 0
    %94 = vsyncpa [#allocation44], 0
    %95 = vsyncpa [#allocation47], 0
    %96 = vsyncpa [#allocation50], 0
    %97 = vsyncpa [#allocation53], 0
    %98 = vsyncpa [#allocation56], 0
    loop: start=0, step=1, limit=4
    $region2: #{resnet_forward.1} parent=1 // loop_pre_header
      _
    $region3: #{resnet_forward.1} parent=1 // loop_header
      %s100 = sphi 0, %s104
      %p101 = scmp.ge.s32.totalorder %s100, 4
      %s110 = sphi 0, %s112
      %s113 = sphi 0, %s110
      %s114 = sphi 0, %s113
      %s130 = sphi 0, %s114
      %s134 = sphi 0, %s134
      %s136 = sphi 0, %s134
      %s137 = sphi 0, %s136
      %s151 = sphi 0, %s137
      %s155 = sphi 0, %s155
      %s157 = sphi 0, %s155
      %s158 = sphi 0, %s157
      %s172 = sphi 0, %s158
      %s176 = sphi 0, %s176
      %s178 = sphi 0, %s176
      %s179 = sphi 0, %s178
      %s193 = sphi 0, %s179
      %s197 = sphi 0, %s197
      %s199 = sphi 0, %s197
      %s200 = sphi 0, %s199
      %s214 = sphi 0, %s200
      %s218 = sphi 0, %s218
      %s220 = sphi 0, %s218
      %s221 = sphi 0, %s220
      %s235 = sphi 0, %s221
      %s239 = sphi 0, %s239
      %s241 = sphi 0, %s239
      %s242 = sphi 0, %s241
      %s256 = sphi 0, %s242
      %s260 = sphi 0, %s260
      %s262 = sphi 0, %s260
      %s263 = sphi 0, %s262
      %s277 = sphi 0, %s263
      %s281 = sphi 0, %s281
      %s283 = sphi 0, %s281
      %s284 = sphi 0, %s283
      %s298 = sphi 0, %s284
      %s302 = sphi 0, %s302
      %s304 = sphi 0, %s302
      %s305 = sphi 0, %s304
      %s319 = sphi 0, %s305
      %s323 = sphi 0, %s323
      %s325 = sphi 0, %s323
      %s326 = sphi 0, %s325
      %s340 = sphi 0, %s326
      %s344 = sphi 0, %s344
      %s346 = sphi 0, %s344
      %s347 = sphi 0, %s346
      %s361 = sphi 0, %s347
      %s365 = sphi 0, %s365
      %s367 = sphi 0, %s365
      %s368 = sphi 0, %s367
      %s382 = sphi 0, %s368
      %s386 = sphi 0, %s386
      %s388 = sphi 0, %s386
      %s389 = sphi 0, %s388
      %s403 = sphi 0, %s389
      %s407 = sphi 0, %s407
      %s409 = sphi 0, %s407
      %s410 = sphi 0, %s409
      %s424 = sphi 0, %s410
      %s428 = sphi 0, %s428
      %s430 = sphi 0, %s428
      %s431 = sphi 0, %s430
      %s445 = sphi 0, %s431
      %s449 = sphi 0, %s449
      %s451 = sphi 0, %s449
      %s452 = sphi 0, %s451
      %s466 = sphi 0, %s452
      %s470 = sphi 0, %s470
      %s472 = sphi 0, %s470
      %s473 = sphi 0, %s472
      %s487 = sphi 0, %s473
      %s491 = sphi 0, %s491
      %s493 = sphi 0, %s491
      %s494 = sphi 0, %s493
      %s508 = sphi 0, %s494
      %s512 = sphi 0, %s512
      %s514 = sphi 0, %s512
      %s515 = sphi 0, %s514
      %s529 = sphi 0, %s515
      %s533 = sphi 0, %s533
      %s535 = sphi 0, %s533
      %s536 = sphi 0, %s535
      %s550 = sphi 0, %s536
      %s554 = sphi 0, %s554
      %s556 = sphi 0, %s554
      %s557 = sphi 0, %s556
      %s571 = sphi 0, %s557
      %s575 = sphi 0, %s575
      %s577 = sphi 0, %s575
      %s578 = sphi 0, %s577
      %s592 = sphi 0, %s578
      %s596 = sphi 0, %s596
      %s598 = sphi 0, %s596
      %s599 = sphi 0, %s598
      %s613 = sphi 0, %s599
      %s617 = sphi 0, %s617
      %s619 = sphi 0, %s617
      %s620 = sphi 0, %s619
      %s634 = sphi 0, %s620
      %s638 = sphi 0, %s638
      %s640 = sphi 0, %s638
      %s641 = sphi 0, %s640
      %s655 = sphi 0, %s641
      %s659 = sphi 0, %s659
      %s661 = sphi 0, %s659
      %s662 = sphi 0, %s661
      %s676 = sphi 0, %s662
      %s680 = sphi 0, %s680
      %s682 = sphi 0, %s680
      %s683 = sphi 0, %s682
      %s697 = sphi 0, %s683
      %s701 = sphi 0, %s701
      %s703 = sphi 0, %s701
      %s704 = sphi 0, %s703
      %s718 = sphi 0, %s704
      %s722 = sphi 0, %s722
      %s724 = sphi 0, %s722
      %s725 = sphi 0, %s724
      %s739 = sphi 0, %s725
      %s743 = sphi 0, %s743
      %s745 = sphi 0, %s743
      %s746 = sphi 0, %s745
      %s760 = sphi 0, %s746
      %s764 = sphi 0, %s764
      %s766 = sphi 0, %s764
      %s767 = sphi 0, %s766
      %s781 = sphi 0, %s767
      %s785 = sphi 0, %s785
      %s787 = sphi 0, %s785
      %s788 = sphi 0, %s787
      %s802 = sphi 0, %s788
      %s806 = sphi 0, %s806
      %s808 = sphi 0, %s806
      %s809 = sphi 0, %s808
      %s823 = sphi 0, %s809
      %s827 = sphi 0, %s827
      %s829 = sphi 0, %s827
      %s830 = sphi 0, %s829
      %s844 = sphi 0, %s830
      %s848 = sphi 0, %s848
      %s850 = sphi 0, %s848
      %s851 = sphi 0, %s850
      %s865 = sphi 0, %s851
      %s869 = sphi 0, %s869
      %s871 = sphi 0, %s869
      %s872 = sphi 0, %s871
      %s886 = sphi 0, %s872
      %s892 = sphi 0, %s894
      %s895 = sphi 0, %s892
      %s896 = sphi 0, %s895
      %s912 = sphi 0, %s896
    $region4: #{resnet_forward.1} parent=1 // loop_header_branch
      %103 = sbr.rel (%p101) target = $region8
    $region5: #{resnet_forward.1} parent=1 // loop_body
      %s105 = ssub.s32 %s100, 1
      %s106 = ssub.s32 %s100, 2
      %s107 = sadd.s32 %s100, 1
      %s108 = ssub.s32 %s100, %s107
      %p109 = scmp.eq.s32.totalorder %s108, 0
      %s111 = sadd.s32 %s110, 1
      %s112 = scalar_select %p109, %s110, %s111
      %p115 = pneg %p109
      %p116 = scmp.eq.s32.totalorder %s100, 1
      %p117 = por %p115, %p116
      %p118 = scmp.ne.s32.totalorder %s110, %s113
      %p119 = scmp.eq.s32.totalorder %s100, 0
      %p120 = por %p118, %p119
      %p121 = scmp.ne.s32.totalorder %s110, %s113
      %p122 = scmp.eq.s32.totalorder %s105, 1
      %p123 = por %p121, %p122
      %p124 = scmp.ne.s32.totalorder %s113, %s114
      %p125 = scmp.eq.s32.totalorder %s105, 0
      %p126 = por %p124, %p125
      %p127 = scmp.ne.s32.totalorder %s113, %s114
      %p128 = scmp.eq.s32.totalorder %s106, 1
      %p129 = por %p127, %p128
      %p131 = scmp.ne.s32.totalorder %s114, %s130
      %p132 = scmp.eq.s32.totalorder %s106, 0
      %p133 = por %p131, %p132
      %s135 = sadd.s32 %s134, 1
      %p138 = scmp.eq.s32.totalorder %s100, 1
      %p139 = scmp.ne.s32.totalorder %s134, %s136
      %p140 = scmp.eq.s32.totalorder %s100, 0
      %p141 = por %p139, %p140
      %p142 = scmp.ne.s32.totalorder %s134, %s136
      %p143 = scmp.eq.s32.totalorder %s105, 1
      %p144 = por %p142, %p143
      %p145 = scmp.ne.s32.totalorder %s136, %s137
      %p146 = scmp.eq.s32.totalorder %s105, 0
      %p147 = por %p145, %p146
      %p148 = scmp.ne.s32.totalorder %s136, %s137
      %p149 = scmp.eq.s32.totalorder %s106, 1
      %p150 = por %p148, %p149
      %p152 = scmp.ne.s32.totalorder %s137, %s151
      %p153 = scmp.eq.s32.totalorder %s106, 0
      %p154 = por %p152, %p153
      %s156 = sadd.s32 %s155, 1
      %p159 = scmp.eq.s32.totalorder %s100, 1
      %p160 = scmp.ne.s32.totalorder %s155, %s157
      %p161 = scmp.eq.s32.totalorder %s100, 0
      %p162 = por %p160, %p161
      %p163 = scmp.ne.s32.totalorder %s155, %s157
      %p164 = scmp.eq.s32.totalorder %s105, 1
      %p165 = por %p163, %p164
      %p166 = scmp.ne.s32.totalorder %s157, %s158
      %p167 = scmp.eq.s32.totalorder %s105, 0
      %p168 = por %p166, %p167
      %p169 = scmp.ne.s32.totalorder %s157, %s158
      %p170 = scmp.eq.s32.totalorder %s106, 1
      %p171 = por %p169, %p170
      %p173 = scmp.ne.s32.totalorder %s158, %s172
      %p174 = scmp.eq.s32.totalorder %s106, 0
      %p175 = por %p173, %p174
      %s177 = sadd.s32 %s176, 1
      %p180 = scmp.eq.s32.totalorder %s100, 1
      %p181 = scmp.ne.s32.totalorder %s176, %s178
      %p182 = scmp.eq.s32.totalorder %s100, 0
      %p183 = por %p181, %p182
      %p184 = scmp.ne.s32.totalorder %s176, %s178
      %p185 = scmp.eq.s32.totalorder %s105, 1
      %p186 = por %p184, %p185
      %p187 = scmp.ne.s32.totalorder %s178, %s179
      %p188 = scmp.eq.s32.totalorder %s105, 0
      %p189 = por %p187, %p188
      %p190 = scmp.ne.s32.totalorder %s178, %s179
      %p191 = scmp.eq.s32.totalorder %s106, 1
      %p192 = por %p190, %p191
      %p194 = scmp.ne.s32.totalorder %s179, %s193
      %p195 = scmp.eq.s32.totalorder %s106, 0
      %p196 = por %p194, %p195
      %s198 = sadd.s32 %s197, 1
      %p201 = scmp.eq.s32.totalorder %s100, 1
      %p202 = scmp.ne.s32.totalorder %s197, %s199
      %p203 = scmp.eq.s32.totalorder %s100, 0
      %p204 = por %p202, %p203
      %p205 = scmp.ne.s32.totalorder %s197, %s199
      %p206 = scmp.eq.s32.totalorder %s105, 1
      %p207 = por %p205, %p206
      %p208 = scmp.ne.s32.totalorder %s199, %s200
      %p209 = scmp.eq.s32.totalorder %s105, 0
      %p210 = por %p208, %p209
      %p211 = scmp.ne.s32.totalorder %s199, %s200
      %p212 = scmp.eq.s32.totalorder %s106, 1
      %p213 = por %p211, %p212
      %p215 = scmp.ne.s32.totalorder %s200, %s214
      %p216 = scmp.eq.s32.totalorder %s106, 0
      %p217 = por %p215, %p216
      %s219 = sadd.s32 %s218, 1
      %p222 = scmp.eq.s32.totalorder %s100, 1
      %p223 = scmp.ne.s32.totalorder %s218, %s220
      %p224 = scmp.eq.s32.totalorder %s100, 0
      %p225 = por %p223, %p224
      %p226 = scmp.ne.s32.totalorder %s218, %s220
      %p227 = scmp.eq.s32.totalorder %s105, 1
      %p228 = por %p226, %p227
      %p229 = scmp.ne.s32.totalorder %s220, %s221
      %p230 = scmp.eq.s32.totalorder %s105, 0
      %p231 = por %p229, %p230
      %p232 = scmp.ne.s32.totalorder %s220, %s221
      %p233 = scmp.eq.s32.totalorder %s106, 1
      %p234 = por %p232, %p233
      %p236 = scmp.ne.s32.totalorder %s221, %s235
      %p237 = scmp.eq.s32.totalorder %s106, 0
      %p238 = por %p236, %p237
      %s240 = sadd.s32 %s239, 1
      %p243 = scmp.eq.s32.totalorder %s100, 1
      %p244 = scmp.ne.s32.totalorder %s239, %s241
      %p245 = scmp.eq.s32.totalorder %s100, 0
      %p246 = por %p244, %p245
      %p247 = scmp.ne.s32.totalorder %s239, %s241
      %p248 = scmp.eq.s32.totalorder %s105, 1
      %p249 = por %p247, %p248
      %p250 = scmp.ne.s32.totalorder %s241, %s242
      %p251 = scmp.eq.s32.totalorder %s105, 0
      %p252 = por %p250, %p251
      %p253 = scmp.ne.s32.totalorder %s241, %s242
      %p254 = scmp.eq.s32.totalorder %s106, 1
      %p255 = por %p253, %p254
      %p257 = scmp.ne.s32.totalorder %s242, %s256
      %p258 = scmp.eq.s32.totalorder %s106, 0
      %p259 = por %p257, %p258
      %s261 = sadd.s32 %s260, 1
      %p264 = scmp.eq.s32.totalorder %s100, 1
      %p265 = scmp.ne.s32.totalorder %s260, %s262
      %p266 = scmp.eq.s32.totalorder %s100, 0
      %p267 = por %p265, %p266
      %p268 = scmp.ne.s32.totalorder %s260, %s262
      %p269 = scmp.eq.s32.totalorder %s105, 1
      %p270 = por %p268, %p269
      %p271 = scmp.ne.s32.totalorder %s262, %s263
      %p272 = scmp.eq.s32.totalorder %s105, 0
      %p273 = por %p271, %p272
      %p274 = scmp.ne.s32.totalorder %s262, %s263
      %p275 = scmp.eq.s32.totalorder %s106, 1
      %p276 = por %p274, %p275
      %p278 = scmp.ne.s32.totalorder %s263, %s277
      %p279 = scmp.eq.s32.totalorder %s106, 0
      %p280 = por %p278, %p279
      %s282 = sadd.s32 %s281, 1
      %p285 = scmp.eq.s32.totalorder %s100, 1
      %p286 = scmp.ne.s32.totalorder %s281, %s283
      %p287 = scmp.eq.s32.totalorder %s100, 0
      %p288 = por %p286, %p287
      %p289 = scmp.ne.s32.totalorder %s281, %s283
      %p290 = scmp.eq.s32.totalorder %s105, 1
      %p291 = por %p289, %p290
      %p292 = scmp.ne.s32.totalorder %s283, %s284
      %p293 = scmp.eq.s32.totalorder %s105, 0
      %p294 = por %p292, %p293
      %p295 = scmp.ne.s32.totalorder %s283, %s284
      %p296 = scmp.eq.s32.totalorder %s106, 1
      %p297 = por %p295, %p296
      %p299 = scmp.ne.s32.totalorder %s284, %s298
      %p300 = scmp.eq.s32.totalorder %s106, 0
      %p301 = por %p299, %p300
      %s303 = sadd.s32 %s302, 1
      %p306 = scmp.eq.s32.totalorder %s100, 1
      %p307 = scmp.ne.s32.totalorder %s302, %s304
      %p308 = scmp.eq.s32.totalorder %s100, 0
      %p309 = por %p307, %p308
      %p310 = scmp.ne.s32.totalorder %s302, %s304
      %p311 = scmp.eq.s32.totalorder %s105, 1
      %p312 = por %p310, %p311
      %p313 = scmp.ne.s32.totalorder %s304, %s305
      %p314 = scmp.eq.s32.totalorder %s105, 0
      %p315 = por %p313, %p314
      %p316 = scmp.ne.s32.totalorder %s304, %s305
      %p317 = scmp.eq.s32.totalorder %s106, 1
      %p318 = por %p316, %p317
      %p320 = scmp.ne.s32.totalorder %s305, %s319
      %p321 = scmp.eq.s32.totalorder %s106, 0
      %p322 = por %p320, %p321
      %s324 = sadd.s32 %s323, 1
      %p327 = scmp.eq.s32.totalorder %s100, 1
      %p328 = scmp.ne.s32.totalorder %s323, %s325
      %p329 = scmp.eq.s32.totalorder %s100, 0
      %p330 = por %p328, %p329
      %p331 = scmp.ne.s32.totalorder %s323, %s325
      %p332 = scmp.eq.s32.totalorder %s105, 1
      %p333 = por %p331, %p332
      %p334 = scmp.ne.s32.totalorder %s325, %s326
      %p335 = scmp.eq.s32.totalorder %s105, 0
      %p336 = por %p334, %p335
      %p337 = scmp.ne.s32.totalorder %s325, %s326
      %p338 = scmp.eq.s32.totalorder %s106, 1
      %p339 = por %p337, %p338
      %p341 = scmp.ne.s32.totalorder %s326, %s340
      %p342 = scmp.eq.s32.totalorder %s106, 0
      %p343 = por %p341, %p342
      %s345 = sadd.s32 %s344, 1
      %p348 = scmp.eq.s32.totalorder %s100, 1
      %p349 = scmp.ne.s32.totalorder %s344, %s346
      %p350 = scmp.eq.s32.totalorder %s100, 0
      %p351 = por %p349, %p350
      %p352 = scmp.ne.s32.totalorder %s344, %s346
      %p353 = scmp.eq.s32.totalorder %s105, 1
      %p354 = por %p352, %p353
      %p355 = scmp.ne.s32.totalorder %s346, %s347
      %p356 = scmp.eq.s32.totalorder %s105, 0
      %p357 = por %p355, %p356
      %p358 = scmp.ne.s32.totalorder %s346, %s347
      %p359 = scmp.eq.s32.totalorder %s106, 1
      %p360 = por %p358, %p359
      %p362 = scmp.ne.s32.totalorder %s347, %s361
      %p363 = scmp.eq.s32.totalorder %s106, 0
      %p364 = por %p362, %p363
      %s366 = sadd.s32 %s365, 1
      %p369 = scmp.eq.s32.totalorder %s100, 1
      %p370 = scmp.ne.s32.totalorder %s365, %s367
      %p371 = scmp.eq.s32.totalorder %s100, 0
      %p372 = por %p370, %p371
      %p373 = scmp.ne.s32.totalorder %s365, %s367
      %p374 = scmp.eq.s32.totalorder %s105, 1
      %p375 = por %p373, %p374
      %p376 = scmp.ne.s32.totalorder %s367, %s368
      %p377 = scmp.eq.s32.totalorder %s105, 0
      %p378 = por %p376, %p377
      %p379 = scmp.ne.s32.totalorder %s367, %s368
      %p380 = scmp.eq.s32.totalorder %s106, 1
      %p381 = por %p379, %p380
      %p383 = scmp.ne.s32.totalorder %s368, %s382
      %p384 = scmp.eq.s32.totalorder %s106, 0
      %p385 = por %p383, %p384
      %s387 = sadd.s32 %s386, 1
      %p390 = scmp.eq.s32.totalorder %s100, 1
      %p391 = scmp.ne.s32.totalorder %s386, %s388
      %p392 = scmp.eq.s32.totalorder %s100, 0
      %p393 = por %p391, %p392
      %p394 = scmp.ne.s32.totalorder %s386, %s388
      %p395 = scmp.eq.s32.totalorder %s105, 1
      %p396 = por %p394, %p395
      %p397 = scmp.ne.s32.totalorder %s388, %s389
      %p398 = scmp.eq.s32.totalorder %s105, 0
      %p399 = por %p397, %p398
      %p400 = scmp.ne.s32.totalorder %s388, %s389
      %p401 = scmp.eq.s32.totalorder %s106, 1
      %p402 = por %p400, %p401
      %p404 = scmp.ne.s32.totalorder %s389, %s403
      %p405 = scmp.eq.s32.totalorder %s106, 0
      %p406 = por %p404, %p405
      %s408 = sadd.s32 %s407, 1
      %p411 = scmp.eq.s32.totalorder %s100, 1
      %p412 = scmp.ne.s32.totalorder %s407, %s409
      %p413 = scmp.eq.s32.totalorder %s100, 0
      %p414 = por %p412, %p413
      %p415 = scmp.ne.s32.totalorder %s407, %s409
      %p416 = scmp.eq.s32.totalorder %s105, 1
      %p417 = por %p415, %p416
      %p418 = scmp.ne.s32.totalorder %s409, %s410
      %p419 = scmp.eq.s32.totalorder %s105, 0
      %p420 = por %p418, %p419
      %p421 = scmp.ne.s32.totalorder %s409, %s410
      %p422 = scmp.eq.s32.totalorder %s106, 1
      %p423 = por %p421, %p422
      %p425 = scmp.ne.s32.totalorder %s410, %s424
      %p426 = scmp.eq.s32.totalorder %s106, 0
      %p427 = por %p425, %p426
      %s429 = sadd.s32 %s428, 1
      %p432 = scmp.eq.s32.totalorder %s100, 1
      %p433 = scmp.ne.s32.totalorder %s428, %s430
      %p434 = scmp.eq.s32.totalorder %s100, 0
      %p435 = por %p433, %p434
      %p436 = scmp.ne.s32.totalorder %s428, %s430
      %p437 = scmp.eq.s32.totalorder %s105, 1
      %p438 = por %p436, %p437
      %p439 = scmp.ne.s32.totalorder %s430, %s431
      %p440 = scmp.eq.s32.totalorder %s105, 0
      %p441 = por %p439, %p440
      %p442 = scmp.ne.s32.totalorder %s430, %s431
      %p443 = scmp.eq.s32.totalorder %s106, 1
      %p444 = por %p442, %p443
      %p446 = scmp.ne.s32.totalorder %s431, %s445
      %p447 = scmp.eq.s32.totalorder %s106, 0
      %p448 = por %p446, %p447
      %s450 = sadd.s32 %s449, 1
      %p453 = scmp.eq.s32.totalorder %s100, 1
      %p454 = scmp.ne.s32.totalorder %s449, %s451
      %p455 = scmp.eq.s32.totalorder %s100, 0
      %p456 = por %p454, %p455
      %p457 = scmp.ne.s32.totalorder %s449, %s451
      %p458 = scmp.eq.s32.totalorder %s105, 1
      %p459 = por %p457, %p458
      %p460 = scmp.ne.s32.totalorder %s451, %s452
      %p461 = scmp.eq.s32.totalorder %s105, 0
      %p462 = por %p460, %p461
      %p463 = scmp.ne.s32.totalorder %s451, %s452
      %p464 = scmp.eq.s32.totalorder %s106, 1
      %p465 = por %p463, %p464
      %p467 = scmp.ne.s32.totalorder %s452, %s466
      %p468 = scmp.eq.s32.totalorder %s106, 0
      %p469 = por %p467, %p468
      %s471 = sadd.s32 %s470, 1
      %p474 = scmp.eq.s32.totalorder %s100, 1
      %p475 = scmp.ne.s32.totalorder %s470, %s472
      %p476 = scmp.eq.s32.totalorder %s100, 0
      %p477 = por %p475, %p476
      %p478 = scmp.ne.s32.totalorder %s470, %s472
      %p479 = scmp.eq.s32.totalorder %s105, 1
      %p480 = por %p478, %p479
      %p481 = scmp.ne.s32.totalorder %s472, %s473
      %p482 = scmp.eq.s32.totalorder %s105, 0
      %p483 = por %p481, %p482
      %p484 = scmp.ne.s32.totalorder %s472, %s473
      %p485 = scmp.eq.s32.totalorder %s106, 1
      %p486 = por %p484, %p485
      %p488 = scmp.ne.s32.totalorder %s473, %s487
      %p489 = scmp.eq.s32.totalorder %s106, 0
      %p490 = por %p488, %p489
      %s492 = sadd.s32 %s491, 1
      %p495 = scmp.eq.s32.totalorder %s100, 1
      %p496 = scmp.ne.s32.totalorder %s491, %s493
      %p497 = scmp.eq.s32.totalorder %s100, 0
      %p498 = por %p496, %p497
      %p499 = scmp.ne.s32.totalorder %s491, %s493
      %p500 = scmp.eq.s32.totalorder %s105, 1
      %p501 = por %p499, %p500
      %p502 = scmp.ne.s32.totalorder %s493, %s494
      %p503 = scmp.eq.s32.totalorder %s105, 0
      %p504 = por %p502, %p503
      %p505 = scmp.ne.s32.totalorder %s493, %s494
      %p506 = scmp.eq.s32.totalorder %s106, 1
      %p507 = por %p505, %p506
      %p509 = scmp.ne.s32.totalorder %s494, %s508
      %p510 = scmp.eq.s32.totalorder %s106, 0
      %p511 = por %p509, %p510
      %s513 = sadd.s32 %s512, 1
      %p516 = scmp.eq.s32.totalorder %s100, 1
      %p517 = scmp.ne.s32.totalorder %s512, %s514
      %p518 = scmp.eq.s32.totalorder %s100, 0
      %p519 = por %p517, %p518
      %p520 = scmp.ne.s32.totalorder %s512, %s514
      %p521 = scmp.eq.s32.totalorder %s105, 1
      %p522 = por %p520, %p521
      %p523 = scmp.ne.s32.totalorder %s514, %s515
      %p524 = scmp.eq.s32.totalorder %s105, 0
      %p525 = por %p523, %p524
      %p526 = scmp.ne.s32.totalorder %s514, %s515
      %p527 = scmp.eq.s32.totalorder %s106, 1
      %p528 = por %p526, %p527
      %p530 = scmp.ne.s32.totalorder %s515, %s529
      %p531 = scmp.eq.s32.totalorder %s106, 0
      %p532 = por %p530, %p531
      %s534 = sadd.s32 %s533, 1
      %p537 = scmp.eq.s32.totalorder %s100, 1
      %p538 = scmp.ne.s32.totalorder %s533, %s535
      %p539 = scmp.eq.s32.totalorder %s100, 0
      %p540 = por %p538, %p539
      %p541 = scmp.ne.s32.totalorder %s533, %s535
      %p542 = scmp.eq.s32.totalorder %s105, 1
      %p543 = por %p541, %p542
      %p544 = scmp.ne.s32.totalorder %s535, %s536
      %p545 = scmp.eq.s32.totalorder %s105, 0
      %p546 = por %p544, %p545
      %p547 = scmp.ne.s32.totalorder %s535, %s536
      %p548 = scmp.eq.s32.totalorder %s106, 1
      %p549 = por %p547, %p548
      %p551 = scmp.ne.s32.totalorder %s536, %s550
      %p552 = scmp.eq.s32.totalorder %s106, 0
      %p553 = por %p551, %p552
      %s555 = sadd.s32 %s554, 1
      %p558 = scmp.eq.s32.totalorder %s100, 1
      %p559 = scmp.ne.s32.totalorder %s554, %s556
      %p560 = scmp.eq.s32.totalorder %s100, 0
      %p561 = por %p559, %p560
      %p562 = scmp.ne.s32.totalorder %s554, %s556
      %p563 = scmp.eq.s32.totalorder %s105, 1
      %p564 = por %p562, %p563
      %p565 = scmp.ne.s32.totalorder %s556, %s557
      %p566 = scmp.eq.s32.totalorder %s105, 0
      %p567 = por %p565, %p566
      %p568 = scmp.ne.s32.totalorder %s556, %s557
      %p569 = scmp.eq.s32.totalorder %s106, 1
      %p570 = por %p568, %p569
      %p572 = scmp.ne.s32.totalorder %s557, %s571
      %p573 = scmp.eq.s32.totalorder %s106, 0
      %p574 = por %p572, %p573
      %s576 = sadd.s32 %s575, 1
      %p579 = scmp.eq.s32.totalorder %s100, 1
      %p580 = scmp.ne.s32.totalorder %s575, %s577
      %p581 = scmp.eq.s32.totalorder %s100, 0
      %p582 = por %p580, %p581
      %p583 = scmp.ne.s32.totalorder %s575, %s577
      %p584 = scmp.eq.s32.totalorder %s105, 1
      %p585 = por %p583, %p584
      %p586 = scmp.ne.s32.totalorder %s577, %s578
      %p587 = scmp.eq.s32.totalorder %s105, 0
      %p588 = por %p586, %p587
      %p589 = scmp.ne.s32.totalorder %s577, %s578
      %p590 = scmp.eq.s32.totalorder %s106, 1
      %p591 = por %p589, %p590
      %p593 = scmp.ne.s32.totalorder %s578, %s592
      %p594 = scmp.eq.s32.totalorder %s106, 0
      %p595 = por %p593, %p594
      %s597 = sadd.s32 %s596, 1
      %p600 = scmp.eq.s32.totalorder %s100, 1
      %p601 = scmp.ne.s32.totalorder %s596, %s598
      %p602 = scmp.eq.s32.totalorder %s100, 0
      %p603 = por %p601, %p602
      %p604 = scmp.ne.s32.totalorder %s596, %s598
      %p605 = scmp.eq.s32.totalorder %s105, 1
      %p606 = por %p604, %p605
      %p607 = scmp.ne.s32.totalorder %s598, %s599
      %p608 = scmp.eq.s32.totalorder %s105, 0
      %p609 = por %p607, %p608
      %p610 = scmp.ne.s32.totalorder %s598, %s599
      %p611 = scmp.eq.s32.totalorder %s106, 1
      %p612 = por %p610, %p611
      %p614 = scmp.ne.s32.totalorder %s599, %s613
      %p615 = scmp.eq.s32.totalorder %s106, 0
      %p616 = por %p614, %p615
      %s618 = sadd.s32 %s617, 1
      %p621 = scmp.eq.s32.totalorder %s100, 1
      %p622 = scmp.ne.s32.totalorder %s617, %s619
      %p623 = scmp.eq.s32.totalorder %s100, 0
      %p624 = por %p622, %p623
      %p625 = scmp.ne.s32.totalorder %s617, %s619
      %p626 = scmp.eq.s32.totalorder %s105, 1
      %p627 = por %p625, %p626
      %p628 = scmp.ne.s32.totalorder %s619, %s620
      %p629 = scmp.eq.s32.totalorder %s105, 0
      %p630 = por %p628, %p629
      %p631 = scmp.ne.s32.totalorder %s619, %s620
      %p632 = scmp.eq.s32.totalorder %s106, 1
      %p633 = por %p631, %p632
      %p635 = scmp.ne.s32.totalorder %s620, %s634
      %p636 = scmp.eq.s32.totalorder %s106, 0
      %p637 = por %p635, %p636
      %s639 = sadd.s32 %s638, 1
      %p642 = scmp.eq.s32.totalorder %s100, 1
      %p643 = scmp.ne.s32.totalorder %s638, %s640
      %p644 = scmp.eq.s32.totalorder %s100, 0
      %p645 = por %p643, %p644
      %p646 = scmp.ne.s32.totalorder %s638, %s640
      %p647 = scmp.eq.s32.totalorder %s105, 1
      %p648 = por %p646, %p647
      %p649 = scmp.ne.s32.totalorder %s640, %s641
      %p650 = scmp.eq.s32.totalorder %s105, 0
      %p651 = por %p649, %p650
      %p652 = scmp.ne.s32.totalorder %s640, %s641
      %p653 = scmp.eq.s32.totalorder %s106, 1
      %p654 = por %p652, %p653
      %p656 = scmp.ne.s32.totalorder %s641, %s655
      %p657 = scmp.eq.s32.totalorder %s106, 0
      %p658 = por %p656, %p657
      %s660 = sadd.s32 %s659, 1
      %p663 = scmp.eq.s32.totalorder %s100, 1
      %p664 = scmp.ne.s32.totalorder %s659, %s661
      %p665 = scmp.eq.s32.totalorder %s100, 0
      %p666 = por %p664, %p665
      %p667 = scmp.ne.s32.totalorder %s659, %s661
      %p668 = scmp.eq.s32.totalorder %s105, 1
      %p669 = por %p667, %p668
      %p670 = scmp.ne.s32.totalorder %s661, %s662
      %p671 = scmp.eq.s32.totalorder %s105, 0
      %p672 = por %p670, %p671
      %p673 = scmp.ne.s32.totalorder %s661, %s662
      %p674 = scmp.eq.s32.totalorder %s106, 1
      %p675 = por %p673, %p674
      %p677 = scmp.ne.s32.totalorder %s662, %s676
      %p678 = scmp.eq.s32.totalorder %s106, 0
      %p679 = por %p677, %p678
      %s681 = sadd.s32 %s680, 1
      %p684 = scmp.eq.s32.totalorder %s100, 1
      %p685 = scmp.ne.s32.totalorder %s680, %s682
      %p686 = scmp.eq.s32.totalorder %s100, 0
      %p687 = por %p685, %p686
      %p688 = scmp.ne.s32.totalorder %s680, %s682
      %p689 = scmp.eq.s32.totalorder %s105, 1
      %p690 = por %p688, %p689
      %p691 = scmp.ne.s32.totalorder %s682, %s683
      %p692 = scmp.eq.s32.totalorder %s105, 0
      %p693 = por %p691, %p692
      %p694 = scmp.ne.s32.totalorder %s682, %s683
      %p695 = scmp.eq.s32.totalorder %s106, 1
      %p696 = por %p694, %p695
      %p698 = scmp.ne.s32.totalorder %s683, %s697
      %p699 = scmp.eq.s32.totalorder %s106, 0
      %p700 = por %p698, %p699
      %s702 = sadd.s32 %s701, 1
      %p705 = scmp.eq.s32.totalorder %s100, 1
      %p706 = scmp.ne.s32.totalorder %s701, %s703
      %p707 = scmp.eq.s32.totalorder %s100, 0
      %p708 = por %p706, %p707
      %p709 = scmp.ne.s32.totalorder %s701, %s703
      %p710 = scmp.eq.s32.totalorder %s105, 1
      %p711 = por %p709, %p710
      %p712 = scmp.ne.s32.totalorder %s703, %s704
      %p713 = scmp.eq.s32.totalorder %s105, 0
      %p714 = por %p712, %p713
      %p715 = scmp.ne.s32.totalorder %s703, %s704
      %p716 = scmp.eq.s32.totalorder %s106, 1
      %p717 = por %p715, %p716
      %p719 = scmp.ne.s32.totalorder %s704, %s718
      %p720 = scmp.eq.s32.totalorder %s106, 0
      %p721 = por %p719, %p720
      %s723 = sadd.s32 %s722, 1
      %p726 = scmp.eq.s32.totalorder %s100, 1
      %p727 = scmp.ne.s32.totalorder %s722, %s724
      %p728 = scmp.eq.s32.totalorder %s100, 0
      %p729 = por %p727, %p728
      %p730 = scmp.ne.s32.totalorder %s722, %s724
      %p731 = scmp.eq.s32.totalorder %s105, 1
      %p732 = por %p730, %p731
      %p733 = scmp.ne.s32.totalorder %s724, %s725
      %p734 = scmp.eq.s32.totalorder %s105, 0
      %p735 = por %p733, %p734
      %p736 = scmp.ne.s32.totalorder %s724, %s725
      %p737 = scmp.eq.s32.totalorder %s106, 1
      %p738 = por %p736, %p737
      %p740 = scmp.ne.s32.totalorder %s725, %s739
      %p741 = scmp.eq.s32.totalorder %s106, 0
      %p742 = por %p740, %p741
      %s744 = sadd.s32 %s743, 1
      %p747 = scmp.eq.s32.totalorder %s100, 1
      %p748 = scmp.ne.s32.totalorder %s743, %s745
      %p749 = scmp.eq.s32.totalorder %s100, 0
      %p750 = por %p748, %p749
      %p751 = scmp.ne.s32.totalorder %s743, %s745
      %p752 = scmp.eq.s32.totalorder %s105, 1
      %p753 = por %p751, %p752
      %p754 = scmp.ne.s32.totalorder %s745, %s746
      %p755 = scmp.eq.s32.totalorder %s105, 0
      %p756 = por %p754, %p755
      %p757 = scmp.ne.s32.totalorder %s745, %s746
      %p758 = scmp.eq.s32.totalorder %s106, 1
      %p759 = por %p757, %p758
      %p761 = scmp.ne.s32.totalorder %s746, %s760
      %p762 = scmp.eq.s32.totalorder %s106, 0
      %p763 = por %p761, %p762
      %s765 = sadd.s32 %s764, 1
      %p768 = scmp.eq.s32.totalorder %s100, 1
      %p769 = scmp.ne.s32.totalorder %s764, %s766
      %p770 = scmp.eq.s32.totalorder %s100, 0
      %p771 = por %p769, %p770
      %p772 = scmp.ne.s32.totalorder %s764, %s766
      %p773 = scmp.eq.s32.totalorder %s105, 1
      %p774 = por %p772, %p773
      %p775 = scmp.ne.s32.totalorder %s766, %s767
      %p776 = scmp.eq.s32.totalorder %s105, 0
      %p777 = por %p775, %p776
      %p778 = scmp.ne.s32.totalorder %s766, %s767
      %p779 = scmp.eq.s32.totalorder %s106, 1
      %p780 = por %p778, %p779
      %p782 = scmp.ne.s32.totalorder %s767, %s781
      %p783 = scmp.eq.s32.totalorder %s106, 0
      %p784 = por %p782, %p783
      %s786 = sadd.s32 %s785, 1
      %p789 = scmp.eq.s32.totalorder %s100, 1
      %p790 = scmp.ne.s32.totalorder %s785, %s787
      %p791 = scmp.eq.s32.totalorder %s100, 0
      %p792 = por %p790, %p791
      %p793 = scmp.ne.s32.totalorder %s785, %s787
      %p794 = scmp.eq.s32.totalorder %s105, 1
      %p795 = por %p793, %p794
      %p796 = scmp.ne.s32.totalorder %s787, %s788
      %p797 = scmp.eq.s32.totalorder %s105, 0
      %p798 = por %p796, %p797
      %p799 = scmp.ne.s32.totalorder %s787, %s788
      %p800 = scmp.eq.s32.totalorder %s106, 1
      %p801 = por %p799, %p800
      %p803 = scmp.ne.s32.totalorder %s788, %s802
      %p804 = scmp.eq.s32.totalorder %s106, 0
      %p805 = por %p803, %p804
      %s807 = sadd.s32 %s806, 1
      %p810 = scmp.eq.s32.totalorder %s100, 1
      %p811 = scmp.ne.s32.totalorder %s806, %s808
      %p812 = scmp.eq.s32.totalorder %s100, 0
      %p813 = por %p811, %p812
      %p814 = scmp.ne.s32.totalorder %s806, %s808
      %p815 = scmp.eq.s32.totalorder %s105, 1
      %p816 = por %p814, %p815
      %p817 = scmp.ne.s32.totalorder %s808, %s809
      %p818 = scmp.eq.s32.totalorder %s105, 0
      %p819 = por %p817, %p818
      %p820 = scmp.ne.s32.totalorder %s808, %s809
      %p821 = scmp.eq.s32.totalorder %s106, 1
      %p822 = por %p820, %p821
      %p824 = scmp.ne.s32.totalorder %s809, %s823
      %p825 = scmp.eq.s32.totalorder %s106, 0
      %p826 = por %p824, %p825
      %s828 = sadd.s32 %s827, 1
      %p831 = scmp.eq.s32.totalorder %s100, 1
      %p832 = scmp.ne.s32.totalorder %s827, %s829
      %p833 = scmp.eq.s32.totalorder %s100, 0
      %p834 = por %p832, %p833
      %p835 = scmp.ne.s32.totalorder %s827, %s829
      %p836 = scmp.eq.s32.totalorder %s105, 1
      %p837 = por %p835, %p836
      %p838 = scmp.ne.s32.totalorder %s829, %s830
      %p839 = scmp.eq.s32.totalorder %s105, 0
      %p840 = por %p838, %p839
      %p841 = scmp.ne.s32.totalorder %s829, %s830
      %p842 = scmp.eq.s32.totalorder %s106, 1
      %p843 = por %p841, %p842
      %p845 = scmp.ne.s32.totalorder %s830, %s844
      %p846 = scmp.eq.s32.totalorder %s106, 0
      %p847 = por %p845, %p846
      %s849 = sadd.s32 %s848, 1
      %p852 = scmp.eq.s32.totalorder %s100, 1
      %p853 = scmp.ne.s32.totalorder %s848, %s850
      %p854 = scmp.eq.s32.totalorder %s100, 0
      %p855 = por %p853, %p854
      %p856 = scmp.ne.s32.totalorder %s848, %s850
      %p857 = scmp.eq.s32.totalorder %s105, 1
      %p858 = por %p856, %p857
      %p859 = scmp.ne.s32.totalorder %s850, %s851
      %p860 = scmp.eq.s32.totalorder %s105, 0
      %p861 = por %p859, %p860
      %p862 = scmp.ne.s32.totalorder %s850, %s851
      %p863 = scmp.eq.s32.totalorder %s106, 1
      %p864 = por %p862, %p863
      %p866 = scmp.ne.s32.totalorder %s851, %s865
      %p867 = scmp.eq.s32.totalorder %s106, 0
      %p868 = por %p866, %p867
      %s870 = sadd.s32 %s869, 1
      %p873 = scmp.eq.s32.totalorder %s100, 1
      %p874 = scmp.ne.s32.totalorder %s869, %s871
      %p875 = scmp.eq.s32.totalorder %s100, 0
      %p876 = por %p874, %p875
      %p877 = scmp.ne.s32.totalorder %s869, %s871
      %p878 = scmp.eq.s32.totalorder %s105, 1
      %p879 = por %p877, %p878
      %p880 = scmp.ne.s32.totalorder %s871, %s872
      %p881 = scmp.eq.s32.totalorder %s105, 0
      %p882 = por %p880, %p881
      %p883 = scmp.ne.s32.totalorder %s871, %s872
      %p884 = scmp.eq.s32.totalorder %s106, 1
      %p885 = por %p883, %p884
      %p887 = scmp.ne.s32.totalorder %s872, %s886
      %p888 = scmp.eq.s32.totalorder %s106, 0
      %p889 = por %p887, %p888
      %s890 = ssub.s32 %s100, %s107
      %p891 = scmp.eq.s32.totalorder %s890, 0
      %s893 = sadd.s32 %s892, 1
      %s894 = scalar_select %p891, %s892, %s893
      %p897 = pneg %p891
      %p898 = scmp.eq.s32.totalorder %s100, 1
      %p899 = por %p897, %p898
      %p900 = scmp.ne.s32.totalorder %s892, %s895
      %p901 = scmp.eq.s32.totalorder %s100, 0
      %p902 = por %p900, %p901
      %p903 = scmp.ne.s32.totalorder %s892, %s895
      %p904 = scmp.eq.s32.totalorder %s105, 1
      %p905 = por %p903, %p904
      %p906 = scmp.ne.s32.totalorder %s895, %s896
      %p907 = scmp.eq.s32.totalorder %s105, 0
      %p908 = por %p906, %p907
      %p909 = scmp.ne.s32.totalorder %s895, %s896
      %p910 = scmp.eq.s32.totalorder %s106, 1
      %p911 = por %p909, %p910
      %p913 = scmp.ne.s32.totalorder %s896, %s912
      %p914 = scmp.eq.s32.totalorder %s106, 0
      %p915 = por %p913, %p914
      %p916 = scmp.le.s32.totalorder 1, %s100
      %p917 = scmp.lt.s32.totalorder %s100, 3
      %p918 = pnand %p916, %p917
      %p919 = pneg %p918
      // Predicated region
      $region9: #{resnet_forward.1} parent=5 // pred_check
        _
      $region10: #{resnet_forward.1} parent=5 // pred_check_branch
        %921 = sbr.rel (%p918) target = $region12
      $region11: #{resnet_forward.1} parent=5 // pred_region
        %s922 = ssub.s32 %s100, 1
        // Predicated region
        $region13: #{resnet_forward.1} parent=11 // pred_check
          %p923 = pneg %p147
        $region14: #{resnet_forward.1} parent=11 // pred_check_branch
          %925 = sbr.rel (%p923) target = $region16
        $region15: #{resnet_forward.1} parent=11 // pred_region
          %927 = vsyncadd [#allocation3], 0
          %s929 = sshll.u32 %s3, 4
          %s930 = int_to_ptr.hbm [resolvable:$true] %s929
          %s931 = sshll.u32 [#allocation2], 4
          %s932 = int_to_ptr.vmem [resolvable:$true] %s931
          %934 = dma.hbm_to_vmem [thread:$0]  %s930, 64, %s932, [#allocation3]
        $region16: #{resnet_forward.1} parent=11 // pred_fallthru
          _
        // Predicated region
        $region17: #{resnet_forward.1} parent=11 // pred_check
          %p935 = pneg %p168
        $region18: #{resnet_forward.1} parent=11 // pred_check_branch
          %937 = sbr.rel (%p935) target = $region20
        $region19: #{resnet_forward.1} parent=11 // pred_region
          %939 = vsyncadd [#allocation5], 0
          %s941 = sshll.u32 %s5, 4
          %s942 = int_to_ptr.hbm [resolvable:$true] %s941
          %s943 = sshll.u32 [#allocation4], 4
          %s944 = int_to_ptr.vmem [resolvable:$true] %s943
          %946 = dma.hbm_to_vmem [thread:$0]  %s942, 16, %s944, [#allocation5]
        $region20: #{resnet_forward.1} parent=11 // pred_fallthru
          _
        // Predicated region
        $region21: #{resnet_forward.1} parent=11 // pred_check
          %p947 = pneg %p189
        $region22: #{resnet_forward.1} parent=11 // pred_check_branch
          %949 = sbr.rel (%p947) target = $region24
        $region23: #{resnet_forward.1} parent=11 // pred_region
          %951 = vsyncadd [#allocation5], 0
          %s953 = sshll.u32 %s7, 4
          %s954 = int_to_ptr.hbm [resolvable:$true] %s953
          %s955 = sshll.u32 [#allocation6], 4
          %s956 = int_to_ptr.vmem [resolvable:$true] %s955
          %958 = dma.hbm_to_vmem [thread:$0]  %s954, 16, %s956, [#allocation5]
        $region24: #{resnet_forward.1} parent=11 // pred_fallthru
          _
        // Predicated region
        $region25: #{resnet_forward.1} parent=11 // pred_check
          %p959 = pneg %p210
        $region26: #{resnet_forward.1} parent=11 // pred_check_branch
          %961 = sbr.rel (%p959) target = $region28
        $region27: #{resnet_forward.1} parent=11 // pred_region
          %963 = vsyncadd [#allocation8], 0
          %s964 = sshll.u32 %s9, 4
          %s965 = int_to_ptr.hbm [resolvable:$true] %s964
          %s966 = sshll.u32 [#allocation7], 4
          %s967 = int_to_ptr.vmem [resolvable:$true] %s966
          %972 = dma.hbm_to_vmem [thread:$0]  %s965, 3072, %s967, [#allocation8], 64, 64, 4
        $region28: #{resnet_forward.1} parent=11 // pred_fallthru
          _
        // Predicated region
        $region29: #{resnet_forward.1} parent=11 // pred_check
          %p973 = pneg %p231
        $region30: #{resnet_forward.1} parent=11 // pred_check_branch
          %975 = sbr.rel (%p973) target = $region32
        $region31: #{resnet_forward.1} parent=11 // pred_region
          %977 = vsyncadd [#allocation8], 0
          %s979 = sshll.u32 %s11, 4
          %s980 = int_to_ptr.hbm [resolvable:$true] %s979
          %s981 = sshll.u32 [#allocation9], 4
          %s982 = int_to_ptr.vmem [resolvable:$true] %s981
          %984 = dma.hbm_to_vmem [thread:$0]  %s980, 16, %s982, [#allocation8]
        $region32: #{resnet_forward.1} parent=11 // pred_fallthru
          _
        // Predicated region
        $region33: #{resnet_forward.1} parent=11 // pred_check
          %p985 = pneg %p252
        $region34: #{resnet_forward.1} parent=11 // pred_check_branch
          %987 = sbr.rel (%p985) target = $region36
        $region35: #{resnet_forward.1} parent=11 // pred_region
          %989 = vsyncadd [#allocation11], 0
          %s991 = sshll.u32 %s13, 4
          %s992 = int_to_ptr.hbm [resolvable:$true] %s991
          %s993 = sshll.u32 [#allocation10], 4
          %s994 = int_to_ptr.vmem [resolvable:$true] %s993
          %996 = dma.hbm_to_vmem [thread:$0]  %s992, 16, %s994, [#allocation11]
        $region36: #{resnet_forward.1} parent=11 // pred_fallthru
          _
        // Predicated region
        $region37: #{resnet_forward.1} parent=11 // pred_check
          %p997 = pneg %p273
        $region38: #{resnet_forward.1} parent=11 // pred_check_branch
          %999 = sbr.rel (%p997) target = $region40
        $region39: #{resnet_forward.1} parent=11 // pred_region
          %1001 = vsyncadd [#allocation11], 0
          %s1002 = sshll.u32 %s15, 4
          %s1003 = int_to_ptr.hbm [resolvable:$true] %s1002
          %s1004 = sshll.u32 [#allocation12], 4
          %s1005 = int_to_ptr.vmem [resolvable:$true] %s1004
          %1010 = dma.hbm_to_vmem [thread:$0]  %s1003, 3072, %s1005, [#allocation11], 64, 64, 4
        $region40: #{resnet_forward.1} parent=11 // pred_fallthru
          _
        // Predicated region
        $region41: #{resnet_forward.1} parent=11 // pred_check
          %p1011 = pneg %p294
        $region42: #{resnet_forward.1} parent=11 // pred_check_branch
          %1013 = sbr.rel (%p1011) target = $region44
        $region43: #{resnet_forward.1} parent=11 // pred_region
          %1015 = vsyncadd [#allocation14], 0
          %s1017 = sshll.u32 %s17, 4
          %s1018 = int_to_ptr.hbm [resolvable:$true] %s1017
          %s1019 = sshll.u32 [#allocation13], 4
          %s1020 = int_to_ptr.vmem [resolvable:$true] %s1019
          %1022 = dma.hbm_to_vmem [thread:$0]  %s1018, 16, %s1020, [#allocation14]
        $region44: #{resnet_forward.1} parent=11 // pred_fallthru
          _
        // Predicated region
        $region45: #{resnet_forward.1} parent=11 // pred_check
          %p1023 = pneg %p315
        $region46: #{resnet_forward.1} parent=11 // pred_check_branch
          %1025 = sbr.rel (%p1023) target = $region48
        $region47: #{resnet_forward.1} parent=11 // pred_region
          %1027 = vsyncadd [#allocation14], 0
          %s1029 = sshll.u32 %s19, 4
          %s1030 = int_to_ptr.hbm [resolvable:$true] %s1029
          %s1031 = sshll.u32 [#allocation15], 4
          %s1032 = int_to_ptr.vmem [resolvable:$true] %s1031
          %1034 = dma.hbm_to_vmem [thread:$0]  %s1030, 16, %s1032, [#allocation14]
        $region48: #{resnet_forward.1} parent=11 // pred_fallthru
          _
        // Predicated region
        $region49: #{resnet_forward.1} parent=11 // pred_check
          %p1035 = pneg %p336
        $region50: #{resnet_forward.1} parent=11 // pred_check_branch
          %1037 = sbr.rel (%p1035) target = $region52
        $region51: #{resnet_forward.1} parent=11 // pred_region
          %1039 = vsyncadd [#allocation17], 0
          %s1040 = sshll.u32 %s21, 4
          %s1041 = int_to_ptr.hbm [resolvable:$true] %s1040
          %s1042 = sshll.u32 [#allocation16], 4
          %s1043 = int_to_ptr.vmem [resolvable:$true] %s1042
          %1048 = dma.hbm_to_vmem [thread:$0]  %s1041, 3072, %s1043, [#allocation17], 64, 64, 4
        $region52: #{resnet_forward.1} parent=11 // pred_fallthru
          _
        // Predicated region
        $region53: #{resnet_forward.1} parent=11 // pred_check
          %p1049 = pneg %p357
        $region54: #{resnet_forward.1} parent=11 // pred_check_branch
          %1051 = sbr.rel (%p1049) target = $region56
        $region55: #{resnet_forward.1} parent=11 // pred_region
          %1053 = vsyncadd [#allocation17], 0
          %s1055 = sshll.u32 %s23, 4
          %s1056 = int_to_ptr.hbm [resolvable:$true] %s1055
          %s1057 = sshll.u32 [#allocation18], 4
          %s1058 = int_to_ptr.vmem [resolvable:$true] %s1057
          %1060 = dma.hbm_to_vmem [thread:$0]  %s1056, 16, %s1058, [#allocation17]
        $region56: #{resnet_forward.1} parent=11 // pred_fallthru
          _
        // Predicated region
        $region57: #{resnet_forward.1} parent=11 // pred_check
          %p1061 = pneg %p378
        $region58: #{resnet_forward.1} parent=11 // pred_check_branch
          %1063 = sbr.rel (%p1061) target = $region60
        $region59: #{resnet_forward.1} parent=11 // pred_region
          %1065 = vsyncadd [#allocation20], 0
          %s1067 = sshll.u32 %s25, 4
          %s1068 = int_to_ptr.hbm [resolvable:$true] %s1067
          %s1069 = sshll.u32 [#allocation19], 4
          %s1070 = int_to_ptr.vmem [resolvable:$true] %s1069
          %1072 = dma.hbm_to_vmem [thread:$0]  %s1068, 16, %s1070, [#allocation20]
        $region60: #{resnet_forward.1} parent=11 // pred_fallthru
          _
        // Predicated region
        $region61: #{resnet_forward.1} parent=11 // pred_check
          %p1073 = pneg %p399
        $region62: #{resnet_forward.1} parent=11 // pred_check_branch
          %1075 = sbr.rel (%p1073) target = $region64
        $region63: #{resnet_forward.1} parent=11 // pred_region
          %1077 = vsyncadd [#allocation20], 0
          %s1078 = sshll.u32 %s27, 4
          %s1079 = int_to_ptr.hbm [resolvable:$true] %s1078
          %s1080 = sshll.u32 [#allocation21], 4
          %s1081 = int_to_ptr.vmem [resolvable:$true] %s1080
          %1086 = dma.hbm_to_vmem [thread:$0]  %s1079, 3072, %s1081, [#allocation20], 64, 64, 4
        $region64: #{resnet_forward.1} parent=11 // pred_fallthru
          _
        // Predicated region
        $region65: #{resnet_forward.1} parent=11 // pred_check
          %p1087 = pneg %p420
        $region66: #{resnet_forward.1} parent=11 // pred_check_branch
          %1089 = sbr.rel (%p1087) target = $region68
        $region67: #{resnet_forward.1} parent=11 // pred_region
          %1091 = vsyncadd [#allocation23], 0
          %s1093 = sshll.u32 %s29, 4
          %s1094 = int_to_ptr.hbm [resolvable:$true] %s1093
          %s1095 = sshll.u32 [#allocation22], 4
          %s1096 = int_to_ptr.vmem [resolvable:$true] %s1095
          %1098 = dma.hbm_to_vmem [thread:$0]  %s1094, 16, %s1096, [#allocation23]
        $region68: #{resnet_forward.1} parent=11 // pred_fallthru
          _
        // Predicated region
        $region69: #{resnet_forward.1} parent=11 // pred_check
          %p1099 = pneg %p441
        $region70: #{resnet_forward.1} parent=11 // pred_check_branch
          %1101 = sbr.rel (%p1099) target = $region72
        $region71: #{resnet_forward.1} parent=11 // pred_region
          %1103 = vsyncadd [#allocation23], 0
          %s1105 = sshll.u32 %s31, 4
          %s1106 = int_to_ptr.hbm [resolvable:$true] %s1105
          %s1107 = sshll.u32 [#allocation24], 4
          %s1108 = int_to_ptr.vmem [resolvable:$true] %s1107
          %1110 = dma.hbm_to_vmem [thread:$0]  %s1106, 16, %s1108, [#allocation23]
        $region72: #{resnet_forward.1} parent=11 // pred_fallthru
          _
        // Predicated region
        $region73: #{resnet_forward.1} parent=11 // pred_check
          %p1111 = pneg %p462
        $region74: #{resnet_forward.1} parent=11 // pred_check_branch
          %1113 = sbr.rel (%p1111) target = $region76
        $region75: #{resnet_forward.1} parent=11 // pred_region
          %1115 = vsyncadd [#allocation26], 0
          %s1116 = sshll.u32 %s33, 4
          %s1117 = int_to_ptr.hbm [resolvable:$true] %s1116
          %s1118 = sshll.u32 [#allocation25], 4
          %s1119 = int_to_ptr.vmem [resolvable:$true] %s1118
          %1124 = dma.hbm_to_vmem [thread:$0]  %s1117, 1024, %s1119, [#allocation26], 64, 64, 4
        $region76: #{resnet_forward.1} parent=11 // pred_fallthru
          _
        // Predicated region
        $region77: #{resnet_forward.1} parent=11 // pred_check
          %p1125 = pneg %p483
        $region78: #{resnet_forward.1} parent=11 // pred_check_branch
          %1127 = sbr.rel (%p1125) target = $region80
        $region79: #{resnet_forward.1} parent=11 // pred_region
          %1129 = vsyncadd [#allocation26], 0
          %s1131 = sshll.u32 %s35, 4
          %s1132 = int_to_ptr.hbm [resolvable:$true] %s1131
          %s1133 = sshll.u32 [#allocation27], 4
          %s1134 = int_to_ptr.vmem [resolvable:$true] %s1133
          %1136 = dma.hbm_to_vmem [thread:$0]  %s1132, 16, %s1134, [#allocation26]
        $region80: #{resnet_forward.1} parent=11 // pred_fallthru
          _
        // Predicated region
        $region81: #{resnet_forward.1} parent=11 // pred_check
          %p1137 = pneg %p504
        $region82: #{resnet_forward.1} parent=11 // pred_check_branch
          %1139 = sbr.rel (%p1137) target = $region84
        $region83: #{resnet_forward.1} parent=11 // pred_region
          %1141 = vsyncadd [#allocation29], 0
          %s1143 = sshll.u32 %s37, 4
          %s1144 = int_to_ptr.hbm [resolvable:$true] %s1143
          %s1145 = sshll.u32 [#allocation28], 4
          %s1146 = int_to_ptr.vmem [resolvable:$true] %s1145
          %1148 = dma.hbm_to_vmem [thread:$0]  %s1144, 16, %s1146, [#allocation29]
        $region84: #{resnet_forward.1} parent=11 // pred_fallthru
          _
        // Predicated region
        $region85: #{resnet_forward.1} parent=11 // pred_check
          %p1149 = pneg %p525
        $region86: #{resnet_forward.1} parent=11 // pred_check_branch
          %1151 = sbr.rel (%p1149) target = $region88
        $region87: #{resnet_forward.1} parent=11 // pred_region
          %1153 = vsyncadd [#allocation29], 0
          %s1154 = sshll.u32 %s39, 4
          %s1155 = int_to_ptr.hbm [resolvable:$true] %s1154
          %s1156 = sshll.u32 [#allocation30], 4
          %s1157 = int_to_ptr.vmem [resolvable:$true] %s1156
          %1162 = dma.hbm_to_vmem [thread:$0]  %s1155, 6144, %s1157, [#allocation29], 128, 128, 8
        $region88: #{resnet_forward.1} parent=11 // pred_fallthru
          _
        // Predicated region
        $region89: #{resnet_forward.1} parent=11 // pred_check
          %p1163 = pneg %p546
        $region90: #{resnet_forward.1} parent=11 // pred_check_branch
          %1165 = sbr.rel (%p1163) target = $region92
        $region91: #{resnet_forward.1} parent=11 // pred_region
          %1167 = vsyncadd [#allocation32], 0
          %s1169 = sshll.u32 %s41, 4
          %s1170 = int_to_ptr.hbm [resolvable:$true] %s1169
          %s1171 = sshll.u32 [#allocation31], 4
          %s1172 = int_to_ptr.vmem [resolvable:$true] %s1171
          %1174 = dma.hbm_to_vmem [thread:$0]  %s1170, 32, %s1172, [#allocation32]
        $region92: #{resnet_forward.1} parent=11 // pred_fallthru
          _
        // Predicated region
        $region93: #{resnet_forward.1} parent=11 // pred_check
          %p1175 = pneg %p567
        $region94: #{resnet_forward.1} parent=11 // pred_check_branch
          %1177 = sbr.rel (%p1175) target = $region96
        $region95: #{resnet_forward.1} parent=11 // pred_region
          %1179 = vsyncadd [#allocation32], 0
          %s1181 = sshll.u32 %s43, 4
          %s1182 = int_to_ptr.hbm [resolvable:$true] %s1181
          %s1183 = sshll.u32 [#allocation33], 4
          %s1184 = int_to_ptr.vmem [resolvable:$true] %s1183
          %1186 = dma.hbm_to_vmem [thread:$0]  %s1182, 32, %s1184, [#allocation32]
        $region96: #{resnet_forward.1} parent=11 // pred_fallthru
          _
        // Predicated region
        $region97: #{resnet_forward.1} parent=11 // pred_check
          %p1187 = pneg %p588
        $region98: #{resnet_forward.1} parent=11 // pred_check_branch
          %1189 = sbr.rel (%p1187) target = $region100
        $region99: #{resnet_forward.1} parent=11 // pred_region
          %1191 = vsyncadd [#allocation35], 0
          %s1192 = sshll.u32 %s45, 4
          %s1193 = int_to_ptr.hbm [resolvable:$true] %s1192
          %s1194 = sshll.u32 [#allocation34], 4
          %s1195 = int_to_ptr.vmem [resolvable:$true] %s1194
          %1200 = dma.hbm_to_vmem [thread:$0]  %s1193, 12288, %s1195, [#allocation35], 128, 128, 8
        $region100: #{resnet_forward.1} parent=11 // pred_fallthru
          _
        // Predicated region
        $region101: #{resnet_forward.1} parent=11 // pred_check
          %p1201 = pneg %p609
        $region102: #{resnet_forward.1} parent=11 // pred_check_branch
          %1203 = sbr.rel (%p1201) target = $region104
        $region103: #{resnet_forward.1} parent=11 // pred_region
          %1205 = vsyncadd [#allocation35], 0
          %s1207 = sshll.u32 %s47, 4
          %s1208 = int_to_ptr.hbm [resolvable:$true] %s1207
          %s1209 = sshll.u32 [#allocation36], 4
          %s1210 = int_to_ptr.vmem [resolvable:$true] %s1209
          %1212 = dma.hbm_to_vmem [thread:$0]  %s1208, 32, %s1210, [#allocation35]
        $region104: #{resnet_forward.1} parent=11 // pred_fallthru
          _
        // Predicated region
        $region105: #{resnet_forward.1} parent=11 // pred_check
          %p1213 = pneg %p630
        $region106: #{resnet_forward.1} parent=11 // pred_check_branch
          %1215 = sbr.rel (%p1213) target = $region108
        $region107: #{resnet_forward.1} parent=11 // pred_region
          %1217 = vsyncadd [#allocation38], 0
          %s1219 = sshll.u32 %s49, 4
          %s1220 = int_to_ptr.hbm [resolvable:$true] %s1219
          %s1221 = sshll.u32 [#allocation37], 4
          %s1222 = int_to_ptr.vmem [resolvable:$true] %s1221
          %1224 = dma.hbm_to_vmem [thread:$0]  %s1220, 32, %s1222, [#allocation38]
        $region108: #{resnet_forward.1} parent=11 // pred_fallthru
          _
        // Predicated region
        $region109: #{resnet_forward.1} parent=11 // pred_check
          %p1225 = pneg %p651
        $region110: #{resnet_forward.1} parent=11 // pred_check_branch
          %1227 = sbr.rel (%p1225) target = $region112
        $region111: #{resnet_forward.1} parent=11 // pred_region
          %1229 = vsyncadd [#allocation38], 0
          %s1230 = sshll.u32 %s51, 4
          %s1231 = int_to_ptr.hbm [resolvable:$true] %s1230
          %s1232 = sshll.u32 [#allocation39], 4
          %s1233 = int_to_ptr.vmem [resolvable:$true] %s1232
          %1238 = dma.hbm_to_vmem [thread:$0]  %s1231, 2048, %s1233, [#allocation38], 128, 128, 8
        $region112: #{resnet_forward.1} parent=11 // pred_fallthru
          _
        // Predicated region
        $region113: #{resnet_forward.1} parent=11 // pred_check
          %p1239 = pneg %p672
        $region114: #{resnet_forward.1} parent=11 // pred_check_branch
          %1241 = sbr.rel (%p1239) target = $region116
        $region115: #{resnet_forward.1} parent=11 // pred_region
          %1243 = vsyncadd [#allocation41], 0
          %s1245 = sshll.u32 %s53, 4
          %s1246 = int_to_ptr.hbm [resolvable:$true] %s1245
          %s1247 = sshll.u32 [#allocation40], 4
          %s1248 = int_to_ptr.vmem [resolvable:$true] %s1247
          %1250 = dma.hbm_to_vmem [thread:$0]  %s1246, 32, %s1248, [#allocation41]
        $region116: #{resnet_forward.1} parent=11 // pred_fallthru
          _
        // Predicated region
        $region117: #{resnet_forward.1} parent=11 // pred_check
          %p1251 = pneg %p693
        $region118: #{resnet_forward.1} parent=11 // pred_check_branch
          %1253 = sbr.rel (%p1251) target = $region120
        $region119: #{resnet_forward.1} parent=11 // pred_region
          %1255 = vsyncadd [#allocation41], 0
          %s1257 = sshll.u32 %s55, 4
          %s1258 = int_to_ptr.hbm [resolvable:$true] %s1257
          %s1259 = sshll.u32 [#allocation42], 4
          %s1260 = int_to_ptr.vmem [resolvable:$true] %s1259
          %1262 = dma.hbm_to_vmem [thread:$0]  %s1258, 32, %s1260, [#allocation41]
        $region120: #{resnet_forward.1} parent=11 // pred_fallthru
          _
        // Predicated region
        $region121: #{resnet_forward.1} parent=11 // pred_check
          %p1263 = pneg %p714
        $region122: #{resnet_forward.1} parent=11 // pred_check_branch
          %1265 = sbr.rel (%p1263) target = $region124
        $region123: #{resnet_forward.1} parent=11 // pred_region
          %1267 = vsyncadd [#allocation44], 0
          %s1268 = sshll.u32 %s57, 4
          %s1269 = int_to_ptr.hbm [resolvable:$true] %s1268
          %s1270 = sshll.u32 [#allocation43], 4
          %s1271 = int_to_ptr.vmem [resolvable:$true] %s1270
          %1276 = dma.hbm_to_vmem [thread:$0]  %s1269, 24576, %s1271, [#allocation44], 256, 256, 16
        $region124: #{resnet_forward.1} parent=11 // pred_fallthru
          _
        // Predicated region
        $region125: #{resnet_forward.1} parent=11 // pred_check
          %p1277 = pneg %p735
        $region126: #{resnet_forward.1} parent=11 // pred_check_branch
          %1279 = sbr.rel (%p1277) target = $region128
        $region127: #{resnet_forward.1} parent=11 // pred_region
          %1281 = vsyncadd [#allocation44], 0
          %s1283 = sshll.u32 %s59, 4
          %s1284 = int_to_ptr.hbm [resolvable:$true] %s1283
          %s1285 = sshll.u32 [#allocation45], 4
          %s1286 = int_to_ptr.vmem [resolvable:$true] %s1285
          %1288 = dma.hbm_to_vmem [thread:$0]  %s1284, 64, %s1286, [#allocation44]
        $region128: #{resnet_forward.1} parent=11 // pred_fallthru
          _
        // Predicated region
        $region129: #{resnet_forward.1} parent=11 // pred_check
          %p1289 = pneg %p756
        $region130: #{resnet_forward.1} parent=11 // pred_check_branch
          %1291 = sbr.rel (%p1289) target = $region132
        $region131: #{resnet_forward.1} parent=11 // pred_region
          %1293 = vsyncadd [#allocation47], 0
          %s1295 = sshll.u32 %s61, 4
          %s1296 = int_to_ptr.hbm [resolvable:$true] %s1295
          %s1297 = sshll.u32 [#allocation46], 4
          %s1298 = int_to_ptr.vmem [resolvable:$true] %s1297
          %1300 = dma.hbm_to_vmem [thread:$0]  %s1296, 64, %s1298, [#allocation47]
        $region132: #{resnet_forward.1} parent=11 // pred_fallthru
          _
        // Predicated region
        $region133: #{resnet_forward.1} parent=11 // pred_check
          %p1301 = pneg %p777
        $region134: #{resnet_forward.1} parent=11 // pred_check_branch
          %1303 = sbr.rel (%p1301) target = $region136
        $region135: #{resnet_forward.1} parent=11 // pred_region
          %1305 = vsyncadd [#allocation47], 0
          %s1306 = sshll.u32 %s63, 4
          %s1307 = int_to_ptr.hbm [resolvable:$true] %s1306
          %s1308 = sshll.u32 [#allocation48], 4
          %s1309 = int_to_ptr.vmem [resolvable:$true] %s1308
          %1314 = dma.hbm_to_vmem [thread:$0]  %s1307, 49152, %s1309, [#allocation47], 256, 256, 16
        $region136: #{resnet_forward.1} parent=11 // pred_fallthru
          _
        // Predicated region
        $region137: #{resnet_forward.1} parent=11 // pred_check
          %p1315 = pneg %p798
        $region138: #{resnet_forward.1} parent=11 // pred_check_branch
          %1317 = sbr.rel (%p1315) target = $region140
        $region139: #{resnet_forward.1} parent=11 // pred_region
          %1319 = vsyncadd [#allocation50], 0
          %s1321 = sshll.u32 %s65, 4
          %s1322 = int_to_ptr.hbm [resolvable:$true] %s1321
          %s1323 = sshll.u32 [#allocation49], 4
          %s1324 = int_to_ptr.vmem [resolvable:$true] %s1323
          %1326 = dma.hbm_to_vmem [thread:$0]  %s1322, 64, %s1324, [#allocation50]
        $region140: #{resnet_forward.1} parent=11 // pred_fallthru
          _
        // Predicated region
        $region141: #{resnet_forward.1} parent=11 // pred_check
          %p1327 = pneg %p819
        $region142: #{resnet_forward.1} parent=11 // pred_check_branch
          %1329 = sbr.rel (%p1327) target = $region144
        $region143: #{resnet_forward.1} parent=11 // pred_region
          %1331 = vsyncadd [#allocation50], 0
          %s1333 = sshll.u32 %s67, 4
          %s1334 = int_to_ptr.hbm [resolvable:$true] %s1333
          %s1335 = sshll.u32 [#allocation51], 4
          %s1336 = int_to_ptr.vmem [resolvable:$true] %s1335
          %1338 = dma.hbm_to_vmem [thread:$0]  %s1334, 64, %s1336, [#allocation50]
        $region144: #{resnet_forward.1} parent=11 // pred_fallthru
          _
        // Predicated region
        $region145: #{resnet_forward.1} parent=11 // pred_check
          %p1339 = pneg %p840
        $region146: #{resnet_forward.1} parent=11 // pred_check_branch
          %1341 = sbr.rel (%p1339) target = $region148
        $region147: #{resnet_forward.1} parent=11 // pred_region
          %1343 = vsyncadd [#allocation53], 0
          %s1344 = sshll.u32 %s69, 4
          %s1345 = int_to_ptr.hbm [resolvable:$true] %s1344
          %s1346 = sshll.u32 [#allocation52], 4
          %s1347 = int_to_ptr.vmem [resolvable:$true] %s1346
          %1352 = dma.hbm_to_vmem [thread:$0]  %s1345, 8192, %s1347, [#allocation53], 256, 256, 16
        $region148: #{resnet_forward.1} parent=11 // pred_fallthru
          _
        // Predicated region
        $region149: #{resnet_forward.1} parent=11 // pred_check
          %p1353 = pneg %p861
        $region150: #{resnet_forward.1} parent=11 // pred_check_branch
          %1355 = sbr.rel (%p1353) target = $region152
        $region151: #{resnet_forward.1} parent=11 // pred_region
          %1357 = vsyncadd [#allocation53], 0
          %s1359 = sshll.u32 %s71, 4
          %s1360 = int_to_ptr.hbm [resolvable:$true] %s1359
          %s1361 = sshll.u32 [#allocation54], 4
          %s1362 = int_to_ptr.vmem [resolvable:$true] %s1361
          %1364 = dma.hbm_to_vmem [thread:$0]  %s1360, 64, %s1362, [#allocation53]
        $region152: #{resnet_forward.1} parent=11 // pred_fallthru
          _
        // Predicated region
        $region153: #{resnet_forward.1} parent=11 // pred_check
          %p1365 = pneg %p882
        $region154: #{resnet_forward.1} parent=11 // pred_check_branch
          %1367 = sbr.rel (%p1365) target = $region156
        $region155: #{resnet_forward.1} parent=11 // pred_region
          %1369 = vsyncadd [#allocation56], 0
          %s1371 = sshll.u32 %s73, 4
          %s1372 = int_to_ptr.hbm [resolvable:$true] %s1371
          %s1373 = sshll.u32 [#allocation55], 4
          %s1374 = int_to_ptr.vmem [resolvable:$true] %s1373
          %1376 = dma.hbm_to_vmem [thread:$0]  %s1372, 64, %s1374, [#allocation56]
        $region156: #{resnet_forward.1} parent=11 // pred_fallthru
          _
      $region12: #{resnet_forward.1} parent=5 // pred_fallthru
        _
      %p1377 = scmp.lt.s32.totalorder %s100, 2
      // Predicated region
      $region157: #{resnet_forward.1} parent=5 // pred_check
        %p1378 = pneg %p1377
      $region158: #{resnet_forward.1} parent=5 // pred_check_branch
        %1380 = sbr.rel (%p1378) target = $region160
      $region159: #{resnet_forward.1} parent=5 // pred_region
        // Predicated region
        $region161: #{resnet_forward.1} parent=159 // pred_check
          %p1381 = pneg %p120
        $region162: #{resnet_forward.1} parent=159 // pred_check_branch
          %1383 = sbr.rel (%p1381) target = $region164
        $region163: #{resnet_forward.1} parent=159 // pred_region
          %p1384 = scmp.lt.s32.totalorder %s100, 1
          %s1385 = scalar_select %p1384, %s100, 1
          %s1386 = smul.addr %s1385, 8
          %s1387 = smul.addr %s1386, 4
          %s1388 = scalar_lea.vmem %s1, %s1387
        $region164: #{resnet_forward.1} parent=159 // pred_fallthru
          _
      $region160: #{resnet_forward.1} parent=5 // pred_fallthru
        _
      %p1389 = scmp.le.s32.totalorder 1, %s100
      %p1390 = scmp.lt.s32.totalorder %s100, 3
      %p1391 = pnand %p1389, %p1390
      %p1392 = pneg %p1391
      // Predicated region
      $region165: #{resnet_forward.1} parent=5 // pred_check
        _
      $region166: #{resnet_forward.1} parent=5 // pred_check_branch
        %1394 = sbr.rel (%p1391) target = $region168
      $region167: #{resnet_forward.1} parent=5 // pred_region
        %s1395 = ssub.s32 %s100, 1
        // Predicated region
        $region169: #{resnet_forward.1} parent=167 // pred_check
          %p1396 = pneg %p147
        $region170: #{resnet_forward.1} parent=167 // pred_check_branch
          %1398 = sbr.rel (%p1396) target = $region172
        $region171: #{resnet_forward.1} parent=167 // pred_region
          %1400 = dma.done [#allocation3], 64
        $region172: #{resnet_forward.1} parent=167 // pred_fallthru
          _
        // Predicated region
        $region173: #{resnet_forward.1} parent=167 // pred_check
          %p1401 = pneg %p168
        $region174: #{resnet_forward.1} parent=167 // pred_check_branch
          %1403 = sbr.rel (%p1401) target = $region176
        $region175: #{resnet_forward.1} parent=167 // pred_region
          %1405 = dma.done [#allocation5], 16
        $region176: #{resnet_forward.1} parent=167 // pred_fallthru
          _
        // Predicated region
        $region177: #{resnet_forward.1} parent=167 // pred_check
          %p1406 = pneg %p189
        $region178: #{resnet_forward.1} parent=167 // pred_check_branch
          %1408 = sbr.rel (%p1406) target = $region180
        $region179: #{resnet_forward.1} parent=167 // pred_region
          %1410 = dma.done [#allocation5], 16
        $region180: #{resnet_forward.1} parent=167 // pred_fallthru
          _
        // Predicated region
        $region181: #{resnet_forward.1} parent=167 // pred_check
          %p1411 = pneg %p210
        $region182: #{resnet_forward.1} parent=167 // pred_check_branch
          %1413 = sbr.rel (%p1411) target = $region184
        $region183: #{resnet_forward.1} parent=167 // pred_region
          %1415 = dma.done [#allocation8], 3072
        $region184: #{resnet_forward.1} parent=167 // pred_fallthru
          _
        // Predicated region
        $region185: #{resnet_forward.1} parent=167 // pred_check
          %p1416 = pneg %p231
        $region186: #{resnet_forward.1} parent=167 // pred_check_branch
          %1418 = sbr.rel (%p1416) target = $region188
        $region187: #{resnet_forward.1} parent=167 // pred_region
          %1420 = dma.done [#allocation8], 16
        $region188: #{resnet_forward.1} parent=167 // pred_fallthru
          _
        // Predicated region
        $region189: #{resnet_forward.1} parent=167 // pred_check
          %p1421 = pneg %p252
        $region190: #{resnet_forward.1} parent=167 // pred_check_branch
          %1423 = sbr.rel (%p1421) target = $region192
        $region191: #{resnet_forward.1} parent=167 // pred_region
          %1425 = dma.done [#allocation11], 16
        $region192: #{resnet_forward.1} parent=167 // pred_fallthru
          _
        // Predicated region
        $region193: #{resnet_forward.1} parent=167 // pred_check
          %p1426 = pneg %p273
        $region194: #{resnet_forward.1} parent=167 // pred_check_branch
          %1428 = sbr.rel (%p1426) target = $region196
        $region195: #{resnet_forward.1} parent=167 // pred_region
          %1430 = dma.done [#allocation11], 3072
        $region196: #{resnet_forward.1} parent=167 // pred_fallthru
          _
        // Predicated region
        $region197: #{resnet_forward.1} parent=167 // pred_check
          %p1431 = pneg %p294
        $region198: #{resnet_forward.1} parent=167 // pred_check_branch
          %1433 = sbr.rel (%p1431) target = $region200
        $region199: #{resnet_forward.1} parent=167 // pred_region
          %1435 = dma.done [#allocation14], 16
        $region200: #{resnet_forward.1} parent=167 // pred_fallthru
          _
        // Predicated region
        $region201: #{resnet_forward.1} parent=167 // pred_check
          %p1436 = pneg %p315
        $region202: #{resnet_forward.1} parent=167 // pred_check_branch
          %1438 = sbr.rel (%p1436) target = $region204
        $region203: #{resnet_forward.1} parent=167 // pred_region
          %1440 = dma.done [#allocation14], 16
        $region204: #{resnet_forward.1} parent=167 // pred_fallthru
          _
        // Predicated region
        $region205: #{resnet_forward.1} parent=167 // pred_check
          %p1441 = pneg %p336
        $region206: #{resnet_forward.1} parent=167 // pred_check_branch
          %1443 = sbr.rel (%p1441) target = $region208
        $region207: #{resnet_forward.1} parent=167 // pred_region
          %1445 = dma.done [#allocation17], 3072
        $region208: #{resnet_forward.1} parent=167 // pred_fallthru
          _
        // Predicated region
        $region209: #{resnet_forward.1} parent=167 // pred_check
          %p1446 = pneg %p357
        $region210: #{resnet_forward.1} parent=167 // pred_check_branch
          %1448 = sbr.rel (%p1446) target = $region212
        $region211: #{resnet_forward.1} parent=167 // pred_region
          %1450 = dma.done [#allocation17], 16
        $region212: #{resnet_forward.1} parent=167 // pred_fallthru
          _
        // Predicated region
        $region213: #{resnet_forward.1} parent=167 // pred_check
          %p1451 = pneg %p378
        $region214: #{resnet_forward.1} parent=167 // pred_check_branch
          %1453 = sbr.rel (%p1451) target = $region216
        $region215: #{resnet_forward.1} parent=167 // pred_region
          %1455 = dma.done [#allocation20], 16
        $region216: #{resnet_forward.1} parent=167 // pred_fallthru
          _
        // Predicated region
        $region217: #{resnet_forward.1} parent=167 // pred_check
          %p1456 = pneg %p399
        $region218: #{resnet_forward.1} parent=167 // pred_check_branch
          %1458 = sbr.rel (%p1456) target = $region220
        $region219: #{resnet_forward.1} parent=167 // pred_region
          %1460 = dma.done [#allocation20], 3072
        $region220: #{resnet_forward.1} parent=167 // pred_fallthru
          _
        // Predicated region
        $region221: #{resnet_forward.1} parent=167 // pred_check
          %p1461 = pneg %p420
        $region222: #{resnet_forward.1} parent=167 // pred_check_branch
          %1463 = sbr.rel (%p1461) target = $region224
        $region223: #{resnet_forward.1} parent=167 // pred_region
          %1465 = dma.done [#allocation23], 16
        $region224: #{resnet_forward.1} parent=167 // pred_fallthru
          _
        // Predicated region
        $region225: #{resnet_forward.1} parent=167 // pred_check
          %p1466 = pneg %p441
        $region226: #{resnet_forward.1} parent=167 // pred_check_branch
          %1468 = sbr.rel (%p1466) target = $region228
        $region227: #{resnet_forward.1} parent=167 // pred_region
          %1470 = dma.done [#allocation23], 16
        $region228: #{resnet_forward.1} parent=167 // pred_fallthru
          _
        // Predicated region
        $region229: #{resnet_forward.1} parent=167 // pred_check
          %p1471 = pneg %p462
        $region230: #{resnet_forward.1} parent=167 // pred_check_branch
          %1473 = sbr.rel (%p1471) target = $region232
        $region231: #{resnet_forward.1} parent=167 // pred_region
          %1475 = dma.done [#allocation26], 1024
        $region232: #{resnet_forward.1} parent=167 // pred_fallthru
          _
        // Predicated region
        $region233: #{resnet_forward.1} parent=167 // pred_check
          %p1476 = pneg %p483
        $region234: #{resnet_forward.1} parent=167 // pred_check_branch
          %1478 = sbr.rel (%p1476) target = $region236
        $region235: #{resnet_forward.1} parent=167 // pred_region
          %1480 = dma.done [#allocation26], 16
        $region236: #{resnet_forward.1} parent=167 // pred_fallthru
          _
        // Predicated region
        $region237: #{resnet_forward.1} parent=167 // pred_check
          %p1481 = pneg %p504
        $region238: #{resnet_forward.1} parent=167 // pred_check_branch
          %1483 = sbr.rel (%p1481) target = $region240
        $region239: #{resnet_forward.1} parent=167 // pred_region
          %1485 = dma.done [#allocation29], 16
        $region240: #{resnet_forward.1} parent=167 // pred_fallthru
          _
        // Predicated region
        $region241: #{resnet_forward.1} parent=167 // pred_check
          %p1486 = pneg %p525
        $region242: #{resnet_forward.1} parent=167 // pred_check_branch
          %1488 = sbr.rel (%p1486) target = $region244
        $region243: #{resnet_forward.1} parent=167 // pred_region
          %1490 = dma.done [#allocation29], 6144
        $region244: #{resnet_forward.1} parent=167 // pred_fallthru
          _
        // Predicated region
        $region245: #{resnet_forward.1} parent=167 // pred_check
          %p1491 = pneg %p546
        $region246: #{resnet_forward.1} parent=167 // pred_check_branch
          %1493 = sbr.rel (%p1491) target = $region248
        $region247: #{resnet_forward.1} parent=167 // pred_region
          %1495 = dma.done [#allocation32], 32
        $region248: #{resnet_forward.1} parent=167 // pred_fallthru
          _
        // Predicated region
        $region249: #{resnet_forward.1} parent=167 // pred_check
          %p1496 = pneg %p567
        $region250: #{resnet_forward.1} parent=167 // pred_check_branch
          %1498 = sbr.rel (%p1496) target = $region252
        $region251: #{resnet_forward.1} parent=167 // pred_region
          %1500 = dma.done [#allocation32], 32
        $region252: #{resnet_forward.1} parent=167 // pred_fallthru
          _
        // Predicated region
        $region253: #{resnet_forward.1} parent=167 // pred_check
          %p1501 = pneg %p588
        $region254: #{resnet_forward.1} parent=167 // pred_check_branch
          %1503 = sbr.rel (%p1501) target = $region256
        $region255: #{resnet_forward.1} parent=167 // pred_region
          %1505 = dma.done [#allocation35], 12288
        $region256: #{resnet_forward.1} parent=167 // pred_fallthru
          _
        // Predicated region
        $region257: #{resnet_forward.1} parent=167 // pred_check
          %p1506 = pneg %p609
        $region258: #{resnet_forward.1} parent=167 // pred_check_branch
          %1508 = sbr.rel (%p1506) target = $region260
        $region259: #{resnet_forward.1} parent=167 // pred_region
          %1510 = dma.done [#allocation35], 32
        $region260: #{resnet_forward.1} parent=167 // pred_fallthru
          _
        // Predicated region
        $region261: #{resnet_forward.1} parent=167 // pred_check
          %p1511 = pneg %p630
        $region262: #{resnet_forward.1} parent=167 // pred_check_branch
          %1513 = sbr.rel (%p1511) target = $region264
        $region263: #{resnet_forward.1} parent=167 // pred_region
          %1515 = dma.done [#allocation38], 32
        $region264: #{resnet_forward.1} parent=167 // pred_fallthru
          _
        // Predicated region
        $region265: #{resnet_forward.1} parent=167 // pred_check
          %p1516 = pneg %p651
        $region266: #{resnet_forward.1} parent=167 // pred_check_branch
          %1518 = sbr.rel (%p1516) target = $region268
        $region267: #{resnet_forward.1} parent=167 // pred_region
          %1520 = dma.done [#allocation38], 2048
        $region268: #{resnet_forward.1} parent=167 // pred_fallthru
          _
        // Predicated region
        $region269: #{resnet_forward.1} parent=167 // pred_check
          %p1521 = pneg %p672
        $region270: #{resnet_forward.1} parent=167 // pred_check_branch
          %1523 = sbr.rel (%p1521) target = $region272
        $region271: #{resnet_forward.1} parent=167 // pred_region
          %1525 = dma.done [#allocation41], 32
        $region272: #{resnet_forward.1} parent=167 // pred_fallthru
          _
        // Predicated region
        $region273: #{resnet_forward.1} parent=167 // pred_check
          %p1526 = pneg %p693
        $region274: #{resnet_forward.1} parent=167 // pred_check_branch
          %1528 = sbr.rel (%p1526) target = $region276
        $region275: #{resnet_forward.1} parent=167 // pred_region
          %1530 = dma.done [#allocation41], 32
        $region276: #{resnet_forward.1} parent=167 // pred_fallthru
          _
        // Predicated region
        $region277: #{resnet_forward.1} parent=167 // pred_check
          %p1531 = pneg %p714
        $region278: #{resnet_forward.1} parent=167 // pred_check_branch
          %1533 = sbr.rel (%p1531) target = $region280
        $region279: #{resnet_forward.1} parent=167 // pred_region
          %1535 = dma.done [#allocation44], 24576
        $region280: #{resnet_forward.1} parent=167 // pred_fallthru
          _
        // Predicated region
        $region281: #{resnet_forward.1} parent=167 // pred_check
          %p1536 = pneg %p735
        $region282: #{resnet_forward.1} parent=167 // pred_check_branch
          %1538 = sbr.rel (%p1536) target = $region284
        $region283: #{resnet_forward.1} parent=167 // pred_region
          %1540 = dma.done [#allocation44], 64
        $region284: #{resnet_forward.1} parent=167 // pred_fallthru
          _
        // Predicated region
        $region285: #{resnet_forward.1} parent=167 // pred_check
          %p1541 = pneg %p756
        $region286: #{resnet_forward.1} parent=167 // pred_check_branch
          %1543 = sbr.rel (%p1541) target = $region288
        $region287: #{resnet_forward.1} parent=167 // pred_region
          %1545 = dma.done [#allocation47], 64
        $region288: #{resnet_forward.1} parent=167 // pred_fallthru
          _
        // Predicated region
        $region289: #{resnet_forward.1} parent=167 // pred_check
          %p1546 = pneg %p777
        $region290: #{resnet_forward.1} parent=167 // pred_check_branch
          %1548 = sbr.rel (%p1546) target = $region292
        $region291: #{resnet_forward.1} parent=167 // pred_region
          %1550 = dma.done [#allocation47], 49152
        $region292: #{resnet_forward.1} parent=167 // pred_fallthru
          _
        // Predicated region
        $region293: #{resnet_forward.1} parent=167 // pred_check
          %p1551 = pneg %p798
        $region294: #{resnet_forward.1} parent=167 // pred_check_branch
          %1553 = sbr.rel (%p1551) target = $region296
        $region295: #{resnet_forward.1} parent=167 // pred_region
          %1555 = dma.done [#allocation50], 64
        $region296: #{resnet_forward.1} parent=167 // pred_fallthru
          _
        // Predicated region
        $region297: #{resnet_forward.1} parent=167 // pred_check
          %p1556 = pneg %p819
        $region298: #{resnet_forward.1} parent=167 // pred_check_branch
          %1558 = sbr.rel (%p1556) target = $region300
        $region299: #{resnet_forward.1} parent=167 // pred_region
          %1560 = dma.done [#allocation50], 64
        $region300: #{resnet_forward.1} parent=167 // pred_fallthru
          _
        // Predicated region
        $region301: #{resnet_forward.1} parent=167 // pred_check
          %p1561 = pneg %p840
        $region302: #{resnet_forward.1} parent=167 // pred_check_branch
          %1563 = sbr.rel (%p1561) target = $region304
        $region303: #{resnet_forward.1} parent=167 // pred_region
          %1565 = dma.done [#allocation53], 8192
        $region304: #{resnet_forward.1} parent=167 // pred_fallthru
          _
        // Predicated region
        $region305: #{resnet_forward.1} parent=167 // pred_check
          %p1566 = pneg %p861
        $region306: #{resnet_forward.1} parent=167 // pred_check_branch
          %1568 = sbr.rel (%p1566) target = $region308
        $region307: #{resnet_forward.1} parent=167 // pred_region
          %1570 = dma.done [#allocation53], 64
        $region308: #{resnet_forward.1} parent=167 // pred_fallthru
          _
        // Predicated region
        $region309: #{resnet_forward.1} parent=167 // pred_check
          %p1571 = pneg %p882
        $region310: #{resnet_forward.1} parent=167 // pred_check_branch
          %1573 = sbr.rel (%p1571) target = $region312
        $region311: #{resnet_forward.1} parent=167 // pred_region
          %1575 = dma.done [#allocation56], 64
        $region312: #{resnet_forward.1} parent=167 // pred_fallthru
          _
        %p1576 = scmp.lt.s32.totalorder %s105, 1
        %s1577 = scalar_select %p1576, %s105, 1
        %s1578 = smul.addr %s1577, 8
        %s1579 = smul.addr %s1578, 4
        %s1580 = scalar_lea.vmem %s1, %s1579
        %p1581 = pneg %p126
        %p1582 = pneg %p123
        %p1583 = pneg %p147
        %p1584 = pneg %p144
        %p1585 = pneg %p168
        %p1586 = pneg %p165
        %p1587 = pneg %p189
        %p1588 = pneg %p186
        %p1589 = pneg %p210
        %p1590 = pneg %p207
        %p1591 = pneg %p231
        %p1592 = pneg %p228
        %p1593 = pneg %p252
        %p1594 = pneg %p249
        %p1595 = pneg %p273
        %p1596 = pneg %p270
        %p1597 = pneg %p294
        %p1598 = pneg %p291
        %p1599 = pneg %p315
        %p1600 = pneg %p312
        %p1601 = pneg %p336
        %p1602 = pneg %p333
        %p1603 = pneg %p357
        %p1604 = pneg %p354
        %p1605 = pneg %p378
        %p1606 = pneg %p375
        %p1607 = pneg %p399
        %p1608 = pneg %p396
        %p1609 = pneg %p420
        %p1610 = pneg %p417
        %p1611 = pneg %p441
        %p1612 = pneg %p438
        %p1613 = pneg %p462
        %p1614 = pneg %p459
        %p1615 = pneg %p483
        %p1616 = pneg %p480
        %p1617 = pneg %p504
        %p1618 = pneg %p501
        %p1619 = pneg %p525
        %p1620 = pneg %p522
        %p1621 = pneg %p546
        %p1622 = pneg %p543
        %p1623 = pneg %p567
        %p1624 = pneg %p564
        %p1625 = pneg %p588
        %p1626 = pneg %p585
        %p1627 = pneg %p609
        %p1628 = pneg %p606
        %p1629 = pneg %p630
        %p1630 = pneg %p627
        %p1631 = pneg %p651
        %p1632 = pneg %p648
        %p1633 = pneg %p672
        %p1634 = pneg %p669
        %p1635 = pneg %p693
        %p1636 = pneg %p690
        %p1637 = pneg %p714
        %p1638 = pneg %p711
        %p1639 = pneg %p735
        %p1640 = pneg %p732
        %p1641 = pneg %p756
        %p1642 = pneg %p753
        %p1643 = pneg %p777
        %p1644 = pneg %p774
        %p1645 = pneg %p798
        %p1646 = pneg %p795
        %p1647 = pneg %p819
        %p1648 = pneg %p816
        %p1649 = pneg %p840
        %p1650 = pneg %p837
        %p1651 = pneg %p861
        %p1652 = pneg %p858
        %p1653 = pneg %p882
        %p1654 = pneg %p879
        %p1655 = pneg %p908
        %p1656 = pneg %p905
        %p1657 = scmp.lt.s32.totalorder %s105, 1
        %s1658 = scalar_select %p1657, %s105, 1
        %s1659 = smul.addr %s1658, 4
        %s1660 = smul.addr %s1659, 2
        %s1661 = scalar_lea.vmem %s75, %s1660
        %p1662 = scmp.lt.s32.totalorder %s105, 1
        %s1663 = scalar_select %p1662, %s105, 1
        %s1664 = smul.addr %s1663, 8
        %s1665 = smul.addr %s1664, 4
        %s1666 = scalar_lea.vmem %s1, %s1665
        %p1667 = scmp.lt.s32.totalorder %s105, 1
        %s1668 = scalar_select %p1667, %s105, 1
        %s1669 = smul.addr %s1668, 4
        %s1670 = smul.addr %s1669, 2
        %s1671 = scalar_lea.vmem %s75, %s1670
        %v1673 = vld [vmem:[%s1666] sm:$0xf]
        %v1674 = vld [vmem:[%s1666 + $0x4] sm:$0xf]
        %v1675 = vld [vmem:[%s1666 + $0x8] sm:$0xf]
        %v1676 = vld [vmem:[%s1666 + $0xc] sm:$0xf]
        %v1677 = vld [vmem:[%s1666 + $0x10] sm:$0xf]
        %v1678 = vld [vmem:[%s1666 + $0x14] sm:$0xf]
        %v1679 = vld [vmem:[%s1666 + $0x18] sm:$0xf]
        %v1680 = vld [vmem:[%s1666 + $0x1c] sm:$0xf]
        %v1681 = vld [vmem:[#allocation2] sm:$0xf]
        %v1690 = vunpack.c.l.b16 %v1673
        %v1691 = vunpack.c.l.b16 %v1674
        %v1692 = vunpack.c.l.b16 %v1675
        %v1693 = vunpack.c.l.b16 %v1676
        %v1694 = vunpack.c.l.b16 %v1677
        %v1695 = vunpack.c.l.b16 %v1678
        %v1696 = vunpack.c.l.b16 %v1679
        %v1697 = vunpack.c.l.b16 %v1680
        %v1698 = vpack.c.b16 %v1691, %v1690
        %v1699 = vpack.c.b16 %v1693, %v1692
        %v1700 = vpack.c.b16 %v1695, %v1694
        %v1701 = vpack.c.b16 %v1697, %v1696
        %vm1702 = vcmask 64512
        %v1704 = vsel %vm1702, %v1698, 0
        %v1707 = vsel %vm1702, %v1699, 0
        %v1710 = vsel %vm1702, %v1700, 0
        %v1713 = vsel %vm1702, %v1701, 0
        %vm1715 = vcmask 1043456
        %v1717 = vsel %vm1715, %v1681, 0
        %1719 = vmatpush.bf16.msra.mxu0 0
        %1720 = vmatpush.bf16.msra.mxu0 0
        %1721 = vmatpush.bf16.msra.mxu0 0
        %1722 = vmatpush.bf16.msra.mxu0 0
        %1723 = vmatpush.bf16.msra.mxu0 0
        %1724 = vmatpush.bf16.msra.mxu0 0
        %1725 = vmatpush.bf16.msra.mxu0 0
        %1726 = vmatpush.bf16.msra.mxu0 %v1717
        %1727 = vmatmul.bf16.gmra.mxu0 %v1704
        %v1728 = vpop.f32.mrf.mxu0
        %v1729 = vadd.f32 0.0, %v1728
        %v1730 = vpop.f32.mrf.mxu0
        %v1731 = vadd.f32 0.0, %v1730
        %1732 = vmatmul.bf16.gmra.mxu0 %v1707
        %v1733 = vpop.f32.mrf.mxu0
        %v1734 = vadd.f32 0.0, %v1733
        %v1735 = vpop.f32.mrf.mxu0
        %v1736 = vadd.f32 0.0, %v1735
        %1737 = vmatmul.bf16.gmra.mxu0 %v1710
        %v1738 = vpop.f32.mrf.mxu0
        %v1739 = vadd.f32 0.0, %v1738
        %v1740 = vpop.f32.mrf.mxu0
        %v1741 = vadd.f32 0.0, %v1740
        %1742 = vmatmul.bf16.gmra.mxu0 %v1713
        %v1743 = vpop.f32.mrf.mxu0
        %v1744 = vadd.f32 0.0, %v1743
        %v1745 = vpop.f32.mrf.mxu0
        %v1746 = vadd.f32 0.0, %v1745
        %1747 = vdwg.mxu0
        %v1748 = vld [vmem:[#allocation4] sm:$0x1]
        %v1750 = vperm.slane %v1748, 0
        %v1752 = vmul.f32 %v1729, %v1750
        %v1753 = vmul.f32 %v1731, %v1750
        %v1754 = vmul.f32 %v1734, %v1750
        %v1755 = vmul.f32 %v1736, %v1750
        %v1756 = vmul.f32 %v1739, %v1750
        %v1757 = vmul.f32 %v1741, %v1750
        %v1758 = vmul.f32 %v1744, %v1750
        %v1759 = vmul.f32 %v1746, %v1750
        %v1760 = vld [vmem:[#allocation6] sm:$0x1]
        %v1762 = vperm.slane %v1760, 0
        %v1764 = vadd.f32 %v1752, %v1762
        %v1765 = vadd.f32 %v1753, %v1762
        %v1766 = vadd.f32 %v1754, %v1762
        %v1767 = vadd.f32 %v1755, %v1762
        %v1768 = vadd.f32 %v1756, %v1762
        %v1769 = vadd.f32 %v1757, %v1762
        %v1770 = vadd.f32 %v1758, %v1762
        %v1771 = vadd.f32 %v1759, %v1762
        %v1772 = vmax.f32 %v1764, 0.0
        %v1773 = vmax.f32 %v1765, 0.0
        %v1774 = vmax.f32 %v1766, 0.0
        %v1775 = vmax.f32 %v1767, 0.0
        %v1776 = vmax.f32 %v1768, 0.0
        %v1777 = vmax.f32 %v1769, 0.0
        %v1778 = vmax.f32 %v1770, 0.0
        %v1779 = vmax.f32 %v1771, 0.0
        %v1780 = vpack.c.bf16 %v1772, %v1772
        %v1781 = vpack.c.bf16 %v1773, %v1773
        %v1782 = vpack.c.bf16 %v1774, %v1774
        %v1783 = vpack.c.bf16 %v1775, %v1775
        %v1784 = vpack.c.bf16 %v1776, %v1776
        %v1785 = vpack.c.bf16 %v1777, %v1777
        %v1786 = vpack.c.bf16 %v1778, %v1778
        %v1787 = vpack.c.bf16 %v1779, %v1779
        %v1788 = vlaneseq
        %v1789 = vshrl.u32 %v1788, 7
        %v1790 = vadd.s32 %v1789, 8
        %v1791 = vadd.s32 %v1789, 16
        %v1792 = vadd.s32 %v1789, 24
        %v1793 = vlaneseq
        %v1794 = vand.u32 %v1793, 127
        %v1795 = vadd.s32 %v1789, 4294967295
        %v1796 = vadd.s32 %v1790, 4294967295
        %v1797 = vadd.s32 %v1791, 4294967295
        %v1798 = vadd.s32 %v1792, 4294967295
        %vm1799 = vcmp.eq.s32.totalorder %v1794, %v1795
        %vm1800 = vcmp.eq.s32.totalorder %v1794, %v1796
        %vm1801 = vcmp.eq.s32.totalorder %v1794, %v1797
        %vm1802 = vcmp.eq.s32.totalorder %v1794, %v1798
        %v1803 = vsel %vm1799, 1, 0
        %v1804 = vsel %vm1800, 1, 0
        %v1805 = vsel %vm1801, 1, 0
        %v1806 = vsel %vm1802, 1, 0
        %v1807 = vcvt.s32.f32 %v1803
        %v1808 = vcvt.s32.f32 %v1804
        %v1809 = vcvt.s32.f32 %v1805
        %v1810 = vcvt.s32.f32 %v1806
        %v1811 = vpack.c.bf16 %v1808, %v1807
        %v1812 = vpack.c.bf16 %v1810, %v1809
        %v1817 = vunpack.c.l.b16 %v1784
        %v1818 = vunpack.c.l.b16 %v1785
        %v1819 = vunpack.c.l.b16 %v1786
        %v1820 = vunpack.c.l.b16 %v1787
        %v1821 = vpack.c.b16 %v1818, %v1817
        %v1822 = vpack.c.b16 %v1820, %v1819
        %vm1825 = vcmask 261120
        %v1827 = vsel %vm1825, %v1811, 0
        %v1830 = vsel %vm1825, %v1812, 0
        %1832 = vmatpush.bf16.msra.mxu0 0
        %1833 = vmatpush.bf16.msra.mxu0 0
        %1834 = vmatpush.bf16.msra.mxu0 0
        %1835 = vmatpush.bf16.msra.mxu0 0
        %1836 = vmatpush.bf16.msra.mxu0 0
        %1837 = vmatpush.bf16.msra.mxu0 0
        %1838 = vmatpush.bf16.msra.mxu0 %v1822
        %1839 = vmatpush.bf16.msra.mxu0 %v1821
        %1840 = vmatmul.bf16.gmra.mxu0 %v1827
        %v1841 = vpop.f32.mrf.mxu0
        %v1842 = vadd.f32 0.0, %v1841
        %v1843 = vpop.f32.mrf.mxu0
        %v1844 = vadd.f32 0.0, %v1843
        %1845 = vmatmul.bf16.gmra.mxu0 %v1830
        %v1846 = vpop.f32.mrf.mxu0
        %v1847 = vadd.f32 0.0, %v1846
        %v1848 = vpop.f32.mrf.mxu0
        %v1849 = vadd.f32 0.0, %v1848
        %1850 = vdwg.mxu0
        %v1851 = vpack.c.bf16 %v1842, %v1842
        %v1852 = vpack.c.bf16 %v1844, %v1844
        %v1853 = vpack.c.bf16 %v1847, %v1847
        %v1854 = vpack.c.bf16 %v1849, %v1849
        %v1855 = vunpack.c.l.bf16 %v1780
        %v1856 = vunpack.c.l.bf16 %v1781
        %v1857 = vunpack.c.l.bf16 %v1782
        %v1858 = vunpack.c.l.bf16 %v1783
        %v1859 = vunpack.c.l.bf16 %v1784
        %v1860 = vunpack.c.l.bf16 %v1785
        %v1861 = vunpack.c.l.bf16 %v1786
        %v1862 = vunpack.c.l.bf16 %v1787
        %v1863 = vmax.f32 %v1855, %v1859
        %v1864 = vmax.f32 %v1856, %v1860
        %v1865 = vmax.f32 %v1857, %v1861
        %v1866 = vmax.f32 %v1858, %v1862
        %v1867 = vpack.c.bf16 %v1863, %v1863
        %v1868 = vpack.c.bf16 %v1864, %v1864
        %v1869 = vpack.c.bf16 %v1865, %v1865
        %v1870 = vpack.c.bf16 %v1866, %v1866
        %v1871 = vunpack.c.l.bf16 %v1867
        %v1872 = vunpack.c.l.bf16 %v1868
        %v1873 = vunpack.c.l.bf16 %v1869
        %v1874 = vunpack.c.l.bf16 %v1870
        %v1875 = vunpack.c.l.bf16 %v1851
        %v1876 = vunpack.c.l.bf16 %v1852
        %v1877 = vunpack.c.l.bf16 %v1853
        %v1878 = vunpack.c.l.bf16 %v1854
        %v1879 = vmax.f32 %v1871, %v1875
        %v1880 = vmax.f32 %v1872, %v1876
        %v1881 = vmax.f32 %v1873, %v1877
        %v1882 = vmax.f32 %v1874, %v1878
        %v1883 = vpack.c.bf16 %v1879, %v1879
        %v1884 = vpack.c.bf16 %v1880, %v1880
        %v1885 = vpack.c.bf16 %v1881, %v1881
        %v1886 = vpack.c.bf16 %v1882, %v1882
        %v1891 = vunpack.c.l.b16 %v1883
        %v1892 = vunpack.c.l.b16 %v1884
        %v1893 = vunpack.c.l.b16 %v1885
        %v1894 = vunpack.c.l.b16 %v1886
        %v1895 = vpack.c.b16 %v1892, %v1891
        %v1896 = vpack.c.b16 %v1894, %v1893
        %1899 = vmatpush.bf16.msra.mxu0 0
        %1900 = vmatpush.bf16.msra.mxu0 0
        %1901 = vmatpush.bf16.msra.mxu0 0
        %1902 = vmatpush.bf16.msra.mxu0 0
        %1903 = vmatpush.bf16.msra.mxu0 0
        %1904 = vmatpush.bf16.msra.mxu0 0
        %1905 = vmatpush.bf16.msra.mxu0 %v1896
        %1906 = vmatpush.bf16.msra.mxu0 %v1895
        %1907 = vmatmul.bf16.gmra.mxu0 %v1827
        %v1908 = vpop.f32.mrf.mxu0
        %v1909 = vadd.f32 0.0, %v1908
        %v1910 = vpop.f32.mrf.mxu0
        %v1911 = vadd.f32 0.0, %v1910
        %1912 = vmatmul.bf16.gmra.mxu0 %v1830
        %v1913 = vpop.f32.mrf.mxu0
        %v1914 = vadd.f32 0.0, %v1913
        %v1915 = vpop.f32.mrf.mxu0
        %v1916 = vadd.f32 0.0, %v1915
        %1917 = vdwg.mxu0
        %v1918 = vpack.c.bf16 %v1911, %v1909
        %v1919 = vpack.c.bf16 %v1916, %v1914
        %v1920 = vadd.s32 %v1789, 1
        %v1921 = vadd.s32 %v1790, 1
        %v1922 = vadd.s32 %v1791, 1
        %v1923 = vadd.s32 %v1792, 1
        %vm1924 = vcmp.eq.s32.totalorder %v1794, %v1920
        %vm1925 = vcmp.eq.s32.totalorder %v1794, %v1921
        %vm1926 = vcmp.eq.s32.totalorder %v1794, %v1922
        %vm1927 = vcmp.eq.s32.totalorder %v1794, %v1923
        %v1928 = vsel %vm1924, 1, 0
        %v1929 = vsel %vm1925, 1, 0
        %v1930 = vsel %vm1926, 1, 0
        %v1931 = vsel %vm1927, 1, 0
        %v1932 = vcvt.s32.f32 %v1928
        %v1933 = vcvt.s32.f32 %v1929
        %v1934 = vcvt.s32.f32 %v1930
        %v1935 = vcvt.s32.f32 %v1931
        %v1936 = vpack.c.bf16 %v1933, %v1932
        %v1937 = vpack.c.bf16 %v1935, %v1934
        %v1939 = vsel %vm1825, %v1936, 0
        %v1942 = vsel %vm1825, %v1937, 0
        %1944 = vmatpush.bf16.msra.mxu0 0
        %1945 = vmatpush.bf16.msra.mxu0 0
        %1946 = vmatpush.bf16.msra.mxu0 0
        %1947 = vmatpush.bf16.msra.mxu0 0
        %1948 = vmatpush.bf16.msra.mxu0 0
        %1949 = vmatpush.bf16.msra.mxu0 0
        %1950 = vmatpush.bf16.msra.mxu0 %v1896
        %1951 = vmatpush.bf16.msra.mxu0 %v1895
        %1952 = vmatmul.bf16.gmra.mxu0 %v1939
        %v1953 = vpop.f32.mrf.mxu0
        %v1954 = vadd.f32 0.0, %v1953
        %v1955 = vpop.f32.mrf.mxu0
        %v1956 = vadd.f32 0.0, %v1955
        %1957 = vmatmul.bf16.gmra.mxu0 %v1942
        %v1958 = vpop.f32.mrf.mxu0
        %v1959 = vadd.f32 0.0, %v1958
        %v1960 = vpop.f32.mrf.mxu0
        %v1961 = vadd.f32 0.0, %v1960
        %1962 = vdwg.mxu0
        %v1963 = vpack.c.bf16 %v1956, %v1954
        %v1964 = vpack.c.bf16 %v1961, %v1959
        %v1965 = vld [vmem:[#allocation7] sm:$0xf]
        %v1966 = vld [vmem:[#allocation7 + $0x4] sm:$0xf]
        %v1967 = vld [vmem:[#allocation7 + $0x8] sm:$0xf]
        %v1968 = vld [vmem:[#allocation7 + $0xc] sm:$0xf]
        %v1969 = vld [vmem:[#allocation7 + $0x10] sm:$0xf]
        %v1970 = vld [vmem:[#allocation7 + $0x14] sm:$0xf]
        %v1971 = vld [vmem:[#allocation7 + $0x18] sm:$0xf]
        %v1972 = vld [vmem:[#allocation7 + $0x1c] sm:$0xf]
        %v1973 = vld [vmem:[#allocation7 + $0x20] sm:$0xf]
        %v1974 = vld [vmem:[#allocation7 + $0x24] sm:$0xf]
        %v1975 = vld [vmem:[#allocation7 + $0x28] sm:$0xf]
        %v1976 = vld [vmem:[#allocation7 + $0x2c] sm:$0xf]
        %v1977 = vld [vmem:[#allocation7 + $0x30] sm:$0xf]
        %v1978 = vld [vmem:[#allocation7 + $0x34] sm:$0xf]
        %v1979 = vld [vmem:[#allocation7 + $0x38] sm:$0xf]
        %v1980 = vld [vmem:[#allocation7 + $0x3c] sm:$0xf]
        %v1981 = vld [vmem:[#allocation7 + $0x40] sm:$0xf]
        %v1982 = vld [vmem:[#allocation7 + $0x44] sm:$0xf]
        %v1983 = vld [vmem:[#allocation7 + $0x48] sm:$0xf]
        %v1984 = vld [vmem:[#allocation7 + $0x4c] sm:$0xf]
        %v1985 = vld [vmem:[#allocation7 + $0x50] sm:$0xf]
        %v1986 = vld [vmem:[#allocation7 + $0x54] sm:$0xf]
        %v1987 = vld [vmem:[#allocation7 + $0x58] sm:$0xf]
        %v1988 = vld [vmem:[#allocation7 + $0x5c] sm:$0xf]
        %v1989 = vld [vmem:[#allocation7 + $0x60] sm:$0xf]
        %v1990 = vld [vmem:[#allocation7 + $0x64] sm:$0xf]
        %v1991 = vld [vmem:[#allocation7 + $0x68] sm:$0xf]
        %v1992 = vld [vmem:[#allocation7 + $0x6c] sm:$0xf]
        %v1993 = vld [vmem:[#allocation7 + $0x70] sm:$0xf]
        %v1994 = vld [vmem:[#allocation7 + $0x74] sm:$0xf]
        %v1995 = vld [vmem:[#allocation7 + $0x78] sm:$0xf]
        %v1996 = vld [vmem:[#allocation7 + $0x7c] sm:$0xf]
        %v2013 = vunpack.c.l.b16 %v1981
        %v2014 = vunpack.c.l.b16 %v1982
        %v2015 = vunpack.c.l.b16 %v1983
        %v2016 = vunpack.c.l.b16 %v1984
        %v2017 = vunpack.c.l.b16 %v1985
        %v2018 = vunpack.c.l.b16 %v1986
        %v2019 = vunpack.c.l.b16 %v1987
        %v2020 = vunpack.c.l.b16 %v1988
        %v2021 = vunpack.c.l.b16 %v1989
        %v2022 = vunpack.c.l.b16 %v1990
        %v2023 = vunpack.c.l.b16 %v1991
        %v2024 = vunpack.c.l.b16 %v1992
        %v2025 = vunpack.c.l.b16 %v1993
        %v2026 = vunpack.c.l.b16 %v1994
        %v2027 = vunpack.c.l.b16 %v1995
        %v2028 = vunpack.c.l.b16 %v1996
        %v2029 = vpack.c.b16 %v2014, %v2013
        %v2030 = vpack.c.b16 %v2016, %v2015
        %v2031 = vpack.c.b16 %v2018, %v2017
        %v2032 = vpack.c.b16 %v2020, %v2019
        %v2033 = vpack.c.b16 %v2022, %v2021
        %v2034 = vpack.c.b16 %v2024, %v2023
        %v2035 = vpack.c.b16 %v2026, %v2025
        %v2036 = vpack.c.b16 %v2028, %v2027
        %2045 = vmatpush.bf16.msra.mxu0 %v2036
        %2046 = vmatpush.bf16.msra.mxu0 %v2035
        %2047 = vmatpush.bf16.msra.mxu0 %v2034
        %2048 = vmatpush.bf16.msra.mxu0 %v2033
        %2049 = vmatpush.bf16.msra.mxu0 %v2032
        %2050 = vmatpush.bf16.msra.mxu0 %v2031
        %2051 = vmatpush.bf16.msra.mxu0 %v2030
        %2052 = vmatpush.bf16.msra.mxu0 %v2029
        %2053 = vmatmul.bf16.gmra.mxu0 %v1895
        %v2054 = vpop.f32.mrf.mxu0
        %v2055 = vadd.f32 0.0, %v2054
        %v2056 = vpop.f32.mrf.mxu0
        %v2057 = vadd.f32 0.0, %v2056
        %2058 = vmatmul.bf16.gmra.mxu0 %v1896
        %v2059 = vpop.f32.mrf.mxu0
        %v2060 = vadd.f32 0.0, %v2059
        %v2061 = vpop.f32.mrf.mxu0
        %v2062 = vadd.f32 0.0, %v2061
        %2063 = vdwg.mxu0
        %v2080 = vunpack.c.l.b16 %v1965
        %v2081 = vunpack.c.l.b16 %v1966
        %v2082 = vunpack.c.l.b16 %v1967
        %v2083 = vunpack.c.l.b16 %v1968
        %v2084 = vunpack.c.l.b16 %v1969
        %v2085 = vunpack.c.l.b16 %v1970
        %v2086 = vunpack.c.l.b16 %v1971
        %v2087 = vunpack.c.l.b16 %v1972
        %v2088 = vunpack.c.l.b16 %v1973
        %v2089 = vunpack.c.l.b16 %v1974
        %v2090 = vunpack.c.l.b16 %v1975
        %v2091 = vunpack.c.l.b16 %v1976
        %v2092 = vunpack.c.l.b16 %v1977
        %v2093 = vunpack.c.l.b16 %v1978
        %v2094 = vunpack.c.l.b16 %v1979
        %v2095 = vunpack.c.l.b16 %v1980
        %v2096 = vpack.c.b16 %v2081, %v2080
        %v2097 = vpack.c.b16 %v2083, %v2082
        %v2098 = vpack.c.b16 %v2085, %v2084
        %v2099 = vpack.c.b16 %v2087, %v2086
        %v2100 = vpack.c.b16 %v2089, %v2088
        %v2101 = vpack.c.b16 %v2091, %v2090
        %v2102 = vpack.c.b16 %v2093, %v2092
        %v2103 = vpack.c.b16 %v2095, %v2094
        %2112 = vmatpush.bf16.msra.mxu0 %v2103
        %2113 = vmatpush.bf16.msra.mxu0 %v2102
        %2114 = vmatpush.bf16.msra.mxu0 %v2101
        %2115 = vmatpush.bf16.msra.mxu0 %v2100
        %2116 = vmatpush.bf16.msra.mxu0 %v2099
        %2117 = vmatpush.bf16.msra.mxu0 %v2098
        %2118 = vmatpush.bf16.msra.mxu0 %v2097
        %2119 = vmatpush.bf16.msra.mxu0 %v2096
        %2120 = vmatmul.bf16.gmra.mxu0 %v1918
        %v2121 = vpop.f32.mrf.mxu0
        %v2122 = vadd.f32 %v2055, %v2121
        %v2123 = vpop.f32.mrf.mxu0
        %v2124 = vadd.f32 %v2057, %v2123
        %2125 = vmatmul.bf16.gmra.mxu0 %v1919
        %v2126 = vpop.f32.mrf.mxu0
        %v2127 = vadd.f32 %v2060, %v2126
        %v2128 = vpop.f32.mrf.mxu0
        %v2129 = vadd.f32 %v2062, %v2128
        %2130 = vdwg.mxu0
        %v2131 = vld [vmem:[#allocation7 + $0x80] sm:$0xf]
        %v2132 = vld [vmem:[#allocation7 + $0x84] sm:$0xf]
        %v2133 = vld [vmem:[#allocation7 + $0x88] sm:$0xf]
        %v2134 = vld [vmem:[#allocation7 + $0x8c] sm:$0xf]
        %v2135 = vld [vmem:[#allocation7 + $0x90] sm:$0xf]
        %v2136 = vld [vmem:[#allocation7 + $0x94] sm:$0xf]
        %v2137 = vld [vmem:[#allocation7 + $0x98] sm:$0xf]
        %v2138 = vld [vmem:[#allocation7 + $0x9c] sm:$0xf]
        %v2139 = vld [vmem:[#allocation7 + $0xa0] sm:$0xf]
        %v2140 = vld [vmem:[#allocation7 + $0xa4] sm:$0xf]
        %v2141 = vld [vmem:[#allocation7 + $0xa8] sm:$0xf]
        %v2142 = vld [vmem:[#allocation7 + $0xac] sm:$0xf]
        %v2143 = vld [vmem:[#allocation7 + $0xb0] sm:$0xf]
        %v2144 = vld [vmem:[#allocation7 + $0xb4] sm:$0xf]
        %v2145 = vld [vmem:[#allocation7 + $0xb8] sm:$0xf]
        %v2146 = vld [vmem:[#allocation7 + $0xbc] sm:$0xf]
        %v2163 = vunpack.c.l.b16 %v2131
        %v2164 = vunpack.c.l.b16 %v2132
        %v2165 = vunpack.c.l.b16 %v2133
        %v2166 = vunpack.c.l.b16 %v2134
        %v2167 = vunpack.c.l.b16 %v2135
        %v2168 = vunpack.c.l.b16 %v2136
        %v2169 = vunpack.c.l.b16 %v2137
        %v2170 = vunpack.c.l.b16 %v2138
        %v2171 = vunpack.c.l.b16 %v2139
        %v2172 = vunpack.c.l.b16 %v2140
        %v2173 = vunpack.c.l.b16 %v2141
        %v2174 = vunpack.c.l.b16 %v2142
        %v2175 = vunpack.c.l.b16 %v2143
        %v2176 = vunpack.c.l.b16 %v2144
        %v2177 = vunpack.c.l.b16 %v2145
        %v2178 = vunpack.c.l.b16 %v2146
        %v2179 = vpack.c.b16 %v2164, %v2163
        %v2180 = vpack.c.b16 %v2166, %v2165
        %v2181 = vpack.c.b16 %v2168, %v2167
        %v2182 = vpack.c.b16 %v2170, %v2169
        %v2183 = vpack.c.b16 %v2172, %v2171
        %v2184 = vpack.c.b16 %v2174, %v2173
        %v2185 = vpack.c.b16 %v2176, %v2175
        %v2186 = vpack.c.b16 %v2178, %v2177
        %2195 = vmatpush.bf16.msra.mxu0 %v2186
        %2196 = vmatpush.bf16.msra.mxu0 %v2185
        %2197 = vmatpush.bf16.msra.mxu0 %v2184
        %2198 = vmatpush.bf16.msra.mxu0 %v2183
        %2199 = vmatpush.bf16.msra.mxu0 %v2182
        %2200 = vmatpush.bf16.msra.mxu0 %v2181
        %2201 = vmatpush.bf16.msra.mxu0 %v2180
        %2202 = vmatpush.bf16.msra.mxu0 %v2179
        %2203 = vmatmul.bf16.gmra.mxu0 %v1963
        %v2204 = vpop.f32.mrf.mxu0
        %v2205 = vadd.f32 0.0, %v2204
        %v2206 = vpop.f32.mrf.mxu0
        %v2207 = vadd.f32 0.0, %v2206
        %2208 = vmatmul.bf16.gmra.mxu0 %v1964
        %v2209 = vpop.f32.mrf.mxu0
        %v2210 = vadd.f32 0.0, %v2209
        %v2211 = vpop.f32.mrf.mxu0
        %v2212 = vadd.f32 0.0, %v2211
        %2213 = vdwg.mxu0
        %v2214 = vadd.f32 %v2122, %v2205
        %v2215 = vadd.f32 %v2124, %v2207
        %v2216 = vadd.f32 %v2127, %v2210
        %v2217 = vadd.f32 %v2129, %v2212
        %v2218 = vld [vmem:[#allocation9] sm:$0x1]
        %v2220 = vperm.slane %v2218, 0
        %v2222 = vmul.f32 %v2214, %v2220
        %v2223 = vmul.f32 %v2215, %v2220
        %v2224 = vmul.f32 %v2216, %v2220
        %v2225 = vmul.f32 %v2217, %v2220
        %v2226 = vld [vmem:[#allocation10] sm:$0x1]
        %v2228 = vperm.slane %v2226, 0
        %v2230 = vadd.f32 %v2222, %v2228
        %v2231 = vadd.f32 %v2223, %v2228
        %v2232 = vadd.f32 %v2224, %v2228
        %v2233 = vadd.f32 %v2225, %v2228
        %v2234 = vmax.f32 %v2230, 0.0
        %v2235 = vmax.f32 %v2231, 0.0
        %v2236 = vmax.f32 %v2232, 0.0
        %v2237 = vmax.f32 %v2233, 0.0
        %v2238 = vpack.c.bf16 %v2235, %v2234
        %v2239 = vpack.c.bf16 %v2237, %v2236
        %2240 = vmatpush.bf16.msra.mxu0 0
        %2241 = vmatpush.bf16.msra.mxu0 0
        %2242 = vmatpush.bf16.msra.mxu0 0
        %2243 = vmatpush.bf16.msra.mxu0 0
        %2244 = vmatpush.bf16.msra.mxu0 0
        %2245 = vmatpush.bf16.msra.mxu0 0
        %2246 = vmatpush.bf16.msra.mxu0 %v2239
        %2247 = vmatpush.bf16.msra.mxu0 %v2238
        %2248 = vmatmul.bf16.gmra.mxu0 %v1827
        %v2249 = vpop.f32.mrf.mxu0
        %v2250 = vadd.f32 0.0, %v2249
        %v2251 = vpop.f32.mrf.mxu0
        %v2252 = vadd.f32 0.0, %v2251
        %2253 = vmatmul.bf16.gmra.mxu0 %v1830
        %v2254 = vpop.f32.mrf.mxu0
        %v2255 = vadd.f32 0.0, %v2254
        %v2256 = vpop.f32.mrf.mxu0
        %v2257 = vadd.f32 0.0, %v2256
        %2258 = vdwg.mxu0
        %v2259 = vpack.c.bf16 %v2252, %v2250
        %v2260 = vpack.c.bf16 %v2257, %v2255
        %2261 = vmatpush.bf16.msra.mxu0 0
        %2262 = vmatpush.bf16.msra.mxu0 0
        %2263 = vmatpush.bf16.msra.mxu0 0
        %2264 = vmatpush.bf16.msra.mxu0 0
        %2265 = vmatpush.bf16.msra.mxu0 0
        %2266 = vmatpush.bf16.msra.mxu0 0
        %2267 = vmatpush.bf16.msra.mxu0 %v2239
        %2268 = vmatpush.bf16.msra.mxu0 %v2238
        %2269 = vmatmul.bf16.gmra.mxu0 %v1939
        %v2270 = vpop.f32.mrf.mxu0
        %v2271 = vadd.f32 0.0, %v2270
        %v2272 = vpop.f32.mrf.mxu0
        %v2273 = vadd.f32 0.0, %v2272
        %2274 = vmatmul.bf16.gmra.mxu0 %v1942
        %v2275 = vpop.f32.mrf.mxu0
        %v2276 = vadd.f32 0.0, %v2275
        %v2277 = vpop.f32.mrf.mxu0
        %v2278 = vadd.f32 0.0, %v2277
        %2279 = vdwg.mxu0
        %v2280 = vpack.c.bf16 %v2273, %v2271
        %v2281 = vpack.c.bf16 %v2278, %v2276
        %v2282 = vld [vmem:[#allocation12] sm:$0xf]
        %v2283 = vld [vmem:[#allocation12 + $0x4] sm:$0xf]
        %v2284 = vld [vmem:[#allocation12 + $0x8] sm:$0xf]
        %v2285 = vld [vmem:[#allocation12 + $0xc] sm:$0xf]
        %v2286 = vld [vmem:[#allocation12 + $0x10] sm:$0xf]
        %v2287 = vld [vmem:[#allocation12 + $0x14] sm:$0xf]
        %v2288 = vld [vmem:[#allocation12 + $0x18] sm:$0xf]
        %v2289 = vld [vmem:[#allocation12 + $0x1c] sm:$0xf]
        %v2290 = vld [vmem:[#allocation12 + $0x20] sm:$0xf]
        %v2291 = vld [vmem:[#allocation12 + $0x24] sm:$0xf]
        %v2292 = vld [vmem:[#allocation12 + $0x28] sm:$0xf]
        %v2293 = vld [vmem:[#allocation12 + $0x2c] sm:$0xf]
        %v2294 = vld [vmem:[#allocation12 + $0x30] sm:$0xf]
        %v2295 = vld [vmem:[#allocation12 + $0x34] sm:$0xf]
        %v2296 = vld [vmem:[#allocation12 + $0x38] sm:$0xf]
        %v2297 = vld [vmem:[#allocation12 + $0x3c] sm:$0xf]
        %v2298 = vld [vmem:[#allocation12 + $0x40] sm:$0xf]
        %v2299 = vld [vmem:[#allocation12 + $0x44] sm:$0xf]
        %v2300 = vld [vmem:[#allocation12 + $0x48] sm:$0xf]
        %v2301 = vld [vmem:[#allocation12 + $0x4c] sm:$0xf]
        %v2302 = vld [vmem:[#allocation12 + $0x50] sm:$0xf]
        %v2303 = vld [vmem:[#allocation12 + $0x54] sm:$0xf]
        %v2304 = vld [vmem:[#allocation12 + $0x58] sm:$0xf]
        %v2305 = vld [vmem:[#allocation12 + $0x5c] sm:$0xf]
        %v2306 = vld [vmem:[#allocation12 + $0x60] sm:$0xf]
        %v2307 = vld [vmem:[#allocation12 + $0x64] sm:$0xf]
        %v2308 = vld [vmem:[#allocation12 + $0x68] sm:$0xf]
        %v2309 = vld [vmem:[#allocation12 + $0x6c] sm:$0xf]
        %v2310 = vld [vmem:[#allocation12 + $0x70] sm:$0xf]
        %v2311 = vld [vmem:[#allocation12 + $0x74] sm:$0xf]
        %v2312 = vld [vmem:[#allocation12 + $0x78] sm:$0xf]
        %v2313 = vld [vmem:[#allocation12 + $0x7c] sm:$0xf]
        %v2330 = vunpack.c.l.b16 %v2298
        %v2331 = vunpack.c.l.b16 %v2299
        %v2332 = vunpack.c.l.b16 %v2300
        %v2333 = vunpack.c.l.b16 %v2301
        %v2334 = vunpack.c.l.b16 %v2302
        %v2335 = vunpack.c.l.b16 %v2303
        %v2336 = vunpack.c.l.b16 %v2304
        %v2337 = vunpack.c.l.b16 %v2305
        %v2338 = vunpack.c.l.b16 %v2306
        %v2339 = vunpack.c.l.b16 %v2307
        %v2340 = vunpack.c.l.b16 %v2308
        %v2341 = vunpack.c.l.b16 %v2309
        %v2342 = vunpack.c.l.b16 %v2310
        %v2343 = vunpack.c.l.b16 %v2311
        %v2344 = vunpack.c.l.b16 %v2312
        %v2345 = vunpack.c.l.b16 %v2313
        %v2346 = vpack.c.b16 %v2331, %v2330
        %v2347 = vpack.c.b16 %v2333, %v2332
        %v2348 = vpack.c.b16 %v2335, %v2334
        %v2349 = vpack.c.b16 %v2337, %v2336
        %v2350 = vpack.c.b16 %v2339, %v2338
        %v2351 = vpack.c.b16 %v2341, %v2340
        %v2352 = vpack.c.b16 %v2343, %v2342
        %v2353 = vpack.c.b16 %v2345, %v2344
        %2362 = vmatpush.bf16.msra.mxu0 %v2353
        %2363 = vmatpush.bf16.msra.mxu0 %v2352
        %2364 = vmatpush.bf16.msra.mxu0 %v2351
        %2365 = vmatpush.bf16.msra.mxu0 %v2350
        %2366 = vmatpush.bf16.msra.mxu0 %v2349
        %2367 = vmatpush.bf16.msra.mxu0 %v2348
        %2368 = vmatpush.bf16.msra.mxu0 %v2347
        %2369 = vmatpush.bf16.msra.mxu0 %v2346
        %2370 = vmatmul.bf16.gmra.mxu0 %v2238
        %v2371 = vpop.f32.mrf.mxu0
        %v2372 = vadd.f32 0.0, %v2371
        %v2373 = vpop.f32.mrf.mxu0
        %v2374 = vadd.f32 0.0, %v2373
        %2375 = vmatmul.bf16.gmra.mxu0 %v2239
        %v2376 = vpop.f32.mrf.mxu0
        %v2377 = vadd.f32 0.0, %v2376
        %v2378 = vpop.f32.mrf.mxu0
        %v2379 = vadd.f32 0.0, %v2378
        %2380 = vdwg.mxu0
        %v2397 = vunpack.c.l.b16 %v2282
        %v2398 = vunpack.c.l.b16 %v2283
        %v2399 = vunpack.c.l.b16 %v2284
        %v2400 = vunpack.c.l.b16 %v2285
        %v2401 = vunpack.c.l.b16 %v2286
        %v2402 = vunpack.c.l.b16 %v2287
        %v2403 = vunpack.c.l.b16 %v2288
        %v2404 = vunpack.c.l.b16 %v2289
        %v2405 = vunpack.c.l.b16 %v2290
        %v2406 = vunpack.c.l.b16 %v2291
        %v2407 = vunpack.c.l.b16 %v2292
        %v2408 = vunpack.c.l.b16 %v2293
        %v2409 = vunpack.c.l.b16 %v2294
        %v2410 = vunpack.c.l.b16 %v2295
        %v2411 = vunpack.c.l.b16 %v2296
        %v2412 = vunpack.c.l.b16 %v2297
        %v2413 = vpack.c.b16 %v2398, %v2397
        %v2414 = vpack.c.b16 %v2400, %v2399
        %v2415 = vpack.c.b16 %v2402, %v2401
        %v2416 = vpack.c.b16 %v2404, %v2403
        %v2417 = vpack.c.b16 %v2406, %v2405
        %v2418 = vpack.c.b16 %v2408, %v2407
        %v2419 = vpack.c.b16 %v2410, %v2409
        %v2420 = vpack.c.b16 %v2412, %v2411
        %2429 = vmatpush.bf16.msra.mxu0 %v2420
        %2430 = vmatpush.bf16.msra.mxu0 %v2419
        %2431 = vmatpush.bf16.msra.mxu0 %v2418
        %2432 = vmatpush.bf16.msra.mxu0 %v2417
        %2433 = vmatpush.bf16.msra.mxu0 %v2416
        %2434 = vmatpush.bf16.msra.mxu0 %v2415
        %2435 = vmatpush.bf16.msra.mxu0 %v2414
        %2436 = vmatpush.bf16.msra.mxu0 %v2413
        %2437 = vmatmul.bf16.gmra.mxu0 %v2259
        %v2438 = vpop.f32.mrf.mxu0
        %v2439 = vadd.f32 %v2372, %v2438
        %v2440 = vpop.f32.mrf.mxu0
        %v2441 = vadd.f32 %v2374, %v2440
        %2442 = vmatmul.bf16.gmra.mxu0 %v2260
        %v2443 = vpop.f32.mrf.mxu0
        %v2444 = vadd.f32 %v2377, %v2443
        %v2445 = vpop.f32.mrf.mxu0
        %v2446 = vadd.f32 %v2379, %v2445
        %2447 = vdwg.mxu0
        %v2448 = vld [vmem:[#allocation12 + $0x80] sm:$0xf]
        %v2449 = vld [vmem:[#allocation12 + $0x84] sm:$0xf]
        %v2450 = vld [vmem:[#allocation12 + $0x88] sm:$0xf]
        %v2451 = vld [vmem:[#allocation12 + $0x8c] sm:$0xf]
        %v2452 = vld [vmem:[#allocation12 + $0x90] sm:$0xf]
        %v2453 = vld [vmem:[#allocation12 + $0x94] sm:$0xf]
        %v2454 = vld [vmem:[#allocation12 + $0x98] sm:$0xf]
        %v2455 = vld [vmem:[#allocation12 + $0x9c] sm:$0xf]
        %v2456 = vld [vmem:[#allocation12 + $0xa0] sm:$0xf]
        %v2457 = vld [vmem:[#allocation12 + $0xa4] sm:$0xf]
        %v2458 = vld [vmem:[#allocation12 + $0xa8] sm:$0xf]
        %v2459 = vld [vmem:[#allocation12 + $0xac] sm:$0xf]
        %v2460 = vld [vmem:[#allocation12 + $0xb0] sm:$0xf]
        %v2461 = vld [vmem:[#allocation12 + $0xb4] sm:$0xf]
        %v2462 = vld [vmem:[#allocation12 + $0xb8] sm:$0xf]
        %v2463 = vld [vmem:[#allocation12 + $0xbc] sm:$0xf]
        %v2480 = vunpack.c.l.b16 %v2448
        %v2481 = vunpack.c.l.b16 %v2449
        %v2482 = vunpack.c.l.b16 %v2450
        %v2483 = vunpack.c.l.b16 %v2451
        %v2484 = vunpack.c.l.b16 %v2452
        %v2485 = vunpack.c.l.b16 %v2453
        %v2486 = vunpack.c.l.b16 %v2454
        %v2487 = vunpack.c.l.b16 %v2455
        %v2488 = vunpack.c.l.b16 %v2456
        %v2489 = vunpack.c.l.b16 %v2457
        %v2490 = vunpack.c.l.b16 %v2458
        %v2491 = vunpack.c.l.b16 %v2459
        %v2492 = vunpack.c.l.b16 %v2460
        %v2493 = vunpack.c.l.b16 %v2461
        %v2494 = vunpack.c.l.b16 %v2462
        %v2495 = vunpack.c.l.b16 %v2463
        %v2496 = vpack.c.b16 %v2481, %v2480
        %v2497 = vpack.c.b16 %v2483, %v2482
        %v2498 = vpack.c.b16 %v2485, %v2484
        %v2499 = vpack.c.b16 %v2487, %v2486
        %v2500 = vpack.c.b16 %v2489, %v2488
        %v2501 = vpack.c.b16 %v2491, %v2490
        %v2502 = vpack.c.b16 %v2493, %v2492
        %v2503 = vpack.c.b16 %v2495, %v2494
        %2512 = vmatpush.bf16.msra.mxu0 %v2503
        %2513 = vmatpush.bf16.msra.mxu0 %v2502
        %2514 = vmatpush.bf16.msra.mxu0 %v2501
        %2515 = vmatpush.bf16.msra.mxu0 %v2500
        %2516 = vmatpush.bf16.msra.mxu0 %v2499
        %2517 = vmatpush.bf16.msra.mxu0 %v2498
        %2518 = vmatpush.bf16.msra.mxu0 %v2497
        %2519 = vmatpush.bf16.msra.mxu0 %v2496
        %2520 = vmatmul.bf16.gmra.mxu0 %v2280
        %v2521 = vpop.f32.mrf.mxu0
        %v2522 = vadd.f32 0.0, %v2521
        %v2523 = vpop.f32.mrf.mxu0
        %v2524 = vadd.f32 0.0, %v2523
        %2525 = vmatmul.bf16.gmra.mxu0 %v2281
        %v2526 = vpop.f32.mrf.mxu0
        %v2527 = vadd.f32 0.0, %v2526
        %v2528 = vpop.f32.mrf.mxu0
        %v2529 = vadd.f32 0.0, %v2528
        %2530 = vdwg.mxu0
        %v2531 = vadd.f32 %v2439, %v2522
        %v2532 = vadd.f32 %v2441, %v2524
        %v2533 = vadd.f32 %v2444, %v2527
        %v2534 = vadd.f32 %v2446, %v2529
        %v2535 = vld [vmem:[#allocation13] sm:$0x1]
        %v2537 = vperm.slane %v2535, 0
        %v2539 = vmul.f32 %v2531, %v2537
        %v2540 = vmul.f32 %v2532, %v2537
        %v2541 = vmul.f32 %v2533, %v2537
        %v2542 = vmul.f32 %v2534, %v2537
        %v2543 = vld [vmem:[#allocation15] sm:$0x1]
        %v2545 = vperm.slane %v2543, 0
        %v2547 = vadd.f32 %v2539, %v2545
        %v2548 = vadd.f32 %v2540, %v2545
        %v2549 = vadd.f32 %v2541, %v2545
        %v2550 = vadd.f32 %v2542, %v2545
        %v2551 = vunpack.c.l.bf16 %v1883
        %v2552 = vunpack.c.l.bf16 %v1884
        %v2553 = vunpack.c.l.bf16 %v1885
        %v2554 = vunpack.c.l.bf16 %v1886
        %v2555 = vadd.f32 %v2547, %v2551
        %v2556 = vadd.f32 %v2548, %v2552
        %v2557 = vadd.f32 %v2549, %v2553
        %v2558 = vadd.f32 %v2550, %v2554
        %v2559 = vmax.f32 %v2555, 0.0
        %v2560 = vmax.f32 %v2556, 0.0
        %v2561 = vmax.f32 %v2557, 0.0
        %v2562 = vmax.f32 %v2558, 0.0
        %v2563 = vpack.c.bf16 %v2560, %v2559
        %v2564 = vpack.c.bf16 %v2562, %v2561
        %2565 = vmatpush.bf16.msra.mxu0 0
        %2566 = vmatpush.bf16.msra.mxu0 0
        %2567 = vmatpush.bf16.msra.mxu0 0
        %2568 = vmatpush.bf16.msra.mxu0 0
        %2569 = vmatpush.bf16.msra.mxu0 0
        %2570 = vmatpush.bf16.msra.mxu0 0
        %2571 = vmatpush.bf16.msra.mxu0 %v2564
        %2572 = vmatpush.bf16.msra.mxu0 %v2563
        %2573 = vmatmul.bf16.gmra.mxu0 %v1827
        %v2574 = vpop.f32.mrf.mxu0
        %v2575 = vadd.f32 0.0, %v2574
        %v2576 = vpop.f32.mrf.mxu0
        %v2577 = vadd.f32 0.0, %v2576
        %2578 = vmatmul.bf16.gmra.mxu0 %v1830
        %v2579 = vpop.f32.mrf.mxu0
        %v2580 = vadd.f32 0.0, %v2579
        %v2581 = vpop.f32.mrf.mxu0
        %v2582 = vadd.f32 0.0, %v2581
        %2583 = vdwg.mxu0
        %v2584 = vpack.c.bf16 %v2577, %v2575
        %v2585 = vpack.c.bf16 %v2582, %v2580
        %2586 = vmatpush.bf16.msra.mxu0 0
        %2587 = vmatpush.bf16.msra.mxu0 0
        %2588 = vmatpush.bf16.msra.mxu0 0
        %2589 = vmatpush.bf16.msra.mxu0 0
        %2590 = vmatpush.bf16.msra.mxu0 0
        %2591 = vmatpush.bf16.msra.mxu0 0
        %2592 = vmatpush.bf16.msra.mxu0 %v2564
        %2593 = vmatpush.bf16.msra.mxu0 %v2563
        %2594 = vmatmul.bf16.gmra.mxu0 %v1939
        %v2595 = vpop.f32.mrf.mxu0
        %v2596 = vadd.f32 0.0, %v2595
        %v2597 = vpop.f32.mrf.mxu0
        %v2598 = vadd.f32 0.0, %v2597
        %2599 = vmatmul.bf16.gmra.mxu0 %v1942
        %v2600 = vpop.f32.mrf.mxu0
        %v2601 = vadd.f32 0.0, %v2600
        %v2602 = vpop.f32.mrf.mxu0
        %v2603 = vadd.f32 0.0, %v2602
        %2604 = vdwg.mxu0
        %v2605 = vpack.c.bf16 %v2598, %v2596
        %v2606 = vpack.c.bf16 %v2603, %v2601
        %v2607 = vld [vmem:[#allocation16] sm:$0xf]
        %v2608 = vld [vmem:[#allocation16 + $0x4] sm:$0xf]
        %v2609 = vld [vmem:[#allocation16 + $0x8] sm:$0xf]
        %v2610 = vld [vmem:[#allocation16 + $0xc] sm:$0xf]
        %v2611 = vld [vmem:[#allocation16 + $0x10] sm:$0xf]
        %v2612 = vld [vmem:[#allocation16 + $0x14] sm:$0xf]
        %v2613 = vld [vmem:[#allocation16 + $0x18] sm:$0xf]
        %v2614 = vld [vmem:[#allocation16 + $0x1c] sm:$0xf]
        %v2615 = vld [vmem:[#allocation16 + $0x20] sm:$0xf]
        %v2616 = vld [vmem:[#allocation16 + $0x24] sm:$0xf]
        %v2617 = vld [vmem:[#allocation16 + $0x28] sm:$0xf]
        %v2618 = vld [vmem:[#allocation16 + $0x2c] sm:$0xf]
        %v2619 = vld [vmem:[#allocation16 + $0x30] sm:$0xf]
        %v2620 = vld [vmem:[#allocation16 + $0x34] sm:$0xf]
        %v2621 = vld [vmem:[#allocation16 + $0x38] sm:$0xf]
        %v2622 = vld [vmem:[#allocation16 + $0x3c] sm:$0xf]
        %v2623 = vld [vmem:[#allocation16 + $0x40] sm:$0xf]
        %v2624 = vld [vmem:[#allocation16 + $0x44] sm:$0xf]
        %v2625 = vld [vmem:[#allocation16 + $0x48] sm:$0xf]
        %v2626 = vld [vmem:[#allocation16 + $0x4c] sm:$0xf]
        %v2627 = vld [vmem:[#allocation16 + $0x50] sm:$0xf]
        %v2628 = vld [vmem:[#allocation16 + $0x54] sm:$0xf]
        %v2629 = vld [vmem:[#allocation16 + $0x58] sm:$0xf]
        %v2630 = vld [vmem:[#allocation16 + $0x5c] sm:$0xf]
        %v2631 = vld [vmem:[#allocation16 + $0x60] sm:$0xf]
        %v2632 = vld [vmem:[#allocation16 + $0x64] sm:$0xf]
        %v2633 = vld [vmem:[#allocation16 + $0x68] sm:$0xf]
        %v2634 = vld [vmem:[#allocation16 + $0x6c] sm:$0xf]
        %v2635 = vld [vmem:[#allocation16 + $0x70] sm:$0xf]
        %v2636 = vld [vmem:[#allocation16 + $0x74] sm:$0xf]
        %v2637 = vld [vmem:[#allocation16 + $0x78] sm:$0xf]
        %v2638 = vld [vmem:[#allocation16 + $0x7c] sm:$0xf]
        %v2655 = vunpack.c.l.b16 %v2623
        %v2656 = vunpack.c.l.b16 %v2624
        %v2657 = vunpack.c.l.b16 %v2625
        %v2658 = vunpack.c.l.b16 %v2626
        %v2659 = vunpack.c.l.b16 %v2627
        %v2660 = vunpack.c.l.b16 %v2628
        %v2661 = vunpack.c.l.b16 %v2629
        %v2662 = vunpack.c.l.b16 %v2630
        %v2663 = vunpack.c.l.b16 %v2631
        %v2664 = vunpack.c.l.b16 %v2632
        %v2665 = vunpack.c.l.b16 %v2633
        %v2666 = vunpack.c.l.b16 %v2634
        %v2667 = vunpack.c.l.b16 %v2635
        %v2668 = vunpack.c.l.b16 %v2636
        %v2669 = vunpack.c.l.b16 %v2637
        %v2670 = vunpack.c.l.b16 %v2638
        %v2671 = vpack.c.b16 %v2656, %v2655
        %v2672 = vpack.c.b16 %v2658, %v2657
        %v2673 = vpack.c.b16 %v2660, %v2659
        %v2674 = vpack.c.b16 %v2662, %v2661
        %v2675 = vpack.c.b16 %v2664, %v2663
        %v2676 = vpack.c.b16 %v2666, %v2665
        %v2677 = vpack.c.b16 %v2668, %v2667
        %v2678 = vpack.c.b16 %v2670, %v2669
        %2687 = vmatpush.bf16.msra.mxu0 %v2678
        %2688 = vmatpush.bf16.msra.mxu0 %v2677
        %2689 = vmatpush.bf16.msra.mxu0 %v2676
        %2690 = vmatpush.bf16.msra.mxu0 %v2675
        %2691 = vmatpush.bf16.msra.mxu0 %v2674
        %2692 = vmatpush.bf16.msra.mxu0 %v2673
        %2693 = vmatpush.bf16.msra.mxu0 %v2672
        %2694 = vmatpush.bf16.msra.mxu0 %v2671
        %2695 = vmatmul.bf16.gmra.mxu0 %v2563
        %v2696 = vpop.f32.mrf.mxu0
        %v2697 = vadd.f32 0.0, %v2696
        %v2698 = vpop.f32.mrf.mxu0
        %v2699 = vadd.f32 0.0, %v2698
        %2700 = vmatmul.bf16.gmra.mxu0 %v2564
        %v2701 = vpop.f32.mrf.mxu0
        %v2702 = vadd.f32 0.0, %v2701
        %v2703 = vpop.f32.mrf.mxu0
        %v2704 = vadd.f32 0.0, %v2703
        %2705 = vdwg.mxu0
        %v2722 = vunpack.c.l.b16 %v2607
        %v2723 = vunpack.c.l.b16 %v2608
        %v2724 = vunpack.c.l.b16 %v2609
        %v2725 = vunpack.c.l.b16 %v2610
        %v2726 = vunpack.c.l.b16 %v2611
        %v2727 = vunpack.c.l.b16 %v2612
        %v2728 = vunpack.c.l.b16 %v2613
        %v2729 = vunpack.c.l.b16 %v2614
        %v2730 = vunpack.c.l.b16 %v2615
        %v2731 = vunpack.c.l.b16 %v2616
        %v2732 = vunpack.c.l.b16 %v2617
        %v2733 = vunpack.c.l.b16 %v2618
        %v2734 = vunpack.c.l.b16 %v2619
        %v2735 = vunpack.c.l.b16 %v2620
        %v2736 = vunpack.c.l.b16 %v2621
        %v2737 = vunpack.c.l.b16 %v2622
        %v2738 = vpack.c.b16 %v2723, %v2722
        %v2739 = vpack.c.b16 %v2725, %v2724
        %v2740 = vpack.c.b16 %v2727, %v2726
        %v2741 = vpack.c.b16 %v2729, %v2728
        %v2742 = vpack.c.b16 %v2731, %v2730
        %v2743 = vpack.c.b16 %v2733, %v2732
        %v2744 = vpack.c.b16 %v2735, %v2734
        %v2745 = vpack.c.b16 %v2737, %v2736
        %2754 = vmatpush.bf16.msra.mxu0 %v2745
        %2755 = vmatpush.bf16.msra.mxu0 %v2744
        %2756 = vmatpush.bf16.msra.mxu0 %v2743
        %2757 = vmatpush.bf16.msra.mxu0 %v2742
        %2758 = vmatpush.bf16.msra.mxu0 %v2741
        %2759 = vmatpush.bf16.msra.mxu0 %v2740
        %2760 = vmatpush.bf16.msra.mxu0 %v2739
        %2761 = vmatpush.bf16.msra.mxu0 %v2738
        %2762 = vmatmul.bf16.gmra.mxu0 %v2584
        %v2763 = vpop.f32.mrf.mxu0
        %v2764 = vadd.f32 %v2697, %v2763
        %v2765 = vpop.f32.mrf.mxu0
        %v2766 = vadd.f32 %v2699, %v2765
        %2767 = vmatmul.bf16.gmra.mxu0 %v2585
        %v2768 = vpop.f32.mrf.mxu0
        %v2769 = vadd.f32 %v2702, %v2768
        %v2770 = vpop.f32.mrf.mxu0
        %v2771 = vadd.f32 %v2704, %v2770
        %2772 = vdwg.mxu0
        %v2773 = vld [vmem:[#allocation16 + $0x80] sm:$0xf]
        %v2774 = vld [vmem:[#allocation16 + $0x84] sm:$0xf]
        %v2775 = vld [vmem:[#allocation16 + $0x88] sm:$0xf]
        %v2776 = vld [vmem:[#allocation16 + $0x8c] sm:$0xf]
        %v2777 = vld [vmem:[#allocation16 + $0x90] sm:$0xf]
        %v2778 = vld [vmem:[#allocation16 + $0x94] sm:$0xf]
        %v2779 = vld [vmem:[#allocation16 + $0x98] sm:$0xf]
        %v2780 = vld [vmem:[#allocation16 + $0x9c] sm:$0xf]
        %v2781 = vld [vmem:[#allocation16 + $0xa0] sm:$0xf]
        %v2782 = vld [vmem:[#allocation16 + $0xa4] sm:$0xf]
        %v2783 = vld [vmem:[#allocation16 + $0xa8] sm:$0xf]
        %v2784 = vld [vmem:[#allocation16 + $0xac] sm:$0xf]
        %v2785 = vld [vmem:[#allocation16 + $0xb0] sm:$0xf]
        %v2786 = vld [vmem:[#allocation16 + $0xb4] sm:$0xf]
        %v2787 = vld [vmem:[#allocation16 + $0xb8] sm:$0xf]
        %v2788 = vld [vmem:[#allocation16 + $0xbc] sm:$0xf]
        %v2805 = vunpack.c.l.b16 %v2773
        %v2806 = vunpack.c.l.b16 %v2774
        %v2807 = vunpack.c.l.b16 %v2775
        %v2808 = vunpack.c.l.b16 %v2776
        %v2809 = vunpack.c.l.b16 %v2777
        %v2810 = vunpack.c.l.b16 %v2778
        %v2811 = vunpack.c.l.b16 %v2779
        %v2812 = vunpack.c.l.b16 %v2780
        %v2813 = vunpack.c.l.b16 %v2781
        %v2814 = vunpack.c.l.b16 %v2782
        %v2815 = vunpack.c.l.b16 %v2783
        %v2816 = vunpack.c.l.b16 %v2784
        %v2817 = vunpack.c.l.b16 %v2785
        %v2818 = vunpack.c.l.b16 %v2786
        %v2819 = vunpack.c.l.b16 %v2787
        %v2820 = vunpack.c.l.b16 %v2788
        %v2821 = vpack.c.b16 %v2806, %v2805
        %v2822 = vpack.c.b16 %v2808, %v2807
        %v2823 = vpack.c.b16 %v2810, %v2809
        %v2824 = vpack.c.b16 %v2812, %v2811
        %v2825 = vpack.c.b16 %v2814, %v2813
        %v2826 = vpack.c.b16 %v2816, %v2815
        %v2827 = vpack.c.b16 %v2818, %v2817
        %v2828 = vpack.c.b16 %v2820, %v2819
        %2837 = vmatpush.bf16.msra.mxu0 %v2828
        %2838 = vmatpush.bf16.msra.mxu0 %v2827
        %2839 = vmatpush.bf16.msra.mxu0 %v2826
        %2840 = vmatpush.bf16.msra.mxu0 %v2825
        %2841 = vmatpush.bf16.msra.mxu0 %v2824
        %2842 = vmatpush.bf16.msra.mxu0 %v2823
        %2843 = vmatpush.bf16.msra.mxu0 %v2822
        %2844 = vmatpush.bf16.msra.mxu0 %v2821
        %2845 = vmatmul.bf16.gmra.mxu0 %v2605
        %v2846 = vpop.f32.mrf.mxu0
        %v2847 = vadd.f32 0.0, %v2846
        %v2848 = vpop.f32.mrf.mxu0
        %v2849 = vadd.f32 0.0, %v2848
        %2850 = vmatmul.bf16.gmra.mxu0 %v2606
        %v2851 = vpop.f32.mrf.mxu0
        %v2852 = vadd.f32 0.0, %v2851
        %v2853 = vpop.f32.mrf.mxu0
        %v2854 = vadd.f32 0.0, %v2853
        %2855 = vdwg.mxu0
        %v2856 = vadd.f32 %v2764, %v2847
        %v2857 = vadd.f32 %v2766, %v2849
        %v2858 = vadd.f32 %v2769, %v2852
        %v2859 = vadd.f32 %v2771, %v2854
        %v2860 = vld [vmem:[#allocation18] sm:$0x1]
        %v2862 = vperm.slane %v2860, 0
        %v2864 = vmul.f32 %v2856, %v2862
        %v2865 = vmul.f32 %v2857, %v2862
        %v2866 = vmul.f32 %v2858, %v2862
        %v2867 = vmul.f32 %v2859, %v2862
        %v2868 = vld [vmem:[#allocation19] sm:$0x1]
        %v2870 = vperm.slane %v2868, 0
        %v2872 = vadd.f32 %v2864, %v2870
        %v2873 = vadd.f32 %v2865, %v2870
        %v2874 = vadd.f32 %v2866, %v2870
        %v2875 = vadd.f32 %v2867, %v2870
        %v2876 = vmax.f32 %v2872, 0.0
        %v2877 = vmax.f32 %v2873, 0.0
        %v2878 = vmax.f32 %v2874, 0.0
        %v2879 = vmax.f32 %v2875, 0.0
        %v2880 = vpack.c.bf16 %v2877, %v2876
        %v2881 = vpack.c.bf16 %v2879, %v2878
        %v2882 = vmul.u32 %v1789, 2
        %v2883 = vmul.u32 %v1790, 2
        %vm2884 = vcmp.eq.s32.totalorder %v1794, %v2882
        %vm2885 = vcmp.eq.s32.totalorder %v1794, %v2883
        %v2886 = vsel %vm2884, 1, 0
        %v2887 = vsel %vm2885, 1, 0
        %v2888 = vcvt.s32.f32 %v2886
        %v2889 = vcvt.s32.f32 %v2887
        %v2890 = vpack.c.bf16 %v2889, %v2888
        %v2892 = vsel %vm1825, %v2890, 0
        %2894 = vmatpush.bf16.msra.mxu0 0
        %2895 = vmatpush.bf16.msra.mxu0 0
        %2896 = vmatpush.bf16.msra.mxu0 0
        %2897 = vmatpush.bf16.msra.mxu0 0
        %2898 = vmatpush.bf16.msra.mxu0 0
        %2899 = vmatpush.bf16.msra.mxu0 0
        %2900 = vmatpush.bf16.msra.mxu0 %v2881
        %2901 = vmatpush.bf16.msra.mxu0 %v2880
        %2902 = vmatmul.bf16.gmra.mxu0 %v2892
        %v2903 = vpop.f32.mrf.mxu0
        %v2904 = vadd.f32 0.0, %v2903
        %v2905 = vpop.f32.mrf.mxu0
        %v2906 = vadd.f32 0.0, %v2905
        %2907 = vdwg.mxu0
        %v2908 = vpack.c.bf16 %v2906, %v2904
        %2909 = vmatpush.bf16.msra.mxu0 0
        %2910 = vmatpush.bf16.msra.mxu0 0
        %2911 = vmatpush.bf16.msra.mxu0 0
        %2912 = vmatpush.bf16.msra.mxu0 0
        %2913 = vmatpush.bf16.msra.mxu0 0
        %2914 = vmatpush.bf16.msra.mxu0 0
        %2915 = vmatpush.bf16.msra.mxu0 %v2564
        %2916 = vmatpush.bf16.msra.mxu0 %v2563
        %2917 = vmatmul.bf16.gmra.mxu0 %v2892
        %v2918 = vpop.f32.mrf.mxu0
        %v2919 = vadd.f32 0.0, %v2918
        %v2920 = vpop.f32.mrf.mxu0
        %v2921 = vadd.f32 0.0, %v2920
        %2922 = vdwg.mxu0
        %v2923 = vpack.c.bf16 %v2921, %v2919
        %vm2924 = vcmask 130048
        %v2925 = vsel %vm2924, %v1811, 0
        %2927 = vmatpush.bf16.msra.mxu0 0
        %2928 = vmatpush.bf16.msra.mxu0 0
        %2929 = vmatpush.bf16.msra.mxu0 0
        %2930 = vmatpush.bf16.msra.mxu0 0
        %2931 = vmatpush.bf16.msra.mxu0 0
        %2932 = vmatpush.bf16.msra.mxu0 0
        %2933 = vmatpush.bf16.msra.mxu0 0
        %2934 = vmatpush.bf16.msra.mxu0 %v2908
        %2935 = vmatmul.bf16.gmra.mxu0 %v2925
        %v2936 = vpop.f32.mrf.mxu0
        %v2937 = vadd.f32 0.0, %v2936
        %v2938 = vpop.f32.mrf.mxu0
        %v2939 = vadd.f32 0.0, %v2938
        %2940 = vdwg.mxu0
        %v2941 = vpack.c.bf16 %v2939, %v2937
        %v2942 = vsel %vm2924, %v1936, 0
        %2944 = vmatpush.bf16.msra.mxu0 0
        %2945 = vmatpush.bf16.msra.mxu0 0
        %2946 = vmatpush.bf16.msra.mxu0 0
        %2947 = vmatpush.bf16.msra.mxu0 0
        %2948 = vmatpush.bf16.msra.mxu0 0
        %2949 = vmatpush.bf16.msra.mxu0 0
        %2950 = vmatpush.bf16.msra.mxu0 0
        %2951 = vmatpush.bf16.msra.mxu0 %v2908
        %2952 = vmatmul.bf16.gmra.mxu0 %v2942
        %v2953 = vpop.f32.mrf.mxu0
        %v2954 = vadd.f32 0.0, %v2953
        %v2955 = vpop.f32.mrf.mxu0
        %v2956 = vadd.f32 0.0, %v2955
        %2957 = vdwg.mxu0
        %v2958 = vpack.c.bf16 %v2956, %v2954
        %v2959 = vld [vmem:[#allocation21] sm:$0xf]
        %v2960 = vld [vmem:[#allocation21 + $0x4] sm:$0xf]
        %v2961 = vld [vmem:[#allocation21 + $0x8] sm:$0xf]
        %v2962 = vld [vmem:[#allocation21 + $0xc] sm:$0xf]
        %v2963 = vld [vmem:[#allocation21 + $0x10] sm:$0xf]
        %v2964 = vld [vmem:[#allocation21 + $0x14] sm:$0xf]
        %v2965 = vld [vmem:[#allocation21 + $0x18] sm:$0xf]
        %v2966 = vld [vmem:[#allocation21 + $0x1c] sm:$0xf]
        %v2967 = vld [vmem:[#allocation21 + $0x20] sm:$0xf]
        %v2968 = vld [vmem:[#allocation21 + $0x24] sm:$0xf]
        %v2969 = vld [vmem:[#allocation21 + $0x28] sm:$0xf]
        %v2970 = vld [vmem:[#allocation21 + $0x2c] sm:$0xf]
        %v2971 = vld [vmem:[#allocation21 + $0x30] sm:$0xf]
        %v2972 = vld [vmem:[#allocation21 + $0x34] sm:$0xf]
        %v2973 = vld [vmem:[#allocation21 + $0x38] sm:$0xf]
        %v2974 = vld [vmem:[#allocation21 + $0x3c] sm:$0xf]
        %v2975 = vld [vmem:[#allocation21 + $0x40] sm:$0xf]
        %v2976 = vld [vmem:[#allocation21 + $0x44] sm:$0xf]
        %v2977 = vld [vmem:[#allocation21 + $0x48] sm:$0xf]
        %v2978 = vld [vmem:[#allocation21 + $0x4c] sm:$0xf]
        %v2979 = vld [vmem:[#allocation21 + $0x50] sm:$0xf]
        %v2980 = vld [vmem:[#allocation21 + $0x54] sm:$0xf]
        %v2981 = vld [vmem:[#allocation21 + $0x58] sm:$0xf]
        %v2982 = vld [vmem:[#allocation21 + $0x5c] sm:$0xf]
        %v2983 = vld [vmem:[#allocation21 + $0x60] sm:$0xf]
        %v2984 = vld [vmem:[#allocation21 + $0x64] sm:$0xf]
        %v2985 = vld [vmem:[#allocation21 + $0x68] sm:$0xf]
        %v2986 = vld [vmem:[#allocation21 + $0x6c] sm:$0xf]
        %v2987 = vld [vmem:[#allocation21 + $0x70] sm:$0xf]
        %v2988 = vld [vmem:[#allocation21 + $0x74] sm:$0xf]
        %v2989 = vld [vmem:[#allocation21 + $0x78] sm:$0xf]
        %v2990 = vld [vmem:[#allocation21 + $0x7c] sm:$0xf]
        %v3007 = vunpack.c.l.b16 %v2975
        %v3008 = vunpack.c.l.b16 %v2976
        %v3009 = vunpack.c.l.b16 %v2977
        %v3010 = vunpack.c.l.b16 %v2978
        %v3011 = vunpack.c.l.b16 %v2979
        %v3012 = vunpack.c.l.b16 %v2980
        %v3013 = vunpack.c.l.b16 %v2981
        %v3014 = vunpack.c.l.b16 %v2982
        %v3015 = vunpack.c.l.b16 %v2983
        %v3016 = vunpack.c.l.b16 %v2984
        %v3017 = vunpack.c.l.b16 %v2985
        %v3018 = vunpack.c.l.b16 %v2986
        %v3019 = vunpack.c.l.b16 %v2987
        %v3020 = vunpack.c.l.b16 %v2988
        %v3021 = vunpack.c.l.b16 %v2989
        %v3022 = vunpack.c.l.b16 %v2990
        %v3023 = vpack.c.b16 %v3008, %v3007
        %v3024 = vpack.c.b16 %v3010, %v3009
        %v3025 = vpack.c.b16 %v3012, %v3011
        %v3026 = vpack.c.b16 %v3014, %v3013
        %v3027 = vpack.c.b16 %v3016, %v3015
        %v3028 = vpack.c.b16 %v3018, %v3017
        %v3029 = vpack.c.b16 %v3020, %v3019
        %v3030 = vpack.c.b16 %v3022, %v3021
        %3039 = vmatpush.bf16.msra.mxu0 %v3030
        %3040 = vmatpush.bf16.msra.mxu0 %v3029
        %3041 = vmatpush.bf16.msra.mxu0 %v3028
        %3042 = vmatpush.bf16.msra.mxu0 %v3027
        %3043 = vmatpush.bf16.msra.mxu0 %v3026
        %3044 = vmatpush.bf16.msra.mxu0 %v3025
        %3045 = vmatpush.bf16.msra.mxu0 %v3024
        %3046 = vmatpush.bf16.msra.mxu0 %v3023
        %3047 = vmatmul.bf16.gmra.mxu0 %v2908
        %v3048 = vpop.f32.mrf.mxu0
        %v3049 = vadd.f32 0.0, %v3048
        %v3050 = vpop.f32.mrf.mxu0
        %v3051 = vadd.f32 0.0, %v3050
        %3052 = vdwg.mxu0
        %v3069 = vunpack.c.l.b16 %v2959
        %v3070 = vunpack.c.l.b16 %v2960
        %v3071 = vunpack.c.l.b16 %v2961
        %v3072 = vunpack.c.l.b16 %v2962
        %v3073 = vunpack.c.l.b16 %v2963
        %v3074 = vunpack.c.l.b16 %v2964
        %v3075 = vunpack.c.l.b16 %v2965
        %v3076 = vunpack.c.l.b16 %v2966
        %v3077 = vunpack.c.l.b16 %v2967
        %v3078 = vunpack.c.l.b16 %v2968
        %v3079 = vunpack.c.l.b16 %v2969
        %v3080 = vunpack.c.l.b16 %v2970
        %v3081 = vunpack.c.l.b16 %v2971
        %v3082 = vunpack.c.l.b16 %v2972
        %v3083 = vunpack.c.l.b16 %v2973
        %v3084 = vunpack.c.l.b16 %v2974
        %v3085 = vpack.c.b16 %v3070, %v3069
        %v3086 = vpack.c.b16 %v3072, %v3071
        %v3087 = vpack.c.b16 %v3074, %v3073
        %v3088 = vpack.c.b16 %v3076, %v3075
        %v3089 = vpack.c.b16 %v3078, %v3077
        %v3090 = vpack.c.b16 %v3080, %v3079
        %v3091 = vpack.c.b16 %v3082, %v3081
        %v3092 = vpack.c.b16 %v3084, %v3083
        %3101 = vmatpush.bf16.msra.mxu0 %v3092
        %3102 = vmatpush.bf16.msra.mxu0 %v3091
        %3103 = vmatpush.bf16.msra.mxu0 %v3090
        %3104 = vmatpush.bf16.msra.mxu0 %v3089
        %3105 = vmatpush.bf16.msra.mxu0 %v3088
        %3106 = vmatpush.bf16.msra.mxu0 %v3087
        %3107 = vmatpush.bf16.msra.mxu0 %v3086
        %3108 = vmatpush.bf16.msra.mxu0 %v3085
        %3109 = vmatmul.bf16.gmra.mxu0 %v2941
        %v3110 = vpop.f32.mrf.mxu0
        %v3111 = vadd.f32 %v3049, %v3110
        %v3112 = vpop.f32.mrf.mxu0
        %v3113 = vadd.f32 %v3051, %v3112
        %3114 = vdwg.mxu0
        %v3115 = vld [vmem:[#allocation21 + $0x80] sm:$0xf]
        %v3116 = vld [vmem:[#allocation21 + $0x84] sm:$0xf]
        %v3117 = vld [vmem:[#allocation21 + $0x88] sm:$0xf]
        %v3118 = vld [vmem:[#allocation21 + $0x8c] sm:$0xf]
        %v3119 = vld [vmem:[#allocation21 + $0x90] sm:$0xf]
        %v3120 = vld [vmem:[#allocation21 + $0x94] sm:$0xf]
        %v3121 = vld [vmem:[#allocation21 + $0x98] sm:$0xf]
        %v3122 = vld [vmem:[#allocation21 + $0x9c] sm:$0xf]
        %v3123 = vld [vmem:[#allocation21 + $0xa0] sm:$0xf]
        %v3124 = vld [vmem:[#allocation21 + $0xa4] sm:$0xf]
        %v3125 = vld [vmem:[#allocation21 + $0xa8] sm:$0xf]
        %v3126 = vld [vmem:[#allocation21 + $0xac] sm:$0xf]
        %v3127 = vld [vmem:[#allocation21 + $0xb0] sm:$0xf]
        %v3128 = vld [vmem:[#allocation21 + $0xb4] sm:$0xf]
        %v3129 = vld [vmem:[#allocation21 + $0xb8] sm:$0xf]
        %v3130 = vld [vmem:[#allocation21 + $0xbc] sm:$0xf]
        %v3147 = vunpack.c.l.b16 %v3115
        %v3148 = vunpack.c.l.b16 %v3116
        %v3149 = vunpack.c.l.b16 %v3117
        %v3150 = vunpack.c.l.b16 %v3118
        %v3151 = vunpack.c.l.b16 %v3119
        %v3152 = vunpack.c.l.b16 %v3120
        %v3153 = vunpack.c.l.b16 %v3121
        %v3154 = vunpack.c.l.b16 %v3122
        %v3155 = vunpack.c.l.b16 %v3123
        %v3156 = vunpack.c.l.b16 %v3124
        %v3157 = vunpack.c.l.b16 %v3125
        %v3158 = vunpack.c.l.b16 %v3126
        %v3159 = vunpack.c.l.b16 %v3127
        %v3160 = vunpack.c.l.b16 %v3128
        %v3161 = vunpack.c.l.b16 %v3129
        %v3162 = vunpack.c.l.b16 %v3130
        %v3163 = vpack.c.b16 %v3148, %v3147
        %v3164 = vpack.c.b16 %v3150, %v3149
        %v3165 = vpack.c.b16 %v3152, %v3151
        %v3166 = vpack.c.b16 %v3154, %v3153
        %v3167 = vpack.c.b16 %v3156, %v3155
        %v3168 = vpack.c.b16 %v3158, %v3157
        %v3169 = vpack.c.b16 %v3160, %v3159
        %v3170 = vpack.c.b16 %v3162, %v3161
        %3179 = vmatpush.bf16.msra.mxu0 %v3170
        %3180 = vmatpush.bf16.msra.mxu0 %v3169
        %3181 = vmatpush.bf16.msra.mxu0 %v3168
        %3182 = vmatpush.bf16.msra.mxu0 %v3167
        %3183 = vmatpush.bf16.msra.mxu0 %v3166
        %3184 = vmatpush.bf16.msra.mxu0 %v3165
        %3185 = vmatpush.bf16.msra.mxu0 %v3164
        %3186 = vmatpush.bf16.msra.mxu0 %v3163
        %3187 = vmatmul.bf16.gmra.mxu0 %v2958
        %v3188 = vpop.f32.mrf.mxu0
        %v3189 = vadd.f32 0.0, %v3188
        %v3190 = vpop.f32.mrf.mxu0
        %v3191 = vadd.f32 0.0, %v3190
        %3192 = vdwg.mxu0
        %v3193 = vadd.f32 %v3111, %v3189
        %v3194 = vadd.f32 %v3113, %v3191
        %v3195 = vld [vmem:[#allocation22] sm:$0x1]
        %v3197 = vperm.slane %v3195, 0
        %v3199 = vmul.f32 %v3193, %v3197
        %v3200 = vmul.f32 %v3194, %v3197
        %v3201 = vld [vmem:[#allocation24] sm:$0x1]
        %v3203 = vperm.slane %v3201, 0
        %v3205 = vadd.f32 %v3199, %v3203
        %v3206 = vadd.f32 %v3200, %v3203
        %v3207 = vld [vmem:[#allocation25] sm:$0xf]
        %v3208 = vld [vmem:[#allocation25 + $0x4] sm:$0xf]
        %v3209 = vld [vmem:[#allocation25 + $0x8] sm:$0xf]
        %v3210 = vld [vmem:[#allocation25 + $0xc] sm:$0xf]
        %v3211 = vld [vmem:[#allocation25 + $0x10] sm:$0xf]
        %v3212 = vld [vmem:[#allocation25 + $0x14] sm:$0xf]
        %v3213 = vld [vmem:[#allocation25 + $0x18] sm:$0xf]
        %v3214 = vld [vmem:[#allocation25 + $0x1c] sm:$0xf]
        %v3215 = vld [vmem:[#allocation25 + $0x20] sm:$0xf]
        %v3216 = vld [vmem:[#allocation25 + $0x24] sm:$0xf]
        %v3217 = vld [vmem:[#allocation25 + $0x28] sm:$0xf]
        %v3218 = vld [vmem:[#allocation25 + $0x2c] sm:$0xf]
        %v3219 = vld [vmem:[#allocation25 + $0x30] sm:$0xf]
        %v3220 = vld [vmem:[#allocation25 + $0x34] sm:$0xf]
        %v3221 = vld [vmem:[#allocation25 + $0x38] sm:$0xf]
        %v3222 = vld [vmem:[#allocation25 + $0x3c] sm:$0xf]
        %v3239 = vunpack.c.l.b16 %v3207
        %v3240 = vunpack.c.l.b16 %v3208
        %v3241 = vunpack.c.l.b16 %v3209
        %v3242 = vunpack.c.l.b16 %v3210
        %v3243 = vunpack.c.l.b16 %v3211
        %v3244 = vunpack.c.l.b16 %v3212
        %v3245 = vunpack.c.l.b16 %v3213
        %v3246 = vunpack.c.l.b16 %v3214
        %v3247 = vunpack.c.l.b16 %v3215
        %v3248 = vunpack.c.l.b16 %v3216
        %v3249 = vunpack.c.l.b16 %v3217
        %v3250 = vunpack.c.l.b16 %v3218
        %v3251 = vunpack.c.l.b16 %v3219
        %v3252 = vunpack.c.l.b16 %v3220
        %v3253 = vunpack.c.l.b16 %v3221
        %v3254 = vunpack.c.l.b16 %v3222
        %v3255 = vpack.c.b16 %v3240, %v3239
        %v3256 = vpack.c.b16 %v3242, %v3241
        %v3257 = vpack.c.b16 %v3244, %v3243
        %v3258 = vpack.c.b16 %v3246, %v3245
        %v3259 = vpack.c.b16 %v3248, %v3247
        %v3260 = vpack.c.b16 %v3250, %v3249
        %v3261 = vpack.c.b16 %v3252, %v3251
        %v3262 = vpack.c.b16 %v3254, %v3253
        %3271 = vmatpush.bf16.msra.mxu0 %v3262
        %3272 = vmatpush.bf16.msra.mxu0 %v3261
        %3273 = vmatpush.bf16.msra.mxu0 %v3260
        %3274 = vmatpush.bf16.msra.mxu0 %v3259
        %3275 = vmatpush.bf16.msra.mxu0 %v3258
        %3276 = vmatpush.bf16.msra.mxu0 %v3257
        %3277 = vmatpush.bf16.msra.mxu0 %v3256
        %3278 = vmatpush.bf16.msra.mxu0 %v3255
        %3279 = vmatmul.bf16.gmra.mxu0 %v2923
        %v3280 = vpop.f32.mrf.mxu0
        %v3281 = vadd.f32 0.0, %v3280
        %v3282 = vpop.f32.mrf.mxu0
        %v3283 = vadd.f32 0.0, %v3282
        %3284 = vdwg.mxu0
        %v3285 = vld [vmem:[#allocation27] sm:$0x1]
        %v3287 = vperm.slane %v3285, 0
        %v3289 = vmul.f32 %v3281, %v3287
        %v3290 = vmul.f32 %v3283, %v3287
        %v3291 = vld [vmem:[#allocation28] sm:$0x1]
        %v3293 = vperm.slane %v3291, 0
        %v3295 = vadd.f32 %v3289, %v3293
        %v3296 = vadd.f32 %v3290, %v3293
        %v3297 = vadd.f32 %v3205, %v3295
        %v3298 = vadd.f32 %v3206, %v3296
        %v3299 = vmax.f32 %v3297, 0.0
        %v3300 = vmax.f32 %v3298, 0.0
        %v3301 = vpack.c.bf16 %v3300, %v3299
        %3302 = vmatpush.bf16.msra.mxu0 0
        %3303 = vmatpush.bf16.msra.mxu0 0
        %3304 = vmatpush.bf16.msra.mxu0 0
        %3305 = vmatpush.bf16.msra.mxu0 0
        %3306 = vmatpush.bf16.msra.mxu0 0
        %3307 = vmatpush.bf16.msra.mxu0 0
        %3308 = vmatpush.bf16.msra.mxu0 0
        %3309 = vmatpush.bf16.msra.mxu0 %v3301
        %3310 = vmatmul.bf16.gmra.mxu0 %v2925
        %v3311 = vpop.f32.mrf.mxu0
        %v3312 = vadd.f32 0.0, %v3311
        %v3313 = vpop.f32.mrf.mxu0
        %v3314 = vadd.f32 0.0, %v3313
        %3315 = vdwg.mxu0
        %v3316 = vpack.c.bf16 %v3314, %v3312
        %3317 = vmatpush.bf16.msra.mxu0 0
        %3318 = vmatpush.bf16.msra.mxu0 0
        %3319 = vmatpush.bf16.msra.mxu0 0
        %3320 = vmatpush.bf16.msra.mxu0 0
        %3321 = vmatpush.bf16.msra.mxu0 0
        %3322 = vmatpush.bf16.msra.mxu0 0
        %3323 = vmatpush.bf16.msra.mxu0 0
        %3324 = vmatpush.bf16.msra.mxu0 %v3301
        %3325 = vmatmul.bf16.gmra.mxu0 %v2942
        %v3326 = vpop.f32.mrf.mxu0
        %v3327 = vadd.f32 0.0, %v3326
        %v3328 = vpop.f32.mrf.mxu0
        %v3329 = vadd.f32 0.0, %v3328
        %3330 = vdwg.mxu0
        %v3331 = vpack.c.bf16 %v3329, %v3327
        %v3332 = vld [vmem:[#allocation30] sm:$0xff]
        %v3333 = vld [vmem:[#allocation30 + $0x8] sm:$0xff]
        %v3334 = vld [vmem:[#allocation30 + $0x10] sm:$0xff]
        %v3335 = vld [vmem:[#allocation30 + $0x18] sm:$0xff]
        %v3336 = vld [vmem:[#allocation30 + $0x20] sm:$0xff]
        %v3337 = vld [vmem:[#allocation30 + $0x28] sm:$0xff]
        %v3338 = vld [vmem:[#allocation30 + $0x30] sm:$0xff]
        %v3339 = vld [vmem:[#allocation30 + $0x38] sm:$0xff]
        %v3340 = vld [vmem:[#allocation30 + $0x40] sm:$0xff]
        %v3341 = vld [vmem:[#allocation30 + $0x48] sm:$0xff]
        %v3342 = vld [vmem:[#allocation30 + $0x50] sm:$0xff]
        %v3343 = vld [vmem:[#allocation30 + $0x58] sm:$0xff]
        %v3344 = vld [vmem:[#allocation30 + $0x60] sm:$0xff]
        %v3345 = vld [vmem:[#allocation30 + $0x68] sm:$0xff]
        %v3346 = vld [vmem:[#allocation30 + $0x70] sm:$0xff]
        %v3347 = vld [vmem:[#allocation30 + $0x78] sm:$0xff]
        %v3348 = vld [vmem:[#allocation30 + $0x80] sm:$0xff]
        %v3349 = vld [vmem:[#allocation30 + $0x88] sm:$0xff]
        %v3350 = vld [vmem:[#allocation30 + $0x90] sm:$0xff]
        %v3351 = vld [vmem:[#allocation30 + $0x98] sm:$0xff]
        %v3352 = vld [vmem:[#allocation30 + $0xa0] sm:$0xff]
        %v3353 = vld [vmem:[#allocation30 + $0xa8] sm:$0xff]
        %v3354 = vld [vmem:[#allocation30 + $0xb0] sm:$0xff]
        %v3355 = vld [vmem:[#allocation30 + $0xb8] sm:$0xff]
        %v3356 = vld [vmem:[#allocation30 + $0xc0] sm:$0xff]
        %v3357 = vld [vmem:[#allocation30 + $0xc8] sm:$0xff]
        %v3358 = vld [vmem:[#allocation30 + $0xd0] sm:$0xff]
        %v3359 = vld [vmem:[#allocation30 + $0xd8] sm:$0xff]
        %v3360 = vld [vmem:[#allocation30 + $0xe0] sm:$0xff]
        %v3361 = vld [vmem:[#allocation30 + $0xe8] sm:$0xff]
        %v3362 = vld [vmem:[#allocation30 + $0xf0] sm:$0xff]
        %v3363 = vld [vmem:[#allocation30 + $0xf8] sm:$0xff]
        %v3380 = vunpack.c.l.b16 %v3348
        %v3381 = vunpack.c.h.b16 %v3348
        %v3382 = vunpack.c.l.b16 %v3349
        %v3383 = vunpack.c.h.b16 %v3349
        %v3384 = vunpack.c.l.b16 %v3350
        %v3385 = vunpack.c.h.b16 %v3350
        %v3386 = vunpack.c.l.b16 %v3351
        %v3387 = vunpack.c.h.b16 %v3351
        %v3388 = vunpack.c.l.b16 %v3352
        %v3389 = vunpack.c.h.b16 %v3352
        %v3390 = vunpack.c.l.b16 %v3353
        %v3391 = vunpack.c.h.b16 %v3353
        %v3392 = vunpack.c.l.b16 %v3354
        %v3393 = vunpack.c.h.b16 %v3354
        %v3394 = vunpack.c.l.b16 %v3355
        %v3395 = vunpack.c.h.b16 %v3355
        %v3396 = vunpack.c.l.b16 %v3356
        %v3397 = vunpack.c.h.b16 %v3356
        %v3398 = vunpack.c.l.b16 %v3357
        %v3399 = vunpack.c.h.b16 %v3357
        %v3400 = vunpack.c.l.b16 %v3358
        %v3401 = vunpack.c.h.b16 %v3358
        %v3402 = vunpack.c.l.b16 %v3359
        %v3403 = vunpack.c.h.b16 %v3359
        %v3404 = vunpack.c.l.b16 %v3360
        %v3405 = vunpack.c.h.b16 %v3360
        %v3406 = vunpack.c.l.b16 %v3361
        %v3407 = vunpack.c.h.b16 %v3361
        %v3408 = vunpack.c.l.b16 %v3362
        %v3409 = vunpack.c.h.b16 %v3362
        %v3410 = vunpack.c.l.b16 %v3363
        %v3411 = vunpack.c.h.b16 %v3363
        %v3412 = vpack.c.b16 %v3382, %v3380
        %v3413 = vpack.c.b16 %v3383, %v3381
        %v3414 = vpack.c.b16 %v3386, %v3384
        %v3415 = vpack.c.b16 %v3387, %v3385
        %v3416 = vpack.c.b16 %v3390, %v3388
        %v3417 = vpack.c.b16 %v3391, %v3389
        %v3418 = vpack.c.b16 %v3394, %v3392
        %v3419 = vpack.c.b16 %v3395, %v3393
        %v3420 = vpack.c.b16 %v3398, %v3396
        %v3421 = vpack.c.b16 %v3399, %v3397
        %v3422 = vpack.c.b16 %v3402, %v3400
        %v3423 = vpack.c.b16 %v3403, %v3401
        %v3424 = vpack.c.b16 %v3406, %v3404
        %v3425 = vpack.c.b16 %v3407, %v3405
        %v3426 = vpack.c.b16 %v3410, %v3408
        %v3427 = vpack.c.b16 %v3411, %v3409
        %3444 = vmatpush.bf16.msra.mxu0 %v3426
        %3445 = vmatpush.bf16.msra.mxu0 %v3424
        %3446 = vmatpush.bf16.msra.mxu0 %v3422
        %3447 = vmatpush.bf16.msra.mxu0 %v3420
        %3448 = vmatpush.bf16.msra.mxu0 %v3418
        %3449 = vmatpush.bf16.msra.mxu0 %v3416
        %3450 = vmatpush.bf16.msra.mxu0 %v3414
        %3451 = vmatpush.bf16.msra.mxu0 %v3412
        %3452 = vmatmul.bf16.gmra.mxu0 %v3301
        %v3453 = vpop.f32.mrf.mxu0
        %v3454 = vadd.f32 0.0, %v3453
        %v3455 = vpop.f32.mrf.mxu0
        %v3456 = vadd.f32 0.0, %v3455
        %3457 = vdwg.mxu0
        %3458 = vmatpush.bf16.msra.mxu0 %v3427
        %3459 = vmatpush.bf16.msra.mxu0 %v3425
        %3460 = vmatpush.bf16.msra.mxu0 %v3423
        %3461 = vmatpush.bf16.msra.mxu0 %v3421
        %3462 = vmatpush.bf16.msra.mxu0 %v3419
        %3463 = vmatpush.bf16.msra.mxu0 %v3417
        %3464 = vmatpush.bf16.msra.mxu0 %v3415
        %3465 = vmatpush.bf16.msra.mxu0 %v3413
        %3466 = vmatmul.bf16.gmra.mxu0 %v3301
        %v3467 = vpop.f32.mrf.mxu0
        %v3468 = vadd.f32 0.0, %v3467
        %v3469 = vpop.f32.mrf.mxu0
        %v3470 = vadd.f32 0.0, %v3469
        %3471 = vdwg.mxu0
        %v3488 = vunpack.c.l.b16 %v3332
        %v3489 = vunpack.c.h.b16 %v3332
        %v3490 = vunpack.c.l.b16 %v3333
        %v3491 = vunpack.c.h.b16 %v3333
        %v3492 = vunpack.c.l.b16 %v3334
        %v3493 = vunpack.c.h.b16 %v3334
        %v3494 = vunpack.c.l.b16 %v3335
        %v3495 = vunpack.c.h.b16 %v3335
        %v3496 = vunpack.c.l.b16 %v3336
        %v3497 = vunpack.c.h.b16 %v3336
        %v3498 = vunpack.c.l.b16 %v3337
        %v3499 = vunpack.c.h.b16 %v3337
        %v3500 = vunpack.c.l.b16 %v3338
        %v3501 = vunpack.c.h.b16 %v3338
        %v3502 = vunpack.c.l.b16 %v3339
        %v3503 = vunpack.c.h.b16 %v3339
        %v3504 = vunpack.c.l.b16 %v3340
        %v3505 = vunpack.c.h.b16 %v3340
        %v3506 = vunpack.c.l.b16 %v3341
        %v3507 = vunpack.c.h.b16 %v3341
        %v3508 = vunpack.c.l.b16 %v3342
        %v3509 = vunpack.c.h.b16 %v3342
        %v3510 = vunpack.c.l.b16 %v3343
        %v3511 = vunpack.c.h.b16 %v3343
        %v3512 = vunpack.c.l.b16 %v3344
        %v3513 = vunpack.c.h.b16 %v3344
        %v3514 = vunpack.c.l.b16 %v3345
        %v3515 = vunpack.c.h.b16 %v3345
        %v3516 = vunpack.c.l.b16 %v3346
        %v3517 = vunpack.c.h.b16 %v3346
        %v3518 = vunpack.c.l.b16 %v3347
        %v3519 = vunpack.c.h.b16 %v3347
        %v3520 = vpack.c.b16 %v3490, %v3488
        %v3521 = vpack.c.b16 %v3491, %v3489
        %v3522 = vpack.c.b16 %v3494, %v3492
        %v3523 = vpack.c.b16 %v3495, %v3493
        %v3524 = vpack.c.b16 %v3498, %v3496
        %v3525 = vpack.c.b16 %v3499, %v3497
        %v3526 = vpack.c.b16 %v3502, %v3500
        %v3527 = vpack.c.b16 %v3503, %v3501
        %v3528 = vpack.c.b16 %v3506, %v3504
        %v3529 = vpack.c.b16 %v3507, %v3505
        %v3530 = vpack.c.b16 %v3510, %v3508
        %v3531 = vpack.c.b16 %v3511, %v3509
        %v3532 = vpack.c.b16 %v3514, %v3512
        %v3533 = vpack.c.b16 %v3515, %v3513
        %v3534 = vpack.c.b16 %v3518, %v3516
        %v3535 = vpack.c.b16 %v3519, %v3517
        %3552 = vmatpush.bf16.msra.mxu0 %v3534
        %3553 = vmatpush.bf16.msra.mxu0 %v3532
        %3554 = vmatpush.bf16.msra.mxu0 %v3530
        %3555 = vmatpush.bf16.msra.mxu0 %v3528
        %3556 = vmatpush.bf16.msra.mxu0 %v3526
        %3557 = vmatpush.bf16.msra.mxu0 %v3524
        %3558 = vmatpush.bf16.msra.mxu0 %v3522
        %3559 = vmatpush.bf16.msra.mxu0 %v3520
        %3560 = vmatmul.bf16.gmra.mxu0 %v3316
        %v3561 = vpop.f32.mrf.mxu0
        %v3562 = vadd.f32 %v3454, %v3561
        %v3563 = vpop.f32.mrf.mxu0
        %v3564 = vadd.f32 %v3456, %v3563
        %3565 = vdwg.mxu0
        %3566 = vmatpush.bf16.msra.mxu0 %v3535
        %3567 = vmatpush.bf16.msra.mxu0 %v3533
        %3568 = vmatpush.bf16.msra.mxu0 %v3531
        %3569 = vmatpush.bf16.msra.mxu0 %v3529
        %3570 = vmatpush.bf16.msra.mxu0 %v3527
        %3571 = vmatpush.bf16.msra.mxu0 %v3525
        %3572 = vmatpush.bf16.msra.mxu0 %v3523
        %3573 = vmatpush.bf16.msra.mxu0 %v3521
        %3574 = vmatmul.bf16.gmra.mxu0 %v3316
        %v3575 = vpop.f32.mrf.mxu0
        %v3576 = vadd.f32 %v3468, %v3575
        %v3577 = vpop.f32.mrf.mxu0
        %v3578 = vadd.f32 %v3470, %v3577
        %3579 = vdwg.mxu0
        %v3580 = vld [vmem:[#allocation30 + $0x100] sm:$0xff]
        %v3581 = vld [vmem:[#allocation30 + $0x108] sm:$0xff]
        %v3582 = vld [vmem:[#allocation30 + $0x110] sm:$0xff]
        %v3583 = vld [vmem:[#allocation30 + $0x118] sm:$0xff]
        %v3584 = vld [vmem:[#allocation30 + $0x120] sm:$0xff]
        %v3585 = vld [vmem:[#allocation30 + $0x128] sm:$0xff]
        %v3586 = vld [vmem:[#allocation30 + $0x130] sm:$0xff]
        %v3587 = vld [vmem:[#allocation30 + $0x138] sm:$0xff]
        %v3588 = vld [vmem:[#allocation30 + $0x140] sm:$0xff]
        %v3589 = vld [vmem:[#allocation30 + $0x148] sm:$0xff]
        %v3590 = vld [vmem:[#allocation30 + $0x150] sm:$0xff]
        %v3591 = vld [vmem:[#allocation30 + $0x158] sm:$0xff]
        %v3592 = vld [vmem:[#allocation30 + $0x160] sm:$0xff]
        %v3593 = vld [vmem:[#allocation30 + $0x168] sm:$0xff]
        %v3594 = vld [vmem:[#allocation30 + $0x170] sm:$0xff]
        %v3595 = vld [vmem:[#allocation30 + $0x178] sm:$0xff]
        %v3612 = vunpack.c.l.b16 %v3580
        %v3613 = vunpack.c.h.b16 %v3580
        %v3614 = vunpack.c.l.b16 %v3581
        %v3615 = vunpack.c.h.b16 %v3581
        %v3616 = vunpack.c.l.b16 %v3582
        %v3617 = vunpack.c.h.b16 %v3582
        %v3618 = vunpack.c.l.b16 %v3583
        %v3619 = vunpack.c.h.b16 %v3583
        %v3620 = vunpack.c.l.b16 %v3584
        %v3621 = vunpack.c.h.b16 %v3584
        %v3622 = vunpack.c.l.b16 %v3585
        %v3623 = vunpack.c.h.b16 %v3585
        %v3624 = vunpack.c.l.b16 %v3586
        %v3625 = vunpack.c.h.b16 %v3586
        %v3626 = vunpack.c.l.b16 %v3587
        %v3627 = vunpack.c.h.b16 %v3587
        %v3628 = vunpack.c.l.b16 %v3588
        %v3629 = vunpack.c.h.b16 %v3588
        %v3630 = vunpack.c.l.b16 %v3589
        %v3631 = vunpack.c.h.b16 %v3589
        %v3632 = vunpack.c.l.b16 %v3590
        %v3633 = vunpack.c.h.b16 %v3590
        %v3634 = vunpack.c.l.b16 %v3591
        %v3635 = vunpack.c.h.b16 %v3591
        %v3636 = vunpack.c.l.b16 %v3592
        %v3637 = vunpack.c.h.b16 %v3592
        %v3638 = vunpack.c.l.b16 %v3593
        %v3639 = vunpack.c.h.b16 %v3593
        %v3640 = vunpack.c.l.b16 %v3594
        %v3641 = vunpack.c.h.b16 %v3594
        %v3642 = vunpack.c.l.b16 %v3595
        %v3643 = vunpack.c.h.b16 %v3595
        %v3644 = vpack.c.b16 %v3614, %v3612
        %v3645 = vpack.c.b16 %v3615, %v3613
        %v3646 = vpack.c.b16 %v3618, %v3616
        %v3647 = vpack.c.b16 %v3619, %v3617
        %v3648 = vpack.c.b16 %v3622, %v3620
        %v3649 = vpack.c.b16 %v3623, %v3621
        %v3650 = vpack.c.b16 %v3626, %v3624
        %v3651 = vpack.c.b16 %v3627, %v3625
        %v3652 = vpack.c.b16 %v3630, %v3628
        %v3653 = vpack.c.b16 %v3631, %v3629
        %v3654 = vpack.c.b16 %v3634, %v3632
        %v3655 = vpack.c.b16 %v3635, %v3633
        %v3656 = vpack.c.b16 %v3638, %v3636
        %v3657 = vpack.c.b16 %v3639, %v3637
        %v3658 = vpack.c.b16 %v3642, %v3640
        %v3659 = vpack.c.b16 %v3643, %v3641
        %3676 = vmatpush.bf16.msra.mxu0 %v3658
        %3677 = vmatpush.bf16.msra.mxu0 %v3656
        %3678 = vmatpush.bf16.msra.mxu0 %v3654
        %3679 = vmatpush.bf16.msra.mxu0 %v3652
        %3680 = vmatpush.bf16.msra.mxu0 %v3650
        %3681 = vmatpush.bf16.msra.mxu0 %v3648
        %3682 = vmatpush.bf16.msra.mxu0 %v3646
        %3683 = vmatpush.bf16.msra.mxu0 %v3644
        %3684 = vmatmul.bf16.gmra.mxu0 %v3331
        %v3685 = vpop.f32.mrf.mxu0
        %v3686 = vadd.f32 0.0, %v3685
        %v3687 = vpop.f32.mrf.mxu0
        %v3688 = vadd.f32 0.0, %v3687
        %3689 = vdwg.mxu0
        %3690 = vmatpush.bf16.msra.mxu0 %v3659
        %3691 = vmatpush.bf16.msra.mxu0 %v3657
        %3692 = vmatpush.bf16.msra.mxu0 %v3655
        %3693 = vmatpush.bf16.msra.mxu0 %v3653
        %3694 = vmatpush.bf16.msra.mxu0 %v3651
        %3695 = vmatpush.bf16.msra.mxu0 %v3649
        %3696 = vmatpush.bf16.msra.mxu0 %v3647
        %3697 = vmatpush.bf16.msra.mxu0 %v3645
        %3698 = vmatmul.bf16.gmra.mxu0 %v3331
        %v3699 = vpop.f32.mrf.mxu0
        %v3700 = vadd.f32 0.0, %v3699
        %v3701 = vpop.f32.mrf.mxu0
        %v3702 = vadd.f32 0.0, %v3701
        %3703 = vdwg.mxu0
        %v3704 = vadd.f32 %v3562, %v3686
        %v3705 = vadd.f32 %v3576, %v3700
        %v3706 = vadd.f32 %v3564, %v3688
        %v3707 = vadd.f32 %v3578, %v3702
        %v3708 = vld [vmem:[#allocation31] sm:$0x3]
        %v3710 = vperm.slane %v3708, 0
        %v3711 = vperm.slane %v3708, 1
        %v3714 = vmul.f32 %v3704, %v3710
        %v3715 = vmul.f32 %v3705, %v3711
        %v3716 = vmul.f32 %v3706, %v3710
        %v3717 = vmul.f32 %v3707, %v3711
        %v3718 = vld [vmem:[#allocation33] sm:$0x3]
        %v3720 = vperm.slane %v3718, 0
        %v3721 = vperm.slane %v3718, 1
        %v3724 = vadd.f32 %v3714, %v3720
        %v3725 = vadd.f32 %v3715, %v3721
        %v3726 = vadd.f32 %v3716, %v3720
        %v3727 = vadd.f32 %v3717, %v3721
        %v3728 = vmax.f32 %v3724, 0.0
        %v3729 = vmax.f32 %v3725, 0.0
        %v3730 = vmax.f32 %v3726, 0.0
        %v3731 = vmax.f32 %v3727, 0.0
        %v3732 = vpack.c.bf16 %v3730, %v3728
        %v3733 = vpack.c.bf16 %v3731, %v3729
        %v3734 = vpack.c.bf16 %v2888, %v2888
        %v3736 = vsel %vm2924, %v3734, 0
        %3738 = vmatpush.bf16.msra.mxu0 0
        %3739 = vmatpush.bf16.msra.mxu0 0
        %3740 = vmatpush.bf16.msra.mxu0 0
        %3741 = vmatpush.bf16.msra.mxu0 0
        %3742 = vmatpush.bf16.msra.mxu0 0
        %3743 = vmatpush.bf16.msra.mxu0 0
        %3744 = vmatpush.bf16.msra.mxu0 0
        %3745 = vmatpush.bf16.msra.mxu0 %v3732
        %3746 = vmatmul.bf16.gmra.mxu0 %v3736
        %v3747 = vpop.f32.mrf.mxu0
        %v3748 = vadd.f32 0.0, %v3747
        %v3749 = vpop.f32.mrf.mxu0
        %3750 = vdwg.mxu0
        %3751 = vmatpush.bf16.msra.mxu0 0
        %3752 = vmatpush.bf16.msra.mxu0 0
        %3753 = vmatpush.bf16.msra.mxu0 0
        %3754 = vmatpush.bf16.msra.mxu0 0
        %3755 = vmatpush.bf16.msra.mxu0 0
        %3756 = vmatpush.bf16.msra.mxu0 0
        %3757 = vmatpush.bf16.msra.mxu0 0
        %3758 = vmatpush.bf16.msra.mxu0 %v3733
        %3759 = vmatmul.bf16.gmra.mxu0 %v3736
        %v3760 = vpop.f32.mrf.mxu0
        %v3761 = vadd.f32 0.0, %v3760
        %v3762 = vpop.f32.mrf.mxu0
        %3763 = vdwg.mxu0
        %v3764 = vpack.c.bf16 %v3748, %v3748
        %v3765 = vpack.c.bf16 %v3761, %v3761
        %3766 = vmatpush.bf16.msra.mxu0 0
        %3767 = vmatpush.bf16.msra.mxu0 0
        %3768 = vmatpush.bf16.msra.mxu0 0
        %3769 = vmatpush.bf16.msra.mxu0 0
        %3770 = vmatpush.bf16.msra.mxu0 0
        %3771 = vmatpush.bf16.msra.mxu0 0
        %3772 = vmatpush.bf16.msra.mxu0 0
        %3773 = vmatpush.bf16.msra.mxu0 %v3301
        %3774 = vmatmul.bf16.gmra.mxu0 %v3736
        %v3775 = vpop.f32.mrf.mxu0
        %v3776 = vadd.f32 0.0, %v3775
        %v3777 = vpop.f32.mrf.mxu0
        %3778 = vdwg.mxu0
        %v3779 = vpack.c.bf16 %v3776, %v3776
        %v3780 = vpack.c.bf16 %v1807, %v1807
        %v3782 = vsel %vm1702, %v3780, 0
        %v3785 = vsel %vm1715, %v3764, 0
        %v3788 = vsel %vm1715, %v3765, 0
        %3790 = vmatpush.bf16.msra.mxu0 0
        %3791 = vmatpush.bf16.msra.mxu0 0
        %3792 = vmatpush.bf16.msra.mxu0 0
        %3793 = vmatpush.bf16.msra.mxu0 0
        %3794 = vmatpush.bf16.msra.mxu0 0
        %3795 = vmatpush.bf16.msra.mxu0 0
        %3796 = vmatpush.bf16.msra.mxu0 0
        %3797 = vmatpush.bf16.msra.mxu0 %v3785
        %3798 = vmatmul.bf16.gmra.mxu0 %v3782
        %v3799 = vpop.f32.mrf.mxu0
        %v3800 = vadd.f32 0.0, %v3799
        %v3801 = vpop.f32.mrf.mxu0
        %3802 = vdwg.mxu0
        %3803 = vmatpush.bf16.msra.mxu0 0
        %3804 = vmatpush.bf16.msra.mxu0 0
        %3805 = vmatpush.bf16.msra.mxu0 0
        %3806 = vmatpush.bf16.msra.mxu0 0
        %3807 = vmatpush.bf16.msra.mxu0 0
        %3808 = vmatpush.bf16.msra.mxu0 0
        %3809 = vmatpush.bf16.msra.mxu0 0
        %3810 = vmatpush.bf16.msra.mxu0 %v3788
        %3811 = vmatmul.bf16.gmra.mxu0 %v3782
        %v3812 = vpop.f32.mrf.mxu0
        %v3813 = vadd.f32 0.0, %v3812
        %v3814 = vpop.f32.mrf.mxu0
        %3815 = vdwg.mxu0
        %v3816 = vpack.c.bf16 %v3800, %v3800
        %v3817 = vpack.c.bf16 %v3813, %v3813
        %v3818 = vpack.c.bf16 %v1932, %v1932
        %v3820 = vsel %vm1702, %v3818, 0
        %3822 = vmatpush.bf16.msra.mxu0 0
        %3823 = vmatpush.bf16.msra.mxu0 0
        %3824 = vmatpush.bf16.msra.mxu0 0
        %3825 = vmatpush.bf16.msra.mxu0 0
        %3826 = vmatpush.bf16.msra.mxu0 0
        %3827 = vmatpush.bf16.msra.mxu0 0
        %3828 = vmatpush.bf16.msra.mxu0 0
        %3829 = vmatpush.bf16.msra.mxu0 %v3785
        %3830 = vmatmul.bf16.gmra.mxu0 %v3820
        %v3831 = vpop.f32.mrf.mxu0
        %v3832 = vadd.f32 0.0, %v3831
        %v3833 = vpop.f32.mrf.mxu0
        %3834 = vdwg.mxu0
        %3835 = vmatpush.bf16.msra.mxu0 0
        %3836 = vmatpush.bf16.msra.mxu0 0
        %3837 = vmatpush.bf16.msra.mxu0 0
        %3838 = vmatpush.bf16.msra.mxu0 0
        %3839 = vmatpush.bf16.msra.mxu0 0
        %3840 = vmatpush.bf16.msra.mxu0 0
        %3841 = vmatpush.bf16.msra.mxu0 0
        %3842 = vmatpush.bf16.msra.mxu0 %v3788
        %3843 = vmatmul.bf16.gmra.mxu0 %v3820
        %v3844 = vpop.f32.mrf.mxu0
        %v3845 = vadd.f32 0.0, %v3844
        %v3846 = vpop.f32.mrf.mxu0
        %3847 = vdwg.mxu0
        %v3848 = vpack.c.bf16 %v3832, %v3832
        %v3849 = vpack.c.bf16 %v3845, %v3845
        %v3850 = vld [vmem:[#allocation34] sm:$0xff]
        %v3851 = vld [vmem:[#allocation34 + $0x8] sm:$0xff]
        %v3852 = vld [vmem:[#allocation34 + $0x10] sm:$0xff]
        %v3853 = vld [vmem:[#allocation34 + $0x18] sm:$0xff]
        %v3854 = vld [vmem:[#allocation34 + $0x20] sm:$0xff]
        %v3855 = vld [vmem:[#allocation34 + $0x28] sm:$0xff]
        %v3856 = vld [vmem:[#allocation34 + $0x30] sm:$0xff]
        %v3857 = vld [vmem:[#allocation34 + $0x38] sm:$0xff]
        %v3858 = vld [vmem:[#allocation34 + $0x40] sm:$0xff]
        %v3859 = vld [vmem:[#allocation34 + $0x48] sm:$0xff]
        %v3860 = vld [vmem:[#allocation34 + $0x50] sm:$0xff]
        %v3861 = vld [vmem:[#allocation34 + $0x58] sm:$0xff]
        %v3862 = vld [vmem:[#allocation34 + $0x60] sm:$0xff]
        %v3863 = vld [vmem:[#allocation34 + $0x68] sm:$0xff]
        %v3864 = vld [vmem:[#allocation34 + $0x70] sm:$0xff]
        %v3865 = vld [vmem:[#allocation34 + $0x78] sm:$0xff]
        %v3866 = vld [vmem:[#allocation34 + $0x80] sm:$0xff]
        %v3867 = vld [vmem:[#allocation34 + $0x88] sm:$0xff]
        %v3868 = vld [vmem:[#allocation34 + $0x90] sm:$0xff]
        %v3869 = vld [vmem:[#allocation34 + $0x98] sm:$0xff]
        %v3870 = vld [vmem:[#allocation34 + $0xa0] sm:$0xff]
        %v3871 = vld [vmem:[#allocation34 + $0xa8] sm:$0xff]
        %v3872 = vld [vmem:[#allocation34 + $0xb0] sm:$0xff]
        %v3873 = vld [vmem:[#allocation34 + $0xb8] sm:$0xff]
        %v3874 = vld [vmem:[#allocation34 + $0xc0] sm:$0xff]
        %v3875 = vld [vmem:[#allocation34 + $0xc8] sm:$0xff]
        %v3876 = vld [vmem:[#allocation34 + $0xd0] sm:$0xff]
        %v3877 = vld [vmem:[#allocation34 + $0xd8] sm:$0xff]
        %v3878 = vld [vmem:[#allocation34 + $0xe0] sm:$0xff]
        %v3879 = vld [vmem:[#allocation34 + $0xe8] sm:$0xff]
        %v3880 = vld [vmem:[#allocation34 + $0xf0] sm:$0xff]
        %v3881 = vld [vmem:[#allocation34 + $0xf8] sm:$0xff]
        %v3882 = vld [vmem:[#allocation34 + $0x100] sm:$0xff]
        %v3883 = vld [vmem:[#allocation34 + $0x108] sm:$0xff]
        %v3884 = vld [vmem:[#allocation34 + $0x110] sm:$0xff]
        %v3885 = vld [vmem:[#allocation34 + $0x118] sm:$0xff]
        %v3886 = vld [vmem:[#allocation34 + $0x120] sm:$0xff]
        %v3887 = vld [vmem:[#allocation34 + $0x128] sm:$0xff]
        %v3888 = vld [vmem:[#allocation34 + $0x130] sm:$0xff]
        %v3889 = vld [vmem:[#allocation34 + $0x138] sm:$0xff]
        %v3890 = vld [vmem:[#allocation34 + $0x140] sm:$0xff]
        %v3891 = vld [vmem:[#allocation34 + $0x148] sm:$0xff]
        %v3892 = vld [vmem:[#allocation34 + $0x150] sm:$0xff]
        %v3893 = vld [vmem:[#allocation34 + $0x158] sm:$0xff]
        %v3894 = vld [vmem:[#allocation34 + $0x160] sm:$0xff]
        %v3895 = vld [vmem:[#allocation34 + $0x168] sm:$0xff]
        %v3896 = vld [vmem:[#allocation34 + $0x170] sm:$0xff]
        %v3897 = vld [vmem:[#allocation34 + $0x178] sm:$0xff]
        %v3898 = vld [vmem:[#allocation34 + $0x180] sm:$0xff]
        %v3899 = vld [vmem:[#allocation34 + $0x188] sm:$0xff]
        %v3900 = vld [vmem:[#allocation34 + $0x190] sm:$0xff]
        %v3901 = vld [vmem:[#allocation34 + $0x198] sm:$0xff]
        %v3902 = vld [vmem:[#allocation34 + $0x1a0] sm:$0xff]
        %v3903 = vld [vmem:[#allocation34 + $0x1a8] sm:$0xff]
        %v3904 = vld [vmem:[#allocation34 + $0x1b0] sm:$0xff]
        %v3905 = vld [vmem:[#allocation34 + $0x1b8] sm:$0xff]
        %v3906 = vld [vmem:[#allocation34 + $0x1c0] sm:$0xff]
        %v3907 = vld [vmem:[#allocation34 + $0x1c8] sm:$0xff]
        %v3908 = vld [vmem:[#allocation34 + $0x1d0] sm:$0xff]
        %v3909 = vld [vmem:[#allocation34 + $0x1d8] sm:$0xff]
        %v3910 = vld [vmem:[#allocation34 + $0x1e0] sm:$0xff]
        %v3911 = vld [vmem:[#allocation34 + $0x1e8] sm:$0xff]
        %v3912 = vld [vmem:[#allocation34 + $0x1f0] sm:$0xff]
        %v3913 = vld [vmem:[#allocation34 + $0x1f8] sm:$0xff]
        %v3946 = vunpack.c.l.b16 %v3882
        %v3947 = vunpack.c.h.b16 %v3882
        %v3948 = vunpack.c.l.b16 %v3883
        %v3949 = vunpack.c.h.b16 %v3883
        %v3950 = vunpack.c.l.b16 %v3884
        %v3951 = vunpack.c.h.b16 %v3884
        %v3952 = vunpack.c.l.b16 %v3885
        %v3953 = vunpack.c.h.b16 %v3885
        %v3954 = vunpack.c.l.b16 %v3886
        %v3955 = vunpack.c.h.b16 %v3886
        %v3956 = vunpack.c.l.b16 %v3887
        %v3957 = vunpack.c.h.b16 %v3887
        %v3958 = vunpack.c.l.b16 %v3888
        %v3959 = vunpack.c.h.b16 %v3888
        %v3960 = vunpack.c.l.b16 %v3889
        %v3961 = vunpack.c.h.b16 %v3889
        %v3962 = vunpack.c.l.b16 %v3890
        %v3963 = vunpack.c.h.b16 %v3890
        %v3964 = vunpack.c.l.b16 %v3891
        %v3965 = vunpack.c.h.b16 %v3891
        %v3966 = vunpack.c.l.b16 %v3892
        %v3967 = vunpack.c.h.b16 %v3892
        %v3968 = vunpack.c.l.b16 %v3893
        %v3969 = vunpack.c.h.b16 %v3893
        %v3970 = vunpack.c.l.b16 %v3894
        %v3971 = vunpack.c.h.b16 %v3894
        %v3972 = vunpack.c.l.b16 %v3895
        %v3973 = vunpack.c.h.b16 %v3895
        %v3974 = vunpack.c.l.b16 %v3896
        %v3975 = vunpack.c.h.b16 %v3896
        %v3976 = vunpack.c.l.b16 %v3897
        %v3977 = vunpack.c.h.b16 %v3897
        %v3978 = vunpack.c.l.b16 %v3898
        %v3979 = vunpack.c.h.b16 %v3898
        %v3980 = vunpack.c.l.b16 %v3899
        %v3981 = vunpack.c.h.b16 %v3899
        %v3982 = vunpack.c.l.b16 %v3900
        %v3983 = vunpack.c.h.b16 %v3900
        %v3984 = vunpack.c.l.b16 %v3901
        %v3985 = vunpack.c.h.b16 %v3901
        %v3986 = vunpack.c.l.b16 %v3902
        %v3987 = vunpack.c.h.b16 %v3902
        %v3988 = vunpack.c.l.b16 %v3903
        %v3989 = vunpack.c.h.b16 %v3903
        %v3990 = vunpack.c.l.b16 %v3904
        %v3991 = vunpack.c.h.b16 %v3904
        %v3992 = vunpack.c.l.b16 %v3905
        %v3993 = vunpack.c.h.b16 %v3905
        %v3994 = vunpack.c.l.b16 %v3906
        %v3995 = vunpack.c.h.b16 %v3906
        %v3996 = vunpack.c.l.b16 %v3907
        %v3997 = vunpack.c.h.b16 %v3907
        %v3998 = vunpack.c.l.b16 %v3908
        %v3999 = vunpack.c.h.b16 %v3908
        %v4000 = vunpack.c.l.b16 %v3909
        %v4001 = vunpack.c.h.b16 %v3909
        %v4002 = vunpack.c.l.b16 %v3910
        %v4003 = vunpack.c.h.b16 %v3910
        %v4004 = vunpack.c.l.b16 %v3911
        %v4005 = vunpack.c.h.b16 %v3911
        %v4006 = vunpack.c.l.b16 %v3912
        %v4007 = vunpack.c.h.b16 %v3912
        %v4008 = vunpack.c.l.b16 %v3913
        %v4009 = vunpack.c.h.b16 %v3913
        %v4010 = vpack.c.b16 %v3948, %v3946
        %v4011 = vpack.c.b16 %v3949, %v3947
        %v4012 = vpack.c.b16 %v3952, %v3950
        %v4013 = vpack.c.b16 %v3953, %v3951
        %v4014 = vpack.c.b16 %v3956, %v3954
        %v4015 = vpack.c.b16 %v3957, %v3955
        %v4016 = vpack.c.b16 %v3960, %v3958
        %v4017 = vpack.c.b16 %v3961, %v3959
        %v4018 = vpack.c.b16 %v3964, %v3962
        %v4019 = vpack.c.b16 %v3965, %v3963
        %v4020 = vpack.c.b16 %v3968, %v3966
        %v4021 = vpack.c.b16 %v3969, %v3967
        %v4022 = vpack.c.b16 %v3972, %v3970
        %v4023 = vpack.c.b16 %v3973, %v3971
        %v4024 = vpack.c.b16 %v3976, %v3974
        %v4025 = vpack.c.b16 %v3977, %v3975
        %v4026 = vpack.c.b16 %v3980, %v3978
        %v4027 = vpack.c.b16 %v3981, %v3979
        %v4028 = vpack.c.b16 %v3984, %v3982
        %v4029 = vpack.c.b16 %v3985, %v3983
        %v4030 = vpack.c.b16 %v3988, %v3986
        %v4031 = vpack.c.b16 %v3989, %v3987
        %v4032 = vpack.c.b16 %v3992, %v3990
        %v4033 = vpack.c.b16 %v3993, %v3991
        %v4034 = vpack.c.b16 %v3996, %v3994
        %v4035 = vpack.c.b16 %v3997, %v3995
        %v4036 = vpack.c.b16 %v4000, %v3998
        %v4037 = vpack.c.b16 %v4001, %v3999
        %v4038 = vpack.c.b16 %v4004, %v4002
        %v4039 = vpack.c.b16 %v4005, %v4003
        %v4040 = vpack.c.b16 %v4008, %v4006
        %v4041 = vpack.c.b16 %v4009, %v4007
        %4074 = vmatpush.bf16.msra.mxu0 %v4024
        %4075 = vmatpush.bf16.msra.mxu0 %v4022
        %4076 = vmatpush.bf16.msra.mxu0 %v4020
        %4077 = vmatpush.bf16.msra.mxu0 %v4018
        %4078 = vmatpush.bf16.msra.mxu0 %v4016
        %4079 = vmatpush.bf16.msra.mxu0 %v4014
        %4080 = vmatpush.bf16.msra.mxu0 %v4012
        %4081 = vmatpush.bf16.msra.mxu0 %v4010
        %4082 = vmatmul.bf16.gmra.mxu0 %v3764
        %v4083 = vpop.f32.mrf.mxu0
        %v4084 = vadd.f32 0.0, %v4083
        %v4085 = vpop.f32.mrf.mxu0
        %4086 = vdwg.mxu0
        %4087 = vmatpush.bf16.msra.mxu0 %v4040
        %4088 = vmatpush.bf16.msra.mxu0 %v4038
        %4089 = vmatpush.bf16.msra.mxu0 %v4036
        %4090 = vmatpush.bf16.msra.mxu0 %v4034
        %4091 = vmatpush.bf16.msra.mxu0 %v4032
        %4092 = vmatpush.bf16.msra.mxu0 %v4030
        %4093 = vmatpush.bf16.msra.mxu0 %v4028
        %4094 = vmatpush.bf16.msra.mxu0 %v4026
        %4095 = vmatmul.bf16.gmra.mxu0 %v3765
        %v4096 = vpop.f32.mrf.mxu0
        %v4097 = vadd.f32 %v4084, %v4096
        %v4098 = vpop.f32.mrf.mxu0
        %4099 = vdwg.mxu0
        %4100 = vmatpush.bf16.msra.mxu0 %v4025
        %4101 = vmatpush.bf16.msra.mxu0 %v4023
        %4102 = vmatpush.bf16.msra.mxu0 %v4021
        %4103 = vmatpush.bf16.msra.mxu0 %v4019
        %4104 = vmatpush.bf16.msra.mxu0 %v4017
        %4105 = vmatpush.bf16.msra.mxu0 %v4015
        %4106 = vmatpush.bf16.msra.mxu0 %v4013
        %4107 = vmatpush.bf16.msra.mxu0 %v4011
        %4108 = vmatmul.bf16.gmra.mxu0 %v3764
        %v4109 = vpop.f32.mrf.mxu0
        %v4110 = vadd.f32 0.0, %v4109
        %v4111 = vpop.f32.mrf.mxu0
        %4112 = vdwg.mxu0
        %4113 = vmatpush.bf16.msra.mxu0 %v4041
        %4114 = vmatpush.bf16.msra.mxu0 %v4039
        %4115 = vmatpush.bf16.msra.mxu0 %v4037
        %4116 = vmatpush.bf16.msra.mxu0 %v4035
        %4117 = vmatpush.bf16.msra.mxu0 %v4033
        %4118 = vmatpush.bf16.msra.mxu0 %v4031
        %4119 = vmatpush.bf16.msra.mxu0 %v4029
        %4120 = vmatpush.bf16.msra.mxu0 %v4027
        %4121 = vmatmul.bf16.gmra.mxu0 %v3765
        %v4122 = vpop.f32.mrf.mxu0
        %v4123 = vadd.f32 %v4110, %v4122
        %v4124 = vpop.f32.mrf.mxu0
        %4125 = vdwg.mxu0
        %v4158 = vunpack.c.l.b16 %v3850
        %v4159 = vunpack.c.h.b16 %v3850
        %v4160 = vunpack.c.l.b16 %v3851
        %v4161 = vunpack.c.h.b16 %v3851
        %v4162 = vunpack.c.l.b16 %v3852
        %v4163 = vunpack.c.h.b16 %v3852
        %v4164 = vunpack.c.l.b16 %v3853
        %v4165 = vunpack.c.h.b16 %v3853
        %v4166 = vunpack.c.l.b16 %v3854
        %v4167 = vunpack.c.h.b16 %v3854
        %v4168 = vunpack.c.l.b16 %v3855
        %v4169 = vunpack.c.h.b16 %v3855
        %v4170 = vunpack.c.l.b16 %v3856
        %v4171 = vunpack.c.h.b16 %v3856
        %v4172 = vunpack.c.l.b16 %v3857
        %v4173 = vunpack.c.h.b16 %v3857
        %v4174 = vunpack.c.l.b16 %v3858
        %v4175 = vunpack.c.h.b16 %v3858
        %v4176 = vunpack.c.l.b16 %v3859
        %v4177 = vunpack.c.h.b16 %v3859
        %v4178 = vunpack.c.l.b16 %v3860
        %v4179 = vunpack.c.h.b16 %v3860
        %v4180 = vunpack.c.l.b16 %v3861
        %v4181 = vunpack.c.h.b16 %v3861
        %v4182 = vunpack.c.l.b16 %v3862
        %v4183 = vunpack.c.h.b16 %v3862
        %v4184 = vunpack.c.l.b16 %v3863
        %v4185 = vunpack.c.h.b16 %v3863
        %v4186 = vunpack.c.l.b16 %v3864
        %v4187 = vunpack.c.h.b16 %v3864
        %v4188 = vunpack.c.l.b16 %v3865
        %v4189 = vunpack.c.h.b16 %v3865
        %v4190 = vunpack.c.l.b16 %v3866
        %v4191 = vunpack.c.h.b16 %v3866
        %v4192 = vunpack.c.l.b16 %v3867
        %v4193 = vunpack.c.h.b16 %v3867
        %v4194 = vunpack.c.l.b16 %v3868
        %v4195 = vunpack.c.h.b16 %v3868
        %v4196 = vunpack.c.l.b16 %v3869
        %v4197 = vunpack.c.h.b16 %v3869
        %v4198 = vunpack.c.l.b16 %v3870
        %v4199 = vunpack.c.h.b16 %v3870
        %v4200 = vunpack.c.l.b16 %v3871
        %v4201 = vunpack.c.h.b16 %v3871
        %v4202 = vunpack.c.l.b16 %v3872
        %v4203 = vunpack.c.h.b16 %v3872
        %v4204 = vunpack.c.l.b16 %v3873
        %v4205 = vunpack.c.h.b16 %v3873
        %v4206 = vunpack.c.l.b16 %v3874
        %v4207 = vunpack.c.h.b16 %v3874
        %v4208 = vunpack.c.l.b16 %v3875
        %v4209 = vunpack.c.h.b16 %v3875
        %v4210 = vunpack.c.l.b16 %v3876
        %v4211 = vunpack.c.h.b16 %v3876
        %v4212 = vunpack.c.l.b16 %v3877
        %v4213 = vunpack.c.h.b16 %v3877
        %v4214 = vunpack.c.l.b16 %v3878
        %v4215 = vunpack.c.h.b16 %v3878
        %v4216 = vunpack.c.l.b16 %v3879
        %v4217 = vunpack.c.h.b16 %v3879
        %v4218 = vunpack.c.l.b16 %v3880
        %v4219 = vunpack.c.h.b16 %v3880
        %v4220 = vunpack.c.l.b16 %v3881
        %v4221 = vunpack.c.h.b16 %v3881
        %v4222 = vpack.c.b16 %v4160, %v4158
        %v4223 = vpack.c.b16 %v4161, %v4159
        %v4224 = vpack.c.b16 %v4164, %v4162
        %v4225 = vpack.c.b16 %v4165, %v4163
        %v4226 = vpack.c.b16 %v4168, %v4166
        %v4227 = vpack.c.b16 %v4169, %v4167
        %v4228 = vpack.c.b16 %v4172, %v4170
        %v4229 = vpack.c.b16 %v4173, %v4171
        %v4230 = vpack.c.b16 %v4176, %v4174
        %v4231 = vpack.c.b16 %v4177, %v4175
        %v4232 = vpack.c.b16 %v4180, %v4178
        %v4233 = vpack.c.b16 %v4181, %v4179
        %v4234 = vpack.c.b16 %v4184, %v4182
        %v4235 = vpack.c.b16 %v4185, %v4183
        %v4236 = vpack.c.b16 %v4188, %v4186
        %v4237 = vpack.c.b16 %v4189, %v4187
        %v4238 = vpack.c.b16 %v4192, %v4190
        %v4239 = vpack.c.b16 %v4193, %v4191
        %v4240 = vpack.c.b16 %v4196, %v4194
        %v4241 = vpack.c.b16 %v4197, %v4195
        %v4242 = vpack.c.b16 %v4200, %v4198
        %v4243 = vpack.c.b16 %v4201, %v4199
        %v4244 = vpack.c.b16 %v4204, %v4202
        %v4245 = vpack.c.b16 %v4205, %v4203
        %v4246 = vpack.c.b16 %v4208, %v4206
        %v4247 = vpack.c.b16 %v4209, %v4207
        %v4248 = vpack.c.b16 %v4212, %v4210
        %v4249 = vpack.c.b16 %v4213, %v4211
        %v4250 = vpack.c.b16 %v4216, %v4214
        %v4251 = vpack.c.b16 %v4217, %v4215
        %v4252 = vpack.c.b16 %v4220, %v4218
        %v4253 = vpack.c.b16 %v4221, %v4219
        %4286 = vmatpush.bf16.msra.mxu0 %v4236
        %4287 = vmatpush.bf16.msra.mxu0 %v4234
        %4288 = vmatpush.bf16.msra.mxu0 %v4232
        %4289 = vmatpush.bf16.msra.mxu0 %v4230
        %4290 = vmatpush.bf16.msra.mxu0 %v4228
        %4291 = vmatpush.bf16.msra.mxu0 %v4226
        %4292 = vmatpush.bf16.msra.mxu0 %v4224
        %4293 = vmatpush.bf16.msra.mxu0 %v4222
        %4294 = vmatmul.bf16.gmra.mxu0 %v3816
        %v4295 = vpop.f32.mrf.mxu0
        %v4296 = vadd.f32 %v4097, %v4295
        %v4297 = vpop.f32.mrf.mxu0
        %4298 = vdwg.mxu0
        %4299 = vmatpush.bf16.msra.mxu0 %v4252
        %4300 = vmatpush.bf16.msra.mxu0 %v4250
        %4301 = vmatpush.bf16.msra.mxu0 %v4248
        %4302 = vmatpush.bf16.msra.mxu0 %v4246
        %4303 = vmatpush.bf16.msra.mxu0 %v4244
        %4304 = vmatpush.bf16.msra.mxu0 %v4242
        %4305 = vmatpush.bf16.msra.mxu0 %v4240
        %4306 = vmatpush.bf16.msra.mxu0 %v4238
        %4307 = vmatmul.bf16.gmra.mxu0 %v3817
        %v4308 = vpop.f32.mrf.mxu0
        %v4309 = vadd.f32 %v4296, %v4308
        %v4310 = vpop.f32.mrf.mxu0
        %4311 = vdwg.mxu0
        %4312 = vmatpush.bf16.msra.mxu0 %v4237
        %4313 = vmatpush.bf16.msra.mxu0 %v4235
        %4314 = vmatpush.bf16.msra.mxu0 %v4233
        %4315 = vmatpush.bf16.msra.mxu0 %v4231
        %4316 = vmatpush.bf16.msra.mxu0 %v4229
        %4317 = vmatpush.bf16.msra.mxu0 %v4227
        %4318 = vmatpush.bf16.msra.mxu0 %v4225
        %4319 = vmatpush.bf16.msra.mxu0 %v4223
        %4320 = vmatmul.bf16.gmra.mxu0 %v3816
        %v4321 = vpop.f32.mrf.mxu0
        %v4322 = vadd.f32 %v4123, %v4321
        %v4323 = vpop.f32.mrf.mxu0
        %4324 = vdwg.mxu0
        %4325 = vmatpush.bf16.msra.mxu0 %v4253
        %4326 = vmatpush.bf16.msra.mxu0 %v4251
        %4327 = vmatpush.bf16.msra.mxu0 %v4249
        %4328 = vmatpush.bf16.msra.mxu0 %v4247
        %4329 = vmatpush.bf16.msra.mxu0 %v4245
        %4330 = vmatpush.bf16.msra.mxu0 %v4243
        %4331 = vmatpush.bf16.msra.mxu0 %v4241
        %4332 = vmatpush.bf16.msra.mxu0 %v4239
        %4333 = vmatmul.bf16.gmra.mxu0 %v3817
        %v4334 = vpop.f32.mrf.mxu0
        %v4335 = vadd.f32 %v4322, %v4334
        %v4336 = vpop.f32.mrf.mxu0
        %4337 = vdwg.mxu0
        %v4338 = vld [vmem:[#allocation34 + $0x200] sm:$0xff]
        %v4339 = vld [vmem:[#allocation34 + $0x208] sm:$0xff]
        %v4340 = vld [vmem:[#allocation34 + $0x210] sm:$0xff]
        %v4341 = vld [vmem:[#allocation34 + $0x218] sm:$0xff]
        %v4342 = vld [vmem:[#allocation34 + $0x220] sm:$0xff]
        %v4343 = vld [vmem:[#allocation34 + $0x228] sm:$0xff]
        %v4344 = vld [vmem:[#allocation34 + $0x230] sm:$0xff]
        %v4345 = vld [vmem:[#allocation34 + $0x238] sm:$0xff]
        %v4346 = vld [vmem:[#allocation34 + $0x240] sm:$0xff]
        %v4347 = vld [vmem:[#allocation34 + $0x248] sm:$0xff]
        %v4348 = vld [vmem:[#allocation34 + $0x250] sm:$0xff]
        %v4349 = vld [vmem:[#allocation34 + $0x258] sm:$0xff]
        %v4350 = vld [vmem:[#allocation34 + $0x260] sm:$0xff]
        %v4351 = vld [vmem:[#allocation34 + $0x268] sm:$0xff]
        %v4352 = vld [vmem:[#allocation34 + $0x270] sm:$0xff]
        %v4353 = vld [vmem:[#allocation34 + $0x278] sm:$0xff]
        %v4354 = vld [vmem:[#allocation34 + $0x280] sm:$0xff]
        %v4355 = vld [vmem:[#allocation34 + $0x288] sm:$0xff]
        %v4356 = vld [vmem:[#allocation34 + $0x290] sm:$0xff]
        %v4357 = vld [vmem:[#allocation34 + $0x298] sm:$0xff]
        %v4358 = vld [vmem:[#allocation34 + $0x2a0] sm:$0xff]
        %v4359 = vld [vmem:[#allocation34 + $0x2a8] sm:$0xff]
        %v4360 = vld [vmem:[#allocation34 + $0x2b0] sm:$0xff]
        %v4361 = vld [vmem:[#allocation34 + $0x2b8] sm:$0xff]
        %v4362 = vld [vmem:[#allocation34 + $0x2c0] sm:$0xff]
        %v4363 = vld [vmem:[#allocation34 + $0x2c8] sm:$0xff]
        %v4364 = vld [vmem:[#allocation34 + $0x2d0] sm:$0xff]
        %v4365 = vld [vmem:[#allocation34 + $0x2d8] sm:$0xff]
        %v4366 = vld [vmem:[#allocation34 + $0x2e0] sm:$0xff]
        %v4367 = vld [vmem:[#allocation34 + $0x2e8] sm:$0xff]
        %v4368 = vld [vmem:[#allocation34 + $0x2f0] sm:$0xff]
        %v4369 = vld [vmem:[#allocation34 + $0x2f8] sm:$0xff]
        %v4402 = vunpack.c.l.b16 %v4338
        %v4403 = vunpack.c.h.b16 %v4338
        %v4404 = vunpack.c.l.b16 %v4339
        %v4405 = vunpack.c.h.b16 %v4339
        %v4406 = vunpack.c.l.b16 %v4340
        %v4407 = vunpack.c.h.b16 %v4340
        %v4408 = vunpack.c.l.b16 %v4341
        %v4409 = vunpack.c.h.b16 %v4341
        %v4410 = vunpack.c.l.b16 %v4342
        %v4411 = vunpack.c.h.b16 %v4342
        %v4412 = vunpack.c.l.b16 %v4343
        %v4413 = vunpack.c.h.b16 %v4343
        %v4414 = vunpack.c.l.b16 %v4344
        %v4415 = vunpack.c.h.b16 %v4344
        %v4416 = vunpack.c.l.b16 %v4345
        %v4417 = vunpack.c.h.b16 %v4345
        %v4418 = vunpack.c.l.b16 %v4346
        %v4419 = vunpack.c.h.b16 %v4346
        %v4420 = vunpack.c.l.b16 %v4347
        %v4421 = vunpack.c.h.b16 %v4347
        %v4422 = vunpack.c.l.b16 %v4348
        %v4423 = vunpack.c.h.b16 %v4348
        %v4424 = vunpack.c.l.b16 %v4349
        %v4425 = vunpack.c.h.b16 %v4349
        %v4426 = vunpack.c.l.b16 %v4350
        %v4427 = vunpack.c.h.b16 %v4350
        %v4428 = vunpack.c.l.b16 %v4351
        %v4429 = vunpack.c.h.b16 %v4351
        %v4430 = vunpack.c.l.b16 %v4352
        %v4431 = vunpack.c.h.b16 %v4352
        %v4432 = vunpack.c.l.b16 %v4353
        %v4433 = vunpack.c.h.b16 %v4353
        %v4434 = vunpack.c.l.b16 %v4354
        %v4435 = vunpack.c.h.b16 %v4354
        %v4436 = vunpack.c.l.b16 %v4355
        %v4437 = vunpack.c.h.b16 %v4355
        %v4438 = vunpack.c.l.b16 %v4356
        %v4439 = vunpack.c.h.b16 %v4356
        %v4440 = vunpack.c.l.b16 %v4357
        %v4441 = vunpack.c.h.b16 %v4357
        %v4442 = vunpack.c.l.b16 %v4358
        %v4443 = vunpack.c.h.b16 %v4358
        %v4444 = vunpack.c.l.b16 %v4359
        %v4445 = vunpack.c.h.b16 %v4359
        %v4446 = vunpack.c.l.b16 %v4360
        %v4447 = vunpack.c.h.b16 %v4360
        %v4448 = vunpack.c.l.b16 %v4361
        %v4449 = vunpack.c.h.b16 %v4361
        %v4450 = vunpack.c.l.b16 %v4362
        %v4451 = vunpack.c.h.b16 %v4362
        %v4452 = vunpack.c.l.b16 %v4363
        %v4453 = vunpack.c.h.b16 %v4363
        %v4454 = vunpack.c.l.b16 %v4364
        %v4455 = vunpack.c.h.b16 %v4364
        %v4456 = vunpack.c.l.b16 %v4365
        %v4457 = vunpack.c.h.b16 %v4365
        %v4458 = vunpack.c.l.b16 %v4366
        %v4459 = vunpack.c.h.b16 %v4366
        %v4460 = vunpack.c.l.b16 %v4367
        %v4461 = vunpack.c.h.b16 %v4367
        %v4462 = vunpack.c.l.b16 %v4368
        %v4463 = vunpack.c.h.b16 %v4368
        %v4464 = vunpack.c.l.b16 %v4369
        %v4465 = vunpack.c.h.b16 %v4369
        %v4466 = vpack.c.b16 %v4404, %v4402
        %v4467 = vpack.c.b16 %v4405, %v4403
        %v4468 = vpack.c.b16 %v4408, %v4406
        %v4469 = vpack.c.b16 %v4409, %v4407
        %v4470 = vpack.c.b16 %v4412, %v4410
        %v4471 = vpack.c.b16 %v4413, %v4411
        %v4472 = vpack.c.b16 %v4416, %v4414
        %v4473 = vpack.c.b16 %v4417, %v4415
        %v4474 = vpack.c.b16 %v4420, %v4418
        %v4475 = vpack.c.b16 %v4421, %v4419
        %v4476 = vpack.c.b16 %v4424, %v4422
        %v4477 = vpack.c.b16 %v4425, %v4423
        %v4478 = vpack.c.b16 %v4428, %v4426
        %v4479 = vpack.c.b16 %v4429, %v4427
        %v4480 = vpack.c.b16 %v4432, %v4430
        %v4481 = vpack.c.b16 %v4433, %v4431
        %v4482 = vpack.c.b16 %v4436, %v4434
        %v4483 = vpack.c.b16 %v4437, %v4435
        %v4484 = vpack.c.b16 %v4440, %v4438
        %v4485 = vpack.c.b16 %v4441, %v4439
        %v4486 = vpack.c.b16 %v4444, %v4442
        %v4487 = vpack.c.b16 %v4445, %v4443
        %v4488 = vpack.c.b16 %v4448, %v4446
        %v4489 = vpack.c.b16 %v4449, %v4447
        %v4490 = vpack.c.b16 %v4452, %v4450
        %v4491 = vpack.c.b16 %v4453, %v4451
        %v4492 = vpack.c.b16 %v4456, %v4454
        %v4493 = vpack.c.b16 %v4457, %v4455
        %v4494 = vpack.c.b16 %v4460, %v4458
        %v4495 = vpack.c.b16 %v4461, %v4459
        %v4496 = vpack.c.b16 %v4464, %v4462
        %v4497 = vpack.c.b16 %v4465, %v4463
        %4530 = vmatpush.bf16.msra.mxu0 %v4480
        %4531 = vmatpush.bf16.msra.mxu0 %v4478
        %4532 = vmatpush.bf16.msra.mxu0 %v4476
        %4533 = vmatpush.bf16.msra.mxu0 %v4474
        %4534 = vmatpush.bf16.msra.mxu0 %v4472
        %4535 = vmatpush.bf16.msra.mxu0 %v4470
        %4536 = vmatpush.bf16.msra.mxu0 %v4468
        %4537 = vmatpush.bf16.msra.mxu0 %v4466
        %4538 = vmatmul.bf16.gmra.mxu0 %v3848
        %v4539 = vpop.f32.mrf.mxu0
        %v4540 = vadd.f32 0.0, %v4539
        %v4541 = vpop.f32.mrf.mxu0
        %4542 = vdwg.mxu0
        %4543 = vmatpush.bf16.msra.mxu0 %v4496
        %4544 = vmatpush.bf16.msra.mxu0 %v4494
        %4545 = vmatpush.bf16.msra.mxu0 %v4492
        %4546 = vmatpush.bf16.msra.mxu0 %v4490
        %4547 = vmatpush.bf16.msra.mxu0 %v4488
        %4548 = vmatpush.bf16.msra.mxu0 %v4486
        %4549 = vmatpush.bf16.msra.mxu0 %v4484
        %4550 = vmatpush.bf16.msra.mxu0 %v4482
        %4551 = vmatmul.bf16.gmra.mxu0 %v3849
        %v4552 = vpop.f32.mrf.mxu0
        %v4553 = vadd.f32 %v4540, %v4552
        %v4554 = vpop.f32.mrf.mxu0
        %4555 = vdwg.mxu0
        %4556 = vmatpush.bf16.msra.mxu0 %v4481
        %4557 = vmatpush.bf16.msra.mxu0 %v4479
        %4558 = vmatpush.bf16.msra.mxu0 %v4477
        %4559 = vmatpush.bf16.msra.mxu0 %v4475
        %4560 = vmatpush.bf16.msra.mxu0 %v4473
        %4561 = vmatpush.bf16.msra.mxu0 %v4471
        %4562 = vmatpush.bf16.msra.mxu0 %v4469
        %4563 = vmatpush.bf16.msra.mxu0 %v4467
        %4564 = vmatmul.bf16.gmra.mxu0 %v3848
        %v4565 = vpop.f32.mrf.mxu0
        %v4566 = vadd.f32 0.0, %v4565
        %v4567 = vpop.f32.mrf.mxu0
        %4568 = vdwg.mxu0
        %4569 = vmatpush.bf16.msra.mxu0 %v4497
        %4570 = vmatpush.bf16.msra.mxu0 %v4495
        %4571 = vmatpush.bf16.msra.mxu0 %v4493
        %4572 = vmatpush.bf16.msra.mxu0 %v4491
        %4573 = vmatpush.bf16.msra.mxu0 %v4489
        %4574 = vmatpush.bf16.msra.mxu0 %v4487
        %4575 = vmatpush.bf16.msra.mxu0 %v4485
        %4576 = vmatpush.bf16.msra.mxu0 %v4483
        %4577 = vmatmul.bf16.gmra.mxu0 %v3849
        %v4578 = vpop.f32.mrf.mxu0
        %v4579 = vadd.f32 %v4566, %v4578
        %v4580 = vpop.f32.mrf.mxu0
        %4581 = vdwg.mxu0
        %v4582 = vadd.f32 %v4309, %v4553
        %v4583 = vadd.f32 %v4335, %v4579
        %v4584 = vld [vmem:[#allocation36] sm:$0x3]
        %v4586 = vperm.slane %v4584, 0
        %v4587 = vperm.slane %v4584, 1
        %v4590 = vmul.f32 %v4582, %v4586
        %v4591 = vmul.f32 %v4583, %v4587
        %v4592 = vld [vmem:[#allocation37] sm:$0x3]
        %v4594 = vperm.slane %v4592, 0
        %v4595 = vperm.slane %v4592, 1
        %v4598 = vadd.f32 %v4590, %v4594
        %v4599 = vadd.f32 %v4591, %v4595
        %v4600 = vld [vmem:[#allocation39] sm:$0xff]
        %v4601 = vld [vmem:[#allocation39 + $0x8] sm:$0xff]
        %v4602 = vld [vmem:[#allocation39 + $0x10] sm:$0xff]
        %v4603 = vld [vmem:[#allocation39 + $0x18] sm:$0xff]
        %v4604 = vld [vmem:[#allocation39 + $0x20] sm:$0xff]
        %v4605 = vld [vmem:[#allocation39 + $0x28] sm:$0xff]
        %v4606 = vld [vmem:[#allocation39 + $0x30] sm:$0xff]
        %v4607 = vld [vmem:[#allocation39 + $0x38] sm:$0xff]
        %v4608 = vld [vmem:[#allocation39 + $0x40] sm:$0xff]
        %v4609 = vld [vmem:[#allocation39 + $0x48] sm:$0xff]
        %v4610 = vld [vmem:[#allocation39 + $0x50] sm:$0xff]
        %v4611 = vld [vmem:[#allocation39 + $0x58] sm:$0xff]
        %v4612 = vld [vmem:[#allocation39 + $0x60] sm:$0xff]
        %v4613 = vld [vmem:[#allocation39 + $0x68] sm:$0xff]
        %v4614 = vld [vmem:[#allocation39 + $0x70] sm:$0xff]
        %v4615 = vld [vmem:[#allocation39 + $0x78] sm:$0xff]
        %v4632 = vunpack.c.l.b16 %v4600
        %v4633 = vunpack.c.h.b16 %v4600
        %v4634 = vunpack.c.l.b16 %v4601
        %v4635 = vunpack.c.h.b16 %v4601
        %v4636 = vunpack.c.l.b16 %v4602
        %v4637 = vunpack.c.h.b16 %v4602
        %v4638 = vunpack.c.l.b16 %v4603
        %v4639 = vunpack.c.h.b16 %v4603
        %v4640 = vunpack.c.l.b16 %v4604
        %v4641 = vunpack.c.h.b16 %v4604
        %v4642 = vunpack.c.l.b16 %v4605
        %v4643 = vunpack.c.h.b16 %v4605
        %v4644 = vunpack.c.l.b16 %v4606
        %v4645 = vunpack.c.h.b16 %v4606
        %v4646 = vunpack.c.l.b16 %v4607
        %v4647 = vunpack.c.h.b16 %v4607
        %v4648 = vunpack.c.l.b16 %v4608
        %v4649 = vunpack.c.h.b16 %v4608
        %v4650 = vunpack.c.l.b16 %v4609
        %v4651 = vunpack.c.h.b16 %v4609
        %v4652 = vunpack.c.l.b16 %v4610
        %v4653 = vunpack.c.h.b16 %v4610
        %v4654 = vunpack.c.l.b16 %v4611
        %v4655 = vunpack.c.h.b16 %v4611
        %v4656 = vunpack.c.l.b16 %v4612
        %v4657 = vunpack.c.h.b16 %v4612
        %v4658 = vunpack.c.l.b16 %v4613
        %v4659 = vunpack.c.h.b16 %v4613
        %v4660 = vunpack.c.l.b16 %v4614
        %v4661 = vunpack.c.h.b16 %v4614
        %v4662 = vunpack.c.l.b16 %v4615
        %v4663 = vunpack.c.h.b16 %v4615
        %v4664 = vpack.c.b16 %v4634, %v4632
        %v4665 = vpack.c.b16 %v4635, %v4633
        %v4666 = vpack.c.b16 %v4638, %v4636
        %v4667 = vpack.c.b16 %v4639, %v4637
        %v4668 = vpack.c.b16 %v4642, %v4640
        %v4669 = vpack.c.b16 %v4643, %v4641
        %v4670 = vpack.c.b16 %v4646, %v4644
        %v4671 = vpack.c.b16 %v4647, %v4645
        %v4672 = vpack.c.b16 %v4650, %v4648
        %v4673 = vpack.c.b16 %v4651, %v4649
        %v4674 = vpack.c.b16 %v4654, %v4652
        %v4675 = vpack.c.b16 %v4655, %v4653
        %v4676 = vpack.c.b16 %v4658, %v4656
        %v4677 = vpack.c.b16 %v4659, %v4657
        %v4678 = vpack.c.b16 %v4662, %v4660
        %v4679 = vpack.c.b16 %v4663, %v4661
        %4696 = vmatpush.bf16.msra.mxu0 %v4678
        %4697 = vmatpush.bf16.msra.mxu0 %v4676
        %4698 = vmatpush.bf16.msra.mxu0 %v4674
        %4699 = vmatpush.bf16.msra.mxu0 %v4672
        %4700 = vmatpush.bf16.msra.mxu0 %v4670
        %4701 = vmatpush.bf16.msra.mxu0 %v4668
        %4702 = vmatpush.bf16.msra.mxu0 %v4666
        %4703 = vmatpush.bf16.msra.mxu0 %v4664
        %4704 = vmatmul.bf16.gmra.mxu0 %v3779
        %v4705 = vpop.f32.mrf.mxu0
        %v4706 = vadd.f32 0.0, %v4705
        %v4707 = vpop.f32.mrf.mxu0
        %4708 = vdwg.mxu0
        %4709 = vmatpush.bf16.msra.mxu0 %v4679
        %4710 = vmatpush.bf16.msra.mxu0 %v4677
        %4711 = vmatpush.bf16.msra.mxu0 %v4675
        %4712 = vmatpush.bf16.msra.mxu0 %v4673
        %4713 = vmatpush.bf16.msra.mxu0 %v4671
        %4714 = vmatpush.bf16.msra.mxu0 %v4669
        %4715 = vmatpush.bf16.msra.mxu0 %v4667
        %4716 = vmatpush.bf16.msra.mxu0 %v4665
        %4717 = vmatmul.bf16.gmra.mxu0 %v3779
        %v4718 = vpop.f32.mrf.mxu0
        %v4719 = vadd.f32 0.0, %v4718
        %v4720 = vpop.f32.mrf.mxu0
        %4721 = vdwg.mxu0
        %v4722 = vld [vmem:[#allocation40] sm:$0x3]
        %v4724 = vperm.slane %v4722, 0
        %v4725 = vperm.slane %v4722, 1
        %v4728 = vmul.f32 %v4706, %v4724
        %v4729 = vmul.f32 %v4719, %v4725
        %v4730 = vld [vmem:[#allocation42] sm:$0x3]
        %v4732 = vperm.slane %v4730, 0
        %v4733 = vperm.slane %v4730, 1
        %v4736 = vadd.f32 %v4728, %v4732
        %v4737 = vadd.f32 %v4729, %v4733
        %v4738 = vadd.f32 %v4598, %v4736
        %v4739 = vadd.f32 %v4599, %v4737
        %v4740 = vmax.f32 %v4738, 0.0
        %v4741 = vmax.f32 %v4739, 0.0
        %v4742 = vpack.c.bf16 %v4740, %v4740
        %v4743 = vpack.c.bf16 %v4741, %v4741
        %v4745 = vsel %vm1715, %v4742, 0
        %v4748 = vsel %vm1715, %v4743, 0
        %4750 = vmatpush.bf16.msra.mxu0 0
        %4751 = vmatpush.bf16.msra.mxu0 0
        %4752 = vmatpush.bf16.msra.mxu0 0
        %4753 = vmatpush.bf16.msra.mxu0 0
        %4754 = vmatpush.bf16.msra.mxu0 0
        %4755 = vmatpush.bf16.msra.mxu0 0
        %4756 = vmatpush.bf16.msra.mxu0 0
        %4757 = vmatpush.bf16.msra.mxu0 %v4745
        %4758 = vmatmul.bf16.gmra.mxu0 %v3782
        %v4759 = vpop.f32.mrf.mxu0
        %v4760 = vadd.f32 0.0, %v4759
        %v4761 = vpop.f32.mrf.mxu0
        %4762 = vdwg.mxu0
        %4763 = vmatpush.bf16.msra.mxu0 0
        %4764 = vmatpush.bf16.msra.mxu0 0
        %4765 = vmatpush.bf16.msra.mxu0 0
        %4766 = vmatpush.bf16.msra.mxu0 0
        %4767 = vmatpush.bf16.msra.mxu0 0
        %4768 = vmatpush.bf16.msra.mxu0 0
        %4769 = vmatpush.bf16.msra.mxu0 0
        %4770 = vmatpush.bf16.msra.mxu0 %v4748
        %4771 = vmatmul.bf16.gmra.mxu0 %v3782
        %v4772 = vpop.f32.mrf.mxu0
        %v4773 = vadd.f32 0.0, %v4772
        %v4774 = vpop.f32.mrf.mxu0
        %4775 = vdwg.mxu0
        %v4776 = vpack.c.bf16 %v4760, %v4760
        %v4777 = vpack.c.bf16 %v4773, %v4773
        %4778 = vmatpush.bf16.msra.mxu0 0
        %4779 = vmatpush.bf16.msra.mxu0 0
        %4780 = vmatpush.bf16.msra.mxu0 0
        %4781 = vmatpush.bf16.msra.mxu0 0
        %4782 = vmatpush.bf16.msra.mxu0 0
        %4783 = vmatpush.bf16.msra.mxu0 0
        %4784 = vmatpush.bf16.msra.mxu0 0
        %4785 = vmatpush.bf16.msra.mxu0 %v4745
        %4786 = vmatmul.bf16.gmra.mxu0 %v3820
        %v4787 = vpop.f32.mrf.mxu0
        %v4788 = vadd.f32 0.0, %v4787
        %v4789 = vpop.f32.mrf.mxu0
        %4790 = vdwg.mxu0
        %4791 = vmatpush.bf16.msra.mxu0 0
        %4792 = vmatpush.bf16.msra.mxu0 0
        %4793 = vmatpush.bf16.msra.mxu0 0
        %4794 = vmatpush.bf16.msra.mxu0 0
        %4795 = vmatpush.bf16.msra.mxu0 0
        %4796 = vmatpush.bf16.msra.mxu0 0
        %4797 = vmatpush.bf16.msra.mxu0 0
        %4798 = vmatpush.bf16.msra.mxu0 %v4748
        %4799 = vmatmul.bf16.gmra.mxu0 %v3820
        %v4800 = vpop.f32.mrf.mxu0
        %v4801 = vadd.f32 0.0, %v4800
        %v4802 = vpop.f32.mrf.mxu0
        %4803 = vdwg.mxu0
        %v4804 = vpack.c.bf16 %v4788, %v4788
        %v4805 = vpack.c.bf16 %v4801, %v4801
        %v4806 = vld [vmem:[#allocation43] sm:$0xff]
        %v4807 = vld [vmem:[#allocation43 + $0x8] sm:$0xff]
        %v4808 = vld [vmem:[#allocation43 + $0x10] sm:$0xff]
        %v4809 = vld [vmem:[#allocation43 + $0x18] sm:$0xff]
        %v4810 = vld [vmem:[#allocation43 + $0x20] sm:$0xff]
        %v4811 = vld [vmem:[#allocation43 + $0x28] sm:$0xff]
        %v4812 = vld [vmem:[#allocation43 + $0x30] sm:$0xff]
        %v4813 = vld [vmem:[#allocation43 + $0x38] sm:$0xff]
        %v4814 = vld [vmem:[#allocation43 + $0x40] sm:$0xff]
        %v4815 = vld [vmem:[#allocation43 + $0x48] sm:$0xff]
        %v4816 = vld [vmem:[#allocation43 + $0x50] sm:$0xff]
        %v4817 = vld [vmem:[#allocation43 + $0x58] sm:$0xff]
        %v4818 = vld [vmem:[#allocation43 + $0x60] sm:$0xff]
        %v4819 = vld [vmem:[#allocation43 + $0x68] sm:$0xff]
        %v4820 = vld [vmem:[#allocation43 + $0x70] sm:$0xff]
        %v4821 = vld [vmem:[#allocation43 + $0x78] sm:$0xff]
        %v4822 = vld [vmem:[#allocation43 + $0x80] sm:$0xff]
        %v4823 = vld [vmem:[#allocation43 + $0x88] sm:$0xff]
        %v4824 = vld [vmem:[#allocation43 + $0x90] sm:$0xff]
        %v4825 = vld [vmem:[#allocation43 + $0x98] sm:$0xff]
        %v4826 = vld [vmem:[#allocation43 + $0xa0] sm:$0xff]
        %v4827 = vld [vmem:[#allocation43 + $0xa8] sm:$0xff]
        %v4828 = vld [vmem:[#allocation43 + $0xb0] sm:$0xff]
        %v4829 = vld [vmem:[#allocation43 + $0xb8] sm:$0xff]
        %v4830 = vld [vmem:[#allocation43 + $0xc0] sm:$0xff]
        %v4831 = vld [vmem:[#allocation43 + $0xc8] sm:$0xff]
        %v4832 = vld [vmem:[#allocation43 + $0xd0] sm:$0xff]
        %v4833 = vld [vmem:[#allocation43 + $0xd8] sm:$0xff]
        %v4834 = vld [vmem:[#allocation43 + $0xe0] sm:$0xff]
        %v4835 = vld [vmem:[#allocation43 + $0xe8] sm:$0xff]
        %v4836 = vld [vmem:[#allocation43 + $0xf0] sm:$0xff]
        %v4837 = vld [vmem:[#allocation43 + $0xf8] sm:$0xff]
        %v4838 = vld [vmem:[#allocation43 + $0x100] sm:$0xff]
        %v4839 = vld [vmem:[#allocation43 + $0x108] sm:$0xff]
        %v4840 = vld [vmem:[#allocation43 + $0x110] sm:$0xff]
        %v4841 = vld [vmem:[#allocation43 + $0x118] sm:$0xff]
        %v4842 = vld [vmem:[#allocation43 + $0x120] sm:$0xff]
        %v4843 = vld [vmem:[#allocation43 + $0x128] sm:$0xff]
        %v4844 = vld [vmem:[#allocation43 + $0x130] sm:$0xff]
        %v4845 = vld [vmem:[#allocation43 + $0x138] sm:$0xff]
        %v4846 = vld [vmem:[#allocation43 + $0x140] sm:$0xff]
        %v4847 = vld [vmem:[#allocation43 + $0x148] sm:$0xff]
        %v4848 = vld [vmem:[#allocation43 + $0x150] sm:$0xff]
        %v4849 = vld [vmem:[#allocation43 + $0x158] sm:$0xff]
        %v4850 = vld [vmem:[#allocation43 + $0x160] sm:$0xff]
        %v4851 = vld [vmem:[#allocation43 + $0x168] sm:$0xff]
        %v4852 = vld [vmem:[#allocation43 + $0x170] sm:$0xff]
        %v4853 = vld [vmem:[#allocation43 + $0x178] sm:$0xff]
        %v4854 = vld [vmem:[#allocation43 + $0x180] sm:$0xff]
        %v4855 = vld [vmem:[#allocation43 + $0x188] sm:$0xff]
        %v4856 = vld [vmem:[#allocation43 + $0x190] sm:$0xff]
        %v4857 = vld [vmem:[#allocation43 + $0x198] sm:$0xff]
        %v4858 = vld [vmem:[#allocation43 + $0x1a0] sm:$0xff]
        %v4859 = vld [vmem:[#allocation43 + $0x1a8] sm:$0xff]
        %v4860 = vld [vmem:[#allocation43 + $0x1b0] sm:$0xff]
        %v4861 = vld [vmem:[#allocation43 + $0x1b8] sm:$0xff]
        %v4862 = vld [vmem:[#allocation43 + $0x1c0] sm:$0xff]
        %v4863 = vld [vmem:[#allocation43 + $0x1c8] sm:$0xff]
        %v4864 = vld [vmem:[#allocation43 + $0x1d0] sm:$0xff]
        %v4865 = vld [vmem:[#allocation43 + $0x1d8] sm:$0xff]
        %v4866 = vld [vmem:[#allocation43 + $0x1e0] sm:$0xff]
        %v4867 = vld [vmem:[#allocation43 + $0x1e8] sm:$0xff]
        %v4868 = vld [vmem:[#allocation43 + $0x1f0] sm:$0xff]
        %v4869 = vld [vmem:[#allocation43 + $0x1f8] sm:$0xff]
        %v4870 = vld [vmem:[#allocation43 + $0x200] sm:$0xff]
        %v4871 = vld [vmem:[#allocation43 + $0x208] sm:$0xff]
        %v4872 = vld [vmem:[#allocation43 + $0x210] sm:$0xff]
        %v4873 = vld [vmem:[#allocation43 + $0x218] sm:$0xff]
        %v4874 = vld [vmem:[#allocation43 + $0x220] sm:$0xff]
        %v4875 = vld [vmem:[#allocation43 + $0x228] sm:$0xff]
        %v4876 = vld [vmem:[#allocation43 + $0x230] sm:$0xff]
        %v4877 = vld [vmem:[#allocation43 + $0x238] sm:$0xff]
        %v4878 = vld [vmem:[#allocation43 + $0x240] sm:$0xff]
        %v4879 = vld [vmem:[#allocation43 + $0x248] sm:$0xff]
        %v4880 = vld [vmem:[#allocation43 + $0x250] sm:$0xff]
        %v4881 = vld [vmem:[#allocation43 + $0x258] sm:$0xff]
        %v4882 = vld [vmem:[#allocation43 + $0x260] sm:$0xff]
        %v4883 = vld [vmem:[#allocation43 + $0x268] sm:$0xff]
        %v4884 = vld [vmem:[#allocation43 + $0x270] sm:$0xff]
        %v4885 = vld [vmem:[#allocation43 + $0x278] sm:$0xff]
        %v4886 = vld [vmem:[#allocation43 + $0x280] sm:$0xff]
        %v4887 = vld [vmem:[#allocation43 + $0x288] sm:$0xff]
        %v4888 = vld [vmem:[#allocation43 + $0x290] sm:$0xff]
        %v4889 = vld [vmem:[#allocation43 + $0x298] sm:$0xff]
        %v4890 = vld [vmem:[#allocation43 + $0x2a0] sm:$0xff]
        %v4891 = vld [vmem:[#allocation43 + $0x2a8] sm:$0xff]
        %v4892 = vld [vmem:[#allocation43 + $0x2b0] sm:$0xff]
        %v4893 = vld [vmem:[#allocation43 + $0x2b8] sm:$0xff]
        %v4894 = vld [vmem:[#allocation43 + $0x2c0] sm:$0xff]
        %v4895 = vld [vmem:[#allocation43 + $0x2c8] sm:$0xff]
        %v4896 = vld [vmem:[#allocation43 + $0x2d0] sm:$0xff]
        %v4897 = vld [vmem:[#allocation43 + $0x2d8] sm:$0xff]
        %v4898 = vld [vmem:[#allocation43 + $0x2e0] sm:$0xff]
        %v4899 = vld [vmem:[#allocation43 + $0x2e8] sm:$0xff]
        %v4900 = vld [vmem:[#allocation43 + $0x2f0] sm:$0xff]
        %v4901 = vld [vmem:[#allocation43 + $0x2f8] sm:$0xff]
        %v4902 = vld [vmem:[#allocation43 + $0x300] sm:$0xff]
        %v4903 = vld [vmem:[#allocation43 + $0x308] sm:$0xff]
        %v4904 = vld [vmem:[#allocation43 + $0x310] sm:$0xff]
        %v4905 = vld [vmem:[#allocation43 + $0x318] sm:$0xff]
        %v4906 = vld [vmem:[#allocation43 + $0x320] sm:$0xff]
        %v4907 = vld [vmem:[#allocation43 + $0x328] sm:$0xff]
        %v4908 = vld [vmem:[#allocation43 + $0x330] sm:$0xff]
        %v4909 = vld [vmem:[#allocation43 + $0x338] sm:$0xff]
        %v4910 = vld [vmem:[#allocation43 + $0x340] sm:$0xff]
        %v4911 = vld [vmem:[#allocation43 + $0x348] sm:$0xff]
        %v4912 = vld [vmem:[#allocation43 + $0x350] sm:$0xff]
        %v4913 = vld [vmem:[#allocation43 + $0x358] sm:$0xff]
        %v4914 = vld [vmem:[#allocation43 + $0x360] sm:$0xff]
        %v4915 = vld [vmem:[#allocation43 + $0x368] sm:$0xff]
        %v4916 = vld [vmem:[#allocation43 + $0x370] sm:$0xff]
        %v4917 = vld [vmem:[#allocation43 + $0x378] sm:$0xff]
        %v4918 = vld [vmem:[#allocation43 + $0x380] sm:$0xff]
        %v4919 = vld [vmem:[#allocation43 + $0x388] sm:$0xff]
        %v4920 = vld [vmem:[#allocation43 + $0x390] sm:$0xff]
        %v4921 = vld [vmem:[#allocation43 + $0x398] sm:$0xff]
        %v4922 = vld [vmem:[#allocation43 + $0x3a0] sm:$0xff]
        %v4923 = vld [vmem:[#allocation43 + $0x3a8] sm:$0xff]
        %v4924 = vld [vmem:[#allocation43 + $0x3b0] sm:$0xff]
        %v4925 = vld [vmem:[#allocation43 + $0x3b8] sm:$0xff]
        %v4926 = vld [vmem:[#allocation43 + $0x3c0] sm:$0xff]
        %v4927 = vld [vmem:[#allocation43 + $0x3c8] sm:$0xff]
        %v4928 = vld [vmem:[#allocation43 + $0x3d0] sm:$0xff]
        %v4929 = vld [vmem:[#allocation43 + $0x3d8] sm:$0xff]
        %v4930 = vld [vmem:[#allocation43 + $0x3e0] sm:$0xff]
        %v4931 = vld [vmem:[#allocation43 + $0x3e8] sm:$0xff]
        %v4932 = vld [vmem:[#allocation43 + $0x3f0] sm:$0xff]
        %v4933 = vld [vmem:[#allocation43 + $0x3f8] sm:$0xff]
        %v4998 = vunpack.c.l.b16 %v4870
        %v4999 = vunpack.c.h.b16 %v4870
        %v5000 = vunpack.c.l.b16 %v4871
        %v5001 = vunpack.c.h.b16 %v4871
        %v5002 = vunpack.c.l.b16 %v4872
        %v5003 = vunpack.c.h.b16 %v4872
        %v5004 = vunpack.c.l.b16 %v4873
        %v5005 = vunpack.c.h.b16 %v4873
        %v5006 = vunpack.c.l.b16 %v4874
        %v5007 = vunpack.c.h.b16 %v4874
        %v5008 = vunpack.c.l.b16 %v4875
        %v5009 = vunpack.c.h.b16 %v4875
        %v5010 = vunpack.c.l.b16 %v4876
        %v5011 = vunpack.c.h.b16 %v4876
        %v5012 = vunpack.c.l.b16 %v4877
        %v5013 = vunpack.c.h.b16 %v4877
        %v5014 = vunpack.c.l.b16 %v4878
        %v5015 = vunpack.c.h.b16 %v4878
        %v5016 = vunpack.c.l.b16 %v4879
        %v5017 = vunpack.c.h.b16 %v4879
        %v5018 = vunpack.c.l.b16 %v4880
        %v5019 = vunpack.c.h.b16 %v4880
        %v5020 = vunpack.c.l.b16 %v4881
        %v5021 = vunpack.c.h.b16 %v4881
        %v5022 = vunpack.c.l.b16 %v4882
        %v5023 = vunpack.c.h.b16 %v4882
        %v5024 = vunpack.c.l.b16 %v4883
        %v5025 = vunpack.c.h.b16 %v4883
        %v5026 = vunpack.c.l.b16 %v4884
        %v5027 = vunpack.c.h.b16 %v4884
        %v5028 = vunpack.c.l.b16 %v4885
        %v5029 = vunpack.c.h.b16 %v4885
        %v5030 = vunpack.c.l.b16 %v4886
        %v5031 = vunpack.c.h.b16 %v4886
        %v5032 = vunpack.c.l.b16 %v4887
        %v5033 = vunpack.c.h.b16 %v4887
        %v5034 = vunpack.c.l.b16 %v4888
        %v5035 = vunpack.c.h.b16 %v4888
        %v5036 = vunpack.c.l.b16 %v4889
        %v5037 = vunpack.c.h.b16 %v4889
        %v5038 = vunpack.c.l.b16 %v4890
        %v5039 = vunpack.c.h.b16 %v4890
        %v5040 = vunpack.c.l.b16 %v4891
        %v5041 = vunpack.c.h.b16 %v4891
        %v5042 = vunpack.c.l.b16 %v4892
        %v5043 = vunpack.c.h.b16 %v4892
        %v5044 = vunpack.c.l.b16 %v4893
        %v5045 = vunpack.c.h.b16 %v4893
        %v5046 = vunpack.c.l.b16 %v4894
        %v5047 = vunpack.c.h.b16 %v4894
        %v5048 = vunpack.c.l.b16 %v4895
        %v5049 = vunpack.c.h.b16 %v4895
        %v5050 = vunpack.c.l.b16 %v4896
        %v5051 = vunpack.c.h.b16 %v4896
        %v5052 = vunpack.c.l.b16 %v4897
        %v5053 = vunpack.c.h.b16 %v4897
        %v5054 = vunpack.c.l.b16 %v4898
        %v5055 = vunpack.c.h.b16 %v4898
        %v5056 = vunpack.c.l.b16 %v4899
        %v5057 = vunpack.c.h.b16 %v4899
        %v5058 = vunpack.c.l.b16 %v4900
        %v5059 = vunpack.c.h.b16 %v4900
        %v5060 = vunpack.c.l.b16 %v4901
        %v5061 = vunpack.c.h.b16 %v4901
        %v5062 = vunpack.c.l.b16 %v4902
        %v5063 = vunpack.c.h.b16 %v4902
        %v5064 = vunpack.c.l.b16 %v4903
        %v5065 = vunpack.c.h.b16 %v4903
        %v5066 = vunpack.c.l.b16 %v4904
        %v5067 = vunpack.c.h.b16 %v4904
        %v5068 = vunpack.c.l.b16 %v4905
        %v5069 = vunpack.c.h.b16 %v4905
        %v5070 = vunpack.c.l.b16 %v4906
        %v5071 = vunpack.c.h.b16 %v4906
        %v5072 = vunpack.c.l.b16 %v4907
        %v5073 = vunpack.c.h.b16 %v4907
        %v5074 = vunpack.c.l.b16 %v4908
        %v5075 = vunpack.c.h.b16 %v4908
        %v5076 = vunpack.c.l.b16 %v4909
        %v5077 = vunpack.c.h.b16 %v4909
        %v5078 = vunpack.c.l.b16 %v4910
        %v5079 = vunpack.c.h.b16 %v4910
        %v5080 = vunpack.c.l.b16 %v4911
        %v5081 = vunpack.c.h.b16 %v4911
        %v5082 = vunpack.c.l.b16 %v4912
        %v5083 = vunpack.c.h.b16 %v4912
        %v5084 = vunpack.c.l.b16 %v4913
        %v5085 = vunpack.c.h.b16 %v4913
        %v5086 = vunpack.c.l.b16 %v4914
        %v5087 = vunpack.c.h.b16 %v4914
        %v5088 = vunpack.c.l.b16 %v4915
        %v5089 = vunpack.c.h.b16 %v4915
        %v5090 = vunpack.c.l.b16 %v4916
        %v5091 = vunpack.c.h.b16 %v4916
        %v5092 = vunpack.c.l.b16 %v4917
        %v5093 = vunpack.c.h.b16 %v4917
        %v5094 = vunpack.c.l.b16 %v4918
        %v5095 = vunpack.c.h.b16 %v4918
        %v5096 = vunpack.c.l.b16 %v4919
        %v5097 = vunpack.c.h.b16 %v4919
        %v5098 = vunpack.c.l.b16 %v4920
        %v5099 = vunpack.c.h.b16 %v4920
        %v5100 = vunpack.c.l.b16 %v4921
        %v5101 = vunpack.c.h.b16 %v4921
        %v5102 = vunpack.c.l.b16 %v4922
        %v5103 = vunpack.c.h.b16 %v4922
        %v5104 = vunpack.c.l.b16 %v4923
        %v5105 = vunpack.c.h.b16 %v4923
        %v5106 = vunpack.c.l.b16 %v4924
        %v5107 = vunpack.c.h.b16 %v4924
        %v5108 = vunpack.c.l.b16 %v4925
        %v5109 = vunpack.c.h.b16 %v4925
        %v5110 = vunpack.c.l.b16 %v4926
        %v5111 = vunpack.c.h.b16 %v4926
        %v5112 = vunpack.c.l.b16 %v4927
        %v5113 = vunpack.c.h.b16 %v4927
        %v5114 = vunpack.c.l.b16 %v4928
        %v5115 = vunpack.c.h.b16 %v4928
        %v5116 = vunpack.c.l.b16 %v4929
        %v5117 = vunpack.c.h.b16 %v4929
        %v5118 = vunpack.c.l.b16 %v4930
        %v5119 = vunpack.c.h.b16 %v4930
        %v5120 = vunpack.c.l.b16 %v4931
        %v5121 = vunpack.c.h.b16 %v4931
        %v5122 = vunpack.c.l.b16 %v4932
        %v5123 = vunpack.c.h.b16 %v4932
        %v5124 = vunpack.c.l.b16 %v4933
        %v5125 = vunpack.c.h.b16 %v4933
        %v5126 = vpack.c.b16 %v5002, %v4998
        %v5127 = vpack.c.b16 %v5003, %v4999
        %v5128 = vpack.c.b16 %v5004, %v5000
        %v5129 = vpack.c.b16 %v5005, %v5001
        %v5130 = vpack.c.b16 %v5010, %v5006
        %v5131 = vpack.c.b16 %v5011, %v5007
        %v5132 = vpack.c.b16 %v5012, %v5008
        %v5133 = vpack.c.b16 %v5013, %v5009
        %v5134 = vpack.c.b16 %v5018, %v5014
        %v5135 = vpack.c.b16 %v5019, %v5015
        %v5136 = vpack.c.b16 %v5020, %v5016
        %v5137 = vpack.c.b16 %v5021, %v5017
        %v5138 = vpack.c.b16 %v5026, %v5022
        %v5139 = vpack.c.b16 %v5027, %v5023
        %v5140 = vpack.c.b16 %v5028, %v5024
        %v5141 = vpack.c.b16 %v5029, %v5025
        %v5142 = vpack.c.b16 %v5034, %v5030
        %v5143 = vpack.c.b16 %v5035, %v5031
        %v5144 = vpack.c.b16 %v5036, %v5032
        %v5145 = vpack.c.b16 %v5037, %v5033
        %v5146 = vpack.c.b16 %v5042, %v5038
        %v5147 = vpack.c.b16 %v5043, %v5039
        %v5148 = vpack.c.b16 %v5044, %v5040
        %v5149 = vpack.c.b16 %v5045, %v5041
        %v5150 = vpack.c.b16 %v5050, %v5046
        %v5151 = vpack.c.b16 %v5051, %v5047
        %v5152 = vpack.c.b16 %v5052, %v5048
        %v5153 = vpack.c.b16 %v5053, %v5049
        %v5154 = vpack.c.b16 %v5058, %v5054
        %v5155 = vpack.c.b16 %v5059, %v5055
        %v5156 = vpack.c.b16 %v5060, %v5056
        %v5157 = vpack.c.b16 %v5061, %v5057
        %v5158 = vpack.c.b16 %v5066, %v5062
        %v5159 = vpack.c.b16 %v5067, %v5063
        %v5160 = vpack.c.b16 %v5068, %v5064
        %v5161 = vpack.c.b16 %v5069, %v5065
        %v5162 = vpack.c.b16 %v5074, %v5070
        %v5163 = vpack.c.b16 %v5075, %v5071
        %v5164 = vpack.c.b16 %v5076, %v5072
        %v5165 = vpack.c.b16 %v5077, %v5073
        %v5166 = vpack.c.b16 %v5082, %v5078
        %v5167 = vpack.c.b16 %v5083, %v5079
        %v5168 = vpack.c.b16 %v5084, %v5080
        %v5169 = vpack.c.b16 %v5085, %v5081
        %v5170 = vpack.c.b16 %v5090, %v5086
        %v5171 = vpack.c.b16 %v5091, %v5087
        %v5172 = vpack.c.b16 %v5092, %v5088
        %v5173 = vpack.c.b16 %v5093, %v5089
        %v5174 = vpack.c.b16 %v5098, %v5094
        %v5175 = vpack.c.b16 %v5099, %v5095
        %v5176 = vpack.c.b16 %v5100, %v5096
        %v5177 = vpack.c.b16 %v5101, %v5097
        %v5178 = vpack.c.b16 %v5106, %v5102
        %v5179 = vpack.c.b16 %v5107, %v5103
        %v5180 = vpack.c.b16 %v5108, %v5104
        %v5181 = vpack.c.b16 %v5109, %v5105
        %v5182 = vpack.c.b16 %v5114, %v5110
        %v5183 = vpack.c.b16 %v5115, %v5111
        %v5184 = vpack.c.b16 %v5116, %v5112
        %v5185 = vpack.c.b16 %v5117, %v5113
        %v5186 = vpack.c.b16 %v5122, %v5118
        %v5187 = vpack.c.b16 %v5123, %v5119
        %v5188 = vpack.c.b16 %v5124, %v5120
        %v5189 = vpack.c.b16 %v5125, %v5121
        %5254 = vmatpush.bf16.msra.mxu0 %v5154
        %5255 = vmatpush.bf16.msra.mxu0 %v5150
        %5256 = vmatpush.bf16.msra.mxu0 %v5146
        %5257 = vmatpush.bf16.msra.mxu0 %v5142
        %5258 = vmatpush.bf16.msra.mxu0 %v5138
        %5259 = vmatpush.bf16.msra.mxu0 %v5134
        %5260 = vmatpush.bf16.msra.mxu0 %v5130
        %5261 = vmatpush.bf16.msra.mxu0 %v5126
        %5262 = vmatmul.bf16.gmra.mxu0 %v4742
        %v5263 = vpop.f32.mrf.mxu0
        %v5264 = vadd.f32 0.0, %v5263
        %v5265 = vpop.f32.mrf.mxu0
        %5266 = vdwg.mxu0
        %5267 = vmatpush.bf16.msra.mxu0 %v5186
        %5268 = vmatpush.bf16.msra.mxu0 %v5182
        %5269 = vmatpush.bf16.msra.mxu0 %v5178
        %5270 = vmatpush.bf16.msra.mxu0 %v5174
        %5271 = vmatpush.bf16.msra.mxu0 %v5170
        %5272 = vmatpush.bf16.msra.mxu0 %v5166
        %5273 = vmatpush.bf16.msra.mxu0 %v5162
        %5274 = vmatpush.bf16.msra.mxu0 %v5158
        %5275 = vmatmul.bf16.gmra.mxu0 %v4743
        %v5276 = vpop.f32.mrf.mxu0
        %v5277 = vadd.f32 %v5264, %v5276
        %v5278 = vpop.f32.mrf.mxu0
        %5279 = vdwg.mxu0
        %5280 = vmatpush.bf16.msra.mxu0 %v5155
        %5281 = vmatpush.bf16.msra.mxu0 %v5151
        %5282 = vmatpush.bf16.msra.mxu0 %v5147
        %5283 = vmatpush.bf16.msra.mxu0 %v5143
        %5284 = vmatpush.bf16.msra.mxu0 %v5139
        %5285 = vmatpush.bf16.msra.mxu0 %v5135
        %5286 = vmatpush.bf16.msra.mxu0 %v5131
        %5287 = vmatpush.bf16.msra.mxu0 %v5127
        %5288 = vmatmul.bf16.gmra.mxu0 %v4742
        %v5289 = vpop.f32.mrf.mxu0
        %v5290 = vadd.f32 0.0, %v5289
        %v5291 = vpop.f32.mrf.mxu0
        %5292 = vdwg.mxu0
        %5293 = vmatpush.bf16.msra.mxu0 %v5187
        %5294 = vmatpush.bf16.msra.mxu0 %v5183
        %5295 = vmatpush.bf16.msra.mxu0 %v5179
        %5296 = vmatpush.bf16.msra.mxu0 %v5175
        %5297 = vmatpush.bf16.msra.mxu0 %v5171
        %5298 = vmatpush.bf16.msra.mxu0 %v5167
        %5299 = vmatpush.bf16.msra.mxu0 %v5163
        %5300 = vmatpush.bf16.msra.mxu0 %v5159
        %5301 = vmatmul.bf16.gmra.mxu0 %v4743
        %v5302 = vpop.f32.mrf.mxu0
        %v5303 = vadd.f32 %v5290, %v5302
        %v5304 = vpop.f32.mrf.mxu0
        %5305 = vdwg.mxu0
        %5306 = vmatpush.bf16.msra.mxu0 %v5156
        %5307 = vmatpush.bf16.msra.mxu0 %v5152
        %5308 = vmatpush.bf16.msra.mxu0 %v5148
        %5309 = vmatpush.bf16.msra.mxu0 %v5144
        %5310 = vmatpush.bf16.msra.mxu0 %v5140
        %5311 = vmatpush.bf16.msra.mxu0 %v5136
        %5312 = vmatpush.bf16.msra.mxu0 %v5132
        %5313 = vmatpush.bf16.msra.mxu0 %v5128
        %5314 = vmatmul.bf16.gmra.mxu0 %v4742
        %v5315 = vpop.f32.mrf.mxu0
        %v5316 = vadd.f32 0.0, %v5315
        %v5317 = vpop.f32.mrf.mxu0
        %5318 = vdwg.mxu0
        %5319 = vmatpush.bf16.msra.mxu0 %v5188
        %5320 = vmatpush.bf16.msra.mxu0 %v5184
        %5321 = vmatpush.bf16.msra.mxu0 %v5180
        %5322 = vmatpush.bf16.msra.mxu0 %v5176
        %5323 = vmatpush.bf16.msra.mxu0 %v5172
        %5324 = vmatpush.bf16.msra.mxu0 %v5168
        %5325 = vmatpush.bf16.msra.mxu0 %v5164
        %5326 = vmatpush.bf16.msra.mxu0 %v5160
        %5327 = vmatmul.bf16.gmra.mxu0 %v4743
        %v5328 = vpop.f32.mrf.mxu0
        %v5329 = vadd.f32 %v5316, %v5328
        %v5330 = vpop.f32.mrf.mxu0
        %5331 = vdwg.mxu0
        %5332 = vmatpush.bf16.msra.mxu0 %v5157
        %5333 = vmatpush.bf16.msra.mxu0 %v5153
        %5334 = vmatpush.bf16.msra.mxu0 %v5149
        %5335 = vmatpush.bf16.msra.mxu0 %v5145
        %5336 = vmatpush.bf16.msra.mxu0 %v5141
        %5337 = vmatpush.bf16.msra.mxu0 %v5137
        %5338 = vmatpush.bf16.msra.mxu0 %v5133
        %5339 = vmatpush.bf16.msra.mxu0 %v5129
        %5340 = vmatmul.bf16.gmra.mxu0 %v4742
        %v5341 = vpop.f32.mrf.mxu0
        %v5342 = vadd.f32 0.0, %v5341
        %v5343 = vpop.f32.mrf.mxu0
        %5344 = vdwg.mxu0
        %5345 = vmatpush.bf16.msra.mxu0 %v5189
        %5346 = vmatpush.bf16.msra.mxu0 %v5185
        %5347 = vmatpush.bf16.msra.mxu0 %v5181
        %5348 = vmatpush.bf16.msra.mxu0 %v5177
        %5349 = vmatpush.bf16.msra.mxu0 %v5173
        %5350 = vmatpush.bf16.msra.mxu0 %v5169
        %5351 = vmatpush.bf16.msra.mxu0 %v5165
        %5352 = vmatpush.bf16.msra.mxu0 %v5161
        %5353 = vmatmul.bf16.gmra.mxu0 %v4743
        %v5354 = vpop.f32.mrf.mxu0
        %v5355 = vadd.f32 %v5342, %v5354
        %v5356 = vpop.f32.mrf.mxu0
        %5357 = vdwg.mxu0
        %v5422 = vunpack.c.l.b16 %v4806
        %v5423 = vunpack.c.h.b16 %v4806
        %v5424 = vunpack.c.l.b16 %v4807
        %v5425 = vunpack.c.h.b16 %v4807
        %v5426 = vunpack.c.l.b16 %v4808
        %v5427 = vunpack.c.h.b16 %v4808
        %v5428 = vunpack.c.l.b16 %v4809
        %v5429 = vunpack.c.h.b16 %v4809
        %v5430 = vunpack.c.l.b16 %v4810
        %v5431 = vunpack.c.h.b16 %v4810
        %v5432 = vunpack.c.l.b16 %v4811
        %v5433 = vunpack.c.h.b16 %v4811
        %v5434 = vunpack.c.l.b16 %v4812
        %v5435 = vunpack.c.h.b16 %v4812
        %v5436 = vunpack.c.l.b16 %v4813
        %v5437 = vunpack.c.h.b16 %v4813
        %v5438 = vunpack.c.l.b16 %v4814
        %v5439 = vunpack.c.h.b16 %v4814
        %v5440 = vunpack.c.l.b16 %v4815
        %v5441 = vunpack.c.h.b16 %v4815
        %v5442 = vunpack.c.l.b16 %v4816
        %v5443 = vunpack.c.h.b16 %v4816
        %v5444 = vunpack.c.l.b16 %v4817
        %v5445 = vunpack.c.h.b16 %v4817
        %v5446 = vunpack.c.l.b16 %v4818
        %v5447 = vunpack.c.h.b16 %v4818
        %v5448 = vunpack.c.l.b16 %v4819
        %v5449 = vunpack.c.h.b16 %v4819
        %v5450 = vunpack.c.l.b16 %v4820
        %v5451 = vunpack.c.h.b16 %v4820
        %v5452 = vunpack.c.l.b16 %v4821
        %v5453 = vunpack.c.h.b16 %v4821
        %v5454 = vunpack.c.l.b16 %v4822
        %v5455 = vunpack.c.h.b16 %v4822
        %v5456 = vunpack.c.l.b16 %v4823
        %v5457 = vunpack.c.h.b16 %v4823
        %v5458 = vunpack.c.l.b16 %v4824
        %v5459 = vunpack.c.h.b16 %v4824
        %v5460 = vunpack.c.l.b16 %v4825
        %v5461 = vunpack.c.h.b16 %v4825
        %v5462 = vunpack.c.l.b16 %v4826
        %v5463 = vunpack.c.h.b16 %v4826
        %v5464 = vunpack.c.l.b16 %v4827
        %v5465 = vunpack.c.h.b16 %v4827
        %v5466 = vunpack.c.l.b16 %v4828
        %v5467 = vunpack.c.h.b16 %v4828
        %v5468 = vunpack.c.l.b16 %v4829
        %v5469 = vunpack.c.h.b16 %v4829
        %v5470 = vunpack.c.l.b16 %v4830
        %v5471 = vunpack.c.h.b16 %v4830
        %v5472 = vunpack.c.l.b16 %v4831
        %v5473 = vunpack.c.h.b16 %v4831
        %v5474 = vunpack.c.l.b16 %v4832
        %v5475 = vunpack.c.h.b16 %v4832
        %v5476 = vunpack.c.l.b16 %v4833
        %v5477 = vunpack.c.h.b16 %v4833
        %v5478 = vunpack.c.l.b16 %v4834
        %v5479 = vunpack.c.h.b16 %v4834
        %v5480 = vunpack.c.l.b16 %v4835
        %v5481 = vunpack.c.h.b16 %v4835
        %v5482 = vunpack.c.l.b16 %v4836
        %v5483 = vunpack.c.h.b16 %v4836
        %v5484 = vunpack.c.l.b16 %v4837
        %v5485 = vunpack.c.h.b16 %v4837
        %v5486 = vunpack.c.l.b16 %v4838
        %v5487 = vunpack.c.h.b16 %v4838
        %v5488 = vunpack.c.l.b16 %v4839
        %v5489 = vunpack.c.h.b16 %v4839
        %v5490 = vunpack.c.l.b16 %v4840
        %v5491 = vunpack.c.h.b16 %v4840
        %v5492 = vunpack.c.l.b16 %v4841
        %v5493 = vunpack.c.h.b16 %v4841
        %v5494 = vunpack.c.l.b16 %v4842
        %v5495 = vunpack.c.h.b16 %v4842
        %v5496 = vunpack.c.l.b16 %v4843
        %v5497 = vunpack.c.h.b16 %v4843
        %v5498 = vunpack.c.l.b16 %v4844
        %v5499 = vunpack.c.h.b16 %v4844
        %v5500 = vunpack.c.l.b16 %v4845
        %v5501 = vunpack.c.h.b16 %v4845
        %v5502 = vunpack.c.l.b16 %v4846
        %v5503 = vunpack.c.h.b16 %v4846
        %v5504 = vunpack.c.l.b16 %v4847
        %v5505 = vunpack.c.h.b16 %v4847
        %v5506 = vunpack.c.l.b16 %v4848
        %v5507 = vunpack.c.h.b16 %v4848
        %v5508 = vunpack.c.l.b16 %v4849
        %v5509 = vunpack.c.h.b16 %v4849
        %v5510 = vunpack.c.l.b16 %v4850
        %v5511 = vunpack.c.h.b16 %v4850
        %v5512 = vunpack.c.l.b16 %v4851
        %v5513 = vunpack.c.h.b16 %v4851
        %v5514 = vunpack.c.l.b16 %v4852
        %v5515 = vunpack.c.h.b16 %v4852
        %v5516 = vunpack.c.l.b16 %v4853
        %v5517 = vunpack.c.h.b16 %v4853
        %v5518 = vunpack.c.l.b16 %v4854
        %v5519 = vunpack.c.h.b16 %v4854
        %v5520 = vunpack.c.l.b16 %v4855
        %v5521 = vunpack.c.h.b16 %v4855
        %v5522 = vunpack.c.l.b16 %v4856
        %v5523 = vunpack.c.h.b16 %v4856
        %v5524 = vunpack.c.l.b16 %v4857
        %v5525 = vunpack.c.h.b16 %v4857
        %v5526 = vunpack.c.l.b16 %v4858
        %v5527 = vunpack.c.h.b16 %v4858
        %v5528 = vunpack.c.l.b16 %v4859
        %v5529 = vunpack.c.h.b16 %v4859
        %v5530 = vunpack.c.l.b16 %v4860
        %v5531 = vunpack.c.h.b16 %v4860
        %v5532 = vunpack.c.l.b16 %v4861
        %v5533 = vunpack.c.h.b16 %v4861
        %v5534 = vunpack.c.l.b16 %v4862
        %v5535 = vunpack.c.h.b16 %v4862
        %v5536 = vunpack.c.l.b16 %v4863
        %v5537 = vunpack.c.h.b16 %v4863
        %v5538 = vunpack.c.l.b16 %v4864
        %v5539 = vunpack.c.h.b16 %v4864
        %v5540 = vunpack.c.l.b16 %v4865
        %v5541 = vunpack.c.h.b16 %v4865
        %v5542 = vunpack.c.l.b16 %v4866
        %v5543 = vunpack.c.h.b16 %v4866
        %v5544 = vunpack.c.l.b16 %v4867
        %v5545 = vunpack.c.h.b16 %v4867
        %v5546 = vunpack.c.l.b16 %v4868
        %v5547 = vunpack.c.h.b16 %v4868
        %v5548 = vunpack.c.l.b16 %v4869
        %v5549 = vunpack.c.h.b16 %v4869
        %v5550 = vpack.c.b16 %v5426, %v5422
        %v5551 = vpack.c.b16 %v5427, %v5423
        %v5552 = vpack.c.b16 %v5428, %v5424
        %v5553 = vpack.c.b16 %v5429, %v5425
        %v5554 = vpack.c.b16 %v5434, %v5430
        %v5555 = vpack.c.b16 %v5435, %v5431
        %v5556 = vpack.c.b16 %v5436, %v5432
        %v5557 = vpack.c.b16 %v5437, %v5433
        %v5558 = vpack.c.b16 %v5442, %v5438
        %v5559 = vpack.c.b16 %v5443, %v5439
        %v5560 = vpack.c.b16 %v5444, %v5440
        %v5561 = vpack.c.b16 %v5445, %v5441
        %v5562 = vpack.c.b16 %v5450, %v5446
        %v5563 = vpack.c.b16 %v5451, %v5447
        %v5564 = vpack.c.b16 %v5452, %v5448
        %v5565 = vpack.c.b16 %v5453, %v5449
        %v5566 = vpack.c.b16 %v5458, %v5454
        %v5567 = vpack.c.b16 %v5459, %v5455
        %v5568 = vpack.c.b16 %v5460, %v5456
        %v5569 = vpack.c.b16 %v5461, %v5457
        %v5570 = vpack.c.b16 %v5466, %v5462
        %v5571 = vpack.c.b16 %v5467, %v5463
        %v5572 = vpack.c.b16 %v5468, %v5464
        %v5573 = vpack.c.b16 %v5469, %v5465
        %v5574 = vpack.c.b16 %v5474, %v5470
        %v5575 = vpack.c.b16 %v5475, %v5471
        %v5576 = vpack.c.b16 %v5476, %v5472
        %v5577 = vpack.c.b16 %v5477, %v5473
        %v5578 = vpack.c.b16 %v5482, %v5478
        %v5579 = vpack.c.b16 %v5483, %v5479
        %v5580 = vpack.c.b16 %v5484, %v5480
        %v5581 = vpack.c.b16 %v5485, %v5481
        %v5582 = vpack.c.b16 %v5490, %v5486
        %v5583 = vpack.c.b16 %v5491, %v5487
        %v5584 = vpack.c.b16 %v5492, %v5488
        %v5585 = vpack.c.b16 %v5493, %v5489
        %v5586 = vpack.c.b16 %v5498, %v5494
        %v5587 = vpack.c.b16 %v5499, %v5495
        %v5588 = vpack.c.b16 %v5500, %v5496
        %v5589 = vpack.c.b16 %v5501, %v5497
        %v5590 = vpack.c.b16 %v5506, %v5502
        %v5591 = vpack.c.b16 %v5507, %v5503
        %v5592 = vpack.c.b16 %v5508, %v5504
        %v5593 = vpack.c.b16 %v5509, %v5505
        %v5594 = vpack.c.b16 %v5514, %v5510
        %v5595 = vpack.c.b16 %v5515, %v5511
        %v5596 = vpack.c.b16 %v5516, %v5512
        %v5597 = vpack.c.b16 %v5517, %v5513
        %v5598 = vpack.c.b16 %v5522, %v5518
        %v5599 = vpack.c.b16 %v5523, %v5519
        %v5600 = vpack.c.b16 %v5524, %v5520
        %v5601 = vpack.c.b16 %v5525, %v5521
        %v5602 = vpack.c.b16 %v5530, %v5526
        %v5603 = vpack.c.b16 %v5531, %v5527
        %v5604 = vpack.c.b16 %v5532, %v5528
        %v5605 = vpack.c.b16 %v5533, %v5529
        %v5606 = vpack.c.b16 %v5538, %v5534
        %v5607 = vpack.c.b16 %v5539, %v5535
        %v5608 = vpack.c.b16 %v5540, %v5536
        %v5609 = vpack.c.b16 %v5541, %v5537
        %v5610 = vpack.c.b16 %v5546, %v5542
        %v5611 = vpack.c.b16 %v5547, %v5543
        %v5612 = vpack.c.b16 %v5548, %v5544
        %v5613 = vpack.c.b16 %v5549, %v5545
        %5678 = vmatpush.bf16.msra.mxu0 %v5578
        %5679 = vmatpush.bf16.msra.mxu0 %v5574
        %5680 = vmatpush.bf16.msra.mxu0 %v5570
        %5681 = vmatpush.bf16.msra.mxu0 %v5566
        %5682 = vmatpush.bf16.msra.mxu0 %v5562
        %5683 = vmatpush.bf16.msra.mxu0 %v5558
        %5684 = vmatpush.bf16.msra.mxu0 %v5554
        %5685 = vmatpush.bf16.msra.mxu0 %v5550
        %5686 = vmatmul.bf16.gmra.mxu0 %v4776
        %v5687 = vpop.f32.mrf.mxu0
        %v5688 = vadd.f32 %v5277, %v5687
        %v5689 = vpop.f32.mrf.mxu0
        %5690 = vdwg.mxu0
        %5691 = vmatpush.bf16.msra.mxu0 %v5610
        %5692 = vmatpush.bf16.msra.mxu0 %v5606
        %5693 = vmatpush.bf16.msra.mxu0 %v5602
        %5694 = vmatpush.bf16.msra.mxu0 %v5598
        %5695 = vmatpush.bf16.msra.mxu0 %v5594
        %5696 = vmatpush.bf16.msra.mxu0 %v5590
        %5697 = vmatpush.bf16.msra.mxu0 %v5586
        %5698 = vmatpush.bf16.msra.mxu0 %v5582
        %5699 = vmatmul.bf16.gmra.mxu0 %v4777
        %v5700 = vpop.f32.mrf.mxu0
        %v5701 = vadd.f32 %v5688, %v5700
        %v5702 = vpop.f32.mrf.mxu0
        %5703 = vdwg.mxu0
        %5704 = vmatpush.bf16.msra.mxu0 %v5579
        %5705 = vmatpush.bf16.msra.mxu0 %v5575
        %5706 = vmatpush.bf16.msra.mxu0 %v5571
        %5707 = vmatpush.bf16.msra.mxu0 %v5567
        %5708 = vmatpush.bf16.msra.mxu0 %v5563
        %5709 = vmatpush.bf16.msra.mxu0 %v5559
        %5710 = vmatpush.bf16.msra.mxu0 %v5555
        %5711 = vmatpush.bf16.msra.mxu0 %v5551
        %5712 = vmatmul.bf16.gmra.mxu0 %v4776
        %v5713 = vpop.f32.mrf.mxu0
        %v5714 = vadd.f32 %v5303, %v5713
        %v5715 = vpop.f32.mrf.mxu0
        %5716 = vdwg.mxu0
        %5717 = vmatpush.bf16.msra.mxu0 %v5611
        %5718 = vmatpush.bf16.msra.mxu0 %v5607
        %5719 = vmatpush.bf16.msra.mxu0 %v5603
        %5720 = vmatpush.bf16.msra.mxu0 %v5599
        %5721 = vmatpush.bf16.msra.mxu0 %v5595
        %5722 = vmatpush.bf16.msra.mxu0 %v5591
        %5723 = vmatpush.bf16.msra.mxu0 %v5587
        %5724 = vmatpush.bf16.msra.mxu0 %v5583
        %5725 = vmatmul.bf16.gmra.mxu0 %v4777
        %v5726 = vpop.f32.mrf.mxu0
        %v5727 = vadd.f32 %v5714, %v5726
        %v5728 = vpop.f32.mrf.mxu0
        %5729 = vdwg.mxu0
        %5730 = vmatpush.bf16.msra.mxu0 %v5580
        %5731 = vmatpush.bf16.msra.mxu0 %v5576
        %5732 = vmatpush.bf16.msra.mxu0 %v5572
        %5733 = vmatpush.bf16.msra.mxu0 %v5568
        %5734 = vmatpush.bf16.msra.mxu0 %v5564
        %5735 = vmatpush.bf16.msra.mxu0 %v5560
        %5736 = vmatpush.bf16.msra.mxu0 %v5556
        %5737 = vmatpush.bf16.msra.mxu0 %v5552
        %5738 = vmatmul.bf16.gmra.mxu0 %v4776
        %v5739 = vpop.f32.mrf.mxu0
        %v5740 = vadd.f32 %v5329, %v5739
        %v5741 = vpop.f32.mrf.mxu0
        %5742 = vdwg.mxu0
        %5743 = vmatpush.bf16.msra.mxu0 %v5612
        %5744 = vmatpush.bf16.msra.mxu0 %v5608
        %5745 = vmatpush.bf16.msra.mxu0 %v5604
        %5746 = vmatpush.bf16.msra.mxu0 %v5600
        %5747 = vmatpush.bf16.msra.mxu0 %v5596
        %5748 = vmatpush.bf16.msra.mxu0 %v5592
        %5749 = vmatpush.bf16.msra.mxu0 %v5588
        %5750 = vmatpush.bf16.msra.mxu0 %v5584
        %5751 = vmatmul.bf16.gmra.mxu0 %v4777
        %v5752 = vpop.f32.mrf.mxu0
        %v5753 = vadd.f32 %v5740, %v5752
        %v5754 = vpop.f32.mrf.mxu0
        %5755 = vdwg.mxu0
        %5756 = vmatpush.bf16.msra.mxu0 %v5581
        %5757 = vmatpush.bf16.msra.mxu0 %v5577
        %5758 = vmatpush.bf16.msra.mxu0 %v5573
        %5759 = vmatpush.bf16.msra.mxu0 %v5569
        %5760 = vmatpush.bf16.msra.mxu0 %v5565
        %5761 = vmatpush.bf16.msra.mxu0 %v5561
        %5762 = vmatpush.bf16.msra.mxu0 %v5557
        %5763 = vmatpush.bf16.msra.mxu0 %v5553
        %5764 = vmatmul.bf16.gmra.mxu0 %v4776
        %v5765 = vpop.f32.mrf.mxu0
        %v5766 = vadd.f32 %v5355, %v5765
        %v5767 = vpop.f32.mrf.mxu0
        %5768 = vdwg.mxu0
        %5769 = vmatpush.bf16.msra.mxu0 %v5613
        %5770 = vmatpush.bf16.msra.mxu0 %v5609
        %5771 = vmatpush.bf16.msra.mxu0 %v5605
        %5772 = vmatpush.bf16.msra.mxu0 %v5601
        %5773 = vmatpush.bf16.msra.mxu0 %v5597
        %5774 = vmatpush.bf16.msra.mxu0 %v5593
        %5775 = vmatpush.bf16.msra.mxu0 %v5589
        %5776 = vmatpush.bf16.msra.mxu0 %v5585
        %5777 = vmatmul.bf16.gmra.mxu0 %v4777
        %v5778 = vpop.f32.mrf.mxu0
        %v5779 = vadd.f32 %v5766, %v5778
        %v5780 = vpop.f32.mrf.mxu0
        %5781 = vdwg.mxu0
        %v5782 = vld [vmem:[#allocation43 + $0x400] sm:$0xff]
        %v5783 = vld [vmem:[#allocation43 + $0x408] sm:$0xff]
        %v5784 = vld [vmem:[#allocation43 + $0x410] sm:$0xff]
        %v5785 = vld [vmem:[#allocation43 + $0x418] sm:$0xff]
        %v5786 = vld [vmem:[#allocation43 + $0x420] sm:$0xff]
        %v5787 = vld [vmem:[#allocation43 + $0x428] sm:$0xff]
        %v5788 = vld [vmem:[#allocation43 + $0x430] sm:$0xff]
        %v5789 = vld [vmem:[#allocation43 + $0x438] sm:$0xff]
        %v5790 = vld [vmem:[#allocation43 + $0x440] sm:$0xff]
        %v5791 = vld [vmem:[#allocation43 + $0x448] sm:$0xff]
        %v5792 = vld [vmem:[#allocation43 + $0x450] sm:$0xff]
        %v5793 = vld [vmem:[#allocation43 + $0x458] sm:$0xff]
        %v5794 = vld [vmem:[#allocation43 + $0x460] sm:$0xff]
        %v5795 = vld [vmem:[#allocation43 + $0x468] sm:$0xff]
        %v5796 = vld [vmem:[#allocation43 + $0x470] sm:$0xff]
        %v5797 = vld [vmem:[#allocation43 + $0x478] sm:$0xff]
        %v5798 = vld [vmem:[#allocation43 + $0x480] sm:$0xff]
        %v5799 = vld [vmem:[#allocation43 + $0x488] sm:$0xff]
        %v5800 = vld [vmem:[#allocation43 + $0x490] sm:$0xff]
        %v5801 = vld [vmem:[#allocation43 + $0x498] sm:$0xff]
        %v5802 = vld [vmem:[#allocation43 + $0x4a0] sm:$0xff]
        %v5803 = vld [vmem:[#allocation43 + $0x4a8] sm:$0xff]
        %v5804 = vld [vmem:[#allocation43 + $0x4b0] sm:$0xff]
        %v5805 = vld [vmem:[#allocation43 + $0x4b8] sm:$0xff]
        %v5806 = vld [vmem:[#allocation43 + $0x4c0] sm:$0xff]
        %v5807 = vld [vmem:[#allocation43 + $0x4c8] sm:$0xff]
        %v5808 = vld [vmem:[#allocation43 + $0x4d0] sm:$0xff]
        %v5809 = vld [vmem:[#allocation43 + $0x4d8] sm:$0xff]
        %v5810 = vld [vmem:[#allocation43 + $0x4e0] sm:$0xff]
        %v5811 = vld [vmem:[#allocation43 + $0x4e8] sm:$0xff]
        %v5812 = vld [vmem:[#allocation43 + $0x4f0] sm:$0xff]
        %v5813 = vld [vmem:[#allocation43 + $0x4f8] sm:$0xff]
        %v5814 = vld [vmem:[#allocation43 + $0x500] sm:$0xff]
        %v5815 = vld [vmem:[#allocation43 + $0x508] sm:$0xff]
        %v5816 = vld [vmem:[#allocation43 + $0x510] sm:$0xff]
        %v5817 = vld [vmem:[#allocation43 + $0x518] sm:$0xff]
        %v5818 = vld [vmem:[#allocation43 + $0x520] sm:$0xff]
        %v5819 = vld [vmem:[#allocation43 + $0x528] sm:$0xff]
        %v5820 = vld [vmem:[#allocation43 + $0x530] sm:$0xff]
        %v5821 = vld [vmem:[#allocation43 + $0x538] sm:$0xff]
        %v5822 = vld [vmem:[#allocation43 + $0x540] sm:$0xff]
        %v5823 = vld [vmem:[#allocation43 + $0x548] sm:$0xff]
        %v5824 = vld [vmem:[#allocation43 + $0x550] sm:$0xff]
        %v5825 = vld [vmem:[#allocation43 + $0x558] sm:$0xff]
        %v5826 = vld [vmem:[#allocation43 + $0x560] sm:$0xff]
        %v5827 = vld [vmem:[#allocation43 + $0x568] sm:$0xff]
        %v5828 = vld [vmem:[#allocation43 + $0x570] sm:$0xff]
        %v5829 = vld [vmem:[#allocation43 + $0x578] sm:$0xff]
        %v5830 = vld [vmem:[#allocation43 + $0x580] sm:$0xff]
        %v5831 = vld [vmem:[#allocation43 + $0x588] sm:$0xff]
        %v5832 = vld [vmem:[#allocation43 + $0x590] sm:$0xff]
        %v5833 = vld [vmem:[#allocation43 + $0x598] sm:$0xff]
        %v5834 = vld [vmem:[#allocation43 + $0x5a0] sm:$0xff]
        %v5835 = vld [vmem:[#allocation43 + $0x5a8] sm:$0xff]
        %v5836 = vld [vmem:[#allocation43 + $0x5b0] sm:$0xff]
        %v5837 = vld [vmem:[#allocation43 + $0x5b8] sm:$0xff]
        %v5838 = vld [vmem:[#allocation43 + $0x5c0] sm:$0xff]
        %v5839 = vld [vmem:[#allocation43 + $0x5c8] sm:$0xff]
        %v5840 = vld [vmem:[#allocation43 + $0x5d0] sm:$0xff]
        %v5841 = vld [vmem:[#allocation43 + $0x5d8] sm:$0xff]
        %v5842 = vld [vmem:[#allocation43 + $0x5e0] sm:$0xff]
        %v5843 = vld [vmem:[#allocation43 + $0x5e8] sm:$0xff]
        %v5844 = vld [vmem:[#allocation43 + $0x5f0] sm:$0xff]
        %v5845 = vld [vmem:[#allocation43 + $0x5f8] sm:$0xff]
        %v5910 = vunpack.c.l.b16 %v5782
        %v5911 = vunpack.c.h.b16 %v5782
        %v5912 = vunpack.c.l.b16 %v5783
        %v5913 = vunpack.c.h.b16 %v5783
        %v5914 = vunpack.c.l.b16 %v5784
        %v5915 = vunpack.c.h.b16 %v5784
        %v5916 = vunpack.c.l.b16 %v5785
        %v5917 = vunpack.c.h.b16 %v5785
        %v5918 = vunpack.c.l.b16 %v5786
        %v5919 = vunpack.c.h.b16 %v5786
        %v5920 = vunpack.c.l.b16 %v5787
        %v5921 = vunpack.c.h.b16 %v5787
        %v5922 = vunpack.c.l.b16 %v5788
        %v5923 = vunpack.c.h.b16 %v5788
        %v5924 = vunpack.c.l.b16 %v5789
        %v5925 = vunpack.c.h.b16 %v5789
        %v5926 = vunpack.c.l.b16 %v5790
        %v5927 = vunpack.c.h.b16 %v5790
        %v5928 = vunpack.c.l.b16 %v5791
        %v5929 = vunpack.c.h.b16 %v5791
        %v5930 = vunpack.c.l.b16 %v5792
        %v5931 = vunpack.c.h.b16 %v5792
        %v5932 = vunpack.c.l.b16 %v5793
        %v5933 = vunpack.c.h.b16 %v5793
        %v5934 = vunpack.c.l.b16 %v5794
        %v5935 = vunpack.c.h.b16 %v5794
        %v5936 = vunpack.c.l.b16 %v5795
        %v5937 = vunpack.c.h.b16 %v5795
        %v5938 = vunpack.c.l.b16 %v5796
        %v5939 = vunpack.c.h.b16 %v5796
        %v5940 = vunpack.c.l.b16 %v5797
        %v5941 = vunpack.c.h.b16 %v5797
        %v5942 = vunpack.c.l.b16 %v5798
        %v5943 = vunpack.c.h.b16 %v5798
        %v5944 = vunpack.c.l.b16 %v5799
        %v5945 = vunpack.c.h.b16 %v5799
        %v5946 = vunpack.c.l.b16 %v5800
        %v5947 = vunpack.c.h.b16 %v5800
        %v5948 = vunpack.c.l.b16 %v5801
        %v5949 = vunpack.c.h.b16 %v5801
        %v5950 = vunpack.c.l.b16 %v5802
        %v5951 = vunpack.c.h.b16 %v5802
        %v5952 = vunpack.c.l.b16 %v5803
        %v5953 = vunpack.c.h.b16 %v5803
        %v5954 = vunpack.c.l.b16 %v5804
        %v5955 = vunpack.c.h.b16 %v5804
        %v5956 = vunpack.c.l.b16 %v5805
        %v5957 = vunpack.c.h.b16 %v5805
        %v5958 = vunpack.c.l.b16 %v5806
        %v5959 = vunpack.c.h.b16 %v5806
        %v5960 = vunpack.c.l.b16 %v5807
        %v5961 = vunpack.c.h.b16 %v5807
        %v5962 = vunpack.c.l.b16 %v5808
        %v5963 = vunpack.c.h.b16 %v5808
        %v5964 = vunpack.c.l.b16 %v5809
        %v5965 = vunpack.c.h.b16 %v5809
        %v5966 = vunpack.c.l.b16 %v5810
        %v5967 = vunpack.c.h.b16 %v5810
        %v5968 = vunpack.c.l.b16 %v5811
        %v5969 = vunpack.c.h.b16 %v5811
        %v5970 = vunpack.c.l.b16 %v5812
        %v5971 = vunpack.c.h.b16 %v5812
        %v5972 = vunpack.c.l.b16 %v5813
        %v5973 = vunpack.c.h.b16 %v5813
        %v5974 = vunpack.c.l.b16 %v5814
        %v5975 = vunpack.c.h.b16 %v5814
        %v5976 = vunpack.c.l.b16 %v5815
        %v5977 = vunpack.c.h.b16 %v5815
        %v5978 = vunpack.c.l.b16 %v5816
        %v5979 = vunpack.c.h.b16 %v5816
        %v5980 = vunpack.c.l.b16 %v5817
        %v5981 = vunpack.c.h.b16 %v5817
        %v5982 = vunpack.c.l.b16 %v5818
        %v5983 = vunpack.c.h.b16 %v5818
        %v5984 = vunpack.c.l.b16 %v5819
        %v5985 = vunpack.c.h.b16 %v5819
        %v5986 = vunpack.c.l.b16 %v5820
        %v5987 = vunpack.c.h.b16 %v5820
        %v5988 = vunpack.c.l.b16 %v5821
        %v5989 = vunpack.c.h.b16 %v5821
        %v5990 = vunpack.c.l.b16 %v5822
        %v5991 = vunpack.c.h.b16 %v5822
        %v5992 = vunpack.c.l.b16 %v5823
        %v5993 = vunpack.c.h.b16 %v5823
        %v5994 = vunpack.c.l.b16 %v5824
        %v5995 = vunpack.c.h.b16 %v5824
        %v5996 = vunpack.c.l.b16 %v5825
        %v5997 = vunpack.c.h.b16 %v5825
        %v5998 = vunpack.c.l.b16 %v5826
        %v5999 = vunpack.c.h.b16 %v5826
        %v6000 = vunpack.c.l.b16 %v5827
        %v6001 = vunpack.c.h.b16 %v5827
        %v6002 = vunpack.c.l.b16 %v5828
        %v6003 = vunpack.c.h.b16 %v5828
        %v6004 = vunpack.c.l.b16 %v5829
        %v6005 = vunpack.c.h.b16 %v5829
        %v6006 = vunpack.c.l.b16 %v5830
        %v6007 = vunpack.c.h.b16 %v5830
        %v6008 = vunpack.c.l.b16 %v5831
        %v6009 = vunpack.c.h.b16 %v5831
        %v6010 = vunpack.c.l.b16 %v5832
        %v6011 = vunpack.c.h.b16 %v5832
        %v6012 = vunpack.c.l.b16 %v5833
        %v6013 = vunpack.c.h.b16 %v5833
        %v6014 = vunpack.c.l.b16 %v5834
        %v6015 = vunpack.c.h.b16 %v5834
        %v6016 = vunpack.c.l.b16 %v5835
        %v6017 = vunpack.c.h.b16 %v5835
        %v6018 = vunpack.c.l.b16 %v5836
        %v6019 = vunpack.c.h.b16 %v5836
        %v6020 = vunpack.c.l.b16 %v5837
        %v6021 = vunpack.c.h.b16 %v5837
        %v6022 = vunpack.c.l.b16 %v5838
        %v6023 = vunpack.c.h.b16 %v5838
        %v6024 = vunpack.c.l.b16 %v5839
        %v6025 = vunpack.c.h.b16 %v5839
        %v6026 = vunpack.c.l.b16 %v5840
        %v6027 = vunpack.c.h.b16 %v5840
        %v6028 = vunpack.c.l.b16 %v5841
        %v6029 = vunpack.c.h.b16 %v5841
        %v6030 = vunpack.c.l.b16 %v5842
        %v6031 = vunpack.c.h.b16 %v5842
        %v6032 = vunpack.c.l.b16 %v5843
        %v6033 = vunpack.c.h.b16 %v5843
        %v6034 = vunpack.c.l.b16 %v5844
        %v6035 = vunpack.c.h.b16 %v5844
        %v6036 = vunpack.c.l.b16 %v5845
        %v6037 = vunpack.c.h.b16 %v5845
        %v6038 = vpack.c.b16 %v5914, %v5910
        %v6039 = vpack.c.b16 %v5915, %v5911
        %v6040 = vpack.c.b16 %v5916, %v5912
        %v6041 = vpack.c.b16 %v5917, %v5913
        %v6042 = vpack.c.b16 %v5922, %v5918
        %v6043 = vpack.c.b16 %v5923, %v5919
        %v6044 = vpack.c.b16 %v5924, %v5920
        %v6045 = vpack.c.b16 %v5925, %v5921
        %v6046 = vpack.c.b16 %v5930, %v5926
        %v6047 = vpack.c.b16 %v5931, %v5927
        %v6048 = vpack.c.b16 %v5932, %v5928
        %v6049 = vpack.c.b16 %v5933, %v5929
        %v6050 = vpack.c.b16 %v5938, %v5934
        %v6051 = vpack.c.b16 %v5939, %v5935
        %v6052 = vpack.c.b16 %v5940, %v5936
        %v6053 = vpack.c.b16 %v5941, %v5937
        %v6054 = vpack.c.b16 %v5946, %v5942
        %v6055 = vpack.c.b16 %v5947, %v5943
        %v6056 = vpack.c.b16 %v5948, %v5944
        %v6057 = vpack.c.b16 %v5949, %v5945
        %v6058 = vpack.c.b16 %v5954, %v5950
        %v6059 = vpack.c.b16 %v5955, %v5951
        %v6060 = vpack.c.b16 %v5956, %v5952
        %v6061 = vpack.c.b16 %v5957, %v5953
        %v6062 = vpack.c.b16 %v5962, %v5958
        %v6063 = vpack.c.b16 %v5963, %v5959
        %v6064 = vpack.c.b16 %v5964, %v5960
        %v6065 = vpack.c.b16 %v5965, %v5961
        %v6066 = vpack.c.b16 %v5970, %v5966
        %v6067 = vpack.c.b16 %v5971, %v5967
        %v6068 = vpack.c.b16 %v5972, %v5968
        %v6069 = vpack.c.b16 %v5973, %v5969
        %v6070 = vpack.c.b16 %v5978, %v5974
        %v6071 = vpack.c.b16 %v5979, %v5975
        %v6072 = vpack.c.b16 %v5980, %v5976
        %v6073 = vpack.c.b16 %v5981, %v5977
        %v6074 = vpack.c.b16 %v5986, %v5982
        %v6075 = vpack.c.b16 %v5987, %v5983
        %v6076 = vpack.c.b16 %v5988, %v5984
        %v6077 = vpack.c.b16 %v5989, %v5985
        %v6078 = vpack.c.b16 %v5994, %v5990
        %v6079 = vpack.c.b16 %v5995, %v5991
        %v6080 = vpack.c.b16 %v5996, %v5992
        %v6081 = vpack.c.b16 %v5997, %v5993
        %v6082 = vpack.c.b16 %v6002, %v5998
        %v6083 = vpack.c.b16 %v6003, %v5999
        %v6084 = vpack.c.b16 %v6004, %v6000
        %v6085 = vpack.c.b16 %v6005, %v6001
        %v6086 = vpack.c.b16 %v6010, %v6006
        %v6087 = vpack.c.b16 %v6011, %v6007
        %v6088 = vpack.c.b16 %v6012, %v6008
        %v6089 = vpack.c.b16 %v6013, %v6009
        %v6090 = vpack.c.b16 %v6018, %v6014
        %v6091 = vpack.c.b16 %v6019, %v6015
        %v6092 = vpack.c.b16 %v6020, %v6016
        %v6093 = vpack.c.b16 %v6021, %v6017
        %v6094 = vpack.c.b16 %v6026, %v6022
        %v6095 = vpack.c.b16 %v6027, %v6023
        %v6096 = vpack.c.b16 %v6028, %v6024
        %v6097 = vpack.c.b16 %v6029, %v6025
        %v6098 = vpack.c.b16 %v6034, %v6030
        %v6099 = vpack.c.b16 %v6035, %v6031
        %v6100 = vpack.c.b16 %v6036, %v6032
        %v6101 = vpack.c.b16 %v6037, %v6033
        %6166 = vmatpush.bf16.msra.mxu0 %v6066
        %6167 = vmatpush.bf16.msra.mxu0 %v6062
        %6168 = vmatpush.bf16.msra.mxu0 %v6058
        %6169 = vmatpush.bf16.msra.mxu0 %v6054
        %6170 = vmatpush.bf16.msra.mxu0 %v6050
        %6171 = vmatpush.bf16.msra.mxu0 %v6046
        %6172 = vmatpush.bf16.msra.mxu0 %v6042
        %6173 = vmatpush.bf16.msra.mxu0 %v6038
        %6174 = vmatmul.bf16.gmra.mxu0 %v4804
        %v6175 = vpop.f32.mrf.mxu0
        %v6176 = vadd.f32 0.0, %v6175
        %v6177 = vpop.f32.mrf.mxu0
        %6178 = vdwg.mxu0
        %6179 = vmatpush.bf16.msra.mxu0 %v6098
        %6180 = vmatpush.bf16.msra.mxu0 %v6094
        %6181 = vmatpush.bf16.msra.mxu0 %v6090
        %6182 = vmatpush.bf16.msra.mxu0 %v6086
        %6183 = vmatpush.bf16.msra.mxu0 %v6082
        %6184 = vmatpush.bf16.msra.mxu0 %v6078
        %6185 = vmatpush.bf16.msra.mxu0 %v6074
        %6186 = vmatpush.bf16.msra.mxu0 %v6070
        %6187 = vmatmul.bf16.gmra.mxu0 %v4805
        %v6188 = vpop.f32.mrf.mxu0
        %v6189 = vadd.f32 %v6176, %v6188
        %v6190 = vpop.f32.mrf.mxu0
        %6191 = vdwg.mxu0
        %6192 = vmatpush.bf16.msra.mxu0 %v6067
        %6193 = vmatpush.bf16.msra.mxu0 %v6063
        %6194 = vmatpush.bf16.msra.mxu0 %v6059
        %6195 = vmatpush.bf16.msra.mxu0 %v6055
        %6196 = vmatpush.bf16.msra.mxu0 %v6051
        %6197 = vmatpush.bf16.msra.mxu0 %v6047
        %6198 = vmatpush.bf16.msra.mxu0 %v6043
        %6199 = vmatpush.bf16.msra.mxu0 %v6039
        %6200 = vmatmul.bf16.gmra.mxu0 %v4804
        %v6201 = vpop.f32.mrf.mxu0
        %v6202 = vadd.f32 0.0, %v6201
        %v6203 = vpop.f32.mrf.mxu0
        %6204 = vdwg.mxu0
        %6205 = vmatpush.bf16.msra.mxu0 %v6099
        %6206 = vmatpush.bf16.msra.mxu0 %v6095
        %6207 = vmatpush.bf16.msra.mxu0 %v6091
        %6208 = vmatpush.bf16.msra.mxu0 %v6087
        %6209 = vmatpush.bf16.msra.mxu0 %v6083
        %6210 = vmatpush.bf16.msra.mxu0 %v6079
        %6211 = vmatpush.bf16.msra.mxu0 %v6075
        %6212 = vmatpush.bf16.msra.mxu0 %v6071
        %6213 = vmatmul.bf16.gmra.mxu0 %v4805
        %v6214 = vpop.f32.mrf.mxu0
        %v6215 = vadd.f32 %v6202, %v6214
        %v6216 = vpop.f32.mrf.mxu0
        %6217 = vdwg.mxu0
        %6218 = vmatpush.bf16.msra.mxu0 %v6068
        %6219 = vmatpush.bf16.msra.mxu0 %v6064
        %6220 = vmatpush.bf16.msra.mxu0 %v6060
        %6221 = vmatpush.bf16.msra.mxu0 %v6056
        %6222 = vmatpush.bf16.msra.mxu0 %v6052
        %6223 = vmatpush.bf16.msra.mxu0 %v6048
        %6224 = vmatpush.bf16.msra.mxu0 %v6044
        %6225 = vmatpush.bf16.msra.mxu0 %v6040
        %6226 = vmatmul.bf16.gmra.mxu0 %v4804
        %v6227 = vpop.f32.mrf.mxu0
        %v6228 = vadd.f32 0.0, %v6227
        %v6229 = vpop.f32.mrf.mxu0
        %6230 = vdwg.mxu0
        %6231 = vmatpush.bf16.msra.mxu0 %v6100
        %6232 = vmatpush.bf16.msra.mxu0 %v6096
        %6233 = vmatpush.bf16.msra.mxu0 %v6092
        %6234 = vmatpush.bf16.msra.mxu0 %v6088
        %6235 = vmatpush.bf16.msra.mxu0 %v6084
        %6236 = vmatpush.bf16.msra.mxu0 %v6080
        %6237 = vmatpush.bf16.msra.mxu0 %v6076
        %6238 = vmatpush.bf16.msra.mxu0 %v6072
        %6239 = vmatmul.bf16.gmra.mxu0 %v4805
        %v6240 = vpop.f32.mrf.mxu0
        %v6241 = vadd.f32 %v6228, %v6240
        %v6242 = vpop.f32.mrf.mxu0
        %6243 = vdwg.mxu0
        %6244 = vmatpush.bf16.msra.mxu0 %v6069
        %6245 = vmatpush.bf16.msra.mxu0 %v6065
        %6246 = vmatpush.bf16.msra.mxu0 %v6061
        %6247 = vmatpush.bf16.msra.mxu0 %v6057
        %6248 = vmatpush.bf16.msra.mxu0 %v6053
        %6249 = vmatpush.bf16.msra.mxu0 %v6049
        %6250 = vmatpush.bf16.msra.mxu0 %v6045
        %6251 = vmatpush.bf16.msra.mxu0 %v6041
        %6252 = vmatmul.bf16.gmra.mxu0 %v4804
        %v6253 = vpop.f32.mrf.mxu0
        %v6254 = vadd.f32 0.0, %v6253
        %v6255 = vpop.f32.mrf.mxu0
        %6256 = vdwg.mxu0
        %6257 = vmatpush.bf16.msra.mxu0 %v6101
        %6258 = vmatpush.bf16.msra.mxu0 %v6097
        %6259 = vmatpush.bf16.msra.mxu0 %v6093
        %6260 = vmatpush.bf16.msra.mxu0 %v6089
        %6261 = vmatpush.bf16.msra.mxu0 %v6085
        %6262 = vmatpush.bf16.msra.mxu0 %v6081
        %6263 = vmatpush.bf16.msra.mxu0 %v6077
        %6264 = vmatpush.bf16.msra.mxu0 %v6073
        %6265 = vmatmul.bf16.gmra.mxu0 %v4805
        %v6266 = vpop.f32.mrf.mxu0
        %v6267 = vadd.f32 %v6254, %v6266
        %v6268 = vpop.f32.mrf.mxu0
        %6269 = vdwg.mxu0
        %v6270 = vadd.f32 %v5701, %v6189
        %v6271 = vadd.f32 %v5727, %v6215
        %v6272 = vadd.f32 %v5753, %v6241
        %v6273 = vadd.f32 %v5779, %v6267
        %v6274 = vld [vmem:[#allocation45] sm:$0xf]
        %v6276 = vperm.slane %v6274, 0
        %v6277 = vperm.slane %v6274, 1
        %v6278 = vperm.slane %v6274, 2
        %v6279 = vperm.slane %v6274, 3
        %v6284 = vmul.f32 %v6270, %v6276
        %v6285 = vmul.f32 %v6271, %v6277
        %v6286 = vmul.f32 %v6272, %v6278
        %v6287 = vmul.f32 %v6273, %v6279
        %v6288 = vld [vmem:[#allocation46] sm:$0xf]
        %v6290 = vperm.slane %v6288, 0
        %v6291 = vperm.slane %v6288, 1
        %v6292 = vperm.slane %v6288, 2
        %v6293 = vperm.slane %v6288, 3
        %v6298 = vadd.f32 %v6284, %v6290
        %v6299 = vadd.f32 %v6285, %v6291
        %v6300 = vadd.f32 %v6286, %v6292
        %v6301 = vadd.f32 %v6287, %v6293
        %v6302 = vmax.f32 %v6298, 0.0
        %v6303 = vmax.f32 %v6299, 0.0
        %v6304 = vmax.f32 %v6300, 0.0
        %v6305 = vmax.f32 %v6301, 0.0
        %v6306 = vpack.c.bf16 %v6302, %v6302
        %v6307 = vpack.c.bf16 %v6303, %v6303
        %v6308 = vpack.c.bf16 %v6304, %v6304
        %v6309 = vpack.c.bf16 %v6305, %v6305
        %v6310 = vsel %vm1702, %v3734, 0
        %v6313 = vsel %vm1715, %v6306, 0
        %v6316 = vsel %vm1715, %v6307, 0
        %v6319 = vsel %vm1715, %v6308, 0
        %v6322 = vsel %vm1715, %v6309, 0
        %6324 = vmatpush.bf16.msra.mxu0 0
        %6325 = vmatpush.bf16.msra.mxu0 0
        %6326 = vmatpush.bf16.msra.mxu0 0
        %6327 = vmatpush.bf16.msra.mxu0 0
        %6328 = vmatpush.bf16.msra.mxu0 0
        %6329 = vmatpush.bf16.msra.mxu0 0
        %6330 = vmatpush.bf16.msra.mxu0 0
        %6331 = vmatpush.bf16.msra.mxu0 %v6313
        %6332 = vmatmul.bf16.gmra.mxu0 %v6310
        %v6333 = vpop.f32.mrf.mxu0
        %v6334 = vadd.f32 0.0, %v6333
        %v6335 = vpop.f32.mrf.mxu0
        %6336 = vdwg.mxu0
        %6337 = vmatpush.bf16.msra.mxu0 0
        %6338 = vmatpush.bf16.msra.mxu0 0
        %6339 = vmatpush.bf16.msra.mxu0 0
        %6340 = vmatpush.bf16.msra.mxu0 0
        %6341 = vmatpush.bf16.msra.mxu0 0
        %6342 = vmatpush.bf16.msra.mxu0 0
        %6343 = vmatpush.bf16.msra.mxu0 0
        %6344 = vmatpush.bf16.msra.mxu0 %v6316
        %6345 = vmatmul.bf16.gmra.mxu0 %v6310
        %v6346 = vpop.f32.mrf.mxu0
        %v6347 = vadd.f32 0.0, %v6346
        %v6348 = vpop.f32.mrf.mxu0
        %6349 = vdwg.mxu0
        %6350 = vmatpush.bf16.msra.mxu0 0
        %6351 = vmatpush.bf16.msra.mxu0 0
        %6352 = vmatpush.bf16.msra.mxu0 0
        %6353 = vmatpush.bf16.msra.mxu0 0
        %6354 = vmatpush.bf16.msra.mxu0 0
        %6355 = vmatpush.bf16.msra.mxu0 0
        %6356 = vmatpush.bf16.msra.mxu0 0
        %6357 = vmatpush.bf16.msra.mxu0 %v6319
        %6358 = vmatmul.bf16.gmra.mxu0 %v6310
        %v6359 = vpop.f32.mrf.mxu0
        %v6360 = vadd.f32 0.0, %v6359
        %v6361 = vpop.f32.mrf.mxu0
        %6362 = vdwg.mxu0
        %6363 = vmatpush.bf16.msra.mxu0 0
        %6364 = vmatpush.bf16.msra.mxu0 0
        %6365 = vmatpush.bf16.msra.mxu0 0
        %6366 = vmatpush.bf16.msra.mxu0 0
        %6367 = vmatpush.bf16.msra.mxu0 0
        %6368 = vmatpush.bf16.msra.mxu0 0
        %6369 = vmatpush.bf16.msra.mxu0 0
        %6370 = vmatpush.bf16.msra.mxu0 %v6322
        %6371 = vmatmul.bf16.gmra.mxu0 %v6310
        %v6372 = vpop.f32.mrf.mxu0
        %v6373 = vadd.f32 0.0, %v6372
        %v6374 = vpop.f32.mrf.mxu0
        %6375 = vdwg.mxu0
        %v6376 = vpack.c.bf16 %v6334, %v6334
        %v6377 = vpack.c.bf16 %v6347, %v6347
        %v6378 = vpack.c.bf16 %v6360, %v6360
        %v6379 = vpack.c.bf16 %v6373, %v6373
        %6380 = vmatpush.bf16.msra.mxu0 0
        %6381 = vmatpush.bf16.msra.mxu0 0
        %6382 = vmatpush.bf16.msra.mxu0 0
        %6383 = vmatpush.bf16.msra.mxu0 0
        %6384 = vmatpush.bf16.msra.mxu0 0
        %6385 = vmatpush.bf16.msra.mxu0 0
        %6386 = vmatpush.bf16.msra.mxu0 0
        %6387 = vmatpush.bf16.msra.mxu0 %v4745
        %6388 = vmatmul.bf16.gmra.mxu0 %v6310
        %v6389 = vpop.f32.mrf.mxu0
        %v6390 = vadd.f32 0.0, %v6389
        %v6391 = vpop.f32.mrf.mxu0
        %6392 = vdwg.mxu0
        %6393 = vmatpush.bf16.msra.mxu0 0
        %6394 = vmatpush.bf16.msra.mxu0 0
        %6395 = vmatpush.bf16.msra.mxu0 0
        %6396 = vmatpush.bf16.msra.mxu0 0
        %6397 = vmatpush.bf16.msra.mxu0 0
        %6398 = vmatpush.bf16.msra.mxu0 0
        %6399 = vmatpush.bf16.msra.mxu0 0
        %6400 = vmatpush.bf16.msra.mxu0 %v4748
        %6401 = vmatmul.bf16.gmra.mxu0 %v6310
        %v6402 = vpop.f32.mrf.mxu0
        %v6403 = vadd.f32 0.0, %v6402
        %v6404 = vpop.f32.mrf.mxu0
        %6405 = vdwg.mxu0
        %v6406 = vpack.c.bf16 %v6390, %v6390
        %v6407 = vpack.c.bf16 %v6403, %v6403
        %vm6408 = vcmask 31744
        %v6409 = vsel %vm6408, %v3780, 0
        %vm6411 = vcmask 1041408
        %v6413 = vsel %vm6411, %v6376, 0
        %v6416 = vsel %vm6411, %v6377, 0
        %v6419 = vsel %vm6411, %v6378, 0
        %v6422 = vsel %vm6411, %v6379, 0
        %6424 = vmatpush.bf16.msra.mxu0 0
        %6425 = vmatpush.bf16.msra.mxu0 0
        %6426 = vmatpush.bf16.msra.mxu0 0
        %6427 = vmatpush.bf16.msra.mxu0 0
        %6428 = vmatpush.bf16.msra.mxu0 0
        %6429 = vmatpush.bf16.msra.mxu0 0
        %6430 = vmatpush.bf16.msra.mxu0 0
        %6431 = vmatpush.bf16.msra.mxu0 %v6413
        %6432 = vmatmul.bf16.gmra.mxu0 %v6409
        %v6433 = vpop.f32.mrf.mxu0
        %v6434 = vadd.f32 0.0, %v6433
        %v6435 = vpop.f32.mrf.mxu0
        %6436 = vdwg.mxu0
        %6437 = vmatpush.bf16.msra.mxu0 0
        %6438 = vmatpush.bf16.msra.mxu0 0
        %6439 = vmatpush.bf16.msra.mxu0 0
        %6440 = vmatpush.bf16.msra.mxu0 0
        %6441 = vmatpush.bf16.msra.mxu0 0
        %6442 = vmatpush.bf16.msra.mxu0 0
        %6443 = vmatpush.bf16.msra.mxu0 0
        %6444 = vmatpush.bf16.msra.mxu0 %v6416
        %6445 = vmatmul.bf16.gmra.mxu0 %v6409
        %v6446 = vpop.f32.mrf.mxu0
        %v6447 = vadd.f32 0.0, %v6446
        %v6448 = vpop.f32.mrf.mxu0
        %6449 = vdwg.mxu0
        %6450 = vmatpush.bf16.msra.mxu0 0
        %6451 = vmatpush.bf16.msra.mxu0 0
        %6452 = vmatpush.bf16.msra.mxu0 0
        %6453 = vmatpush.bf16.msra.mxu0 0
        %6454 = vmatpush.bf16.msra.mxu0 0
        %6455 = vmatpush.bf16.msra.mxu0 0
        %6456 = vmatpush.bf16.msra.mxu0 0
        %6457 = vmatpush.bf16.msra.mxu0 %v6419
        %6458 = vmatmul.bf16.gmra.mxu0 %v6409
        %v6459 = vpop.f32.mrf.mxu0
        %v6460 = vadd.f32 0.0, %v6459
        %v6461 = vpop.f32.mrf.mxu0
        %6462 = vdwg.mxu0
        %6463 = vmatpush.bf16.msra.mxu0 0
        %6464 = vmatpush.bf16.msra.mxu0 0
        %6465 = vmatpush.bf16.msra.mxu0 0
        %6466 = vmatpush.bf16.msra.mxu0 0
        %6467 = vmatpush.bf16.msra.mxu0 0
        %6468 = vmatpush.bf16.msra.mxu0 0
        %6469 = vmatpush.bf16.msra.mxu0 0
        %6470 = vmatpush.bf16.msra.mxu0 %v6422
        %6471 = vmatmul.bf16.gmra.mxu0 %v6409
        %v6472 = vpop.f32.mrf.mxu0
        %v6473 = vadd.f32 0.0, %v6472
        %v6474 = vpop.f32.mrf.mxu0
        %6475 = vdwg.mxu0
        %v6476 = vpack.c.bf16 %v6434, %v6434
        %v6477 = vpack.c.bf16 %v6447, %v6447
        %v6478 = vpack.c.bf16 %v6460, %v6460
        %v6479 = vpack.c.bf16 %v6473, %v6473
        %v6480 = vsel %vm6408, %v3818, 0
        %6482 = vmatpush.bf16.msra.mxu0 0
        %6483 = vmatpush.bf16.msra.mxu0 0
        %6484 = vmatpush.bf16.msra.mxu0 0
        %6485 = vmatpush.bf16.msra.mxu0 0
        %6486 = vmatpush.bf16.msra.mxu0 0
        %6487 = vmatpush.bf16.msra.mxu0 0
        %6488 = vmatpush.bf16.msra.mxu0 0
        %6489 = vmatpush.bf16.msra.mxu0 %v6413
        %6490 = vmatmul.bf16.gmra.mxu0 %v6480
        %v6491 = vpop.f32.mrf.mxu0
        %v6492 = vadd.f32 0.0, %v6491
        %v6493 = vpop.f32.mrf.mxu0
        %6494 = vdwg.mxu0
        %6495 = vmatpush.bf16.msra.mxu0 0
        %6496 = vmatpush.bf16.msra.mxu0 0
        %6497 = vmatpush.bf16.msra.mxu0 0
        %6498 = vmatpush.bf16.msra.mxu0 0
        %6499 = vmatpush.bf16.msra.mxu0 0
        %6500 = vmatpush.bf16.msra.mxu0 0
        %6501 = vmatpush.bf16.msra.mxu0 0
        %6502 = vmatpush.bf16.msra.mxu0 %v6416
        %6503 = vmatmul.bf16.gmra.mxu0 %v6480
        %v6504 = vpop.f32.mrf.mxu0
        %v6505 = vadd.f32 0.0, %v6504
        %v6506 = vpop.f32.mrf.mxu0
        %6507 = vdwg.mxu0
        %6508 = vmatpush.bf16.msra.mxu0 0
        %6509 = vmatpush.bf16.msra.mxu0 0
        %6510 = vmatpush.bf16.msra.mxu0 0
        %6511 = vmatpush.bf16.msra.mxu0 0
        %6512 = vmatpush.bf16.msra.mxu0 0
        %6513 = vmatpush.bf16.msra.mxu0 0
        %6514 = vmatpush.bf16.msra.mxu0 0
        %6515 = vmatpush.bf16.msra.mxu0 %v6419
        %6516 = vmatmul.bf16.gmra.mxu0 %v6480
        %v6517 = vpop.f32.mrf.mxu0
        %v6518 = vadd.f32 0.0, %v6517
        %v6519 = vpop.f32.mrf.mxu0
        %6520 = vdwg.mxu0
        %6521 = vmatpush.bf16.msra.mxu0 0
        %6522 = vmatpush.bf16.msra.mxu0 0
        %6523 = vmatpush.bf16.msra.mxu0 0
        %6524 = vmatpush.bf16.msra.mxu0 0
        %6525 = vmatpush.bf16.msra.mxu0 0
        %6526 = vmatpush.bf16.msra.mxu0 0
        %6527 = vmatpush.bf16.msra.mxu0 0
        %6528 = vmatpush.bf16.msra.mxu0 %v6422
        %6529 = vmatmul.bf16.gmra.mxu0 %v6480
        %v6530 = vpop.f32.mrf.mxu0
        %v6531 = vadd.f32 0.0, %v6530
        %v6532 = vpop.f32.mrf.mxu0
        %6533 = vdwg.mxu0
        %v6534 = vpack.c.bf16 %v6492, %v6492
        %v6535 = vpack.c.bf16 %v6505, %v6505
        %v6536 = vpack.c.bf16 %v6518, %v6518
        %v6537 = vpack.c.bf16 %v6531, %v6531
        %v6538 = vld [vmem:[#allocation48] sm:$0xff]
        %v6539 = vld [vmem:[#allocation48 + $0x8] sm:$0xff]
        %v6540 = vld [vmem:[#allocation48 + $0x10] sm:$0xff]
        %v6541 = vld [vmem:[#allocation48 + $0x18] sm:$0xff]
        %v6542 = vld [vmem:[#allocation48 + $0x20] sm:$0xff]
        %v6543 = vld [vmem:[#allocation48 + $0x28] sm:$0xff]
        %v6544 = vld [vmem:[#allocation48 + $0x30] sm:$0xff]
        %v6545 = vld [vmem:[#allocation48 + $0x38] sm:$0xff]
        %v6546 = vld [vmem:[#allocation48 + $0x40] sm:$0xff]
        %v6547 = vld [vmem:[#allocation48 + $0x48] sm:$0xff]
        %v6548 = vld [vmem:[#allocation48 + $0x50] sm:$0xff]
        %v6549 = vld [vmem:[#allocation48 + $0x58] sm:$0xff]
        %v6550 = vld [vmem:[#allocation48 + $0x60] sm:$0xff]
        %v6551 = vld [vmem:[#allocation48 + $0x68] sm:$0xff]
        %v6552 = vld [vmem:[#allocation48 + $0x70] sm:$0xff]
        %v6553 = vld [vmem:[#allocation48 + $0x78] sm:$0xff]
        %v6554 = vld [vmem:[#allocation48 + $0x80] sm:$0xff]
        %v6555 = vld [vmem:[#allocation48 + $0x88] sm:$0xff]
        %v6556 = vld [vmem:[#allocation48 + $0x90] sm:$0xff]
        %v6557 = vld [vmem:[#allocation48 + $0x98] sm:$0xff]
        %v6558 = vld [vmem:[#allocation48 + $0xa0] sm:$0xff]
        %v6559 = vld [vmem:[#allocation48 + $0xa8] sm:$0xff]
        %v6560 = vld [vmem:[#allocation48 + $0xb0] sm:$0xff]
        %v6561 = vld [vmem:[#allocation48 + $0xb8] sm:$0xff]
        %v6562 = vld [vmem:[#allocation48 + $0xc0] sm:$0xff]
        %v6563 = vld [vmem:[#allocation48 + $0xc8] sm:$0xff]
        %v6564 = vld [vmem:[#allocation48 + $0xd0] sm:$0xff]
        %v6565 = vld [vmem:[#allocation48 + $0xd8] sm:$0xff]
        %v6566 = vld [vmem:[#allocation48 + $0xe0] sm:$0xff]
        %v6567 = vld [vmem:[#allocation48 + $0xe8] sm:$0xff]
        %v6568 = vld [vmem:[#allocation48 + $0xf0] sm:$0xff]
        %v6569 = vld [vmem:[#allocation48 + $0xf8] sm:$0xff]
        %v6570 = vld [vmem:[#allocation48 + $0x100] sm:$0xff]
        %v6571 = vld [vmem:[#allocation48 + $0x108] sm:$0xff]
        %v6572 = vld [vmem:[#allocation48 + $0x110] sm:$0xff]
        %v6573 = vld [vmem:[#allocation48 + $0x118] sm:$0xff]
        %v6574 = vld [vmem:[#allocation48 + $0x120] sm:$0xff]
        %v6575 = vld [vmem:[#allocation48 + $0x128] sm:$0xff]
        %v6576 = vld [vmem:[#allocation48 + $0x130] sm:$0xff]
        %v6577 = vld [vmem:[#allocation48 + $0x138] sm:$0xff]
        %v6578 = vld [vmem:[#allocation48 + $0x140] sm:$0xff]
        %v6579 = vld [vmem:[#allocation48 + $0x148] sm:$0xff]
        %v6580 = vld [vmem:[#allocation48 + $0x150] sm:$0xff]
        %v6581 = vld [vmem:[#allocation48 + $0x158] sm:$0xff]
        %v6582 = vld [vmem:[#allocation48 + $0x160] sm:$0xff]
        %v6583 = vld [vmem:[#allocation48 + $0x168] sm:$0xff]
        %v6584 = vld [vmem:[#allocation48 + $0x170] sm:$0xff]
        %v6585 = vld [vmem:[#allocation48 + $0x178] sm:$0xff]
        %v6586 = vld [vmem:[#allocation48 + $0x180] sm:$0xff]
        %v6587 = vld [vmem:[#allocation48 + $0x188] sm:$0xff]
        %v6588 = vld [vmem:[#allocation48 + $0x190] sm:$0xff]
        %v6589 = vld [vmem:[#allocation48 + $0x198] sm:$0xff]
        %v6590 = vld [vmem:[#allocation48 + $0x1a0] sm:$0xff]
        %v6591 = vld [vmem:[#allocation48 + $0x1a8] sm:$0xff]
        %v6592 = vld [vmem:[#allocation48 + $0x1b0] sm:$0xff]
        %v6593 = vld [vmem:[#allocation48 + $0x1b8] sm:$0xff]
        %v6594 = vld [vmem:[#allocation48 + $0x1c0] sm:$0xff]
        %v6595 = vld [vmem:[#allocation48 + $0x1c8] sm:$0xff]
        %v6596 = vld [vmem:[#allocation48 + $0x1d0] sm:$0xff]
        %v6597 = vld [vmem:[#allocation48 + $0x1d8] sm:$0xff]
        %v6598 = vld [vmem:[#allocation48 + $0x1e0] sm:$0xff]
        %v6599 = vld [vmem:[#allocation48 + $0x1e8] sm:$0xff]
        %v6600 = vld [vmem:[#allocation48 + $0x1f0] sm:$0xff]
        %v6601 = vld [vmem:[#allocation48 + $0x1f8] sm:$0xff]
        %v6602 = vld [vmem:[#allocation48 + $0x200] sm:$0xff]
        %v6603 = vld [vmem:[#allocation48 + $0x208] sm:$0xff]
        %v6604 = vld [vmem:[#allocation48 + $0x210] sm:$0xff]
        %v6605 = vld [vmem:[#allocation48 + $0x218] sm:$0xff]
        %v6606 = vld [vmem:[#allocation48 + $0x220] sm:$0xff]
        %v6607 = vld [vmem:[#allocation48 + $0x228] sm:$0xff]
        %v6608 = vld [vmem:[#allocation48 + $0x230] sm:$0xff]
        %v6609 = vld [vmem:[#allocation48 + $0x238] sm:$0xff]
        %v6610 = vld [vmem:[#allocation48 + $0x240] sm:$0xff]
        %v6611 = vld [vmem:[#allocation48 + $0x248] sm:$0xff]
        %v6612 = vld [vmem:[#allocation48 + $0x250] sm:$0xff]
        %v6613 = vld [vmem:[#allocation48 + $0x258] sm:$0xff]
        %v6614 = vld [vmem:[#allocation48 + $0x260] sm:$0xff]
        %v6615 = vld [vmem:[#allocation48 + $0x268] sm:$0xff]
        %v6616 = vld [vmem:[#allocation48 + $0x270] sm:$0xff]
        %v6617 = vld [vmem:[#allocation48 + $0x278] sm:$0xff]
        %v6618 = vld [vmem:[#allocation48 + $0x280] sm:$0xff]
        %v6619 = vld [vmem:[#allocation48 + $0x288] sm:$0xff]
        %v6620 = vld [vmem:[#allocation48 + $0x290] sm:$0xff]
        %v6621 = vld [vmem:[#allocation48 + $0x298] sm:$0xff]
        %v6622 = vld [vmem:[#allocation48 + $0x2a0] sm:$0xff]
        %v6623 = vld [vmem:[#allocation48 + $0x2a8] sm:$0xff]
        %v6624 = vld [vmem:[#allocation48 + $0x2b0] sm:$0xff]
        %v6625 = vld [vmem:[#allocation48 + $0x2b8] sm:$0xff]
        %v6626 = vld [vmem:[#allocation48 + $0x2c0] sm:$0xff]
        %v6627 = vld [vmem:[#allocation48 + $0x2c8] sm:$0xff]
        %v6628 = vld [vmem:[#allocation48 + $0x2d0] sm:$0xff]
        %v6629 = vld [vmem:[#allocation48 + $0x2d8] sm:$0xff]
        %v6630 = vld [vmem:[#allocation48 + $0x2e0] sm:$0xff]
        %v6631 = vld [vmem:[#allocation48 + $0x2e8] sm:$0xff]
        %v6632 = vld [vmem:[#allocation48 + $0x2f0] sm:$0xff]
        %v6633 = vld [vmem:[#allocation48 + $0x2f8] sm:$0xff]
        %v6634 = vld [vmem:[#allocation48 + $0x300] sm:$0xff]
        %v6635 = vld [vmem:[#allocation48 + $0x308] sm:$0xff]
        %v6636 = vld [vmem:[#allocation48 + $0x310] sm:$0xff]
        %v6637 = vld [vmem:[#allocation48 + $0x318] sm:$0xff]
        %v6638 = vld [vmem:[#allocation48 + $0x320] sm:$0xff]
        %v6639 = vld [vmem:[#allocation48 + $0x328] sm:$0xff]
        %v6640 = vld [vmem:[#allocation48 + $0x330] sm:$0xff]
        %v6641 = vld [vmem:[#allocation48 + $0x338] sm:$0xff]
        %v6642 = vld [vmem:[#allocation48 + $0x340] sm:$0xff]
        %v6643 = vld [vmem:[#allocation48 + $0x348] sm:$0xff]
        %v6644 = vld [vmem:[#allocation48 + $0x350] sm:$0xff]
        %v6645 = vld [vmem:[#allocation48 + $0x358] sm:$0xff]
        %v6646 = vld [vmem:[#allocation48 + $0x360] sm:$0xff]
        %v6647 = vld [vmem:[#allocation48 + $0x368] sm:$0xff]
        %v6648 = vld [vmem:[#allocation48 + $0x370] sm:$0xff]
        %v6649 = vld [vmem:[#allocation48 + $0x378] sm:$0xff]
        %v6650 = vld [vmem:[#allocation48 + $0x380] sm:$0xff]
        %v6651 = vld [vmem:[#allocation48 + $0x388] sm:$0xff]
        %v6652 = vld [vmem:[#allocation48 + $0x390] sm:$0xff]
        %v6653 = vld [vmem:[#allocation48 + $0x398] sm:$0xff]
        %v6654 = vld [vmem:[#allocation48 + $0x3a0] sm:$0xff]
        %v6655 = vld [vmem:[#allocation48 + $0x3a8] sm:$0xff]
        %v6656 = vld [vmem:[#allocation48 + $0x3b0] sm:$0xff]
        %v6657 = vld [vmem:[#allocation48 + $0x3b8] sm:$0xff]
        %v6658 = vld [vmem:[#allocation48 + $0x3c0] sm:$0xff]
        %v6659 = vld [vmem:[#allocation48 + $0x3c8] sm:$0xff]
        %v6660 = vld [vmem:[#allocation48 + $0x3d0] sm:$0xff]
        %v6661 = vld [vmem:[#allocation48 + $0x3d8] sm:$0xff]
        %v6662 = vld [vmem:[#allocation48 + $0x3e0] sm:$0xff]
        %v6663 = vld [vmem:[#allocation48 + $0x3e8] sm:$0xff]
        %v6664 = vld [vmem:[#allocation48 + $0x3f0] sm:$0xff]
        %v6665 = vld [vmem:[#allocation48 + $0x3f8] sm:$0xff]
        %v6666 = vld [vmem:[#allocation48 + $0x400] sm:$0xff]
        %v6667 = vld [vmem:[#allocation48 + $0x408] sm:$0xff]
        %v6668 = vld [vmem:[#allocation48 + $0x410] sm:$0xff]
        %v6669 = vld [vmem:[#allocation48 + $0x418] sm:$0xff]
        %v6670 = vld [vmem:[#allocation48 + $0x420] sm:$0xff]
        %v6671 = vld [vmem:[#allocation48 + $0x428] sm:$0xff]
        %v6672 = vld [vmem:[#allocation48 + $0x430] sm:$0xff]
        %v6673 = vld [vmem:[#allocation48 + $0x438] sm:$0xff]
        %v6674 = vld [vmem:[#allocation48 + $0x440] sm:$0xff]
        %v6675 = vld [vmem:[#allocation48 + $0x448] sm:$0xff]
        %v6676 = vld [vmem:[#allocation48 + $0x450] sm:$0xff]
        %v6677 = vld [vmem:[#allocation48 + $0x458] sm:$0xff]
        %v6678 = vld [vmem:[#allocation48 + $0x460] sm:$0xff]
        %v6679 = vld [vmem:[#allocation48 + $0x468] sm:$0xff]
        %v6680 = vld [vmem:[#allocation48 + $0x470] sm:$0xff]
        %v6681 = vld [vmem:[#allocation48 + $0x478] sm:$0xff]
        %v6682 = vld [vmem:[#allocation48 + $0x480] sm:$0xff]
        %v6683 = vld [vmem:[#allocation48 + $0x488] sm:$0xff]
        %v6684 = vld [vmem:[#allocation48 + $0x490] sm:$0xff]
        %v6685 = vld [vmem:[#allocation48 + $0x498] sm:$0xff]
        %v6686 = vld [vmem:[#allocation48 + $0x4a0] sm:$0xff]
        %v6687 = vld [vmem:[#allocation48 + $0x4a8] sm:$0xff]
        %v6688 = vld [vmem:[#allocation48 + $0x4b0] sm:$0xff]
        %v6689 = vld [vmem:[#allocation48 + $0x4b8] sm:$0xff]
        %v6690 = vld [vmem:[#allocation48 + $0x4c0] sm:$0xff]
        %v6691 = vld [vmem:[#allocation48 + $0x4c8] sm:$0xff]
        %v6692 = vld [vmem:[#allocation48 + $0x4d0] sm:$0xff]
        %v6693 = vld [vmem:[#allocation48 + $0x4d8] sm:$0xff]
        %v6694 = vld [vmem:[#allocation48 + $0x4e0] sm:$0xff]
        %v6695 = vld [vmem:[#allocation48 + $0x4e8] sm:$0xff]
        %v6696 = vld [vmem:[#allocation48 + $0x4f0] sm:$0xff]
        %v6697 = vld [vmem:[#allocation48 + $0x4f8] sm:$0xff]
        %v6698 = vld [vmem:[#allocation48 + $0x500] sm:$0xff]
        %v6699 = vld [vmem:[#allocation48 + $0x508] sm:$0xff]
        %v6700 = vld [vmem:[#allocation48 + $0x510] sm:$0xff]
        %v6701 = vld [vmem:[#allocation48 + $0x518] sm:$0xff]
        %v6702 = vld [vmem:[#allocation48 + $0x520] sm:$0xff]
        %v6703 = vld [vmem:[#allocation48 + $0x528] sm:$0xff]
        %v6704 = vld [vmem:[#allocation48 + $0x530] sm:$0xff]
        %v6705 = vld [vmem:[#allocation48 + $0x538] sm:$0xff]
        %v6706 = vld [vmem:[#allocation48 + $0x540] sm:$0xff]
        %v6707 = vld [vmem:[#allocation48 + $0x548] sm:$0xff]
        %v6708 = vld [vmem:[#allocation48 + $0x550] sm:$0xff]
        %v6709 = vld [vmem:[#allocation48 + $0x558] sm:$0xff]
        %v6710 = vld [vmem:[#allocation48 + $0x560] sm:$0xff]
        %v6711 = vld [vmem:[#allocation48 + $0x568] sm:$0xff]
        %v6712 = vld [vmem:[#allocation48 + $0x570] sm:$0xff]
        %v6713 = vld [vmem:[#allocation48 + $0x578] sm:$0xff]
        %v6714 = vld [vmem:[#allocation48 + $0x580] sm:$0xff]
        %v6715 = vld [vmem:[#allocation48 + $0x588] sm:$0xff]
        %v6716 = vld [vmem:[#allocation48 + $0x590] sm:$0xff]
        %v6717 = vld [vmem:[#allocation48 + $0x598] sm:$0xff]
        %v6718 = vld [vmem:[#allocation48 + $0x5a0] sm:$0xff]
        %v6719 = vld [vmem:[#allocation48 + $0x5a8] sm:$0xff]
        %v6720 = vld [vmem:[#allocation48 + $0x5b0] sm:$0xff]
        %v6721 = vld [vmem:[#allocation48 + $0x5b8] sm:$0xff]
        %v6722 = vld [vmem:[#allocation48 + $0x5c0] sm:$0xff]
        %v6723 = vld [vmem:[#allocation48 + $0x5c8] sm:$0xff]
        %v6724 = vld [vmem:[#allocation48 + $0x5d0] sm:$0xff]
        %v6725 = vld [vmem:[#allocation48 + $0x5d8] sm:$0xff]
        %v6726 = vld [vmem:[#allocation48 + $0x5e0] sm:$0xff]
        %v6727 = vld [vmem:[#allocation48 + $0x5e8] sm:$0xff]
        %v6728 = vld [vmem:[#allocation48 + $0x5f0] sm:$0xff]
        %v6729 = vld [vmem:[#allocation48 + $0x5f8] sm:$0xff]
        %v6730 = vld [vmem:[#allocation48 + $0x600] sm:$0xff]
        %v6731 = vld [vmem:[#allocation48 + $0x608] sm:$0xff]
        %v6732 = vld [vmem:[#allocation48 + $0x610] sm:$0xff]
        %v6733 = vld [vmem:[#allocation48 + $0x618] sm:$0xff]
        %v6734 = vld [vmem:[#allocation48 + $0x620] sm:$0xff]
        %v6735 = vld [vmem:[#allocation48 + $0x628] sm:$0xff]
        %v6736 = vld [vmem:[#allocation48 + $0x630] sm:$0xff]
        %v6737 = vld [vmem:[#allocation48 + $0x638] sm:$0xff]
        %v6738 = vld [vmem:[#allocation48 + $0x640] sm:$0xff]
        %v6739 = vld [vmem:[#allocation48 + $0x648] sm:$0xff]
        %v6740 = vld [vmem:[#allocation48 + $0x650] sm:$0xff]
        %v6741 = vld [vmem:[#allocation48 + $0x658] sm:$0xff]
        %v6742 = vld [vmem:[#allocation48 + $0x660] sm:$0xff]
        %v6743 = vld [vmem:[#allocation48 + $0x668] sm:$0xff]
        %v6744 = vld [vmem:[#allocation48 + $0x670] sm:$0xff]
        %v6745 = vld [vmem:[#allocation48 + $0x678] sm:$0xff]
        %v6746 = vld [vmem:[#allocation48 + $0x680] sm:$0xff]
        %v6747 = vld [vmem:[#allocation48 + $0x688] sm:$0xff]
        %v6748 = vld [vmem:[#allocation48 + $0x690] sm:$0xff]
        %v6749 = vld [vmem:[#allocation48 + $0x698] sm:$0xff]
        %v6750 = vld [vmem:[#allocation48 + $0x6a0] sm:$0xff]
        %v6751 = vld [vmem:[#allocation48 + $0x6a8] sm:$0xff]
        %v6752 = vld [vmem:[#allocation48 + $0x6b0] sm:$0xff]
        %v6753 = vld [vmem:[#allocation48 + $0x6b8] sm:$0xff]
        %v6754 = vld [vmem:[#allocation48 + $0x6c0] sm:$0xff]
        %v6755 = vld [vmem:[#allocation48 + $0x6c8] sm:$0xff]
        %v6756 = vld [vmem:[#allocation48 + $0x6d0] sm:$0xff]
        %v6757 = vld [vmem:[#allocation48 + $0x6d8] sm:$0xff]
        %v6758 = vld [vmem:[#allocation48 + $0x6e0] sm:$0xff]
        %v6759 = vld [vmem:[#allocation48 + $0x6e8] sm:$0xff]
        %v6760 = vld [vmem:[#allocation48 + $0x6f0] sm:$0xff]
        %v6761 = vld [vmem:[#allocation48 + $0x6f8] sm:$0xff]
        %v6762 = vld [vmem:[#allocation48 + $0x700] sm:$0xff]
        %v6763 = vld [vmem:[#allocation48 + $0x708] sm:$0xff]
        %v6764 = vld [vmem:[#allocation48 + $0x710] sm:$0xff]
        %v6765 = vld [vmem:[#allocation48 + $0x718] sm:$0xff]
        %v6766 = vld [vmem:[#allocation48 + $0x720] sm:$0xff]
        %v6767 = vld [vmem:[#allocation48 + $0x728] sm:$0xff]
        %v6768 = vld [vmem:[#allocation48 + $0x730] sm:$0xff]
        %v6769 = vld [vmem:[#allocation48 + $0x738] sm:$0xff]
        %v6770 = vld [vmem:[#allocation48 + $0x740] sm:$0xff]
        %v6771 = vld [vmem:[#allocation48 + $0x748] sm:$0xff]
        %v6772 = vld [vmem:[#allocation48 + $0x750] sm:$0xff]
        %v6773 = vld [vmem:[#allocation48 + $0x758] sm:$0xff]
        %v6774 = vld [vmem:[#allocation48 + $0x760] sm:$0xff]
        %v6775 = vld [vmem:[#allocation48 + $0x768] sm:$0xff]
        %v6776 = vld [vmem:[#allocation48 + $0x770] sm:$0xff]
        %v6777 = vld [vmem:[#allocation48 + $0x778] sm:$0xff]
        %v6778 = vld [vmem:[#allocation48 + $0x780] sm:$0xff]
        %v6779 = vld [vmem:[#allocation48 + $0x788] sm:$0xff]
        %v6780 = vld [vmem:[#allocation48 + $0x790] sm:$0xff]
        %v6781 = vld [vmem:[#allocation48 + $0x798] sm:$0xff]
        %v6782 = vld [vmem:[#allocation48 + $0x7a0] sm:$0xff]
        %v6783 = vld [vmem:[#allocation48 + $0x7a8] sm:$0xff]
        %v6784 = vld [vmem:[#allocation48 + $0x7b0] sm:$0xff]
        %v6785 = vld [vmem:[#allocation48 + $0x7b8] sm:$0xff]
        %v6786 = vld [vmem:[#allocation48 + $0x7c0] sm:$0xff]
        %v6787 = vld [vmem:[#allocation48 + $0x7c8] sm:$0xff]
        %v6788 = vld [vmem:[#allocation48 + $0x7d0] sm:$0xff]
        %v6789 = vld [vmem:[#allocation48 + $0x7d8] sm:$0xff]
        %v6790 = vld [vmem:[#allocation48 + $0x7e0] sm:$0xff]
        %v6791 = vld [vmem:[#allocation48 + $0x7e8] sm:$0xff]
        %v6792 = vld [vmem:[#allocation48 + $0x7f0] sm:$0xff]
        %v6793 = vld [vmem:[#allocation48 + $0x7f8] sm:$0xff]
        %v6922 = vunpack.c.l.b16 %v6666
        %v6923 = vunpack.c.h.b16 %v6666
        %v6924 = vunpack.c.l.b16 %v6667
        %v6925 = vunpack.c.h.b16 %v6667
        %v6926 = vunpack.c.l.b16 %v6668
        %v6927 = vunpack.c.h.b16 %v6668
        %v6928 = vunpack.c.l.b16 %v6669
        %v6929 = vunpack.c.h.b16 %v6669
        %v6930 = vunpack.c.l.b16 %v6670
        %v6931 = vunpack.c.h.b16 %v6670
        %v6932 = vunpack.c.l.b16 %v6671
        %v6933 = vunpack.c.h.b16 %v6671
        %v6934 = vunpack.c.l.b16 %v6672
        %v6935 = vunpack.c.h.b16 %v6672
        %v6936 = vunpack.c.l.b16 %v6673
        %v6937 = vunpack.c.h.b16 %v6673
        %v6938 = vunpack.c.l.b16 %v6674
        %v6939 = vunpack.c.h.b16 %v6674
        %v6940 = vunpack.c.l.b16 %v6675
        %v6941 = vunpack.c.h.b16 %v6675
        %v6942 = vunpack.c.l.b16 %v6676
        %v6943 = vunpack.c.h.b16 %v6676
        %v6944 = vunpack.c.l.b16 %v6677
        %v6945 = vunpack.c.h.b16 %v6677
        %v6946 = vunpack.c.l.b16 %v6678
        %v6947 = vunpack.c.h.b16 %v6678
        %v6948 = vunpack.c.l.b16 %v6679
        %v6949 = vunpack.c.h.b16 %v6679
        %v6950 = vunpack.c.l.b16 %v6680
        %v6951 = vunpack.c.h.b16 %v6680
        %v6952 = vunpack.c.l.b16 %v6681
        %v6953 = vunpack.c.h.b16 %v6681
        %v6954 = vunpack.c.l.b16 %v6682
        %v6955 = vunpack.c.h.b16 %v6682
        %v6956 = vunpack.c.l.b16 %v6683
        %v6957 = vunpack.c.h.b16 %v6683
        %v6958 = vunpack.c.l.b16 %v6684
        %v6959 = vunpack.c.h.b16 %v6684
        %v6960 = vunpack.c.l.b16 %v6685
        %v6961 = vunpack.c.h.b16 %v6685
        %v6962 = vunpack.c.l.b16 %v6686
        %v6963 = vunpack.c.h.b16 %v6686
        %v6964 = vunpack.c.l.b16 %v6687
        %v6965 = vunpack.c.h.b16 %v6687
        %v6966 = vunpack.c.l.b16 %v6688
        %v6967 = vunpack.c.h.b16 %v6688
        %v6968 = vunpack.c.l.b16 %v6689
        %v6969 = vunpack.c.h.b16 %v6689
        %v6970 = vunpack.c.l.b16 %v6690
        %v6971 = vunpack.c.h.b16 %v6690
        %v6972 = vunpack.c.l.b16 %v6691
        %v6973 = vunpack.c.h.b16 %v6691
        %v6974 = vunpack.c.l.b16 %v6692
        %v6975 = vunpack.c.h.b16 %v6692
        %v6976 = vunpack.c.l.b16 %v6693
        %v6977 = vunpack.c.h.b16 %v6693
        %v6978 = vunpack.c.l.b16 %v6694
        %v6979 = vunpack.c.h.b16 %v6694
        %v6980 = vunpack.c.l.b16 %v6695
        %v6981 = vunpack.c.h.b16 %v6695
        %v6982 = vunpack.c.l.b16 %v6696
        %v6983 = vunpack.c.h.b16 %v6696
        %v6984 = vunpack.c.l.b16 %v6697
        %v6985 = vunpack.c.h.b16 %v6697
        %v6986 = vunpack.c.l.b16 %v6698
        %v6987 = vunpack.c.h.b16 %v6698
        %v6988 = vunpack.c.l.b16 %v6699
        %v6989 = vunpack.c.h.b16 %v6699
        %v6990 = vunpack.c.l.b16 %v6700
        %v6991 = vunpack.c.h.b16 %v6700
        %v6992 = vunpack.c.l.b16 %v6701
        %v6993 = vunpack.c.h.b16 %v6701
        %v6994 = vunpack.c.l.b16 %v6702
        %v6995 = vunpack.c.h.b16 %v6702
        %v6996 = vunpack.c.l.b16 %v6703
        %v6997 = vunpack.c.h.b16 %v6703
        %v6998 = vunpack.c.l.b16 %v6704
        %v6999 = vunpack.c.h.b16 %v6704
        %v7000 = vunpack.c.l.b16 %v6705
        %v7001 = vunpack.c.h.b16 %v6705
        %v7002 = vunpack.c.l.b16 %v6706
        %v7003 = vunpack.c.h.b16 %v6706
        %v7004 = vunpack.c.l.b16 %v6707
        %v7005 = vunpack.c.h.b16 %v6707
        %v7006 = vunpack.c.l.b16 %v6708
        %v7007 = vunpack.c.h.b16 %v6708
        %v7008 = vunpack.c.l.b16 %v6709
        %v7009 = vunpack.c.h.b16 %v6709
        %v7010 = vunpack.c.l.b16 %v6710
        %v7011 = vunpack.c.h.b16 %v6710
        %v7012 = vunpack.c.l.b16 %v6711
        %v7013 = vunpack.c.h.b16 %v6711
        %v7014 = vunpack.c.l.b16 %v6712
        %v7015 = vunpack.c.h.b16 %v6712
        %v7016 = vunpack.c.l.b16 %v6713
        %v7017 = vunpack.c.h.b16 %v6713
        %v7018 = vunpack.c.l.b16 %v6714
        %v7019 = vunpack.c.h.b16 %v6714
        %v7020 = vunpack.c.l.b16 %v6715
        %v7021 = vunpack.c.h.b16 %v6715
        %v7022 = vunpack.c.l.b16 %v6716
        %v7023 = vunpack.c.h.b16 %v6716
        %v7024 = vunpack.c.l.b16 %v6717
        %v7025 = vunpack.c.h.b16 %v6717
        %v7026 = vunpack.c.l.b16 %v6718
        %v7027 = vunpack.c.h.b16 %v6718
        %v7028 = vunpack.c.l.b16 %v6719
        %v7029 = vunpack.c.h.b16 %v6719
        %v7030 = vunpack.c.l.b16 %v6720
        %v7031 = vunpack.c.h.b16 %v6720
        %v7032 = vunpack.c.l.b16 %v6721
        %v7033 = vunpack.c.h.b16 %v6721
        %v7034 = vunpack.c.l.b16 %v6722
        %v7035 = vunpack.c.h.b16 %v6722
        %v7036 = vunpack.c.l.b16 %v6723
        %v7037 = vunpack.c.h.b16 %v6723
        %v7038 = vunpack.c.l.b16 %v6724
        %v7039 = vunpack.c.h.b16 %v6724
        %v7040 = vunpack.c.l.b16 %v6725
        %v7041 = vunpack.c.h.b16 %v6725
        %v7042 = vunpack.c.l.b16 %v6726
        %v7043 = vunpack.c.h.b16 %v6726
        %v7044 = vunpack.c.l.b16 %v6727
        %v7045 = vunpack.c.h.b16 %v6727
        %v7046 = vunpack.c.l.b16 %v6728
        %v7047 = vunpack.c.h.b16 %v6728
        %v7048 = vunpack.c.l.b16 %v6729
        %v7049 = vunpack.c.h.b16 %v6729
        %v7050 = vunpack.c.l.b16 %v6730
        %v7051 = vunpack.c.h.b16 %v6730
        %v7052 = vunpack.c.l.b16 %v6731
        %v7053 = vunpack.c.h.b16 %v6731
        %v7054 = vunpack.c.l.b16 %v6732
        %v7055 = vunpack.c.h.b16 %v6732
        %v7056 = vunpack.c.l.b16 %v6733
        %v7057 = vunpack.c.h.b16 %v6733
        %v7058 = vunpack.c.l.b16 %v6734
        %v7059 = vunpack.c.h.b16 %v6734
        %v7060 = vunpack.c.l.b16 %v6735
        %v7061 = vunpack.c.h.b16 %v6735
        %v7062 = vunpack.c.l.b16 %v6736
        %v7063 = vunpack.c.h.b16 %v6736
        %v7064 = vunpack.c.l.b16 %v6737
        %v7065 = vunpack.c.h.b16 %v6737
        %v7066 = vunpack.c.l.b16 %v6738
        %v7067 = vunpack.c.h.b16 %v6738
        %v7068 = vunpack.c.l.b16 %v6739
        %v7069 = vunpack.c.h.b16 %v6739
        %v7070 = vunpack.c.l.b16 %v6740
        %v7071 = vunpack.c.h.b16 %v6740
        %v7072 = vunpack.c.l.b16 %v6741
        %v7073 = vunpack.c.h.b16 %v6741
        %v7074 = vunpack.c.l.b16 %v6742
        %v7075 = vunpack.c.h.b16 %v6742
        %v7076 = vunpack.c.l.b16 %v6743
        %v7077 = vunpack.c.h.b16 %v6743
        %v7078 = vunpack.c.l.b16 %v6744
        %v7079 = vunpack.c.h.b16 %v6744
        %v7080 = vunpack.c.l.b16 %v6745
        %v7081 = vunpack.c.h.b16 %v6745
        %v7082 = vunpack.c.l.b16 %v6746
        %v7083 = vunpack.c.h.b16 %v6746
        %v7084 = vunpack.c.l.b16 %v6747
        %v7085 = vunpack.c.h.b16 %v6747
        %v7086 = vunpack.c.l.b16 %v6748
        %v7087 = vunpack.c.h.b16 %v6748
        %v7088 = vunpack.c.l.b16 %v6749
        %v7089 = vunpack.c.h.b16 %v6749
        %v7090 = vunpack.c.l.b16 %v6750
        %v7091 = vunpack.c.h.b16 %v6750
        %v7092 = vunpack.c.l.b16 %v6751
        %v7093 = vunpack.c.h.b16 %v6751
        %v7094 = vunpack.c.l.b16 %v6752
        %v7095 = vunpack.c.h.b16 %v6752
        %v7096 = vunpack.c.l.b16 %v6753
        %v7097 = vunpack.c.h.b16 %v6753
        %v7098 = vunpack.c.l.b16 %v6754
        %v7099 = vunpack.c.h.b16 %v6754
        %v7100 = vunpack.c.l.b16 %v6755
        %v7101 = vunpack.c.h.b16 %v6755
        %v7102 = vunpack.c.l.b16 %v6756
        %v7103 = vunpack.c.h.b16 %v6756
        %v7104 = vunpack.c.l.b16 %v6757
        %v7105 = vunpack.c.h.b16 %v6757
        %v7106 = vunpack.c.l.b16 %v6758
        %v7107 = vunpack.c.h.b16 %v6758
        %v7108 = vunpack.c.l.b16 %v6759
        %v7109 = vunpack.c.h.b16 %v6759
        %v7110 = vunpack.c.l.b16 %v6760
        %v7111 = vunpack.c.h.b16 %v6760
        %v7112 = vunpack.c.l.b16 %v6761
        %v7113 = vunpack.c.h.b16 %v6761
        %v7114 = vunpack.c.l.b16 %v6762
        %v7115 = vunpack.c.h.b16 %v6762
        %v7116 = vunpack.c.l.b16 %v6763
        %v7117 = vunpack.c.h.b16 %v6763
        %v7118 = vunpack.c.l.b16 %v6764
        %v7119 = vunpack.c.h.b16 %v6764
        %v7120 = vunpack.c.l.b16 %v6765
        %v7121 = vunpack.c.h.b16 %v6765
        %v7122 = vunpack.c.l.b16 %v6766
        %v7123 = vunpack.c.h.b16 %v6766
        %v7124 = vunpack.c.l.b16 %v6767
        %v7125 = vunpack.c.h.b16 %v6767
        %v7126 = vunpack.c.l.b16 %v6768
        %v7127 = vunpack.c.h.b16 %v6768
        %v7128 = vunpack.c.l.b16 %v6769
        %v7129 = vunpack.c.h.b16 %v6769
        %v7130 = vunpack.c.l.b16 %v6770
        %v7131 = vunpack.c.h.b16 %v6770
        %v7132 = vunpack.c.l.b16 %v6771
        %v7133 = vunpack.c.h.b16 %v6771
        %v7134 = vunpack.c.l.b16 %v6772
        %v7135 = vunpack.c.h.b16 %v6772
        %v7136 = vunpack.c.l.b16 %v6773
        %v7137 = vunpack.c.h.b16 %v6773
        %v7138 = vunpack.c.l.b16 %v6774
        %v7139 = vunpack.c.h.b16 %v6774
        %v7140 = vunpack.c.l.b16 %v6775
        %v7141 = vunpack.c.h.b16 %v6775
        %v7142 = vunpack.c.l.b16 %v6776
        %v7143 = vunpack.c.h.b16 %v6776
        %v7144 = vunpack.c.l.b16 %v6777
        %v7145 = vunpack.c.h.b16 %v6777
        %v7146 = vunpack.c.l.b16 %v6778
        %v7147 = vunpack.c.h.b16 %v6778
        %v7148 = vunpack.c.l.b16 %v6779
        %v7149 = vunpack.c.h.b16 %v6779
        %v7150 = vunpack.c.l.b16 %v6780
        %v7151 = vunpack.c.h.b16 %v6780
        %v7152 = vunpack.c.l.b16 %v6781
        %v7153 = vunpack.c.h.b16 %v6781
        %v7154 = vunpack.c.l.b16 %v6782
        %v7155 = vunpack.c.h.b16 %v6782
        %v7156 = vunpack.c.l.b16 %v6783
        %v7157 = vunpack.c.h.b16 %v6783
        %v7158 = vunpack.c.l.b16 %v6784
        %v7159 = vunpack.c.h.b16 %v6784
        %v7160 = vunpack.c.l.b16 %v6785
        %v7161 = vunpack.c.h.b16 %v6785
        %v7162 = vunpack.c.l.b16 %v6786
        %v7163 = vunpack.c.h.b16 %v6786
        %v7164 = vunpack.c.l.b16 %v6787
        %v7165 = vunpack.c.h.b16 %v6787
        %v7166 = vunpack.c.l.b16 %v6788
        %v7167 = vunpack.c.h.b16 %v6788
        %v7168 = vunpack.c.l.b16 %v6789
        %v7169 = vunpack.c.h.b16 %v6789
        %v7170 = vunpack.c.l.b16 %v6790
        %v7171 = vunpack.c.h.b16 %v6790
        %v7172 = vunpack.c.l.b16 %v6791
        %v7173 = vunpack.c.h.b16 %v6791
        %v7174 = vunpack.c.l.b16 %v6792
        %v7175 = vunpack.c.h.b16 %v6792
        %v7176 = vunpack.c.l.b16 %v6793
        %v7177 = vunpack.c.h.b16 %v6793
        %v7178 = vpack.c.b16 %v6926, %v6922
        %v7179 = vpack.c.b16 %v6927, %v6923
        %v7180 = vpack.c.b16 %v6928, %v6924
        %v7181 = vpack.c.b16 %v6929, %v6925
        %v7182 = vpack.c.b16 %v6934, %v6930
        %v7183 = vpack.c.b16 %v6935, %v6931
        %v7184 = vpack.c.b16 %v6936, %v6932
        %v7185 = vpack.c.b16 %v6937, %v6933
        %v7186 = vpack.c.b16 %v6942, %v6938
        %v7187 = vpack.c.b16 %v6943, %v6939
        %v7188 = vpack.c.b16 %v6944, %v6940
        %v7189 = vpack.c.b16 %v6945, %v6941
        %v7190 = vpack.c.b16 %v6950, %v6946
        %v7191 = vpack.c.b16 %v6951, %v6947
        %v7192 = vpack.c.b16 %v6952, %v6948
        %v7193 = vpack.c.b16 %v6953, %v6949
        %v7194 = vpack.c.b16 %v6958, %v6954
        %v7195 = vpack.c.b16 %v6959, %v6955
        %v7196 = vpack.c.b16 %v6960, %v6956
        %v7197 = vpack.c.b16 %v6961, %v6957
        %v7198 = vpack.c.b16 %v6966, %v6962
        %v7199 = vpack.c.b16 %v6967, %v6963
        %v7200 = vpack.c.b16 %v6968, %v6964
        %v7201 = vpack.c.b16 %v6969, %v6965
        %v7202 = vpack.c.b16 %v6974, %v6970
        %v7203 = vpack.c.b16 %v6975, %v6971
        %v7204 = vpack.c.b16 %v6976, %v6972
        %v7205 = vpack.c.b16 %v6977, %v6973
        %v7206 = vpack.c.b16 %v6982, %v6978
        %v7207 = vpack.c.b16 %v6983, %v6979
        %v7208 = vpack.c.b16 %v6984, %v6980
        %v7209 = vpack.c.b16 %v6985, %v6981
        %v7210 = vpack.c.b16 %v6990, %v6986
        %v7211 = vpack.c.b16 %v6991, %v6987
        %v7212 = vpack.c.b16 %v6992, %v6988
        %v7213 = vpack.c.b16 %v6993, %v6989
        %v7214 = vpack.c.b16 %v6998, %v6994
        %v7215 = vpack.c.b16 %v6999, %v6995
        %v7216 = vpack.c.b16 %v7000, %v6996
        %v7217 = vpack.c.b16 %v7001, %v6997
        %v7218 = vpack.c.b16 %v7006, %v7002
        %v7219 = vpack.c.b16 %v7007, %v7003
        %v7220 = vpack.c.b16 %v7008, %v7004
        %v7221 = vpack.c.b16 %v7009, %v7005
        %v7222 = vpack.c.b16 %v7014, %v7010
        %v7223 = vpack.c.b16 %v7015, %v7011
        %v7224 = vpack.c.b16 %v7016, %v7012
        %v7225 = vpack.c.b16 %v7017, %v7013
        %v7226 = vpack.c.b16 %v7022, %v7018
        %v7227 = vpack.c.b16 %v7023, %v7019
        %v7228 = vpack.c.b16 %v7024, %v7020
        %v7229 = vpack.c.b16 %v7025, %v7021
        %v7230 = vpack.c.b16 %v7030, %v7026
        %v7231 = vpack.c.b16 %v7031, %v7027
        %v7232 = vpack.c.b16 %v7032, %v7028
        %v7233 = vpack.c.b16 %v7033, %v7029
        %v7234 = vpack.c.b16 %v7038, %v7034
        %v7235 = vpack.c.b16 %v7039, %v7035
        %v7236 = vpack.c.b16 %v7040, %v7036
        %v7237 = vpack.c.b16 %v7041, %v7037
        %v7238 = vpack.c.b16 %v7046, %v7042
        %v7239 = vpack.c.b16 %v7047, %v7043
        %v7240 = vpack.c.b16 %v7048, %v7044
        %v7241 = vpack.c.b16 %v7049, %v7045
        %v7242 = vpack.c.b16 %v7054, %v7050
        %v7243 = vpack.c.b16 %v7055, %v7051
        %v7244 = vpack.c.b16 %v7056, %v7052
        %v7245 = vpack.c.b16 %v7057, %v7053
        %v7246 = vpack.c.b16 %v7062, %v7058
        %v7247 = vpack.c.b16 %v7063, %v7059
        %v7248 = vpack.c.b16 %v7064, %v7060
        %v7249 = vpack.c.b16 %v7065, %v7061
        %v7250 = vpack.c.b16 %v7070, %v7066
        %v7251 = vpack.c.b16 %v7071, %v7067
        %v7252 = vpack.c.b16 %v7072, %v7068
        %v7253 = vpack.c.b16 %v7073, %v7069
        %v7254 = vpack.c.b16 %v7078, %v7074
        %v7255 = vpack.c.b16 %v7079, %v7075
        %v7256 = vpack.c.b16 %v7080, %v7076
        %v7257 = vpack.c.b16 %v7081, %v7077
        %v7258 = vpack.c.b16 %v7086, %v7082
        %v7259 = vpack.c.b16 %v7087, %v7083
        %v7260 = vpack.c.b16 %v7088, %v7084
        %v7261 = vpack.c.b16 %v7089, %v7085
        %v7262 = vpack.c.b16 %v7094, %v7090
        %v7263 = vpack.c.b16 %v7095, %v7091
        %v7264 = vpack.c.b16 %v7096, %v7092
        %v7265 = vpack.c.b16 %v7097, %v7093
        %v7266 = vpack.c.b16 %v7102, %v7098
        %v7267 = vpack.c.b16 %v7103, %v7099
        %v7268 = vpack.c.b16 %v7104, %v7100
        %v7269 = vpack.c.b16 %v7105, %v7101
        %v7270 = vpack.c.b16 %v7110, %v7106
        %v7271 = vpack.c.b16 %v7111, %v7107
        %v7272 = vpack.c.b16 %v7112, %v7108
        %v7273 = vpack.c.b16 %v7113, %v7109
        %v7274 = vpack.c.b16 %v7118, %v7114
        %v7275 = vpack.c.b16 %v7119, %v7115
        %v7276 = vpack.c.b16 %v7120, %v7116
        %v7277 = vpack.c.b16 %v7121, %v7117
        %v7278 = vpack.c.b16 %v7126, %v7122
        %v7279 = vpack.c.b16 %v7127, %v7123
        %v7280 = vpack.c.b16 %v7128, %v7124
        %v7281 = vpack.c.b16 %v7129, %v7125
        %v7282 = vpack.c.b16 %v7134, %v7130
        %v7283 = vpack.c.b16 %v7135, %v7131
        %v7284 = vpack.c.b16 %v7136, %v7132
        %v7285 = vpack.c.b16 %v7137, %v7133
        %v7286 = vpack.c.b16 %v7142, %v7138
        %v7287 = vpack.c.b16 %v7143, %v7139
        %v7288 = vpack.c.b16 %v7144, %v7140
        %v7289 = vpack.c.b16 %v7145, %v7141
        %v7290 = vpack.c.b16 %v7150, %v7146
        %v7291 = vpack.c.b16 %v7151, %v7147
        %v7292 = vpack.c.b16 %v7152, %v7148
        %v7293 = vpack.c.b16 %v7153, %v7149
        %v7294 = vpack.c.b16 %v7158, %v7154
        %v7295 = vpack.c.b16 %v7159, %v7155
        %v7296 = vpack.c.b16 %v7160, %v7156
        %v7297 = vpack.c.b16 %v7161, %v7157
        %v7298 = vpack.c.b16 %v7166, %v7162
        %v7299 = vpack.c.b16 %v7167, %v7163
        %v7300 = vpack.c.b16 %v7168, %v7164
        %v7301 = vpack.c.b16 %v7169, %v7165
        %v7302 = vpack.c.b16 %v7174, %v7170
        %v7303 = vpack.c.b16 %v7175, %v7171
        %v7304 = vpack.c.b16 %v7176, %v7172
        %v7305 = vpack.c.b16 %v7177, %v7173
        %7434 = vmatpush.bf16.msra.mxu0 %v7206
        %7435 = vmatpush.bf16.msra.mxu0 %v7202
        %7436 = vmatpush.bf16.msra.mxu0 %v7198
        %7437 = vmatpush.bf16.msra.mxu0 %v7194
        %7438 = vmatpush.bf16.msra.mxu0 %v7190
        %7439 = vmatpush.bf16.msra.mxu0 %v7186
        %7440 = vmatpush.bf16.msra.mxu0 %v7182
        %7441 = vmatpush.bf16.msra.mxu0 %v7178
        %7442 = vmatmul.bf16.gmra.mxu0 %v6376
        %v7443 = vpop.f32.mrf.mxu0
        %v7444 = vadd.f32 0.0, %v7443
        %v7445 = vpop.f32.mrf.mxu0
        %7446 = vdwg.mxu0
        %7447 = vmatpush.bf16.msra.mxu0 %v7238
        %7448 = vmatpush.bf16.msra.mxu0 %v7234
        %7449 = vmatpush.bf16.msra.mxu0 %v7230
        %7450 = vmatpush.bf16.msra.mxu0 %v7226
        %7451 = vmatpush.bf16.msra.mxu0 %v7222
        %7452 = vmatpush.bf16.msra.mxu0 %v7218
        %7453 = vmatpush.bf16.msra.mxu0 %v7214
        %7454 = vmatpush.bf16.msra.mxu0 %v7210
        %7455 = vmatmul.bf16.gmra.mxu0 %v6377
        %v7456 = vpop.f32.mrf.mxu0
        %v7457 = vadd.f32 %v7444, %v7456
        %v7458 = vpop.f32.mrf.mxu0
        %7459 = vdwg.mxu0
        %7460 = vmatpush.bf16.msra.mxu0 %v7270
        %7461 = vmatpush.bf16.msra.mxu0 %v7266
        %7462 = vmatpush.bf16.msra.mxu0 %v7262
        %7463 = vmatpush.bf16.msra.mxu0 %v7258
        %7464 = vmatpush.bf16.msra.mxu0 %v7254
        %7465 = vmatpush.bf16.msra.mxu0 %v7250
        %7466 = vmatpush.bf16.msra.mxu0 %v7246
        %7467 = vmatpush.bf16.msra.mxu0 %v7242
        %7468 = vmatmul.bf16.gmra.mxu0 %v6378
        %v7469 = vpop.f32.mrf.mxu0
        %v7470 = vadd.f32 %v7457, %v7469
        %v7471 = vpop.f32.mrf.mxu0
        %7472 = vdwg.mxu0
        %7473 = vmatpush.bf16.msra.mxu0 %v7302
        %7474 = vmatpush.bf16.msra.mxu0 %v7298
        %7475 = vmatpush.bf16.msra.mxu0 %v7294
        %7476 = vmatpush.bf16.msra.mxu0 %v7290
        %7477 = vmatpush.bf16.msra.mxu0 %v7286
        %7478 = vmatpush.bf16.msra.mxu0 %v7282
        %7479 = vmatpush.bf16.msra.mxu0 %v7278
        %7480 = vmatpush.bf16.msra.mxu0 %v7274
        %7481 = vmatmul.bf16.gmra.mxu0 %v6379
        %v7482 = vpop.f32.mrf.mxu0
        %v7483 = vadd.f32 %v7470, %v7482
        %v7484 = vpop.f32.mrf.mxu0
        %7485 = vdwg.mxu0
        %7486 = vmatpush.bf16.msra.mxu0 %v7207
        %7487 = vmatpush.bf16.msra.mxu0 %v7203
        %7488 = vmatpush.bf16.msra.mxu0 %v7199
        %7489 = vmatpush.bf16.msra.mxu0 %v7195
        %7490 = vmatpush.bf16.msra.mxu0 %v7191
        %7491 = vmatpush.bf16.msra.mxu0 %v7187
        %7492 = vmatpush.bf16.msra.mxu0 %v7183
        %7493 = vmatpush.bf16.msra.mxu0 %v7179
        %7494 = vmatmul.bf16.gmra.mxu0 %v6376
        %v7495 = vpop.f32.mrf.mxu0
        %v7496 = vadd.f32 0.0, %v7495
        %v7497 = vpop.f32.mrf.mxu0
        %7498 = vdwg.mxu0
        %7499 = vmatpush.bf16.msra.mxu0 %v7239
        %7500 = vmatpush.bf16.msra.mxu0 %v7235
        %7501 = vmatpush.bf16.msra.mxu0 %v7231
        %7502 = vmatpush.bf16.msra.mxu0 %v7227
        %7503 = vmatpush.bf16.msra.mxu0 %v7223
        %7504 = vmatpush.bf16.msra.mxu0 %v7219
        %7505 = vmatpush.bf16.msra.mxu0 %v7215
        %7506 = vmatpush.bf16.msra.mxu0 %v7211
        %7507 = vmatmul.bf16.gmra.mxu0 %v6377
        %v7508 = vpop.f32.mrf.mxu0
        %v7509 = vadd.f32 %v7496, %v7508
        %v7510 = vpop.f32.mrf.mxu0
        %7511 = vdwg.mxu0
        %7512 = vmatpush.bf16.msra.mxu0 %v7271
        %7513 = vmatpush.bf16.msra.mxu0 %v7267
        %7514 = vmatpush.bf16.msra.mxu0 %v7263
        %7515 = vmatpush.bf16.msra.mxu0 %v7259
        %7516 = vmatpush.bf16.msra.mxu0 %v7255
        %7517 = vmatpush.bf16.msra.mxu0 %v7251
        %7518 = vmatpush.bf16.msra.mxu0 %v7247
        %7519 = vmatpush.bf16.msra.mxu0 %v7243
        %7520 = vmatmul.bf16.gmra.mxu0 %v6378
        %v7521 = vpop.f32.mrf.mxu0
        %v7522 = vadd.f32 %v7509, %v7521
        %v7523 = vpop.f32.mrf.mxu0
        %7524 = vdwg.mxu0
        %7525 = vmatpush.bf16.msra.mxu0 %v7303
        %7526 = vmatpush.bf16.msra.mxu0 %v7299
        %7527 = vmatpush.bf16.msra.mxu0 %v7295
        %7528 = vmatpush.bf16.msra.mxu0 %v7291
        %7529 = vmatpush.bf16.msra.mxu0 %v7287
        %7530 = vmatpush.bf16.msra.mxu0 %v7283
        %7531 = vmatpush.bf16.msra.mxu0 %v7279
        %7532 = vmatpush.bf16.msra.mxu0 %v7275
        %7533 = vmatmul.bf16.gmra.mxu0 %v6379
        %v7534 = vpop.f32.mrf.mxu0
        %v7535 = vadd.f32 %v7522, %v7534
        %v7536 = vpop.f32.mrf.mxu0
        %7537 = vdwg.mxu0
        %7538 = vmatpush.bf16.msra.mxu0 %v7208
        %7539 = vmatpush.bf16.msra.mxu0 %v7204
        %7540 = vmatpush.bf16.msra.mxu0 %v7200
        %7541 = vmatpush.bf16.msra.mxu0 %v7196
        %7542 = vmatpush.bf16.msra.mxu0 %v7192
        %7543 = vmatpush.bf16.msra.mxu0 %v7188
        %7544 = vmatpush.bf16.msra.mxu0 %v7184
        %7545 = vmatpush.bf16.msra.mxu0 %v7180
        %7546 = vmatmul.bf16.gmra.mxu0 %v6376
        %v7547 = vpop.f32.mrf.mxu0
        %v7548 = vadd.f32 0.0, %v7547
        %v7549 = vpop.f32.mrf.mxu0
        %7550 = vdwg.mxu0
        %7551 = vmatpush.bf16.msra.mxu0 %v7240
        %7552 = vmatpush.bf16.msra.mxu0 %v7236
        %7553 = vmatpush.bf16.msra.mxu0 %v7232
        %7554 = vmatpush.bf16.msra.mxu0 %v7228
        %7555 = vmatpush.bf16.msra.mxu0 %v7224
        %7556 = vmatpush.bf16.msra.mxu0 %v7220
        %7557 = vmatpush.bf16.msra.mxu0 %v7216
        %7558 = vmatpush.bf16.msra.mxu0 %v7212
        %7559 = vmatmul.bf16.gmra.mxu0 %v6377
        %v7560 = vpop.f32.mrf.mxu0
        %v7561 = vadd.f32 %v7548, %v7560
        %v7562 = vpop.f32.mrf.mxu0
        %7563 = vdwg.mxu0
        %7564 = vmatpush.bf16.msra.mxu0 %v7272
        %7565 = vmatpush.bf16.msra.mxu0 %v7268
        %7566 = vmatpush.bf16.msra.mxu0 %v7264
        %7567 = vmatpush.bf16.msra.mxu0 %v7260
        %7568 = vmatpush.bf16.msra.mxu0 %v7256
        %7569 = vmatpush.bf16.msra.mxu0 %v7252
        %7570 = vmatpush.bf16.msra.mxu0 %v7248
        %7571 = vmatpush.bf16.msra.mxu0 %v7244
        %7572 = vmatmul.bf16.gmra.mxu0 %v6378
        %v7573 = vpop.f32.mrf.mxu0
        %v7574 = vadd.f32 %v7561, %v7573
        %v7575 = vpop.f32.mrf.mxu0
        %7576 = vdwg.mxu0
        %7577 = vmatpush.bf16.msra.mxu0 %v7304
        %7578 = vmatpush.bf16.msra.mxu0 %v7300
        %7579 = vmatpush.bf16.msra.mxu0 %v7296
        %7580 = vmatpush.bf16.msra.mxu0 %v7292
        %7581 = vmatpush.bf16.msra.mxu0 %v7288
        %7582 = vmatpush.bf16.msra.mxu0 %v7284
        %7583 = vmatpush.bf16.msra.mxu0 %v7280
        %7584 = vmatpush.bf16.msra.mxu0 %v7276
        %7585 = vmatmul.bf16.gmra.mxu0 %v6379
        %v7586 = vpop.f32.mrf.mxu0
        %v7587 = vadd.f32 %v7574, %v7586
        %v7588 = vpop.f32.mrf.mxu0
        %7589 = vdwg.mxu0
        %7590 = vmatpush.bf16.msra.mxu0 %v7209
        %7591 = vmatpush.bf16.msra.mxu0 %v7205
        %7592 = vmatpush.bf16.msra.mxu0 %v7201
        %7593 = vmatpush.bf16.msra.mxu0 %v7197
        %7594 = vmatpush.bf16.msra.mxu0 %v7193
        %7595 = vmatpush.bf16.msra.mxu0 %v7189
        %7596 = vmatpush.bf16.msra.mxu0 %v7185
        %7597 = vmatpush.bf16.msra.mxu0 %v7181
        %7598 = vmatmul.bf16.gmra.mxu0 %v6376
        %v7599 = vpop.f32.mrf.mxu0
        %v7600 = vadd.f32 0.0, %v7599
        %v7601 = vpop.f32.mrf.mxu0
        %7602 = vdwg.mxu0
        %7603 = vmatpush.bf16.msra.mxu0 %v7241
        %7604 = vmatpush.bf16.msra.mxu0 %v7237
        %7605 = vmatpush.bf16.msra.mxu0 %v7233
        %7606 = vmatpush.bf16.msra.mxu0 %v7229
        %7607 = vmatpush.bf16.msra.mxu0 %v7225
        %7608 = vmatpush.bf16.msra.mxu0 %v7221
        %7609 = vmatpush.bf16.msra.mxu0 %v7217
        %7610 = vmatpush.bf16.msra.mxu0 %v7213
        %7611 = vmatmul.bf16.gmra.mxu0 %v6377
        %v7612 = vpop.f32.mrf.mxu0
        %v7613 = vadd.f32 %v7600, %v7612
        %v7614 = vpop.f32.mrf.mxu0
        %7615 = vdwg.mxu0
        %7616 = vmatpush.bf16.msra.mxu0 %v7273
        %7617 = vmatpush.bf16.msra.mxu0 %v7269
        %7618 = vmatpush.bf16.msra.mxu0 %v7265
        %7619 = vmatpush.bf16.msra.mxu0 %v7261
        %7620 = vmatpush.bf16.msra.mxu0 %v7257
        %7621 = vmatpush.bf16.msra.mxu0 %v7253
        %7622 = vmatpush.bf16.msra.mxu0 %v7249
        %7623 = vmatpush.bf16.msra.mxu0 %v7245
        %7624 = vmatmul.bf16.gmra.mxu0 %v6378
        %v7625 = vpop.f32.mrf.mxu0
        %v7626 = vadd.f32 %v7613, %v7625
        %v7627 = vpop.f32.mrf.mxu0
        %7628 = vdwg.mxu0
        %7629 = vmatpush.bf16.msra.mxu0 %v7305
        %7630 = vmatpush.bf16.msra.mxu0 %v7301
        %7631 = vmatpush.bf16.msra.mxu0 %v7297
        %7632 = vmatpush.bf16.msra.mxu0 %v7293
        %7633 = vmatpush.bf16.msra.mxu0 %v7289
        %7634 = vmatpush.bf16.msra.mxu0 %v7285
        %7635 = vmatpush.bf16.msra.mxu0 %v7281
        %7636 = vmatpush.bf16.msra.mxu0 %v7277
        %7637 = vmatmul.bf16.gmra.mxu0 %v6379
        %v7638 = vpop.f32.mrf.mxu0
        %v7639 = vadd.f32 %v7626, %v7638
        %v7640 = vpop.f32.mrf.mxu0
        %7641 = vdwg.mxu0
        %v7770 = vunpack.c.l.b16 %v6538
        %v7771 = vunpack.c.h.b16 %v6538
        %v7772 = vunpack.c.l.b16 %v6539
        %v7773 = vunpack.c.h.b16 %v6539
        %v7774 = vunpack.c.l.b16 %v6540
        %v7775 = vunpack.c.h.b16 %v6540
        %v7776 = vunpack.c.l.b16 %v6541
        %v7777 = vunpack.c.h.b16 %v6541
        %v7778 = vunpack.c.l.b16 %v6542
        %v7779 = vunpack.c.h.b16 %v6542
        %v7780 = vunpack.c.l.b16 %v6543
        %v7781 = vunpack.c.h.b16 %v6543
        %v7782 = vunpack.c.l.b16 %v6544
        %v7783 = vunpack.c.h.b16 %v6544
        %v7784 = vunpack.c.l.b16 %v6545
        %v7785 = vunpack.c.h.b16 %v6545
        %v7786 = vunpack.c.l.b16 %v6546
        %v7787 = vunpack.c.h.b16 %v6546
        %v7788 = vunpack.c.l.b16 %v6547
        %v7789 = vunpack.c.h.b16 %v6547
        %v7790 = vunpack.c.l.b16 %v6548
        %v7791 = vunpack.c.h.b16 %v6548
        %v7792 = vunpack.c.l.b16 %v6549
        %v7793 = vunpack.c.h.b16 %v6549
        %v7794 = vunpack.c.l.b16 %v6550
        %v7795 = vunpack.c.h.b16 %v6550
        %v7796 = vunpack.c.l.b16 %v6551
        %v7797 = vunpack.c.h.b16 %v6551
        %v7798 = vunpack.c.l.b16 %v6552
        %v7799 = vunpack.c.h.b16 %v6552
        %v7800 = vunpack.c.l.b16 %v6553
        %v7801 = vunpack.c.h.b16 %v6553
        %v7802 = vunpack.c.l.b16 %v6554
        %v7803 = vunpack.c.h.b16 %v6554
        %v7804 = vunpack.c.l.b16 %v6555
        %v7805 = vunpack.c.h.b16 %v6555
        %v7806 = vunpack.c.l.b16 %v6556
        %v7807 = vunpack.c.h.b16 %v6556
        %v7808 = vunpack.c.l.b16 %v6557
        %v7809 = vunpack.c.h.b16 %v6557
        %v7810 = vunpack.c.l.b16 %v6558
        %v7811 = vunpack.c.h.b16 %v6558
        %v7812 = vunpack.c.l.b16 %v6559
        %v7813 = vunpack.c.h.b16 %v6559
        %v7814 = vunpack.c.l.b16 %v6560
        %v7815 = vunpack.c.h.b16 %v6560
        %v7816 = vunpack.c.l.b16 %v6561
        %v7817 = vunpack.c.h.b16 %v6561
        %v7818 = vunpack.c.l.b16 %v6562
        %v7819 = vunpack.c.h.b16 %v6562
        %v7820 = vunpack.c.l.b16 %v6563
        %v7821 = vunpack.c.h.b16 %v6563
        %v7822 = vunpack.c.l.b16 %v6564
        %v7823 = vunpack.c.h.b16 %v6564
        %v7824 = vunpack.c.l.b16 %v6565
        %v7825 = vunpack.c.h.b16 %v6565
        %v7826 = vunpack.c.l.b16 %v6566
        %v7827 = vunpack.c.h.b16 %v6566
        %v7828 = vunpack.c.l.b16 %v6567
        %v7829 = vunpack.c.h.b16 %v6567
        %v7830 = vunpack.c.l.b16 %v6568
        %v7831 = vunpack.c.h.b16 %v6568
        %v7832 = vunpack.c.l.b16 %v6569
        %v7833 = vunpack.c.h.b16 %v6569
        %v7834 = vunpack.c.l.b16 %v6570
        %v7835 = vunpack.c.h.b16 %v6570
        %v7836 = vunpack.c.l.b16 %v6571
        %v7837 = vunpack.c.h.b16 %v6571
        %v7838 = vunpack.c.l.b16 %v6572
        %v7839 = vunpack.c.h.b16 %v6572
        %v7840 = vunpack.c.l.b16 %v6573
        %v7841 = vunpack.c.h.b16 %v6573
        %v7842 = vunpack.c.l.b16 %v6574
        %v7843 = vunpack.c.h.b16 %v6574
        %v7844 = vunpack.c.l.b16 %v6575
        %v7845 = vunpack.c.h.b16 %v6575
        %v7846 = vunpack.c.l.b16 %v6576
        %v7847 = vunpack.c.h.b16 %v6576
        %v7848 = vunpack.c.l.b16 %v6577
        %v7849 = vunpack.c.h.b16 %v6577
        %v7850 = vunpack.c.l.b16 %v6578
        %v7851 = vunpack.c.h.b16 %v6578
        %v7852 = vunpack.c.l.b16 %v6579
        %v7853 = vunpack.c.h.b16 %v6579
        %v7854 = vunpack.c.l.b16 %v6580
        %v7855 = vunpack.c.h.b16 %v6580
        %v7856 = vunpack.c.l.b16 %v6581
        %v7857 = vunpack.c.h.b16 %v6581
        %v7858 = vunpack.c.l.b16 %v6582
        %v7859 = vunpack.c.h.b16 %v6582
        %v7860 = vunpack.c.l.b16 %v6583
        %v7861 = vunpack.c.h.b16 %v6583
        %v7862 = vunpack.c.l.b16 %v6584
        %v7863 = vunpack.c.h.b16 %v6584
        %v7864 = vunpack.c.l.b16 %v6585
        %v7865 = vunpack.c.h.b16 %v6585
        %v7866 = vunpack.c.l.b16 %v6586
        %v7867 = vunpack.c.h.b16 %v6586
        %v7868 = vunpack.c.l.b16 %v6587
        %v7869 = vunpack.c.h.b16 %v6587
        %v7870 = vunpack.c.l.b16 %v6588
        %v7871 = vunpack.c.h.b16 %v6588
        %v7872 = vunpack.c.l.b16 %v6589
        %v7873 = vunpack.c.h.b16 %v6589
        %v7874 = vunpack.c.l.b16 %v6590
        %v7875 = vunpack.c.h.b16 %v6590
        %v7876 = vunpack.c.l.b16 %v6591
        %v7877 = vunpack.c.h.b16 %v6591
        %v7878 = vunpack.c.l.b16 %v6592
        %v7879 = vunpack.c.h.b16 %v6592
        %v7880 = vunpack.c.l.b16 %v6593
        %v7881 = vunpack.c.h.b16 %v6593
        %v7882 = vunpack.c.l.b16 %v6594
        %v7883 = vunpack.c.h.b16 %v6594
        %v7884 = vunpack.c.l.b16 %v6595
        %v7885 = vunpack.c.h.b16 %v6595
        %v7886 = vunpack.c.l.b16 %v6596
        %v7887 = vunpack.c.h.b16 %v6596
        %v7888 = vunpack.c.l.b16 %v6597
        %v7889 = vunpack.c.h.b16 %v6597
        %v7890 = vunpack.c.l.b16 %v6598
        %v7891 = vunpack.c.h.b16 %v6598
        %v7892 = vunpack.c.l.b16 %v6599
        %v7893 = vunpack.c.h.b16 %v6599
        %v7894 = vunpack.c.l.b16 %v6600
        %v7895 = vunpack.c.h.b16 %v6600
        %v7896 = vunpack.c.l.b16 %v6601
        %v7897 = vunpack.c.h.b16 %v6601
        %v7898 = vunpack.c.l.b16 %v6602
        %v7899 = vunpack.c.h.b16 %v6602
        %v7900 = vunpack.c.l.b16 %v6603
        %v7901 = vunpack.c.h.b16 %v6603
        %v7902 = vunpack.c.l.b16 %v6604
        %v7903 = vunpack.c.h.b16 %v6604
        %v7904 = vunpack.c.l.b16 %v6605
        %v7905 = vunpack.c.h.b16 %v6605
        %v7906 = vunpack.c.l.b16 %v6606
        %v7907 = vunpack.c.h.b16 %v6606
        %v7908 = vunpack.c.l.b16 %v6607
        %v7909 = vunpack.c.h.b16 %v6607
        %v7910 = vunpack.c.l.b16 %v6608
        %v7911 = vunpack.c.h.b16 %v6608
        %v7912 = vunpack.c.l.b16 %v6609
        %v7913 = vunpack.c.h.b16 %v6609
        %v7914 = vunpack.c.l.b16 %v6610
        %v7915 = vunpack.c.h.b16 %v6610
        %v7916 = vunpack.c.l.b16 %v6611
        %v7917 = vunpack.c.h.b16 %v6611
        %v7918 = vunpack.c.l.b16 %v6612
        %v7919 = vunpack.c.h.b16 %v6612
        %v7920 = vunpack.c.l.b16 %v6613
        %v7921 = vunpack.c.h.b16 %v6613
        %v7922 = vunpack.c.l.b16 %v6614
        %v7923 = vunpack.c.h.b16 %v6614
        %v7924 = vunpack.c.l.b16 %v6615
        %v7925 = vunpack.c.h.b16 %v6615
        %v7926 = vunpack.c.l.b16 %v6616
        %v7927 = vunpack.c.h.b16 %v6616
        %v7928 = vunpack.c.l.b16 %v6617
        %v7929 = vunpack.c.h.b16 %v6617
        %v7930 = vunpack.c.l.b16 %v6618
        %v7931 = vunpack.c.h.b16 %v6618
        %v7932 = vunpack.c.l.b16 %v6619
        %v7933 = vunpack.c.h.b16 %v6619
        %v7934 = vunpack.c.l.b16 %v6620
        %v7935 = vunpack.c.h.b16 %v6620
        %v7936 = vunpack.c.l.b16 %v6621
        %v7937 = vunpack.c.h.b16 %v6621
        %v7938 = vunpack.c.l.b16 %v6622
        %v7939 = vunpack.c.h.b16 %v6622
        %v7940 = vunpack.c.l.b16 %v6623
        %v7941 = vunpack.c.h.b16 %v6623
        %v7942 = vunpack.c.l.b16 %v6624
        %v7943 = vunpack.c.h.b16 %v6624
        %v7944 = vunpack.c.l.b16 %v6625
        %v7945 = vunpack.c.h.b16 %v6625
        %v7946 = vunpack.c.l.b16 %v6626
        %v7947 = vunpack.c.h.b16 %v6626
        %v7948 = vunpack.c.l.b16 %v6627
        %v7949 = vunpack.c.h.b16 %v6627
        %v7950 = vunpack.c.l.b16 %v6628
        %v7951 = vunpack.c.h.b16 %v6628
        %v7952 = vunpack.c.l.b16 %v6629
        %v7953 = vunpack.c.h.b16 %v6629
        %v7954 = vunpack.c.l.b16 %v6630
        %v7955 = vunpack.c.h.b16 %v6630
        %v7956 = vunpack.c.l.b16 %v6631
        %v7957 = vunpack.c.h.b16 %v6631
        %v7958 = vunpack.c.l.b16 %v6632
        %v7959 = vunpack.c.h.b16 %v6632
        %v7960 = vunpack.c.l.b16 %v6633
        %v7961 = vunpack.c.h.b16 %v6633
        %v7962 = vunpack.c.l.b16 %v6634
        %v7963 = vunpack.c.h.b16 %v6634
        %v7964 = vunpack.c.l.b16 %v6635
        %v7965 = vunpack.c.h.b16 %v6635
        %v7966 = vunpack.c.l.b16 %v6636
        %v7967 = vunpack.c.h.b16 %v6636
        %v7968 = vunpack.c.l.b16 %v6637
        %v7969 = vunpack.c.h.b16 %v6637
        %v7970 = vunpack.c.l.b16 %v6638
        %v7971 = vunpack.c.h.b16 %v6638
        %v7972 = vunpack.c.l.b16 %v6639
        %v7973 = vunpack.c.h.b16 %v6639
        %v7974 = vunpack.c.l.b16 %v6640
        %v7975 = vunpack.c.h.b16 %v6640
        %v7976 = vunpack.c.l.b16 %v6641
        %v7977 = vunpack.c.h.b16 %v6641
        %v7978 = vunpack.c.l.b16 %v6642
        %v7979 = vunpack.c.h.b16 %v6642
        %v7980 = vunpack.c.l.b16 %v6643
        %v7981 = vunpack.c.h.b16 %v6643
        %v7982 = vunpack.c.l.b16 %v6644
        %v7983 = vunpack.c.h.b16 %v6644
        %v7984 = vunpack.c.l.b16 %v6645
        %v7985 = vunpack.c.h.b16 %v6645
        %v7986 = vunpack.c.l.b16 %v6646
        %v7987 = vunpack.c.h.b16 %v6646
        %v7988 = vunpack.c.l.b16 %v6647
        %v7989 = vunpack.c.h.b16 %v6647
        %v7990 = vunpack.c.l.b16 %v6648
        %v7991 = vunpack.c.h.b16 %v6648
        %v7992 = vunpack.c.l.b16 %v6649
        %v7993 = vunpack.c.h.b16 %v6649
        %v7994 = vunpack.c.l.b16 %v6650
        %v7995 = vunpack.c.h.b16 %v6650
        %v7996 = vunpack.c.l.b16 %v6651
        %v7997 = vunpack.c.h.b16 %v6651
        %v7998 = vunpack.c.l.b16 %v6652
        %v7999 = vunpack.c.h.b16 %v6652
        %v8000 = vunpack.c.l.b16 %v6653
        %v8001 = vunpack.c.h.b16 %v6653
        %v8002 = vunpack.c.l.b16 %v6654
        %v8003 = vunpack.c.h.b16 %v6654
        %v8004 = vunpack.c.l.b16 %v6655
        %v8005 = vunpack.c.h.b16 %v6655
        %v8006 = vunpack.c.l.b16 %v6656
        %v8007 = vunpack.c.h.b16 %v6656
        %v8008 = vunpack.c.l.b16 %v6657
        %v8009 = vunpack.c.h.b16 %v6657
        %v8010 = vunpack.c.l.b16 %v6658
        %v8011 = vunpack.c.h.b16 %v6658
        %v8012 = vunpack.c.l.b16 %v6659
        %v8013 = vunpack.c.h.b16 %v6659
        %v8014 = vunpack.c.l.b16 %v6660
        %v8015 = vunpack.c.h.b16 %v6660
        %v8016 = vunpack.c.l.b16 %v6661
        %v8017 = vunpack.c.h.b16 %v6661
        %v8018 = vunpack.c.l.b16 %v6662
        %v8019 = vunpack.c.h.b16 %v6662
        %v8020 = vunpack.c.l.b16 %v6663
        %v8021 = vunpack.c.h.b16 %v6663
        %v8022 = vunpack.c.l.b16 %v6664
        %v8023 = vunpack.c.h.b16 %v6664
        %v8024 = vunpack.c.l.b16 %v6665
        %v8025 = vunpack.c.h.b16 %v6665
        %v8026 = vpack.c.b16 %v7774, %v7770
        %v8027 = vpack.c.b16 %v7775, %v7771
        %v8028 = vpack.c.b16 %v7776, %v7772
        %v8029 = vpack.c.b16 %v7777, %v7773
        %v8030 = vpack.c.b16 %v7782, %v7778
        %v8031 = vpack.c.b16 %v7783, %v7779
        %v8032 = vpack.c.b16 %v7784, %v7780
        %v8033 = vpack.c.b16 %v7785, %v7781
        %v8034 = vpack.c.b16 %v7790, %v7786
        %v8035 = vpack.c.b16 %v7791, %v7787
        %v8036 = vpack.c.b16 %v7792, %v7788
        %v8037 = vpack.c.b16 %v7793, %v7789
        %v8038 = vpack.c.b16 %v7798, %v7794
        %v8039 = vpack.c.b16 %v7799, %v7795
        %v8040 = vpack.c.b16 %v7800, %v7796
        %v8041 = vpack.c.b16 %v7801, %v7797
        %v8042 = vpack.c.b16 %v7806, %v7802
        %v8043 = vpack.c.b16 %v7807, %v7803
        %v8044 = vpack.c.b16 %v7808, %v7804
        %v8045 = vpack.c.b16 %v7809, %v7805
        %v8046 = vpack.c.b16 %v7814, %v7810
        %v8047 = vpack.c.b16 %v7815, %v7811
        %v8048 = vpack.c.b16 %v7816, %v7812
        %v8049 = vpack.c.b16 %v7817, %v7813
        %v8050 = vpack.c.b16 %v7822, %v7818
        %v8051 = vpack.c.b16 %v7823, %v7819
        %v8052 = vpack.c.b16 %v7824, %v7820
        %v8053 = vpack.c.b16 %v7825, %v7821
        %v8054 = vpack.c.b16 %v7830, %v7826
        %v8055 = vpack.c.b16 %v7831, %v7827
        %v8056 = vpack.c.b16 %v7832, %v7828
        %v8057 = vpack.c.b16 %v7833, %v7829
        %v8058 = vpack.c.b16 %v7838, %v7834
        %v8059 = vpack.c.b16 %v7839, %v7835
        %v8060 = vpack.c.b16 %v7840, %v7836
        %v8061 = vpack.c.b16 %v7841, %v7837
        %v8062 = vpack.c.b16 %v7846, %v7842
        %v8063 = vpack.c.b16 %v7847, %v7843
        %v8064 = vpack.c.b16 %v7848, %v7844
        %v8065 = vpack.c.b16 %v7849, %v7845
        %v8066 = vpack.c.b16 %v7854, %v7850
        %v8067 = vpack.c.b16 %v7855, %v7851
        %v8068 = vpack.c.b16 %v7856, %v7852
        %v8069 = vpack.c.b16 %v7857, %v7853
        %v8070 = vpack.c.b16 %v7862, %v7858
        %v8071 = vpack.c.b16 %v7863, %v7859
        %v8072 = vpack.c.b16 %v7864, %v7860
        %v8073 = vpack.c.b16 %v7865, %v7861
        %v8074 = vpack.c.b16 %v7870, %v7866
        %v8075 = vpack.c.b16 %v7871, %v7867
        %v8076 = vpack.c.b16 %v7872, %v7868
        %v8077 = vpack.c.b16 %v7873, %v7869
        %v8078 = vpack.c.b16 %v7878, %v7874
        %v8079 = vpack.c.b16 %v7879, %v7875
        %v8080 = vpack.c.b16 %v7880, %v7876
        %v8081 = vpack.c.b16 %v7881, %v7877
        %v8082 = vpack.c.b16 %v7886, %v7882
        %v8083 = vpack.c.b16 %v7887, %v7883
        %v8084 = vpack.c.b16 %v7888, %v7884
        %v8085 = vpack.c.b16 %v7889, %v7885
        %v8086 = vpack.c.b16 %v7894, %v7890
        %v8087 = vpack.c.b16 %v7895, %v7891
        %v8088 = vpack.c.b16 %v7896, %v7892
        %v8089 = vpack.c.b16 %v7897, %v7893
        %v8090 = vpack.c.b16 %v7902, %v7898
        %v8091 = vpack.c.b16 %v7903, %v7899
        %v8092 = vpack.c.b16 %v7904, %v7900
        %v8093 = vpack.c.b16 %v7905, %v7901
        %v8094 = vpack.c.b16 %v7910, %v7906
        %v8095 = vpack.c.b16 %v7911, %v7907
        %v8096 = vpack.c.b16 %v7912, %v7908
        %v8097 = vpack.c.b16 %v7913, %v7909
        %v8098 = vpack.c.b16 %v7918, %v7914
        %v8099 = vpack.c.b16 %v7919, %v7915
        %v8100 = vpack.c.b16 %v7920, %v7916
        %v8101 = vpack.c.b16 %v7921, %v7917
        %v8102 = vpack.c.b16 %v7926, %v7922
        %v8103 = vpack.c.b16 %v7927, %v7923
        %v8104 = vpack.c.b16 %v7928, %v7924
        %v8105 = vpack.c.b16 %v7929, %v7925
        %v8106 = vpack.c.b16 %v7934, %v7930
        %v8107 = vpack.c.b16 %v7935, %v7931
        %v8108 = vpack.c.b16 %v7936, %v7932
        %v8109 = vpack.c.b16 %v7937, %v7933
        %v8110 = vpack.c.b16 %v7942, %v7938
        %v8111 = vpack.c.b16 %v7943, %v7939
        %v8112 = vpack.c.b16 %v7944, %v7940
        %v8113 = vpack.c.b16 %v7945, %v7941
        %v8114 = vpack.c.b16 %v7950, %v7946
        %v8115 = vpack.c.b16 %v7951, %v7947
        %v8116 = vpack.c.b16 %v7952, %v7948
        %v8117 = vpack.c.b16 %v7953, %v7949
        %v8118 = vpack.c.b16 %v7958, %v7954
        %v8119 = vpack.c.b16 %v7959, %v7955
        %v8120 = vpack.c.b16 %v7960, %v7956
        %v8121 = vpack.c.b16 %v7961, %v7957
        %v8122 = vpack.c.b16 %v7966, %v7962
        %v8123 = vpack.c.b16 %v7967, %v7963
        %v8124 = vpack.c.b16 %v7968, %v7964
        %v8125 = vpack.c.b16 %v7969, %v7965
        %v8126 = vpack.c.b16 %v7974, %v7970
        %v8127 = vpack.c.b16 %v7975, %v7971
        %v8128 = vpack.c.b16 %v7976, %v7972
        %v8129 = vpack.c.b16 %v7977, %v7973
        %v8130 = vpack.c.b16 %v7982, %v7978
        %v8131 = vpack.c.b16 %v7983, %v7979
        %v8132 = vpack.c.b16 %v7984, %v7980
        %v8133 = vpack.c.b16 %v7985, %v7981
        %v8134 = vpack.c.b16 %v7990, %v7986
        %v8135 = vpack.c.b16 %v7991, %v7987
        %v8136 = vpack.c.b16 %v7992, %v7988
        %v8137 = vpack.c.b16 %v7993, %v7989
        %v8138 = vpack.c.b16 %v7998, %v7994
        %v8139 = vpack.c.b16 %v7999, %v7995
        %v8140 = vpack.c.b16 %v8000, %v7996
        %v8141 = vpack.c.b16 %v8001, %v7997
        %v8142 = vpack.c.b16 %v8006, %v8002
        %v8143 = vpack.c.b16 %v8007, %v8003
        %v8144 = vpack.c.b16 %v8008, %v8004
        %v8145 = vpack.c.b16 %v8009, %v8005
        %v8146 = vpack.c.b16 %v8014, %v8010
        %v8147 = vpack.c.b16 %v8015, %v8011
        %v8148 = vpack.c.b16 %v8016, %v8012
        %v8149 = vpack.c.b16 %v8017, %v8013
        %v8150 = vpack.c.b16 %v8022, %v8018
        %v8151 = vpack.c.b16 %v8023, %v8019
        %v8152 = vpack.c.b16 %v8024, %v8020
        %v8153 = vpack.c.b16 %v8025, %v8021
        %8282 = vmatpush.bf16.msra.mxu0 %v8054
        %8283 = vmatpush.bf16.msra.mxu0 %v8050
        %8284 = vmatpush.bf16.msra.mxu0 %v8046
        %8285 = vmatpush.bf16.msra.mxu0 %v8042
        %8286 = vmatpush.bf16.msra.mxu0 %v8038
        %8287 = vmatpush.bf16.msra.mxu0 %v8034
        %8288 = vmatpush.bf16.msra.mxu0 %v8030
        %8289 = vmatpush.bf16.msra.mxu0 %v8026
        %8290 = vmatmul.bf16.gmra.mxu0 %v6476
        %v8291 = vpop.f32.mrf.mxu0
        %v8292 = vadd.f32 %v7483, %v8291
        %v8293 = vpop.f32.mrf.mxu0
        %8294 = vdwg.mxu0
        %8295 = vmatpush.bf16.msra.mxu0 %v8086
        %8296 = vmatpush.bf16.msra.mxu0 %v8082
        %8297 = vmatpush.bf16.msra.mxu0 %v8078
        %8298 = vmatpush.bf16.msra.mxu0 %v8074
        %8299 = vmatpush.bf16.msra.mxu0 %v8070
        %8300 = vmatpush.bf16.msra.mxu0 %v8066
        %8301 = vmatpush.bf16.msra.mxu0 %v8062
        %8302 = vmatpush.bf16.msra.mxu0 %v8058
        %8303 = vmatmul.bf16.gmra.mxu0 %v6477
        %v8304 = vpop.f32.mrf.mxu0
        %v8305 = vadd.f32 %v8292, %v8304
        %v8306 = vpop.f32.mrf.mxu0
        %8307 = vdwg.mxu0
        %8308 = vmatpush.bf16.msra.mxu0 %v8118
        %8309 = vmatpush.bf16.msra.mxu0 %v8114
        %8310 = vmatpush.bf16.msra.mxu0 %v8110
        %8311 = vmatpush.bf16.msra.mxu0 %v8106
        %8312 = vmatpush.bf16.msra.mxu0 %v8102
        %8313 = vmatpush.bf16.msra.mxu0 %v8098
        %8314 = vmatpush.bf16.msra.mxu0 %v8094
        %8315 = vmatpush.bf16.msra.mxu0 %v8090
        %8316 = vmatmul.bf16.gmra.mxu0 %v6478
        %v8317 = vpop.f32.mrf.mxu0
        %v8318 = vadd.f32 %v8305, %v8317
        %v8319 = vpop.f32.mrf.mxu0
        %8320 = vdwg.mxu0
        %8321 = vmatpush.bf16.msra.mxu0 %v8150
        %8322 = vmatpush.bf16.msra.mxu0 %v8146
        %8323 = vmatpush.bf16.msra.mxu0 %v8142
        %8324 = vmatpush.bf16.msra.mxu0 %v8138
        %8325 = vmatpush.bf16.msra.mxu0 %v8134
        %8326 = vmatpush.bf16.msra.mxu0 %v8130
        %8327 = vmatpush.bf16.msra.mxu0 %v8126
        %8328 = vmatpush.bf16.msra.mxu0 %v8122
        %8329 = vmatmul.bf16.gmra.mxu0 %v6479
        %v8330 = vpop.f32.mrf.mxu0
        %v8331 = vadd.f32 %v8318, %v8330
        %v8332 = vpop.f32.mrf.mxu0
        %8333 = vdwg.mxu0
        %8334 = vmatpush.bf16.msra.mxu0 %v8055
        %8335 = vmatpush.bf16.msra.mxu0 %v8051
        %8336 = vmatpush.bf16.msra.mxu0 %v8047
        %8337 = vmatpush.bf16.msra.mxu0 %v8043
        %8338 = vmatpush.bf16.msra.mxu0 %v8039
        %8339 = vmatpush.bf16.msra.mxu0 %v8035
        %8340 = vmatpush.bf16.msra.mxu0 %v8031
        %8341 = vmatpush.bf16.msra.mxu0 %v8027
        %8342 = vmatmul.bf16.gmra.mxu0 %v6476
        %v8343 = vpop.f32.mrf.mxu0
        %v8344 = vadd.f32 %v7535, %v8343
        %v8345 = vpop.f32.mrf.mxu0
        %8346 = vdwg.mxu0
        %8347 = vmatpush.bf16.msra.mxu0 %v8087
        %8348 = vmatpush.bf16.msra.mxu0 %v8083
        %8349 = vmatpush.bf16.msra.mxu0 %v8079
        %8350 = vmatpush.bf16.msra.mxu0 %v8075
        %8351 = vmatpush.bf16.msra.mxu0 %v8071
        %8352 = vmatpush.bf16.msra.mxu0 %v8067
        %8353 = vmatpush.bf16.msra.mxu0 %v8063
        %8354 = vmatpush.bf16.msra.mxu0 %v8059
        %8355 = vmatmul.bf16.gmra.mxu0 %v6477
        %v8356 = vpop.f32.mrf.mxu0
        %v8357 = vadd.f32 %v8344, %v8356
        %v8358 = vpop.f32.mrf.mxu0
        %8359 = vdwg.mxu0
        %8360 = vmatpush.bf16.msra.mxu0 %v8119
        %8361 = vmatpush.bf16.msra.mxu0 %v8115
        %8362 = vmatpush.bf16.msra.mxu0 %v8111
        %8363 = vmatpush.bf16.msra.mxu0 %v8107
        %8364 = vmatpush.bf16.msra.mxu0 %v8103
        %8365 = vmatpush.bf16.msra.mxu0 %v8099
        %8366 = vmatpush.bf16.msra.mxu0 %v8095
        %8367 = vmatpush.bf16.msra.mxu0 %v8091
        %8368 = vmatmul.bf16.gmra.mxu0 %v6478
        %v8369 = vpop.f32.mrf.mxu0
        %v8370 = vadd.f32 %v8357, %v8369
        %v8371 = vpop.f32.mrf.mxu0
        %8372 = vdwg.mxu0
        %8373 = vmatpush.bf16.msra.mxu0 %v8151
        %8374 = vmatpush.bf16.msra.mxu0 %v8147
        %8375 = vmatpush.bf16.msra.mxu0 %v8143
        %8376 = vmatpush.bf16.msra.mxu0 %v8139
        %8377 = vmatpush.bf16.msra.mxu0 %v8135
        %8378 = vmatpush.bf16.msra.mxu0 %v8131
        %8379 = vmatpush.bf16.msra.mxu0 %v8127
        %8380 = vmatpush.bf16.msra.mxu0 %v8123
        %8381 = vmatmul.bf16.gmra.mxu0 %v6479
        %v8382 = vpop.f32.mrf.mxu0
        %v8383 = vadd.f32 %v8370, %v8382
        %v8384 = vpop.f32.mrf.mxu0
        %8385 = vdwg.mxu0
        %8386 = vmatpush.bf16.msra.mxu0 %v8056
        %8387 = vmatpush.bf16.msra.mxu0 %v8052
        %8388 = vmatpush.bf16.msra.mxu0 %v8048
        %8389 = vmatpush.bf16.msra.mxu0 %v8044
        %8390 = vmatpush.bf16.msra.mxu0 %v8040
        %8391 = vmatpush.bf16.msra.mxu0 %v8036
        %8392 = vmatpush.bf16.msra.mxu0 %v8032
        %8393 = vmatpush.bf16.msra.mxu0 %v8028
        %8394 = vmatmul.bf16.gmra.mxu0 %v6476
        %v8395 = vpop.f32.mrf.mxu0
        %v8396 = vadd.f32 %v7587, %v8395
        %v8397 = vpop.f32.mrf.mxu0
        %8398 = vdwg.mxu0
        %8399 = vmatpush.bf16.msra.mxu0 %v8088
        %8400 = vmatpush.bf16.msra.mxu0 %v8084
        %8401 = vmatpush.bf16.msra.mxu0 %v8080
        %8402 = vmatpush.bf16.msra.mxu0 %v8076
        %8403 = vmatpush.bf16.msra.mxu0 %v8072
        %8404 = vmatpush.bf16.msra.mxu0 %v8068
        %8405 = vmatpush.bf16.msra.mxu0 %v8064
        %8406 = vmatpush.bf16.msra.mxu0 %v8060
        %8407 = vmatmul.bf16.gmra.mxu0 %v6477
        %v8408 = vpop.f32.mrf.mxu0
        %v8409 = vadd.f32 %v8396, %v8408
        %v8410 = vpop.f32.mrf.mxu0
        %8411 = vdwg.mxu0
        %8412 = vmatpush.bf16.msra.mxu0 %v8120
        %8413 = vmatpush.bf16.msra.mxu0 %v8116
        %8414 = vmatpush.bf16.msra.mxu0 %v8112
        %8415 = vmatpush.bf16.msra.mxu0 %v8108
        %8416 = vmatpush.bf16.msra.mxu0 %v8104
        %8417 = vmatpush.bf16.msra.mxu0 %v8100
        %8418 = vmatpush.bf16.msra.mxu0 %v8096
        %8419 = vmatpush.bf16.msra.mxu0 %v8092
        %8420 = vmatmul.bf16.gmra.mxu0 %v6478
        %v8421 = vpop.f32.mrf.mxu0
        %v8422 = vadd.f32 %v8409, %v8421
        %v8423 = vpop.f32.mrf.mxu0
        %8424 = vdwg.mxu0
        %8425 = vmatpush.bf16.msra.mxu0 %v8152
        %8426 = vmatpush.bf16.msra.mxu0 %v8148
        %8427 = vmatpush.bf16.msra.mxu0 %v8144
        %8428 = vmatpush.bf16.msra.mxu0 %v8140
        %8429 = vmatpush.bf16.msra.mxu0 %v8136
        %8430 = vmatpush.bf16.msra.mxu0 %v8132
        %8431 = vmatpush.bf16.msra.mxu0 %v8128
        %8432 = vmatpush.bf16.msra.mxu0 %v8124
        %8433 = vmatmul.bf16.gmra.mxu0 %v6479
        %v8434 = vpop.f32.mrf.mxu0
        %v8435 = vadd.f32 %v8422, %v8434
        %v8436 = vpop.f32.mrf.mxu0
        %8437 = vdwg.mxu0
        %8438 = vmatpush.bf16.msra.mxu0 %v8057
        %8439 = vmatpush.bf16.msra.mxu0 %v8053
        %8440 = vmatpush.bf16.msra.mxu0 %v8049
        %8441 = vmatpush.bf16.msra.mxu0 %v8045
        %8442 = vmatpush.bf16.msra.mxu0 %v8041
        %8443 = vmatpush.bf16.msra.mxu0 %v8037
        %8444 = vmatpush.bf16.msra.mxu0 %v8033
        %8445 = vmatpush.bf16.msra.mxu0 %v8029
        %8446 = vmatmul.bf16.gmra.mxu0 %v6476
        %v8447 = vpop.f32.mrf.mxu0
        %v8448 = vadd.f32 %v7639, %v8447
        %v8449 = vpop.f32.mrf.mxu0
        %8450 = vdwg.mxu0
        %8451 = vmatpush.bf16.msra.mxu0 %v8089
        %8452 = vmatpush.bf16.msra.mxu0 %v8085
        %8453 = vmatpush.bf16.msra.mxu0 %v8081
        %8454 = vmatpush.bf16.msra.mxu0 %v8077
        %8455 = vmatpush.bf16.msra.mxu0 %v8073
        %8456 = vmatpush.bf16.msra.mxu0 %v8069
        %8457 = vmatpush.bf16.msra.mxu0 %v8065
        %8458 = vmatpush.bf16.msra.mxu0 %v8061
        %8459 = vmatmul.bf16.gmra.mxu0 %v6477
        %v8460 = vpop.f32.mrf.mxu0
        %v8461 = vadd.f32 %v8448, %v8460
        %v8462 = vpop.f32.mrf.mxu0
        %8463 = vdwg.mxu0
        %8464 = vmatpush.bf16.msra.mxu0 %v8121
        %8465 = vmatpush.bf16.msra.mxu0 %v8117
        %8466 = vmatpush.bf16.msra.mxu0 %v8113
        %8467 = vmatpush.bf16.msra.mxu0 %v8109
        %8468 = vmatpush.bf16.msra.mxu0 %v8105
        %8469 = vmatpush.bf16.msra.mxu0 %v8101
        %8470 = vmatpush.bf16.msra.mxu0 %v8097
        %8471 = vmatpush.bf16.msra.mxu0 %v8093
        %8472 = vmatmul.bf16.gmra.mxu0 %v6478
        %v8473 = vpop.f32.mrf.mxu0
        %v8474 = vadd.f32 %v8461, %v8473
        %v8475 = vpop.f32.mrf.mxu0
        %8476 = vdwg.mxu0
        %8477 = vmatpush.bf16.msra.mxu0 %v8153
        %8478 = vmatpush.bf16.msra.mxu0 %v8149
        %8479 = vmatpush.bf16.msra.mxu0 %v8145
        %8480 = vmatpush.bf16.msra.mxu0 %v8141
        %8481 = vmatpush.bf16.msra.mxu0 %v8137
        %8482 = vmatpush.bf16.msra.mxu0 %v8133
        %8483 = vmatpush.bf16.msra.mxu0 %v8129
        %8484 = vmatpush.bf16.msra.mxu0 %v8125
        %8485 = vmatmul.bf16.gmra.mxu0 %v6479
        %v8486 = vpop.f32.mrf.mxu0
        %v8487 = vadd.f32 %v8474, %v8486
        %v8488 = vpop.f32.mrf.mxu0
        %8489 = vdwg.mxu0
        %v8490 = vld [vmem:[#allocation48 + $0x800] sm:$0xff]
        %v8491 = vld [vmem:[#allocation48 + $0x808] sm:$0xff]
        %v8492 = vld [vmem:[#allocation48 + $0x810] sm:$0xff]
        %v8493 = vld [vmem:[#allocation48 + $0x818] sm:$0xff]
        %v8494 = vld [vmem:[#allocation48 + $0x820] sm:$0xff]
        %v8495 = vld [vmem:[#allocation48 + $0x828] sm:$0xff]
        %v8496 = vld [vmem:[#allocation48 + $0x830] sm:$0xff]
        %v8497 = vld [vmem:[#allocation48 + $0x838] sm:$0xff]
        %v8498 = vld [vmem:[#allocation48 + $0x840] sm:$0xff]
        %v8499 = vld [vmem:[#allocation48 + $0x848] sm:$0xff]
        %v8500 = vld [vmem:[#allocation48 + $0x850] sm:$0xff]
        %v8501 = vld [vmem:[#allocation48 + $0x858] sm:$0xff]
        %v8502 = vld [vmem:[#allocation48 + $0x860] sm:$0xff]
        %v8503 = vld [vmem:[#allocation48 + $0x868] sm:$0xff]
        %v8504 = vld [vmem:[#allocation48 + $0x870] sm:$0xff]
        %v8505 = vld [vmem:[#allocation48 + $0x878] sm:$0xff]
        %v8506 = vld [vmem:[#allocation48 + $0x880] sm:$0xff]
        %v8507 = vld [vmem:[#allocation48 + $0x888] sm:$0xff]
        %v8508 = vld [vmem:[#allocation48 + $0x890] sm:$0xff]
        %v8509 = vld [vmem:[#allocation48 + $0x898] sm:$0xff]
        %v8510 = vld [vmem:[#allocation48 + $0x8a0] sm:$0xff]
        %v8511 = vld [vmem:[#allocation48 + $0x8a8] sm:$0xff]
        %v8512 = vld [vmem:[#allocation48 + $0x8b0] sm:$0xff]
        %v8513 = vld [vmem:[#allocation48 + $0x8b8] sm:$0xff]
        %v8514 = vld [vmem:[#allocation48 + $0x8c0] sm:$0xff]
        %v8515 = vld [vmem:[#allocation48 + $0x8c8] sm:$0xff]
        %v8516 = vld [vmem:[#allocation48 + $0x8d0] sm:$0xff]
        %v8517 = vld [vmem:[#allocation48 + $0x8d8] sm:$0xff]
        %v8518 = vld [vmem:[#allocation48 + $0x8e0] sm:$0xff]
        %v8519 = vld [vmem:[#allocation48 + $0x8e8] sm:$0xff]
        %v8520 = vld [vmem:[#allocation48 + $0x8f0] sm:$0xff]
        %v8521 = vld [vmem:[#allocation48 + $0x8f8] sm:$0xff]
        %v8522 = vld [vmem:[#allocation48 + $0x900] sm:$0xff]
        %v8523 = vld [vmem:[#allocation48 + $0x908] sm:$0xff]
        %v8524 = vld [vmem:[#allocation48 + $0x910] sm:$0xff]
        %v8525 = vld [vmem:[#allocation48 + $0x918] sm:$0xff]
        %v8526 = vld [vmem:[#allocation48 + $0x920] sm:$0xff]
        %v8527 = vld [vmem:[#allocation48 + $0x928] sm:$0xff]
        %v8528 = vld [vmem:[#allocation48 + $0x930] sm:$0xff]
        %v8529 = vld [vmem:[#allocation48 + $0x938] sm:$0xff]
        %v8530 = vld [vmem:[#allocation48 + $0x940] sm:$0xff]
        %v8531 = vld [vmem:[#allocation48 + $0x948] sm:$0xff]
        %v8532 = vld [vmem:[#allocation48 + $0x950] sm:$0xff]
        %v8533 = vld [vmem:[#allocation48 + $0x958] sm:$0xff]
        %v8534 = vld [vmem:[#allocation48 + $0x960] sm:$0xff]
        %v8535 = vld [vmem:[#allocation48 + $0x968] sm:$0xff]
        %v8536 = vld [vmem:[#allocation48 + $0x970] sm:$0xff]
        %v8537 = vld [vmem:[#allocation48 + $0x978] sm:$0xff]
        %v8538 = vld [vmem:[#allocation48 + $0x980] sm:$0xff]
        %v8539 = vld [vmem:[#allocation48 + $0x988] sm:$0xff]
        %v8540 = vld [vmem:[#allocation48 + $0x990] sm:$0xff]
        %v8541 = vld [vmem:[#allocation48 + $0x998] sm:$0xff]
        %v8542 = vld [vmem:[#allocation48 + $0x9a0] sm:$0xff]
        %v8543 = vld [vmem:[#allocation48 + $0x9a8] sm:$0xff]
        %v8544 = vld [vmem:[#allocation48 + $0x9b0] sm:$0xff]
        %v8545 = vld [vmem:[#allocation48 + $0x9b8] sm:$0xff]
        %v8546 = vld [vmem:[#allocation48 + $0x9c0] sm:$0xff]
        %v8547 = vld [vmem:[#allocation48 + $0x9c8] sm:$0xff]
        %v8548 = vld [vmem:[#allocation48 + $0x9d0] sm:$0xff]
        %v8549 = vld [vmem:[#allocation48 + $0x9d8] sm:$0xff]
        %v8550 = vld [vmem:[#allocation48 + $0x9e0] sm:$0xff]
        %v8551 = vld [vmem:[#allocation48 + $0x9e8] sm:$0xff]
        %v8552 = vld [vmem:[#allocation48 + $0x9f0] sm:$0xff]
        %v8553 = vld [vmem:[#allocation48 + $0x9f8] sm:$0xff]
        %v8554 = vld [vmem:[#allocation48 + $0xa00] sm:$0xff]
        %v8555 = vld [vmem:[#allocation48 + $0xa08] sm:$0xff]
        %v8556 = vld [vmem:[#allocation48 + $0xa10] sm:$0xff]
        %v8557 = vld [vmem:[#allocation48 + $0xa18] sm:$0xff]
        %v8558 = vld [vmem:[#allocation48 + $0xa20] sm:$0xff]
        %v8559 = vld [vmem:[#allocation48 + $0xa28] sm:$0xff]
        %v8560 = vld [vmem:[#allocation48 + $0xa30] sm:$0xff]
        %v8561 = vld [vmem:[#allocation48 + $0xa38] sm:$0xff]
        %v8562 = vld [vmem:[#allocation48 + $0xa40] sm:$0xff]
        %v8563 = vld [vmem:[#allocation48 + $0xa48] sm:$0xff]
        %v8564 = vld [vmem:[#allocation48 + $0xa50] sm:$0xff]
        %v8565 = vld [vmem:[#allocation48 + $0xa58] sm:$0xff]
        %v8566 = vld [vmem:[#allocation48 + $0xa60] sm:$0xff]
        %v8567 = vld [vmem:[#allocation48 + $0xa68] sm:$0xff]
        %v8568 = vld [vmem:[#allocation48 + $0xa70] sm:$0xff]
        %v8569 = vld [vmem:[#allocation48 + $0xa78] sm:$0xff]
        %v8570 = vld [vmem:[#allocation48 + $0xa80] sm:$0xff]
        %v8571 = vld [vmem:[#allocation48 + $0xa88] sm:$0xff]
        %v8572 = vld [vmem:[#allocation48 + $0xa90] sm:$0xff]
        %v8573 = vld [vmem:[#allocation48 + $0xa98] sm:$0xff]
        %v8574 = vld [vmem:[#allocation48 + $0xaa0] sm:$0xff]
        %v8575 = vld [vmem:[#allocation48 + $0xaa8] sm:$0xff]
        %v8576 = vld [vmem:[#allocation48 + $0xab0] sm:$0xff]
        %v8577 = vld [vmem:[#allocation48 + $0xab8] sm:$0xff]
        %v8578 = vld [vmem:[#allocation48 + $0xac0] sm:$0xff]
        %v8579 = vld [vmem:[#allocation48 + $0xac8] sm:$0xff]
        %v8580 = vld [vmem:[#allocation48 + $0xad0] sm:$0xff]
        %v8581 = vld [vmem:[#allocation48 + $0xad8] sm:$0xff]
        %v8582 = vld [vmem:[#allocation48 + $0xae0] sm:$0xff]
        %v8583 = vld [vmem:[#allocation48 + $0xae8] sm:$0xff]
        %v8584 = vld [vmem:[#allocation48 + $0xaf0] sm:$0xff]
        %v8585 = vld [vmem:[#allocation48 + $0xaf8] sm:$0xff]
        %v8586 = vld [vmem:[#allocation48 + $0xb00] sm:$0xff]
        %v8587 = vld [vmem:[#allocation48 + $0xb08] sm:$0xff]
        %v8588 = vld [vmem:[#allocation48 + $0xb10] sm:$0xff]
        %v8589 = vld [vmem:[#allocation48 + $0xb18] sm:$0xff]
        %v8590 = vld [vmem:[#allocation48 + $0xb20] sm:$0xff]
        %v8591 = vld [vmem:[#allocation48 + $0xb28] sm:$0xff]
        %v8592 = vld [vmem:[#allocation48 + $0xb30] sm:$0xff]
        %v8593 = vld [vmem:[#allocation48 + $0xb38] sm:$0xff]
        %v8594 = vld [vmem:[#allocation48 + $0xb40] sm:$0xff]
        %v8595 = vld [vmem:[#allocation48 + $0xb48] sm:$0xff]
        %v8596 = vld [vmem:[#allocation48 + $0xb50] sm:$0xff]
        %v8597 = vld [vmem:[#allocation48 + $0xb58] sm:$0xff]
        %v8598 = vld [vmem:[#allocation48 + $0xb60] sm:$0xff]
        %v8599 = vld [vmem:[#allocation48 + $0xb68] sm:$0xff]
        %v8600 = vld [vmem:[#allocation48 + $0xb70] sm:$0xff]
        %v8601 = vld [vmem:[#allocation48 + $0xb78] sm:$0xff]
        %v8602 = vld [vmem:[#allocation48 + $0xb80] sm:$0xff]
        %v8603 = vld [vmem:[#allocation48 + $0xb88] sm:$0xff]
        %v8604 = vld [vmem:[#allocation48 + $0xb90] sm:$0xff]
        %v8605 = vld [vmem:[#allocation48 + $0xb98] sm:$0xff]
        %v8606 = vld [vmem:[#allocation48 + $0xba0] sm:$0xff]
        %v8607 = vld [vmem:[#allocation48 + $0xba8] sm:$0xff]
        %v8608 = vld [vmem:[#allocation48 + $0xbb0] sm:$0xff]
        %v8609 = vld [vmem:[#allocation48 + $0xbb8] sm:$0xff]
        %v8610 = vld [vmem:[#allocation48 + $0xbc0] sm:$0xff]
        %v8611 = vld [vmem:[#allocation48 + $0xbc8] sm:$0xff]
        %v8612 = vld [vmem:[#allocation48 + $0xbd0] sm:$0xff]
        %v8613 = vld [vmem:[#allocation48 + $0xbd8] sm:$0xff]
        %v8614 = vld [vmem:[#allocation48 + $0xbe0] sm:$0xff]
        %v8615 = vld [vmem:[#allocation48 + $0xbe8] sm:$0xff]
        %v8616 = vld [vmem:[#allocation48 + $0xbf0] sm:$0xff]
        %v8617 = vld [vmem:[#allocation48 + $0xbf8] sm:$0xff]
        %v8746 = vunpack.c.l.b16 %v8490
        %v8747 = vunpack.c.h.b16 %v8490
        %v8748 = vunpack.c.l.b16 %v8491
        %v8749 = vunpack.c.h.b16 %v8491
        %v8750 = vunpack.c.l.b16 %v8492
        %v8751 = vunpack.c.h.b16 %v8492
        %v8752 = vunpack.c.l.b16 %v8493
        %v8753 = vunpack.c.h.b16 %v8493
        %v8754 = vunpack.c.l.b16 %v8494
        %v8755 = vunpack.c.h.b16 %v8494
        %v8756 = vunpack.c.l.b16 %v8495
        %v8757 = vunpack.c.h.b16 %v8495
        %v8758 = vunpack.c.l.b16 %v8496
        %v8759 = vunpack.c.h.b16 %v8496
        %v8760 = vunpack.c.l.b16 %v8497
        %v8761 = vunpack.c.h.b16 %v8497
        %v8762 = vunpack.c.l.b16 %v8498
        %v8763 = vunpack.c.h.b16 %v8498
        %v8764 = vunpack.c.l.b16 %v8499
        %v8765 = vunpack.c.h.b16 %v8499
        %v8766 = vunpack.c.l.b16 %v8500
        %v8767 = vunpack.c.h.b16 %v8500
        %v8768 = vunpack.c.l.b16 %v8501
        %v8769 = vunpack.c.h.b16 %v8501
        %v8770 = vunpack.c.l.b16 %v8502
        %v8771 = vunpack.c.h.b16 %v8502
        %v8772 = vunpack.c.l.b16 %v8503
        %v8773 = vunpack.c.h.b16 %v8503
        %v8774 = vunpack.c.l.b16 %v8504
        %v8775 = vunpack.c.h.b16 %v8504
        %v8776 = vunpack.c.l.b16 %v8505
        %v8777 = vunpack.c.h.b16 %v8505
        %v8778 = vunpack.c.l.b16 %v8506
        %v8779 = vunpack.c.h.b16 %v8506
        %v8780 = vunpack.c.l.b16 %v8507
        %v8781 = vunpack.c.h.b16 %v8507
        %v8782 = vunpack.c.l.b16 %v8508
        %v8783 = vunpack.c.h.b16 %v8508
        %v8784 = vunpack.c.l.b16 %v8509
        %v8785 = vunpack.c.h.b16 %v8509
        %v8786 = vunpack.c.l.b16 %v8510
        %v8787 = vunpack.c.h.b16 %v8510
        %v8788 = vunpack.c.l.b16 %v8511
        %v8789 = vunpack.c.h.b16 %v8511
        %v8790 = vunpack.c.l.b16 %v8512
        %v8791 = vunpack.c.h.b16 %v8512
        %v8792 = vunpack.c.l.b16 %v8513
        %v8793 = vunpack.c.h.b16 %v8513
        %v8794 = vunpack.c.l.b16 %v8514
        %v8795 = vunpack.c.h.b16 %v8514
        %v8796 = vunpack.c.l.b16 %v8515
        %v8797 = vunpack.c.h.b16 %v8515
        %v8798 = vunpack.c.l.b16 %v8516
        %v8799 = vunpack.c.h.b16 %v8516
        %v8800 = vunpack.c.l.b16 %v8517
        %v8801 = vunpack.c.h.b16 %v8517
        %v8802 = vunpack.c.l.b16 %v8518
        %v8803 = vunpack.c.h.b16 %v8518
        %v8804 = vunpack.c.l.b16 %v8519
        %v8805 = vunpack.c.h.b16 %v8519
        %v8806 = vunpack.c.l.b16 %v8520
        %v8807 = vunpack.c.h.b16 %v8520
        %v8808 = vunpack.c.l.b16 %v8521
        %v8809 = vunpack.c.h.b16 %v8521
        %v8810 = vunpack.c.l.b16 %v8522
        %v8811 = vunpack.c.h.b16 %v8522
        %v8812 = vunpack.c.l.b16 %v8523
        %v8813 = vunpack.c.h.b16 %v8523
        %v8814 = vunpack.c.l.b16 %v8524
        %v8815 = vunpack.c.h.b16 %v8524
        %v8816 = vunpack.c.l.b16 %v8525
        %v8817 = vunpack.c.h.b16 %v8525
        %v8818 = vunpack.c.l.b16 %v8526
        %v8819 = vunpack.c.h.b16 %v8526
        %v8820 = vunpack.c.l.b16 %v8527
        %v8821 = vunpack.c.h.b16 %v8527
        %v8822 = vunpack.c.l.b16 %v8528
        %v8823 = vunpack.c.h.b16 %v8528
        %v8824 = vunpack.c.l.b16 %v8529
        %v8825 = vunpack.c.h.b16 %v8529
        %v8826 = vunpack.c.l.b16 %v8530
        %v8827 = vunpack.c.h.b16 %v8530
        %v8828 = vunpack.c.l.b16 %v8531
        %v8829 = vunpack.c.h.b16 %v8531
        %v8830 = vunpack.c.l.b16 %v8532
        %v8831 = vunpack.c.h.b16 %v8532
        %v8832 = vunpack.c.l.b16 %v8533
        %v8833 = vunpack.c.h.b16 %v8533
        %v8834 = vunpack.c.l.b16 %v8534
        %v8835 = vunpack.c.h.b16 %v8534
        %v8836 = vunpack.c.l.b16 %v8535
        %v8837 = vunpack.c.h.b16 %v8535
        %v8838 = vunpack.c.l.b16 %v8536
        %v8839 = vunpack.c.h.b16 %v8536
        %v8840 = vunpack.c.l.b16 %v8537
        %v8841 = vunpack.c.h.b16 %v8537
        %v8842 = vunpack.c.l.b16 %v8538
        %v8843 = vunpack.c.h.b16 %v8538
        %v8844 = vunpack.c.l.b16 %v8539
        %v8845 = vunpack.c.h.b16 %v8539
        %v8846 = vunpack.c.l.b16 %v8540
        %v8847 = vunpack.c.h.b16 %v8540
        %v8848 = vunpack.c.l.b16 %v8541
        %v8849 = vunpack.c.h.b16 %v8541
        %v8850 = vunpack.c.l.b16 %v8542
        %v8851 = vunpack.c.h.b16 %v8542
        %v8852 = vunpack.c.l.b16 %v8543
        %v8853 = vunpack.c.h.b16 %v8543
        %v8854 = vunpack.c.l.b16 %v8544
        %v8855 = vunpack.c.h.b16 %v8544
        %v8856 = vunpack.c.l.b16 %v8545
        %v8857 = vunpack.c.h.b16 %v8545
        %v8858 = vunpack.c.l.b16 %v8546
        %v8859 = vunpack.c.h.b16 %v8546
        %v8860 = vunpack.c.l.b16 %v8547
        %v8861 = vunpack.c.h.b16 %v8547
        %v8862 = vunpack.c.l.b16 %v8548
        %v8863 = vunpack.c.h.b16 %v8548
        %v8864 = vunpack.c.l.b16 %v8549
        %v8865 = vunpack.c.h.b16 %v8549
        %v8866 = vunpack.c.l.b16 %v8550
        %v8867 = vunpack.c.h.b16 %v8550
        %v8868 = vunpack.c.l.b16 %v8551
        %v8869 = vunpack.c.h.b16 %v8551
        %v8870 = vunpack.c.l.b16 %v8552
        %v8871 = vunpack.c.h.b16 %v8552
        %v8872 = vunpack.c.l.b16 %v8553
        %v8873 = vunpack.c.h.b16 %v8553
        %v8874 = vunpack.c.l.b16 %v8554
        %v8875 = vunpack.c.h.b16 %v8554
        %v8876 = vunpack.c.l.b16 %v8555
        %v8877 = vunpack.c.h.b16 %v8555
        %v8878 = vunpack.c.l.b16 %v8556
        %v8879 = vunpack.c.h.b16 %v8556
        %v8880 = vunpack.c.l.b16 %v8557
        %v8881 = vunpack.c.h.b16 %v8557
        %v8882 = vunpack.c.l.b16 %v8558
        %v8883 = vunpack.c.h.b16 %v8558
        %v8884 = vunpack.c.l.b16 %v8559
        %v8885 = vunpack.c.h.b16 %v8559
        %v8886 = vunpack.c.l.b16 %v8560
        %v8887 = vunpack.c.h.b16 %v8560
        %v8888 = vunpack.c.l.b16 %v8561
        %v8889 = vunpack.c.h.b16 %v8561
        %v8890 = vunpack.c.l.b16 %v8562
        %v8891 = vunpack.c.h.b16 %v8562
        %v8892 = vunpack.c.l.b16 %v8563
        %v8893 = vunpack.c.h.b16 %v8563
        %v8894 = vunpack.c.l.b16 %v8564
        %v8895 = vunpack.c.h.b16 %v8564
        %v8896 = vunpack.c.l.b16 %v8565
        %v8897 = vunpack.c.h.b16 %v8565
        %v8898 = vunpack.c.l.b16 %v8566
        %v8899 = vunpack.c.h.b16 %v8566
        %v8900 = vunpack.c.l.b16 %v8567
        %v8901 = vunpack.c.h.b16 %v8567
        %v8902 = vunpack.c.l.b16 %v8568
        %v8903 = vunpack.c.h.b16 %v8568
        %v8904 = vunpack.c.l.b16 %v8569
        %v8905 = vunpack.c.h.b16 %v8569
        %v8906 = vunpack.c.l.b16 %v8570
        %v8907 = vunpack.c.h.b16 %v8570
        %v8908 = vunpack.c.l.b16 %v8571
        %v8909 = vunpack.c.h.b16 %v8571
        %v8910 = vunpack.c.l.b16 %v8572
        %v8911 = vunpack.c.h.b16 %v8572
        %v8912 = vunpack.c.l.b16 %v8573
        %v8913 = vunpack.c.h.b16 %v8573
        %v8914 = vunpack.c.l.b16 %v8574
        %v8915 = vunpack.c.h.b16 %v8574
        %v8916 = vunpack.c.l.b16 %v8575
        %v8917 = vunpack.c.h.b16 %v8575
        %v8918 = vunpack.c.l.b16 %v8576
        %v8919 = vunpack.c.h.b16 %v8576
        %v8920 = vunpack.c.l.b16 %v8577
        %v8921 = vunpack.c.h.b16 %v8577
        %v8922 = vunpack.c.l.b16 %v8578
        %v8923 = vunpack.c.h.b16 %v8578
        %v8924 = vunpack.c.l.b16 %v8579
        %v8925 = vunpack.c.h.b16 %v8579
        %v8926 = vunpack.c.l.b16 %v8580
        %v8927 = vunpack.c.h.b16 %v8580
        %v8928 = vunpack.c.l.b16 %v8581
        %v8929 = vunpack.c.h.b16 %v8581
        %v8930 = vunpack.c.l.b16 %v8582
        %v8931 = vunpack.c.h.b16 %v8582
        %v8932 = vunpack.c.l.b16 %v8583
        %v8933 = vunpack.c.h.b16 %v8583
        %v8934 = vunpack.c.l.b16 %v8584
        %v8935 = vunpack.c.h.b16 %v8584
        %v8936 = vunpack.c.l.b16 %v8585
        %v8937 = vunpack.c.h.b16 %v8585
        %v8938 = vunpack.c.l.b16 %v8586
        %v8939 = vunpack.c.h.b16 %v8586
        %v8940 = vunpack.c.l.b16 %v8587
        %v8941 = vunpack.c.h.b16 %v8587
        %v8942 = vunpack.c.l.b16 %v8588
        %v8943 = vunpack.c.h.b16 %v8588
        %v8944 = vunpack.c.l.b16 %v8589
        %v8945 = vunpack.c.h.b16 %v8589
        %v8946 = vunpack.c.l.b16 %v8590
        %v8947 = vunpack.c.h.b16 %v8590
        %v8948 = vunpack.c.l.b16 %v8591
        %v8949 = vunpack.c.h.b16 %v8591
        %v8950 = vunpack.c.l.b16 %v8592
        %v8951 = vunpack.c.h.b16 %v8592
        %v8952 = vunpack.c.l.b16 %v8593
        %v8953 = vunpack.c.h.b16 %v8593
        %v8954 = vunpack.c.l.b16 %v8594
        %v8955 = vunpack.c.h.b16 %v8594
        %v8956 = vunpack.c.l.b16 %v8595
        %v8957 = vunpack.c.h.b16 %v8595
        %v8958 = vunpack.c.l.b16 %v8596
        %v8959 = vunpack.c.h.b16 %v8596
        %v8960 = vunpack.c.l.b16 %v8597
        %v8961 = vunpack.c.h.b16 %v8597
        %v8962 = vunpack.c.l.b16 %v8598
        %v8963 = vunpack.c.h.b16 %v8598
        %v8964 = vunpack.c.l.b16 %v8599
        %v8965 = vunpack.c.h.b16 %v8599
        %v8966 = vunpack.c.l.b16 %v8600
        %v8967 = vunpack.c.h.b16 %v8600
        %v8968 = vunpack.c.l.b16 %v8601
        %v8969 = vunpack.c.h.b16 %v8601
        %v8970 = vunpack.c.l.b16 %v8602
        %v8971 = vunpack.c.h.b16 %v8602
        %v8972 = vunpack.c.l.b16 %v8603
        %v8973 = vunpack.c.h.b16 %v8603
        %v8974 = vunpack.c.l.b16 %v8604
        %v8975 = vunpack.c.h.b16 %v8604
        %v8976 = vunpack.c.l.b16 %v8605
        %v8977 = vunpack.c.h.b16 %v8605
        %v8978 = vunpack.c.l.b16 %v8606
        %v8979 = vunpack.c.h.b16 %v8606
        %v8980 = vunpack.c.l.b16 %v8607
        %v8981 = vunpack.c.h.b16 %v8607
        %v8982 = vunpack.c.l.b16 %v8608
        %v8983 = vunpack.c.h.b16 %v8608
        %v8984 = vunpack.c.l.b16 %v8609
        %v8985 = vunpack.c.h.b16 %v8609
        %v8986 = vunpack.c.l.b16 %v8610
        %v8987 = vunpack.c.h.b16 %v8610
        %v8988 = vunpack.c.l.b16 %v8611
        %v8989 = vunpack.c.h.b16 %v8611
        %v8990 = vunpack.c.l.b16 %v8612
        %v8991 = vunpack.c.h.b16 %v8612
        %v8992 = vunpack.c.l.b16 %v8613
        %v8993 = vunpack.c.h.b16 %v8613
        %v8994 = vunpack.c.l.b16 %v8614
        %v8995 = vunpack.c.h.b16 %v8614
        %v8996 = vunpack.c.l.b16 %v8615
        %v8997 = vunpack.c.h.b16 %v8615
        %v8998 = vunpack.c.l.b16 %v8616
        %v8999 = vunpack.c.h.b16 %v8616
        %v9000 = vunpack.c.l.b16 %v8617
        %v9001 = vunpack.c.h.b16 %v8617
        %v9002 = vpack.c.b16 %v8750, %v8746
        %v9003 = vpack.c.b16 %v8751, %v8747
        %v9004 = vpack.c.b16 %v8752, %v8748
        %v9005 = vpack.c.b16 %v8753, %v8749
        %v9006 = vpack.c.b16 %v8758, %v8754
        %v9007 = vpack.c.b16 %v8759, %v8755
        %v9008 = vpack.c.b16 %v8760, %v8756
        %v9009 = vpack.c.b16 %v8761, %v8757
        %v9010 = vpack.c.b16 %v8766, %v8762
        %v9011 = vpack.c.b16 %v8767, %v8763
        %v9012 = vpack.c.b16 %v8768, %v8764
        %v9013 = vpack.c.b16 %v8769, %v8765
        %v9014 = vpack.c.b16 %v8774, %v8770
        %v9015 = vpack.c.b16 %v8775, %v8771
        %v9016 = vpack.c.b16 %v8776, %v8772
        %v9017 = vpack.c.b16 %v8777, %v8773
        %v9018 = vpack.c.b16 %v8782, %v8778
        %v9019 = vpack.c.b16 %v8783, %v8779
        %v9020 = vpack.c.b16 %v8784, %v8780
        %v9021 = vpack.c.b16 %v8785, %v8781
        %v9022 = vpack.c.b16 %v8790, %v8786
        %v9023 = vpack.c.b16 %v8791, %v8787
        %v9024 = vpack.c.b16 %v8792, %v8788
        %v9025 = vpack.c.b16 %v8793, %v8789
        %v9026 = vpack.c.b16 %v8798, %v8794
        %v9027 = vpack.c.b16 %v8799, %v8795
        %v9028 = vpack.c.b16 %v8800, %v8796
        %v9029 = vpack.c.b16 %v8801, %v8797
        %v9030 = vpack.c.b16 %v8806, %v8802
        %v9031 = vpack.c.b16 %v8807, %v8803
        %v9032 = vpack.c.b16 %v8808, %v8804
        %v9033 = vpack.c.b16 %v8809, %v8805
        %v9034 = vpack.c.b16 %v8814, %v8810
        %v9035 = vpack.c.b16 %v8815, %v8811
        %v9036 = vpack.c.b16 %v8816, %v8812
        %v9037 = vpack.c.b16 %v8817, %v8813
        %v9038 = vpack.c.b16 %v8822, %v8818
        %v9039 = vpack.c.b16 %v8823, %v8819
        %v9040 = vpack.c.b16 %v8824, %v8820
        %v9041 = vpack.c.b16 %v8825, %v8821
        %v9042 = vpack.c.b16 %v8830, %v8826
        %v9043 = vpack.c.b16 %v8831, %v8827
        %v9044 = vpack.c.b16 %v8832, %v8828
        %v9045 = vpack.c.b16 %v8833, %v8829
        %v9046 = vpack.c.b16 %v8838, %v8834
        %v9047 = vpack.c.b16 %v8839, %v8835
        %v9048 = vpack.c.b16 %v8840, %v8836
        %v9049 = vpack.c.b16 %v8841, %v8837
        %v9050 = vpack.c.b16 %v8846, %v8842
        %v9051 = vpack.c.b16 %v8847, %v8843
        %v9052 = vpack.c.b16 %v8848, %v8844
        %v9053 = vpack.c.b16 %v8849, %v8845
        %v9054 = vpack.c.b16 %v8854, %v8850
        %v9055 = vpack.c.b16 %v8855, %v8851
        %v9056 = vpack.c.b16 %v8856, %v8852
        %v9057 = vpack.c.b16 %v8857, %v8853
        %v9058 = vpack.c.b16 %v8862, %v8858
        %v9059 = vpack.c.b16 %v8863, %v8859
        %v9060 = vpack.c.b16 %v8864, %v8860
        %v9061 = vpack.c.b16 %v8865, %v8861
        %v9062 = vpack.c.b16 %v8870, %v8866
        %v9063 = vpack.c.b16 %v8871, %v8867
        %v9064 = vpack.c.b16 %v8872, %v8868
        %v9065 = vpack.c.b16 %v8873, %v8869
        %v9066 = vpack.c.b16 %v8878, %v8874
        %v9067 = vpack.c.b16 %v8879, %v8875
        %v9068 = vpack.c.b16 %v8880, %v8876
        %v9069 = vpack.c.b16 %v8881, %v8877
        %v9070 = vpack.c.b16 %v8886, %v8882
        %v9071 = vpack.c.b16 %v8887, %v8883
        %v9072 = vpack.c.b16 %v8888, %v8884
        %v9073 = vpack.c.b16 %v8889, %v8885
        %v9074 = vpack.c.b16 %v8894, %v8890
        %v9075 = vpack.c.b16 %v8895, %v8891
        %v9076 = vpack.c.b16 %v8896, %v8892
        %v9077 = vpack.c.b16 %v8897, %v8893
        %v9078 = vpack.c.b16 %v8902, %v8898
        %v9079 = vpack.c.b16 %v8903, %v8899
        %v9080 = vpack.c.b16 %v8904, %v8900
        %v9081 = vpack.c.b16 %v8905, %v8901
        %v9082 = vpack.c.b16 %v8910, %v8906
        %v9083 = vpack.c.b16 %v8911, %v8907
        %v9084 = vpack.c.b16 %v8912, %v8908
        %v9085 = vpack.c.b16 %v8913, %v8909
        %v9086 = vpack.c.b16 %v8918, %v8914
        %v9087 = vpack.c.b16 %v8919, %v8915
        %v9088 = vpack.c.b16 %v8920, %v8916
        %v9089 = vpack.c.b16 %v8921, %v8917
        %v9090 = vpack.c.b16 %v8926, %v8922
        %v9091 = vpack.c.b16 %v8927, %v8923
        %v9092 = vpack.c.b16 %v8928, %v8924
        %v9093 = vpack.c.b16 %v8929, %v8925
        %v9094 = vpack.c.b16 %v8934, %v8930
        %v9095 = vpack.c.b16 %v8935, %v8931
        %v9096 = vpack.c.b16 %v8936, %v8932
        %v9097 = vpack.c.b16 %v8937, %v8933
        %v9098 = vpack.c.b16 %v8942, %v8938
        %v9099 = vpack.c.b16 %v8943, %v8939
        %v9100 = vpack.c.b16 %v8944, %v8940
        %v9101 = vpack.c.b16 %v8945, %v8941
        %v9102 = vpack.c.b16 %v8950, %v8946
        %v9103 = vpack.c.b16 %v8951, %v8947
        %v9104 = vpack.c.b16 %v8952, %v8948
        %v9105 = vpack.c.b16 %v8953, %v8949
        %v9106 = vpack.c.b16 %v8958, %v8954
        %v9107 = vpack.c.b16 %v8959, %v8955
        %v9108 = vpack.c.b16 %v8960, %v8956
        %v9109 = vpack.c.b16 %v8961, %v8957
        %v9110 = vpack.c.b16 %v8966, %v8962
        %v9111 = vpack.c.b16 %v8967, %v8963
        %v9112 = vpack.c.b16 %v8968, %v8964
        %v9113 = vpack.c.b16 %v8969, %v8965
        %v9114 = vpack.c.b16 %v8974, %v8970
        %v9115 = vpack.c.b16 %v8975, %v8971
        %v9116 = vpack.c.b16 %v8976, %v8972
        %v9117 = vpack.c.b16 %v8977, %v8973
        %v9118 = vpack.c.b16 %v8982, %v8978
        %v9119 = vpack.c.b16 %v8983, %v8979
        %v9120 = vpack.c.b16 %v8984, %v8980
        %v9121 = vpack.c.b16 %v8985, %v8981
        %v9122 = vpack.c.b16 %v8990, %v8986
        %v9123 = vpack.c.b16 %v8991, %v8987
        %v9124 = vpack.c.b16 %v8992, %v8988
        %v9125 = vpack.c.b16 %v8993, %v8989
        %v9126 = vpack.c.b16 %v8998, %v8994
        %v9127 = vpack.c.b16 %v8999, %v8995
        %v9128 = vpack.c.b16 %v9000, %v8996
        %v9129 = vpack.c.b16 %v9001, %v8997
        %9258 = vmatpush.bf16.msra.mxu0 %v9030
        %9259 = vmatpush.bf16.msra.mxu0 %v9026
        %9260 = vmatpush.bf16.msra.mxu0 %v9022
        %9261 = vmatpush.bf16.msra.mxu0 %v9018
        %9262 = vmatpush.bf16.msra.mxu0 %v9014
        %9263 = vmatpush.bf16.msra.mxu0 %v9010
        %9264 = vmatpush.bf16.msra.mxu0 %v9006
        %9265 = vmatpush.bf16.msra.mxu0 %v9002
        %9266 = vmatmul.bf16.gmra.mxu0 %v6534
        %v9267 = vpop.f32.mrf.mxu0
        %v9268 = vadd.f32 0.0, %v9267
        %v9269 = vpop.f32.mrf.mxu0
        %9270 = vdwg.mxu0
        %9271 = vmatpush.bf16.msra.mxu0 %v9062
        %9272 = vmatpush.bf16.msra.mxu0 %v9058
        %9273 = vmatpush.bf16.msra.mxu0 %v9054
        %9274 = vmatpush.bf16.msra.mxu0 %v9050
        %9275 = vmatpush.bf16.msra.mxu0 %v9046
        %9276 = vmatpush.bf16.msra.mxu0 %v9042
        %9277 = vmatpush.bf16.msra.mxu0 %v9038
        %9278 = vmatpush.bf16.msra.mxu0 %v9034
        %9279 = vmatmul.bf16.gmra.mxu0 %v6535
        %v9280 = vpop.f32.mrf.mxu0
        %v9281 = vadd.f32 %v9268, %v9280
        %v9282 = vpop.f32.mrf.mxu0
        %9283 = vdwg.mxu0
        %9284 = vmatpush.bf16.msra.mxu0 %v9094
        %9285 = vmatpush.bf16.msra.mxu0 %v9090
        %9286 = vmatpush.bf16.msra.mxu0 %v9086
        %9287 = vmatpush.bf16.msra.mxu0 %v9082
        %9288 = vmatpush.bf16.msra.mxu0 %v9078
        %9289 = vmatpush.bf16.msra.mxu0 %v9074
        %9290 = vmatpush.bf16.msra.mxu0 %v9070
        %9291 = vmatpush.bf16.msra.mxu0 %v9066
        %9292 = vmatmul.bf16.gmra.mxu0 %v6536
        %v9293 = vpop.f32.mrf.mxu0
        %v9294 = vadd.f32 %v9281, %v9293
        %v9295 = vpop.f32.mrf.mxu0
        %9296 = vdwg.mxu0
        %9297 = vmatpush.bf16.msra.mxu0 %v9126
        %9298 = vmatpush.bf16.msra.mxu0 %v9122
        %9299 = vmatpush.bf16.msra.mxu0 %v9118
        %9300 = vmatpush.bf16.msra.mxu0 %v9114
        %9301 = vmatpush.bf16.msra.mxu0 %v9110
        %9302 = vmatpush.bf16.msra.mxu0 %v9106
        %9303 = vmatpush.bf16.msra.mxu0 %v9102
        %9304 = vmatpush.bf16.msra.mxu0 %v9098
        %9305 = vmatmul.bf16.gmra.mxu0 %v6537
        %v9306 = vpop.f32.mrf.mxu0
        %v9307 = vadd.f32 %v9294, %v9306
        %v9308 = vpop.f32.mrf.mxu0
        %9309 = vdwg.mxu0
        %9310 = vmatpush.bf16.msra.mxu0 %v9031
        %9311 = vmatpush.bf16.msra.mxu0 %v9027
        %9312 = vmatpush.bf16.msra.mxu0 %v9023
        %9313 = vmatpush.bf16.msra.mxu0 %v9019
        %9314 = vmatpush.bf16.msra.mxu0 %v9015
        %9315 = vmatpush.bf16.msra.mxu0 %v9011
        %9316 = vmatpush.bf16.msra.mxu0 %v9007
        %9317 = vmatpush.bf16.msra.mxu0 %v9003
        %9318 = vmatmul.bf16.gmra.mxu0 %v6534
        %v9319 = vpop.f32.mrf.mxu0
        %v9320 = vadd.f32 0.0, %v9319
        %v9321 = vpop.f32.mrf.mxu0
        %9322 = vdwg.mxu0
        %9323 = vmatpush.bf16.msra.mxu0 %v9063
        %9324 = vmatpush.bf16.msra.mxu0 %v9059
        %9325 = vmatpush.bf16.msra.mxu0 %v9055
        %9326 = vmatpush.bf16.msra.mxu0 %v9051
        %9327 = vmatpush.bf16.msra.mxu0 %v9047
        %9328 = vmatpush.bf16.msra.mxu0 %v9043
        %9329 = vmatpush.bf16.msra.mxu0 %v9039
        %9330 = vmatpush.bf16.msra.mxu0 %v9035
        %9331 = vmatmul.bf16.gmra.mxu0 %v6535
        %v9332 = vpop.f32.mrf.mxu0
        %v9333 = vadd.f32 %v9320, %v9332
        %v9334 = vpop.f32.mrf.mxu0
        %9335 = vdwg.mxu0
        %9336 = vmatpush.bf16.msra.mxu0 %v9095
        %9337 = vmatpush.bf16.msra.mxu0 %v9091
        %9338 = vmatpush.bf16.msra.mxu0 %v9087
        %9339 = vmatpush.bf16.msra.mxu0 %v9083
        %9340 = vmatpush.bf16.msra.mxu0 %v9079
        %9341 = vmatpush.bf16.msra.mxu0 %v9075
        %9342 = vmatpush.bf16.msra.mxu0 %v9071
        %9343 = vmatpush.bf16.msra.mxu0 %v9067
        %9344 = vmatmul.bf16.gmra.mxu0 %v6536
        %v9345 = vpop.f32.mrf.mxu0
        %v9346 = vadd.f32 %v9333, %v9345
        %v9347 = vpop.f32.mrf.mxu0
        %9348 = vdwg.mxu0
        %9349 = vmatpush.bf16.msra.mxu0 %v9127
        %9350 = vmatpush.bf16.msra.mxu0 %v9123
        %9351 = vmatpush.bf16.msra.mxu0 %v9119
        %9352 = vmatpush.bf16.msra.mxu0 %v9115
        %9353 = vmatpush.bf16.msra.mxu0 %v9111
        %9354 = vmatpush.bf16.msra.mxu0 %v9107
        %9355 = vmatpush.bf16.msra.mxu0 %v9103
        %9356 = vmatpush.bf16.msra.mxu0 %v9099
        %9357 = vmatmul.bf16.gmra.mxu0 %v6537
        %v9358 = vpop.f32.mrf.mxu0
        %v9359 = vadd.f32 %v9346, %v9358
        %v9360 = vpop.f32.mrf.mxu0
        %9361 = vdwg.mxu0
        %9362 = vmatpush.bf16.msra.mxu0 %v9032
        %9363 = vmatpush.bf16.msra.mxu0 %v9028
        %9364 = vmatpush.bf16.msra.mxu0 %v9024
        %9365 = vmatpush.bf16.msra.mxu0 %v9020
        %9366 = vmatpush.bf16.msra.mxu0 %v9016
        %9367 = vmatpush.bf16.msra.mxu0 %v9012
        %9368 = vmatpush.bf16.msra.mxu0 %v9008
        %9369 = vmatpush.bf16.msra.mxu0 %v9004
        %9370 = vmatmul.bf16.gmra.mxu0 %v6534
        %v9371 = vpop.f32.mrf.mxu0
        %v9372 = vadd.f32 0.0, %v9371
        %v9373 = vpop.f32.mrf.mxu0
        %9374 = vdwg.mxu0
        %9375 = vmatpush.bf16.msra.mxu0 %v9064
        %9376 = vmatpush.bf16.msra.mxu0 %v9060
        %9377 = vmatpush.bf16.msra.mxu0 %v9056
        %9378 = vmatpush.bf16.msra.mxu0 %v9052
        %9379 = vmatpush.bf16.msra.mxu0 %v9048
        %9380 = vmatpush.bf16.msra.mxu0 %v9044
        %9381 = vmatpush.bf16.msra.mxu0 %v9040
        %9382 = vmatpush.bf16.msra.mxu0 %v9036
        %9383 = vmatmul.bf16.gmra.mxu0 %v6535
        %v9384 = vpop.f32.mrf.mxu0
        %v9385 = vadd.f32 %v9372, %v9384
        %v9386 = vpop.f32.mrf.mxu0
        %9387 = vdwg.mxu0
        %9388 = vmatpush.bf16.msra.mxu0 %v9096
        %9389 = vmatpush.bf16.msra.mxu0 %v9092
        %9390 = vmatpush.bf16.msra.mxu0 %v9088
        %9391 = vmatpush.bf16.msra.mxu0 %v9084
        %9392 = vmatpush.bf16.msra.mxu0 %v9080
        %9393 = vmatpush.bf16.msra.mxu0 %v9076
        %9394 = vmatpush.bf16.msra.mxu0 %v9072
        %9395 = vmatpush.bf16.msra.mxu0 %v9068
        %9396 = vmatmul.bf16.gmra.mxu0 %v6536
        %v9397 = vpop.f32.mrf.mxu0
        %v9398 = vadd.f32 %v9385, %v9397
        %v9399 = vpop.f32.mrf.mxu0
        %9400 = vdwg.mxu0
        %9401 = vmatpush.bf16.msra.mxu0 %v9128
        %9402 = vmatpush.bf16.msra.mxu0 %v9124
        %9403 = vmatpush.bf16.msra.mxu0 %v9120
        %9404 = vmatpush.bf16.msra.mxu0 %v9116
        %9405 = vmatpush.bf16.msra.mxu0 %v9112
        %9406 = vmatpush.bf16.msra.mxu0 %v9108
        %9407 = vmatpush.bf16.msra.mxu0 %v9104
        %9408 = vmatpush.bf16.msra.mxu0 %v9100
        %9409 = vmatmul.bf16.gmra.mxu0 %v6537
        %v9410 = vpop.f32.mrf.mxu0
        %v9411 = vadd.f32 %v9398, %v9410
        %v9412 = vpop.f32.mrf.mxu0
        %9413 = vdwg.mxu0
        %9414 = vmatpush.bf16.msra.mxu0 %v9033
        %9415 = vmatpush.bf16.msra.mxu0 %v9029
        %9416 = vmatpush.bf16.msra.mxu0 %v9025
        %9417 = vmatpush.bf16.msra.mxu0 %v9021
        %9418 = vmatpush.bf16.msra.mxu0 %v9017
        %9419 = vmatpush.bf16.msra.mxu0 %v9013
        %9420 = vmatpush.bf16.msra.mxu0 %v9009
        %9421 = vmatpush.bf16.msra.mxu0 %v9005
        %9422 = vmatmul.bf16.gmra.mxu0 %v6534
        %v9423 = vpop.f32.mrf.mxu0
        %v9424 = vadd.f32 0.0, %v9423
        %v9425 = vpop.f32.mrf.mxu0
        %9426 = vdwg.mxu0
        %9427 = vmatpush.bf16.msra.mxu0 %v9065
        %9428 = vmatpush.bf16.msra.mxu0 %v9061
        %9429 = vmatpush.bf16.msra.mxu0 %v9057
        %9430 = vmatpush.bf16.msra.mxu0 %v9053
        %9431 = vmatpush.bf16.msra.mxu0 %v9049
        %9432 = vmatpush.bf16.msra.mxu0 %v9045
        %9433 = vmatpush.bf16.msra.mxu0 %v9041
        %9434 = vmatpush.bf16.msra.mxu0 %v9037
        %9435 = vmatmul.bf16.gmra.mxu0 %v6535
        %v9436 = vpop.f32.mrf.mxu0
        %v9437 = vadd.f32 %v9424, %v9436
        %v9438 = vpop.f32.mrf.mxu0
        %9439 = vdwg.mxu0
        %9440 = vmatpush.bf16.msra.mxu0 %v9097
        %9441 = vmatpush.bf16.msra.mxu0 %v9093
        %9442 = vmatpush.bf16.msra.mxu0 %v9089
        %9443 = vmatpush.bf16.msra.mxu0 %v9085
        %9444 = vmatpush.bf16.msra.mxu0 %v9081
        %9445 = vmatpush.bf16.msra.mxu0 %v9077
        %9446 = vmatpush.bf16.msra.mxu0 %v9073
        %9447 = vmatpush.bf16.msra.mxu0 %v9069
        %9448 = vmatmul.bf16.gmra.mxu0 %v6536
        %v9449 = vpop.f32.mrf.mxu0
        %v9450 = vadd.f32 %v9437, %v9449
        %v9451 = vpop.f32.mrf.mxu0
        %9452 = vdwg.mxu0
        %9453 = vmatpush.bf16.msra.mxu0 %v9129
        %9454 = vmatpush.bf16.msra.mxu0 %v9125
        %9455 = vmatpush.bf16.msra.mxu0 %v9121
        %9456 = vmatpush.bf16.msra.mxu0 %v9117
        %9457 = vmatpush.bf16.msra.mxu0 %v9113
        %9458 = vmatpush.bf16.msra.mxu0 %v9109
        %9459 = vmatpush.bf16.msra.mxu0 %v9105
        %9460 = vmatpush.bf16.msra.mxu0 %v9101
        %9461 = vmatmul.bf16.gmra.mxu0 %v6537
        %v9462 = vpop.f32.mrf.mxu0
        %v9463 = vadd.f32 %v9450, %v9462
        %v9464 = vpop.f32.mrf.mxu0
        %9465 = vdwg.mxu0
        %v9466 = vadd.f32 %v8331, %v9307
        %v9467 = vadd.f32 %v8383, %v9359
        %v9468 = vadd.f32 %v8435, %v9411
        %v9469 = vadd.f32 %v8487, %v9463
        %v9470 = vld [vmem:[#allocation49] sm:$0xf]
        %v9472 = vperm.slane %v9470, 0
        %v9473 = vperm.slane %v9470, 1
        %v9474 = vperm.slane %v9470, 2
        %v9475 = vperm.slane %v9470, 3
        %v9480 = vmul.f32 %v9466, %v9472
        %v9481 = vmul.f32 %v9467, %v9473
        %v9482 = vmul.f32 %v9468, %v9474
        %v9483 = vmul.f32 %v9469, %v9475
        %v9484 = vld [vmem:[#allocation51] sm:$0xf]
        %v9486 = vperm.slane %v9484, 0
        %v9487 = vperm.slane %v9484, 1
        %v9488 = vperm.slane %v9484, 2
        %v9489 = vperm.slane %v9484, 3
        %v9494 = vadd.f32 %v9480, %v9486
        %v9495 = vadd.f32 %v9481, %v9487
        %v9496 = vadd.f32 %v9482, %v9488
        %v9497 = vadd.f32 %v9483, %v9489
        %v9498 = vld [vmem:[#allocation52] sm:$0xff]
        %v9499 = vld [vmem:[#allocation52 + $0x8] sm:$0xff]
        %v9500 = vld [vmem:[#allocation52 + $0x10] sm:$0xff]
        %v9501 = vld [vmem:[#allocation52 + $0x18] sm:$0xff]
        %v9502 = vld [vmem:[#allocation52 + $0x20] sm:$0xff]
        %v9503 = vld [vmem:[#allocation52 + $0x28] sm:$0xff]
        %v9504 = vld [vmem:[#allocation52 + $0x30] sm:$0xff]
        %v9505 = vld [vmem:[#allocation52 + $0x38] sm:$0xff]
        %v9506 = vld [vmem:[#allocation52 + $0x40] sm:$0xff]
        %v9507 = vld [vmem:[#allocation52 + $0x48] sm:$0xff]
        %v9508 = vld [vmem:[#allocation52 + $0x50] sm:$0xff]
        %v9509 = vld [vmem:[#allocation52 + $0x58] sm:$0xff]
        %v9510 = vld [vmem:[#allocation52 + $0x60] sm:$0xff]
        %v9511 = vld [vmem:[#allocation52 + $0x68] sm:$0xff]
        %v9512 = vld [vmem:[#allocation52 + $0x70] sm:$0xff]
        %v9513 = vld [vmem:[#allocation52 + $0x78] sm:$0xff]
        %v9514 = vld [vmem:[#allocation52 + $0x80] sm:$0xff]
        %v9515 = vld [vmem:[#allocation52 + $0x88] sm:$0xff]
        %v9516 = vld [vmem:[#allocation52 + $0x90] sm:$0xff]
        %v9517 = vld [vmem:[#allocation52 + $0x98] sm:$0xff]
        %v9518 = vld [vmem:[#allocation52 + $0xa0] sm:$0xff]
        %v9519 = vld [vmem:[#allocation52 + $0xa8] sm:$0xff]
        %v9520 = vld [vmem:[#allocation52 + $0xb0] sm:$0xff]
        %v9521 = vld [vmem:[#allocation52 + $0xb8] sm:$0xff]
        %v9522 = vld [vmem:[#allocation52 + $0xc0] sm:$0xff]
        %v9523 = vld [vmem:[#allocation52 + $0xc8] sm:$0xff]
        %v9524 = vld [vmem:[#allocation52 + $0xd0] sm:$0xff]
        %v9525 = vld [vmem:[#allocation52 + $0xd8] sm:$0xff]
        %v9526 = vld [vmem:[#allocation52 + $0xe0] sm:$0xff]
        %v9527 = vld [vmem:[#allocation52 + $0xe8] sm:$0xff]
        %v9528 = vld [vmem:[#allocation52 + $0xf0] sm:$0xff]
        %v9529 = vld [vmem:[#allocation52 + $0xf8] sm:$0xff]
        %v9530 = vld [vmem:[#allocation52 + $0x100] sm:$0xff]
        %v9531 = vld [vmem:[#allocation52 + $0x108] sm:$0xff]
        %v9532 = vld [vmem:[#allocation52 + $0x110] sm:$0xff]
        %v9533 = vld [vmem:[#allocation52 + $0x118] sm:$0xff]
        %v9534 = vld [vmem:[#allocation52 + $0x120] sm:$0xff]
        %v9535 = vld [vmem:[#allocation52 + $0x128] sm:$0xff]
        %v9536 = vld [vmem:[#allocation52 + $0x130] sm:$0xff]
        %v9537 = vld [vmem:[#allocation52 + $0x138] sm:$0xff]
        %v9538 = vld [vmem:[#allocation52 + $0x140] sm:$0xff]
        %v9539 = vld [vmem:[#allocation52 + $0x148] sm:$0xff]
        %v9540 = vld [vmem:[#allocation52 + $0x150] sm:$0xff]
        %v9541 = vld [vmem:[#allocation52 + $0x158] sm:$0xff]
        %v9542 = vld [vmem:[#allocation52 + $0x160] sm:$0xff]
        %v9543 = vld [vmem:[#allocation52 + $0x168] sm:$0xff]
        %v9544 = vld [vmem:[#allocation52 + $0x170] sm:$0xff]
        %v9545 = vld [vmem:[#allocation52 + $0x178] sm:$0xff]
        %v9546 = vld [vmem:[#allocation52 + $0x180] sm:$0xff]
        %v9547 = vld [vmem:[#allocation52 + $0x188] sm:$0xff]
        %v9548 = vld [vmem:[#allocation52 + $0x190] sm:$0xff]
        %v9549 = vld [vmem:[#allocation52 + $0x198] sm:$0xff]
        %v9550 = vld [vmem:[#allocation52 + $0x1a0] sm:$0xff]
        %v9551 = vld [vmem:[#allocation52 + $0x1a8] sm:$0xff]
        %v9552 = vld [vmem:[#allocation52 + $0x1b0] sm:$0xff]
        %v9553 = vld [vmem:[#allocation52 + $0x1b8] sm:$0xff]
        %v9554 = vld [vmem:[#allocation52 + $0x1c0] sm:$0xff]
        %v9555 = vld [vmem:[#allocation52 + $0x1c8] sm:$0xff]
        %v9556 = vld [vmem:[#allocation52 + $0x1d0] sm:$0xff]
        %v9557 = vld [vmem:[#allocation52 + $0x1d8] sm:$0xff]
        %v9558 = vld [vmem:[#allocation52 + $0x1e0] sm:$0xff]
        %v9559 = vld [vmem:[#allocation52 + $0x1e8] sm:$0xff]
        %v9560 = vld [vmem:[#allocation52 + $0x1f0] sm:$0xff]
        %v9561 = vld [vmem:[#allocation52 + $0x1f8] sm:$0xff]
        %v9626 = vunpack.c.l.b16 %v9498
        %v9627 = vunpack.c.h.b16 %v9498
        %v9628 = vunpack.c.l.b16 %v9499
        %v9629 = vunpack.c.h.b16 %v9499
        %v9630 = vunpack.c.l.b16 %v9500
        %v9631 = vunpack.c.h.b16 %v9500
        %v9632 = vunpack.c.l.b16 %v9501
        %v9633 = vunpack.c.h.b16 %v9501
        %v9634 = vunpack.c.l.b16 %v9502
        %v9635 = vunpack.c.h.b16 %v9502
        %v9636 = vunpack.c.l.b16 %v9503
        %v9637 = vunpack.c.h.b16 %v9503
        %v9638 = vunpack.c.l.b16 %v9504
        %v9639 = vunpack.c.h.b16 %v9504
        %v9640 = vunpack.c.l.b16 %v9505
        %v9641 = vunpack.c.h.b16 %v9505
        %v9642 = vunpack.c.l.b16 %v9506
        %v9643 = vunpack.c.h.b16 %v9506
        %v9644 = vunpack.c.l.b16 %v9507
        %v9645 = vunpack.c.h.b16 %v9507
        %v9646 = vunpack.c.l.b16 %v9508
        %v9647 = vunpack.c.h.b16 %v9508
        %v9648 = vunpack.c.l.b16 %v9509
        %v9649 = vunpack.c.h.b16 %v9509
        %v9650 = vunpack.c.l.b16 %v9510
        %v9651 = vunpack.c.h.b16 %v9510
        %v9652 = vunpack.c.l.b16 %v9511
        %v9653 = vunpack.c.h.b16 %v9511
        %v9654 = vunpack.c.l.b16 %v9512
        %v9655 = vunpack.c.h.b16 %v9512
        %v9656 = vunpack.c.l.b16 %v9513
        %v9657 = vunpack.c.h.b16 %v9513
        %v9658 = vunpack.c.l.b16 %v9514
        %v9659 = vunpack.c.h.b16 %v9514
        %v9660 = vunpack.c.l.b16 %v9515
        %v9661 = vunpack.c.h.b16 %v9515
        %v9662 = vunpack.c.l.b16 %v9516
        %v9663 = vunpack.c.h.b16 %v9516
        %v9664 = vunpack.c.l.b16 %v9517
        %v9665 = vunpack.c.h.b16 %v9517
        %v9666 = vunpack.c.l.b16 %v9518
        %v9667 = vunpack.c.h.b16 %v9518
        %v9668 = vunpack.c.l.b16 %v9519
        %v9669 = vunpack.c.h.b16 %v9519
        %v9670 = vunpack.c.l.b16 %v9520
        %v9671 = vunpack.c.h.b16 %v9520
        %v9672 = vunpack.c.l.b16 %v9521
        %v9673 = vunpack.c.h.b16 %v9521
        %v9674 = vunpack.c.l.b16 %v9522
        %v9675 = vunpack.c.h.b16 %v9522
        %v9676 = vunpack.c.l.b16 %v9523
        %v9677 = vunpack.c.h.b16 %v9523
        %v9678 = vunpack.c.l.b16 %v9524
        %v9679 = vunpack.c.h.b16 %v9524
        %v9680 = vunpack.c.l.b16 %v9525
        %v9681 = vunpack.c.h.b16 %v9525
        %v9682 = vunpack.c.l.b16 %v9526
        %v9683 = vunpack.c.h.b16 %v9526
        %v9684 = vunpack.c.l.b16 %v9527
        %v9685 = vunpack.c.h.b16 %v9527
        %v9686 = vunpack.c.l.b16 %v9528
        %v9687 = vunpack.c.h.b16 %v9528
        %v9688 = vunpack.c.l.b16 %v9529
        %v9689 = vunpack.c.h.b16 %v9529
        %v9690 = vunpack.c.l.b16 %v9530
        %v9691 = vunpack.c.h.b16 %v9530
        %v9692 = vunpack.c.l.b16 %v9531
        %v9693 = vunpack.c.h.b16 %v9531
        %v9694 = vunpack.c.l.b16 %v9532
        %v9695 = vunpack.c.h.b16 %v9532
        %v9696 = vunpack.c.l.b16 %v9533
        %v9697 = vunpack.c.h.b16 %v9533
        %v9698 = vunpack.c.l.b16 %v9534
        %v9699 = vunpack.c.h.b16 %v9534
        %v9700 = vunpack.c.l.b16 %v9535
        %v9701 = vunpack.c.h.b16 %v9535
        %v9702 = vunpack.c.l.b16 %v9536
        %v9703 = vunpack.c.h.b16 %v9536
        %v9704 = vunpack.c.l.b16 %v9537
        %v9705 = vunpack.c.h.b16 %v9537
        %v9706 = vunpack.c.l.b16 %v9538
        %v9707 = vunpack.c.h.b16 %v9538
        %v9708 = vunpack.c.l.b16 %v9539
        %v9709 = vunpack.c.h.b16 %v9539
        %v9710 = vunpack.c.l.b16 %v9540
        %v9711 = vunpack.c.h.b16 %v9540
        %v9712 = vunpack.c.l.b16 %v9541
        %v9713 = vunpack.c.h.b16 %v9541
        %v9714 = vunpack.c.l.b16 %v9542
        %v9715 = vunpack.c.h.b16 %v9542
        %v9716 = vunpack.c.l.b16 %v9543
        %v9717 = vunpack.c.h.b16 %v9543
        %v9718 = vunpack.c.l.b16 %v9544
        %v9719 = vunpack.c.h.b16 %v9544
        %v9720 = vunpack.c.l.b16 %v9545
        %v9721 = vunpack.c.h.b16 %v9545
        %v9722 = vunpack.c.l.b16 %v9546
        %v9723 = vunpack.c.h.b16 %v9546
        %v9724 = vunpack.c.l.b16 %v9547
        %v9725 = vunpack.c.h.b16 %v9547
        %v9726 = vunpack.c.l.b16 %v9548
        %v9727 = vunpack.c.h.b16 %v9548
        %v9728 = vunpack.c.l.b16 %v9549
        %v9729 = vunpack.c.h.b16 %v9549
        %v9730 = vunpack.c.l.b16 %v9550
        %v9731 = vunpack.c.h.b16 %v9550
        %v9732 = vunpack.c.l.b16 %v9551
        %v9733 = vunpack.c.h.b16 %v9551
        %v9734 = vunpack.c.l.b16 %v9552
        %v9735 = vunpack.c.h.b16 %v9552
        %v9736 = vunpack.c.l.b16 %v9553
        %v9737 = vunpack.c.h.b16 %v9553
        %v9738 = vunpack.c.l.b16 %v9554
        %v9739 = vunpack.c.h.b16 %v9554
        %v9740 = vunpack.c.l.b16 %v9555
        %v9741 = vunpack.c.h.b16 %v9555
        %v9742 = vunpack.c.l.b16 %v9556
        %v9743 = vunpack.c.h.b16 %v9556
        %v9744 = vunpack.c.l.b16 %v9557
        %v9745 = vunpack.c.h.b16 %v9557
        %v9746 = vunpack.c.l.b16 %v9558
        %v9747 = vunpack.c.h.b16 %v9558
        %v9748 = vunpack.c.l.b16 %v9559
        %v9749 = vunpack.c.h.b16 %v9559
        %v9750 = vunpack.c.l.b16 %v9560
        %v9751 = vunpack.c.h.b16 %v9560
        %v9752 = vunpack.c.l.b16 %v9561
        %v9753 = vunpack.c.h.b16 %v9561
        %v9754 = vpack.c.b16 %v9630, %v9626
        %v9755 = vpack.c.b16 %v9631, %v9627
        %v9756 = vpack.c.b16 %v9632, %v9628
        %v9757 = vpack.c.b16 %v9633, %v9629
        %v9758 = vpack.c.b16 %v9638, %v9634
        %v9759 = vpack.c.b16 %v9639, %v9635
        %v9760 = vpack.c.b16 %v9640, %v9636
        %v9761 = vpack.c.b16 %v9641, %v9637
        %v9762 = vpack.c.b16 %v9646, %v9642
        %v9763 = vpack.c.b16 %v9647, %v9643
        %v9764 = vpack.c.b16 %v9648, %v9644
        %v9765 = vpack.c.b16 %v9649, %v9645
        %v9766 = vpack.c.b16 %v9654, %v9650
        %v9767 = vpack.c.b16 %v9655, %v9651
        %v9768 = vpack.c.b16 %v9656, %v9652
        %v9769 = vpack.c.b16 %v9657, %v9653
        %v9770 = vpack.c.b16 %v9662, %v9658
        %v9771 = vpack.c.b16 %v9663, %v9659
        %v9772 = vpack.c.b16 %v9664, %v9660
        %v9773 = vpack.c.b16 %v9665, %v9661
        %v9774 = vpack.c.b16 %v9670, %v9666
        %v9775 = vpack.c.b16 %v9671, %v9667
        %v9776 = vpack.c.b16 %v9672, %v9668
        %v9777 = vpack.c.b16 %v9673, %v9669
        %v9778 = vpack.c.b16 %v9678, %v9674
        %v9779 = vpack.c.b16 %v9679, %v9675
        %v9780 = vpack.c.b16 %v9680, %v9676
        %v9781 = vpack.c.b16 %v9681, %v9677
        %v9782 = vpack.c.b16 %v9686, %v9682
        %v9783 = vpack.c.b16 %v9687, %v9683
        %v9784 = vpack.c.b16 %v9688, %v9684
        %v9785 = vpack.c.b16 %v9689, %v9685
        %v9786 = vpack.c.b16 %v9694, %v9690
        %v9787 = vpack.c.b16 %v9695, %v9691
        %v9788 = vpack.c.b16 %v9696, %v9692
        %v9789 = vpack.c.b16 %v9697, %v9693
        %v9790 = vpack.c.b16 %v9702, %v9698
        %v9791 = vpack.c.b16 %v9703, %v9699
        %v9792 = vpack.c.b16 %v9704, %v9700
        %v9793 = vpack.c.b16 %v9705, %v9701
        %v9794 = vpack.c.b16 %v9710, %v9706
        %v9795 = vpack.c.b16 %v9711, %v9707
        %v9796 = vpack.c.b16 %v9712, %v9708
        %v9797 = vpack.c.b16 %v9713, %v9709
        %v9798 = vpack.c.b16 %v9718, %v9714
        %v9799 = vpack.c.b16 %v9719, %v9715
        %v9800 = vpack.c.b16 %v9720, %v9716
        %v9801 = vpack.c.b16 %v9721, %v9717
        %v9802 = vpack.c.b16 %v9726, %v9722
        %v9803 = vpack.c.b16 %v9727, %v9723
        %v9804 = vpack.c.b16 %v9728, %v9724
        %v9805 = vpack.c.b16 %v9729, %v9725
        %v9806 = vpack.c.b16 %v9734, %v9730
        %v9807 = vpack.c.b16 %v9735, %v9731
        %v9808 = vpack.c.b16 %v9736, %v9732
        %v9809 = vpack.c.b16 %v9737, %v9733
        %v9810 = vpack.c.b16 %v9742, %v9738
        %v9811 = vpack.c.b16 %v9743, %v9739
        %v9812 = vpack.c.b16 %v9744, %v9740
        %v9813 = vpack.c.b16 %v9745, %v9741
        %v9814 = vpack.c.b16 %v9750, %v9746
        %v9815 = vpack.c.b16 %v9751, %v9747
        %v9816 = vpack.c.b16 %v9752, %v9748
        %v9817 = vpack.c.b16 %v9753, %v9749
        %9882 = vmatpush.bf16.msra.mxu0 %v9782
        %9883 = vmatpush.bf16.msra.mxu0 %v9778
        %9884 = vmatpush.bf16.msra.mxu0 %v9774
        %9885 = vmatpush.bf16.msra.mxu0 %v9770
        %9886 = vmatpush.bf16.msra.mxu0 %v9766
        %9887 = vmatpush.bf16.msra.mxu0 %v9762
        %9888 = vmatpush.bf16.msra.mxu0 %v9758
        %9889 = vmatpush.bf16.msra.mxu0 %v9754
        %9890 = vmatmul.bf16.gmra.mxu0 %v6406
        %v9891 = vpop.f32.mrf.mxu0
        %v9892 = vadd.f32 0.0, %v9891
        %v9893 = vpop.f32.mrf.mxu0
        %9894 = vdwg.mxu0
        %9895 = vmatpush.bf16.msra.mxu0 %v9814
        %9896 = vmatpush.bf16.msra.mxu0 %v9810
        %9897 = vmatpush.bf16.msra.mxu0 %v9806
        %9898 = vmatpush.bf16.msra.mxu0 %v9802
        %9899 = vmatpush.bf16.msra.mxu0 %v9798
        %9900 = vmatpush.bf16.msra.mxu0 %v9794
        %9901 = vmatpush.bf16.msra.mxu0 %v9790
        %9902 = vmatpush.bf16.msra.mxu0 %v9786
        %9903 = vmatmul.bf16.gmra.mxu0 %v6407
        %v9904 = vpop.f32.mrf.mxu0
        %v9905 = vadd.f32 %v9892, %v9904
        %v9906 = vpop.f32.mrf.mxu0
        %9907 = vdwg.mxu0
        %9908 = vmatpush.bf16.msra.mxu0 %v9783
        %9909 = vmatpush.bf16.msra.mxu0 %v9779
        %9910 = vmatpush.bf16.msra.mxu0 %v9775
        %9911 = vmatpush.bf16.msra.mxu0 %v9771
        %9912 = vmatpush.bf16.msra.mxu0 %v9767
        %9913 = vmatpush.bf16.msra.mxu0 %v9763
        %9914 = vmatpush.bf16.msra.mxu0 %v9759
        %9915 = vmatpush.bf16.msra.mxu0 %v9755
        %9916 = vmatmul.bf16.gmra.mxu0 %v6406
        %v9917 = vpop.f32.mrf.mxu0
        %v9918 = vadd.f32 0.0, %v9917
        %v9919 = vpop.f32.mrf.mxu0
        %9920 = vdwg.mxu0
        %9921 = vmatpush.bf16.msra.mxu0 %v9815
        %9922 = vmatpush.bf16.msra.mxu0 %v9811
        %9923 = vmatpush.bf16.msra.mxu0 %v9807
        %9924 = vmatpush.bf16.msra.mxu0 %v9803
        %9925 = vmatpush.bf16.msra.mxu0 %v9799
        %9926 = vmatpush.bf16.msra.mxu0 %v9795
        %9927 = vmatpush.bf16.msra.mxu0 %v9791
        %9928 = vmatpush.bf16.msra.mxu0 %v9787
        %9929 = vmatmul.bf16.gmra.mxu0 %v6407
        %v9930 = vpop.f32.mrf.mxu0
        %v9931 = vadd.f32 %v9918, %v9930
        %v9932 = vpop.f32.mrf.mxu0
        %9933 = vdwg.mxu0
        %9934 = vmatpush.bf16.msra.mxu0 %v9784
        %9935 = vmatpush.bf16.msra.mxu0 %v9780
        %9936 = vmatpush.bf16.msra.mxu0 %v9776
        %9937 = vmatpush.bf16.msra.mxu0 %v9772
        %9938 = vmatpush.bf16.msra.mxu0 %v9768
        %9939 = vmatpush.bf16.msra.mxu0 %v9764
        %9940 = vmatpush.bf16.msra.mxu0 %v9760
        %9941 = vmatpush.bf16.msra.mxu0 %v9756
        %9942 = vmatmul.bf16.gmra.mxu0 %v6406
        %v9943 = vpop.f32.mrf.mxu0
        %v9944 = vadd.f32 0.0, %v9943
        %v9945 = vpop.f32.mrf.mxu0
        %9946 = vdwg.mxu0
        %9947 = vmatpush.bf16.msra.mxu0 %v9816
        %9948 = vmatpush.bf16.msra.mxu0 %v9812
        %9949 = vmatpush.bf16.msra.mxu0 %v9808
        %9950 = vmatpush.bf16.msra.mxu0 %v9804
        %9951 = vmatpush.bf16.msra.mxu0 %v9800
        %9952 = vmatpush.bf16.msra.mxu0 %v9796
        %9953 = vmatpush.bf16.msra.mxu0 %v9792
        %9954 = vmatpush.bf16.msra.mxu0 %v9788
        %9955 = vmatmul.bf16.gmra.mxu0 %v6407
        %v9956 = vpop.f32.mrf.mxu0
        %v9957 = vadd.f32 %v9944, %v9956
        %v9958 = vpop.f32.mrf.mxu0
        %9959 = vdwg.mxu0
        %9960 = vmatpush.bf16.msra.mxu0 %v9785
        %9961 = vmatpush.bf16.msra.mxu0 %v9781
        %9962 = vmatpush.bf16.msra.mxu0 %v9777
        %9963 = vmatpush.bf16.msra.mxu0 %v9773
        %9964 = vmatpush.bf16.msra.mxu0 %v9769
        %9965 = vmatpush.bf16.msra.mxu0 %v9765
        %9966 = vmatpush.bf16.msra.mxu0 %v9761
        %9967 = vmatpush.bf16.msra.mxu0 %v9757
        %9968 = vmatmul.bf16.gmra.mxu0 %v6406
        %v9969 = vpop.f32.mrf.mxu0
        %v9970 = vadd.f32 0.0, %v9969
        %v9971 = vpop.f32.mrf.mxu0
        %9972 = vdwg.mxu0
        %9973 = vmatpush.bf16.msra.mxu0 %v9817
        %9974 = vmatpush.bf16.msra.mxu0 %v9813
        %9975 = vmatpush.bf16.msra.mxu0 %v9809
        %9976 = vmatpush.bf16.msra.mxu0 %v9805
        %9977 = vmatpush.bf16.msra.mxu0 %v9801
        %9978 = vmatpush.bf16.msra.mxu0 %v9797
        %9979 = vmatpush.bf16.msra.mxu0 %v9793
        %9980 = vmatpush.bf16.msra.mxu0 %v9789
        %9981 = vmatmul.bf16.gmra.mxu0 %v6407
        %v9982 = vpop.f32.mrf.mxu0
        %v9983 = vadd.f32 %v9970, %v9982
        %v9984 = vpop.f32.mrf.mxu0
        %9985 = vdwg.mxu0
        %v9986 = vld [vmem:[#allocation54] sm:$0xf]
        %v9988 = vperm.slane %v9986, 0
        %v9989 = vperm.slane %v9986, 1
        %v9990 = vperm.slane %v9986, 2
        %v9991 = vperm.slane %v9986, 3
        %v9996 = vmul.f32 %v9905, %v9988
        %v9997 = vmul.f32 %v9931, %v9989
        %v9998 = vmul.f32 %v9957, %v9990
        %v9999 = vmul.f32 %v9983, %v9991
        %v10000 = vld [vmem:[#allocation55] sm:$0xf]
        %v10002 = vperm.slane %v10000, 0
        %v10003 = vperm.slane %v10000, 1
        %v10004 = vperm.slane %v10000, 2
        %v10005 = vperm.slane %v10000, 3
        %v10010 = vadd.f32 %v9996, %v10002
        %v10011 = vadd.f32 %v9997, %v10003
        %v10012 = vadd.f32 %v9998, %v10004
        %v10013 = vadd.f32 %v9999, %v10005
        %v10014 = vadd.f32 %v9494, %v10010
        %v10015 = vadd.f32 %v9495, %v10011
        %v10016 = vadd.f32 %v9496, %v10012
        %v10017 = vadd.f32 %v9497, %v10013
        %v10018 = vmax.f32 %v10014, 0.0
        %v10019 = vmax.f32 %v10015, 0.0
        %v10020 = vmax.f32 %v10016, 0.0
        %v10021 = vmax.f32 %v10017, 0.0
        %v10022 = vpack.c.bf16 %v10019, %v10018
        %v10023 = vpack.c.bf16 %v10021, %v10020
        %v10026 = vrot.slane %v10022, 2
        %v10027 = vrot.slane %v10023, 4
        %v10028 = vrot.slane %v10023, 6
        %v10031 = vsel %vm6411, %v10022, %v10026
        %vm10032 = vcmask 1045508
        %v10035 = vsel %vm10032, %v10027, %v10028
        %v10036 = vsel %vm1715, %v10031, %v10035
        %10038 = vst [vmem:[%s1671] sm:$0xff] %v10036
        %p10039 = scmp.lt.s32.totalorder %s105, 1
        %s10040 = scalar_select %p10039, %s105, 1
        %s10041 = smul.addr %s10040, 4
        %s10042 = smul.addr %s10041, 2
        %s10043 = scalar_lea.vmem %s75, %s10042
        // Predicated region
        $region313: #{resnet_forward.1} parent=167 // pred_check
          %p10044 = pneg %p905
        $region314: #{resnet_forward.1} parent=167 // pred_check_branch
          %10046 = sbr.rel (%p10044) target = $region316
        $region315: #{resnet_forward.1} parent=167 // pred_region
          _
        $region316: #{resnet_forward.1} parent=167 // pred_fallthru
          _
      $region168: #{resnet_forward.1} parent=5 // pred_fallthru
        _
      %p10047 = scmp.le.s32.totalorder 2, %s100
      // Predicated region
      $region317: #{resnet_forward.1} parent=5 // pred_check
        %p10048 = pneg %p10047
      $region318: #{resnet_forward.1} parent=5 // pred_check_branch
        %10050 = sbr.rel (%p10048) target = $region320
      $region319: #{resnet_forward.1} parent=5 // pred_region
        %s10051 = ssub.s32 %s100, 2
        // Predicated region
        $region321: #{resnet_forward.1} parent=319 // pred_check
          %p10052 = pneg %p911
        $region322: #{resnet_forward.1} parent=319 // pred_check_branch
          %10054 = sbr.rel (%p10052) target = $region324
        $region323: #{resnet_forward.1} parent=319 // pred_region
          %p10055 = scmp.lt.s32.totalorder %s106, 1
          %s10056 = scalar_select %p10055, %s106, 1
          %s10057 = smul.addr %s10056, 4
          %s10058 = smul.addr %s10057, 2
          %s10059 = scalar_lea.vmem %s75, %s10058
        $region324: #{resnet_forward.1} parent=319 // pred_fallthru
          _
      $region320: #{resnet_forward.1} parent=5 // pred_fallthru
        _
    $region6: #{resnet_forward.1} parent=1 // loop_footer
      %s104 = sadd.s32 1, %s100
    $region7: #{resnet_forward.1} parent=1 // loop_footer_branch
      %99 = sbr.rel target = $region3
    $region8: #{resnet_forward.1} parent=1 // loop_exit
      _
    %10060 = vsyncpa [#allocation3], 1
    %s10061 = scalar_lea.sflag [#allocation3], 1
    %10062 = vsyncpa %s10061, 1
    %10063 = vsyncpa [#allocation5], 1
    %10064 = vsyncpa [#allocation8], 1
    %10065 = vsyncpa [#allocation11], 1
    %10066 = vsyncpa [#allocation14], 1
    %10067 = vsyncpa [#allocation17], 1
    %10068 = vsyncpa [#allocation20], 1
    %10069 = vsyncpa [#allocation23], 1
    %10070 = vsyncpa [#allocation26], 1
    %10071 = vsyncpa [#allocation29], 1
    %10072 = vsyncpa [#allocation32], 1
    %10073 = vsyncpa [#allocation35], 1
    %10074 = vsyncpa [#allocation38], 1
    %10075 = vsyncpa [#allocation41], 1
    %10076 = vsyncpa [#allocation44], 1
    %10077 = vsyncpa [#allocation47], 1
    %10078 = vsyncpa [#allocation50], 1
    %10079 = vsyncpa [#allocation53], 1
    %10080 = vsyncpa [#allocation56], 1

</llo_original>
